<compile_context>
chip_gen: v7x
topology: tpu7x:2x2x1
jax: 0.10.0
libtpu: 0.0.40
codegen_flags: <defaults>
</compile_context>

<pallas_src>
import math
import functools

import jax
import jax.numpy as jnp
from jax.experimental import pallas as pl
from jax.experimental.pallas import tpu as pltpu


# ----------------------------- configuration ---------------------------------

class Cfg:
    token_nums = 16          # vocabulary size (pad_idx = token_nums - 1)
    tf_de_dim = 32           # d_model
    tf_de_heads = 4          # nhead
    tf_de_layers = 2         # num decoder layers
    tf_de_tgt_dim = 9        # target length + 1 (forward slices tgt[:, :-1] -> T = 8)
    tf_de_dropout = 0.1      # unused at inference
    dim_feedforward = 2048   # nn.TransformerDecoderLayer default
    ln_eps = 1e-5


LOGIT_PAD = 128              # lane-dense padded logits width (kernel's only HBM store)
FFN_CHUNKS = 4               # FFN hidden processed in 4 x 512-lane chunks (bounds live vregs)
FFN_DTYPE = jnp.bfloat16     # FFN matmul operand dtype (f32 accumulation); halves weight DMA.
NEG = -1e30                  # finite "masked" value (avoids inf-inf -> NaN on masked rows)


def _div_mod(idx, n):
    """Integer div/mod of an int32 vector by a static int; shift/mask when n is a power of 2."""
    if n & (n - 1) == 0:
        k = n.bit_length() - 1
        return jnp.right_shift(idx, k), jnp.bitwise_and(idx, n - 1)
    return idx // n, idx % n


# ----------------------------- fused Pallas kernel ----------------------------

def _fused_decoder_kernel(
        tgt_col_ref, tgt_row_ref, mem_ref, emb_ref, pos_ref,
        sa_wqkv_ref, sa_bqkv_ref, sa_wo_ref, sa_bo_ref,
        ca_wq_ref, ca_bq_ref, ca_wkv_ref, ca_bkv_ref, ca_wo_ref, ca_bo_ref,
        ln1_g_ref, ln1_b_ref, ln2_g_ref, ln2_b_ref, ln3_g_ref, ln3_b_ref,
        lin1_w_ref, lin1_b_ref, lin2_w_ref, lin2_b_ref,
        out_w_ref, out_b_ref,
        o_ref,
        *, num_layers, num_heads, B, T, S, V, pad_idx, eps):
    D = emb_ref.shape[1]
    hd = D // num_heads
    scale = 1.0 / math.sqrt(hd)
    BT, BS = B * T, B * S
    n_chunks = lin1_w_ref.shape[0] // num_layers
    f32 = jnp.float32

    # --- embedding lookup as one-hot MXU matmul + positional add (pos_drop = identity, eval) ---
    ids_col = tgt_col_ref[...]                                              # (BT, 1) int32
    onehot = (ids_col == jax.lax.broadcasted_iota(jnp.int32, (BT, V), 1)).astype(f32)
    x = jnp.dot(onehot, emb_ref[...], preferred_element_type=f32)           # (BT, D)
    x = x + jnp.concatenate([pos_ref[...]] * B, axis=0)                     # (BT, D)

    # --- additive masks in flat (BT, B*K) form: a batch block-diagonal term lets every
    #     (batch, head) attention problem collapse into a plain 2-D matmul ---
    r = jax.lax.broadcasted_iota(jnp.int32, (BT, BT), 0)
    c = jax.lax.broadcasted_iota(jnp.int32, (BT, BT), 1)
    rb, rp = _div_mod(r, T)
    cb, cp = _div_mod(c, T)
    key_ok = tgt_row_ref[...] != pad_idx                                    # (1, BT) bool
    self_mask = jnp.where((rb == cb) & (cp <= rp) & key_ok, 0.0, NEG)       # (BT, BT)

    rm = jax.lax.broadcasted_iota(jnp.int32, (BT, BS), 0)
    cm = jax.lax.broadcasted_iota(jnp.int32, (BT, BS), 1)
    rmb, _ = _div_mod(rm, T)
    cmb, _ = _div_mod(cm, S)
    cross_mask = jnp.where(rmb == cmb, 0.0, NEG)                            # (BT, BS)

    mem = mem_ref[...].reshape(BS, D)

    # --- cross-attention K/V for ALL layers up front (memory is layer-invariant):
    #     one lane-dense (BS, D) @ (D, L*2D) matmul instead of one per layer ---
    kv_all = jnp.dot(mem, ca_wkv_ref[...], preferred_element_type=f32) + ca_bkv_ref[...]

    def layer_norm(v, g, b):
        mu = jnp.mean(v, axis=-1, keepdims=True)
        var = jnp.mean(jnp.square(v - mu), axis=-1, keepdims=True)
        return (v - mu) * jax.lax.rsqrt(var + eps) * g + b

    def mha(q2d, k2d, v2d, wo, bo, mask):
        # Flat 2-D attention: per head, scores = q_h @ k_h^T over the whole (batch-flattened)
        # key axis with the block-diagonal batch mask; no 3-D reshapes.  Heads are re-packed
        # once and projected with a SINGLE wo matmul.
        heads = []
        for h in range(num_heads):
            sl = slice(h * hd, (h + 1) * hd)
            s = jax.lax.dot_general(q2d[:, sl], k2d[:, sl],
                                    (((1,), (1,)), ((), ())),
                                    preferred_element_type=f32) * scale + mask
            s = s - jnp.max(s, axis=-1, keepdims=True)
            p = jnp.exp(s)
            p = p / jnp.sum(p, axis=-1, keepdims=True)
            heads.append(jnp.dot(p, v2d[:, sl], preferred_element_type=f32))
        o = jnp.concatenate(heads, axis=1)                                  # (BT, D)
        return jnp.dot(o, wo, preferred_element_type=f32) + bo

    for l in range(num_layers):
        # ---------------- self attention (fused QKV projection) ----------------
        qkv = jnp.dot(x, sa_wqkv_ref[l], preferred_element_type=f32) + sa_bqkv_ref[l]
        sa = mha(qkv[:, :D], qkv[:, D:2 * D], qkv[:, 2 * D:],
                 sa_wo_ref[l], sa_bo_ref[l], self_mask)
        x = layer_norm(x + sa, ln1_g_ref[l], ln1_b_ref[l])

        # ---------------- cross attention (K/V hoisted above the loop) ---------
        q = jnp.dot(x, ca_wq_ref[l], preferred_element_type=f32) + ca_bq_ref[l]
        k = kv_all[:, 2 * D * l: 2 * D * l + D]
        v = kv_all[:, 2 * D * l + D: 2 * D * (l + 1)]
        ca = mha(q, k, v, ca_wo_ref[l], ca_bo_ref[l], cross_mask)
        x = layer_norm(x + ca, ln2_g_ref[l], ln2_b_ref[l])

        # ----- FFN: bf16-operand matmuls (f32 acc), hidden chunked so at most -----
        # ----- (BT, F/FFN_CHUNKS) of the 2048-wide hidden is ever live        -----
        xb = x.astype(lin1_w_ref.dtype)
        acc = None
        for ci in range(n_chunks):
            wi = l * n_chunks + ci
            h = jnp.dot(xb, lin1_w_ref[wi], preferred_element_type=f32) + lin1_b_ref[wi]
            h = jnp.maximum(h, 0.0).astype(lin2_w_ref.dtype)
            contrib = jnp.dot(h, lin2_w_ref[wi], preferred_element_type=f32)
            acc = contrib if acc is None else acc + contrib
        x = layer_norm(x + acc + lin2_b_ref[l], ln3_g_ref[l], ln3_b_ref[l])

    # --- output head: lane-dense padded (BT, 128) store (wrapper slices [:, :V]) ---
    o_ref[...] = jnp.dot(x, out_w_ref[...], preferred_element_type=f32) + out_b_ref[...]


def _vmem_spec():
    return pl.BlockSpec(memory_space=pltpu.MemorySpace.VMEM)


# ------------------------- Pallas-backed model forward -------------------------

def control_predict_forward_pallas(fused, encoder_out, tgt, cfg):
    """Exact eval-mode semantics of ControlPredict.forward."""
    V = cfg.token_nums
    pad_idx = V - 1

    tgt = tgt[:, :-1]                         # (B, T)
    B, T = tgt.shape
    S = encoder_out.shape[1]
    BT = B * T

    # free metadata reshapes; all real work (embedding gather, mask build) happens in-kernel
    tgt_col = tgt.reshape(BT, 1).astype(jnp.int32)
    tgt_row = tgt.reshape(1, BT).astype(jnp.int32)
    mem = encoder_out.astype(jnp.float32)     # (B, S, D)

    operands = [
        tgt_col, tgt_row, mem, fused["embedding"], fused["pos_embed"],
        fused["sa_wqkv"], fused["sa_bqkv"], fused["sa_wo"], fused["sa_bo"],
        fused["ca_wq"], fused["ca_bq"], fused["ca_wkv"], fused["ca_bkv"],
        fused["ca_wo"], fused["ca_bo"],
        fused["ln1_g"], fused["ln1_b"], fused["ln2_g"], fused["ln2_b"],
        fused["ln3_g"], fused["ln3_b"],
        fused["lin1_w"], fused["lin1_b"], fused["lin2_w"], fused["lin2_b"],
        fused["out_w_pad"], fused["out_b_pad"],
    ]
    kernel = functools.partial(
        _fused_decoder_kernel,
        num_layers=cfg.tf_de_layers, num_heads=cfg.tf_de_heads,
        B=B, T=T, S=S, V=V, pad_idx=pad_idx, eps=cfg.ln_eps)

    out_pad = pl.pallas_call(
        kernel,
        out_shape=jax.ShapeDtypeStruct((BT, LOGIT_PAD), jnp.float32),
        in_specs=[_vmem_spec() for _ in operands],
        out_specs=_vmem_spec(),
    )(*operands)
    return out_pad[:, :V].reshape(B, T, V)


# -------------------------- pure-JAX reference forward -------------------------

def _ref_ln(x, g, b, eps):
    mu = jnp.mean(x, axis=-1, keepdims=True)
    var = jnp.mean(jnp.square(x - mu), axis=-1, keepdims=True)
    return (x - mu) * jax.lax.rsqrt(var + eps) * g + b


def _ref_mha(x_q, x_kv, mask, p, num_heads):
    B, Tq, D = x_q.shape
    Tk = x_kv.shape[1]
    hd = D // num_heads
    q = x_q @ p["wq"] + p["bq"]
    k = x_kv @ p["wk"] + p["bk"]
    v = x_kv @ p["wv"] + p["bv"]
    q = q.reshape(B, Tq, num_heads, hd).transpose(0, 2, 1, 3)
    k = k.reshape(B, Tk, num_heads, hd).transpose(0, 2, 1, 3)
    v = v.reshape(B, Tk, num_heads, hd).transpose(0, 2, 1, 3)
    s = jnp.einsum("bhqd,bhkd->bhqk", q, k) / math.sqrt(hd)
    if mask is not None:
        s = s + mask[:, None, :, :]
    pr = jax.nn.softmax(s, axis=-1)
    o = jnp.einsum("bhqk,bhkd->bhqd", pr, v)
    o = o.transpose(0, 2, 1, 3).reshape(B, Tq, D)
    return o @ p["wo"] + p["bo"]


def control_predict_forward_ref(params, cfg, encoder_out, tgt):
    pad_idx = cfg.token_nums - 1
    tgt = tgt[:, :-1]
    B, T = tgt.shape
    causal = jnp.where(jnp.tril(jnp.ones((T, T), dtype=bool)), 0.0, -jnp.inf)
    pad_add = jnp.where(tgt == pad_idx, -jnp.inf, 0.0)
    self_mask = causal[None, :, :] + pad_add[:, None, :]

    x = jnp.take(params["embedding"], tgt, axis=0) + params["pos_embed"]
    for lp in params["layers"]:
        x = _ref_ln(x + _ref_mha(x, x, self_mask, lp["sa"], cfg.tf_de_heads),
                    lp["ln1_g"], lp["ln1_b"], cfg.ln_eps)
        x = _ref_ln(x + _ref_mha(x, encoder_out, None, lp["ca"], cfg.tf_de_heads),
                    lp["ln2_g"], lp["ln2_b"], cfg.ln_eps)
        # same inference-precision policy as the kernel: bf16 FFN matmul operands, f32 accumulate
        w1 = lp["lin1_w"].astype(FFN_DTYPE)
        w2 = lp["lin2_w"].astype(FFN_DTYPE)
        h = jnp.dot(x.astype(FFN_DTYPE), w1, preferred_element_type=jnp.float32) + lp["lin1_b"]
        h = jnp.maximum(h, 0.0)
        y = jnp.dot(h.astype(FFN_DTYPE), w2, preferred_element_type=jnp.float32) + lp["lin2_b"]
        x = _ref_ln(x + y, lp["ln3_g"], lp["ln3_b"], cfg.ln_eps)
    return x @ params["out_w"] + params["out_b"]


# ------------------------------ parameter handling ------------------------------

def _xavier(key, fan_in, fan_out):
    limit = math.sqrt(6.0 / (fan_in + fan_out))
    return jax.random.uniform(key, (fan_in, fan_out), jnp.float32, -limit, limit)


def init_params(key, cfg):
    D, V, F = cfg.tf_de_dim, cfg.token_nums, cfg.dim_feedforward
    keys = iter(jax.random.split(key, 128))

    def vec(n):
        return 0.02 * jax.random.normal(next(keys), (n,), jnp.float32)

    def attn():
        return {"wq": _xavier(next(keys), D, D), "bq": vec(D),
                "wk": _xavier(next(keys), D, D), "bk": vec(D),
                "wv": _xavier(next(keys), D, D), "bv": vec(D),
                "wo": _xavier(next(keys), D, D), "bo": vec(D)}

    layers = []
    for _ in range(cfg.tf_de_layers):
        layers.append({
            "sa": attn(), "ca": attn(),
            "lin1_w": _xavier(next(keys), D, F), "lin1_b": vec(F),
            "lin2_w": _xavier(next(keys), F, D), "lin2_b": vec(D),
            "ln1_g": jnp.ones((D,), jnp.float32), "ln1_b": vec(D),
            "ln2_g": jnp.ones((D,), jnp.float32), "ln2_b": vec(D),
            "ln3_g": jnp.ones((D,), jnp.float32), "ln3_b": vec(D),
        })
    return {
        "embedding": _xavier(next(keys), V, D),
        "pos_embed": 0.02 * jax.random.normal(
            next(keys), (1, cfg.tf_de_tgt_dim - 1, D), jnp.float32),
        "layers": layers,
        "out_w": _xavier(next(keys), D, V),
        "out_b": vec(V),
    }


def prepare_fused_params(params, cfg):
    """One-time prep: QKV concat, cross-layer K/V concat, chunked bf16 FFN, lane-padded head."""
    D, V, F, L = cfg.tf_de_dim, cfg.token_nums, cfg.dim_feedforward, cfg.tf_de_layers
    C = FFN_CHUNKS
    Fc = F // C

    def stack(fn):
        return jnp.stack([fn(lp) for lp in params["layers"]], axis=0)

    fused = {
        "embedding": params["embedding"],                                     # (V, D)
        "pos_embed": params["pos_embed"].reshape(cfg.tf_de_tgt_dim - 1, D),   # (T, D)
        # self-attn: fused QKV projection
        "sa_wqkv": stack(lambda lp: jnp.concatenate(
            [lp["sa"]["wq"], lp["sa"]["wk"], lp["sa"]["wv"]], axis=1)),       # (L, D, 3D)
        "sa_bqkv": stack(lambda lp: jnp.concatenate(
            [lp["sa"]["bq"], lp["sa"]["bk"], lp["sa"]["bv"]]).reshape(1, 3 * D)),
        "sa_wo": stack(lambda lp: lp["sa"]["wo"]),
        "sa_bo": stack(lambda lp: lp["sa"]["bo"].reshape(1, D)),
        # cross-attn: Q per layer; K/V weights of ALL layers concatenated lane-dense (D, L*2D)
        "ca_wq": stack(lambda lp: lp["ca"]["wq"]),
        "ca_bq": stack(lambda lp: lp["ca"]["bq"].reshape(1, D)),
        "ca_wkv": jnp.concatenate(
            [jnp.concatenate([lp["ca"]["wk"], lp["ca"]["wv"]], axis=1)
             for lp in params["layers"]], axis=1),                            # (D, L*2D)
        "ca_bkv": jnp.concatenate(
            [jnp.concatenate([lp["ca"]["bk"], lp["ca"]["bv"]])
             for lp in params["layers"]]).reshape(1, L * 2 * D),
        "ca_wo": stack(lambda lp: lp["ca"]["wo"]),
        "ca_bo": stack(lambda lp: lp["ca"]["bo"].reshape(1, D)),
        # layer norms
        "ln1_g": stack(lambda lp: lp["ln1_g"].reshape(1, D)),
        "ln1_b": stack(lambda lp: lp["ln1_b"].reshape(1, D)),
        "ln2_g": stack(lambda lp: lp["ln2_g"].reshape(1, D)),
        "ln2_b": stack(lambda lp: lp["ln2_b"].reshape(1, D)),
        "ln3_g": stack(lambda lp: lp["ln3_g"].reshape(1, D)),
        "ln3_b": stack(lambda lp: lp["ln3_b"].reshape(1, D)),
        # FFN: bf16 weights, pre-chunked so the kernel indexes (layer, chunk) statically
        "lin1_w": jnp.stack(
            [lp["lin1_w"].reshape(D, C, Fc).transpose(1, 0, 2)[ci]
             for lp in params["layers"] for ci in range(C)], axis=0).astype(FFN_DTYPE),
        "lin1_b": jnp.stack(
            [lp["lin1_b"].reshape(C, 1, Fc)[ci]
             for lp in params["layers"] for ci in range(C)], axis=0),         # (L*C, 1, Fc) f32
        "lin2_w": jnp.stack(
            [lp["lin2_w"].reshape(C, Fc, D)[ci]
             for lp in params["layers"] for ci in range(C)], axis=0).astype(FFN_DTYPE),
        "lin2_b": stack(lambda lp: lp["lin2_b"].reshape(1, D)),
        # output head, lane-padded to 128 so the only HBM store is lane-dense
        "out_w_pad": jnp.zeros((D, LOGIT_PAD), jnp.float32).at[:, :V].set(params["out_w"]),
        "out_b_pad": jnp.zeros((1, LOGIT_PAD), jnp.float32).at[:, :V].set(
            params["out_b"].reshape(1, V)),
    }
    return fused


# ----------------------------------- main --------------------------------------

if __name__ == "__main__":
    cfg = Cfg()
    key = jax.random.PRNGKey(0)
    k_par, k_enc, k_tgt = jax.random.split(key, 3)

    B = 2
    S_mem = 8
    params = init_params(k_par, cfg)
    fused = prepare_fused_params(params, cfg)

    encoder_out = jax.random.normal(k_enc, (B, S_mem, cfg.tf_de_dim), jnp.float32)
    # tokens in [0, pad_idx), with trailing pad tokens to exercise the key-padding mask
    tgt_core = jax.random.randint(k_tgt, (B, cfg.tf_de_tgt_dim - 3), 0, cfg.token_nums - 1)
    tgt_pad = jnp.full((B, 3), cfg.token_nums - 1, jnp.int32)
    tgt = jnp.concatenate([tgt_core, tgt_pad], axis=1).astype(jnp.int32)   # (B, tf_de_tgt_dim)

    forward = jax.jit(functools.partial(control_predict_forward_pallas, cfg=cfg))
    out_pallas = jax.block_until_ready(forward(fused, encoder_out, tgt))

    out_ref = jax.block_until_ready(control_predict_forward_ref(params, cfg, encoder_out, tgt))

    assert out_pallas.shape == (B, cfg.tf_de_tgt_dim - 1, cfg.token_nums), out_pallas.shape
    max_err = float(jnp.max(jnp.abs(out_pallas - out_ref)))
    assert max_err < 1e-3, f"Pallas vs reference mismatch: max abs err = {max_err}"

    print("KERNEL_OK")
</pallas_src>

<mosaic_0001>
module attributes {stable_mosaic.version = 11 : i64} {
  func.func @_fused_decoder_kernel(%arg0: memref<16x1xi32, #tpu.memory_space<vmem>>, %arg1: memref<1x16xi32, #tpu.memory_space<vmem>>, %arg2: memref<2x8x32xf32, #tpu.memory_space<vmem>>, %arg3: memref<16x32xf32, #tpu.memory_space<vmem>>, %arg4: memref<8x32xf32, #tpu.memory_space<vmem>>, %arg5: memref<2x32x96xf32, #tpu.memory_space<vmem>>, %arg6: memref<2x1x96xf32, #tpu.memory_space<vmem>>, %arg7: memref<2x32x32xf32, #tpu.memory_space<vmem>>, %arg8: memref<2x1x32xf32, #tpu.memory_space<vmem>>, %arg9: memref<2x32x32xf32, #tpu.memory_space<vmem>>, %arg10: memref<2x1x32xf32, #tpu.memory_space<vmem>>, %arg11: memref<32x128xf32, #tpu.memory_space<vmem>>, %arg12: memref<1x128xf32, #tpu.memory_space<vmem>>, %arg13: memref<2x32x32xf32, #tpu.memory_space<vmem>>, %arg14: memref<2x1x32xf32, #tpu.memory_space<vmem>>, %arg15: memref<2x1x32xf32, #tpu.memory_space<vmem>>, %arg16: memref<2x1x32xf32, #tpu.memory_space<vmem>>, %arg17: memref<2x1x32xf32, #tpu.memory_space<vmem>>, %arg18: memref<2x1x32xf32, #tpu.memory_space<vmem>>, %arg19: memref<2x1x32xf32, #tpu.memory_space<vmem>>, %arg20: memref<2x1x32xf32, #tpu.memory_space<vmem>>, %arg21: memref<8x32x512xbf16, #tpu.memory_space<vmem>>, %arg22: memref<8x1x512xf32, #tpu.memory_space<vmem>>, %arg23: memref<8x512x32xbf16, #tpu.memory_space<vmem>>, %arg24: memref<2x1x32xf32, #tpu.memory_space<vmem>>, %arg25: memref<32x128xf32, #tpu.memory_space<vmem>>, %arg26: memref<1x128xf32, #tpu.memory_space<vmem>>, %arg27: memref<16x128xf32, #tpu.memory_space<vmem>>) attributes {dimension_semantics = [], scalar_prefetch = 0 : i64, scratch_operands = 0 : i64, tpu.core_type = #tpu.core_type<tc>} {
    %c0 = arith.constant 0 : index
    %c0_0 = arith.constant 0 : index
    %0 = vector.load %arg0[%c0, %c0_0] : memref<16x1xi32, #tpu.memory_space<vmem>>, vector<16x1xi32>
    %1 = tpu.iota {dimensions = array<i32: 1>} : vector<16x16xi32>
    %2 = vector.broadcast %0 : vector<16x1xi32> to vector<16x16xi32>
    %3 = arith.cmpi eq, %2, %1 : vector<16x16xi32>
    %4 = arith.extui %3 : vector<16x16xi1> to vector<16x16xi32>
    %5 = arith.sitofp %4 : vector<16x16xi32> to vector<16x16xf32>
    %c0_1 = arith.constant 0 : index
    %c0_2 = arith.constant 0 : index
    %6 = vector.load %arg3[%c0_1, %c0_2] : memref<16x32xf32, #tpu.memory_space<vmem>>, vector<16x32xf32>
    %cst = arith.constant dense<0.000000e+00> : vector<16x32xf32>
    %7 = tpu.matmul %5, %6, %cst {dimension_numbers = #tpu.dot_dimension_numbers<[1], [0], [0], [1], [0, 0, 1, 1], [], []>} : vector<16x16xf32>, vector<16x32xf32>, vector<16x32xf32> -> vector<16x32xf32>
    %c0_3 = arith.constant 0 : index
    %c0_4 = arith.constant 0 : index
    %8 = vector.load %arg4[%c0_3, %c0_4] : memref<8x32xf32, #tpu.memory_space<vmem>>, vector<8x32xf32>
    %9 = tpu.concatenate %8, %8 in 0 : vector<8x32xf32>, vector<8x32xf32> -> vector<16x32xf32>
    %10 = arith.addf %7, %9 : vector<16x32xf32>
    %11 = tpu.iota {dimensions = array<i32: 0>} : vector<16x16xi32>
    %12 = tpu.iota {dimensions = array<i32: 1>} : vector<16x16xi32>
    %c3_i32 = arith.constant 3 : i32
    %13 = vector.broadcast %c3_i32 : i32 to vector<16x16xi32>
    %14 = arith.shrsi %11, %13 : vector<16x16xi32>
    %c7_i32 = arith.constant 7 : i32
    %15 = vector.broadcast %c7_i32 : i32 to vector<16x16xi32>
    %16 = arith.andi %11, %15 : vector<16x16xi32>
    %c3_i32_5 = arith.constant 3 : i32
    %17 = vector.broadcast %c3_i32_5 : i32 to vector<16x16xi32>
    %18 = arith.shrsi %12, %17 : vector<16x16xi32>
    %c7_i32_6 = arith.constant 7 : i32
    %19 = vector.broadcast %c7_i32_6 : i32 to vector<16x16xi32>
    %20 = arith.andi %12, %19 : vector<16x16xi32>
    %c0_7 = arith.constant 0 : index
    %c0_8 = arith.constant 0 : index
    %21 = vector.load %arg1[%c0_7, %c0_8] : memref<1x16xi32, #tpu.memory_space<vmem>>, vector<1x16xi32>
    %c15_i32 = arith.constant 15 : i32
    %22 = vector.broadcast %c15_i32 : i32 to vector<1x16xi32>
    %23 = arith.cmpi ne, %21, %22 : vector<1x16xi32>
    %24 = arith.cmpi eq, %14, %18 : vector<16x16xi32>
    %25 = arith.cmpi sle, %20, %16 : vector<16x16xi32>
    %26 = arith.andi %24, %25 : vector<16x16xi1>
    %27 = vector.broadcast %23 : vector<1x16xi1> to vector<16x16xi1>
    %28 = arith.andi %26, %27 : vector<16x16xi1>
    %cst_9 = arith.constant 0.000000e+00 : f32
    %cst_10 = arith.constant -1.000000e+30 : f32
    %29 = vector.broadcast %cst_9 : f32 to vector<16x16xf32>
    %30 = vector.broadcast %cst_10 : f32 to vector<16x16xf32>
    %31 = arith.select %28, %29, %30 : vector<16x16xi1>, vector<16x16xf32>
    %32 = tpu.iota {dimensions = array<i32: 0>} : vector<16x16xi32>
    %33 = tpu.iota {dimensions = array<i32: 1>} : vector<16x16xi32>
    %c3_i32_11 = arith.constant 3 : i32
    %34 = vector.broadcast %c3_i32_11 : i32 to vector<16x16xi32>
    %35 = arith.shrsi %32, %34 : vector<16x16xi32>
    %c3_i32_12 = arith.constant 3 : i32
    %36 = vector.broadcast %c3_i32_12 : i32 to vector<16x16xi32>
    %37 = arith.shrsi %33, %36 : vector<16x16xi32>
    %38 = arith.cmpi eq, %35, %37 : vector<16x16xi32>
    %cst_13 = arith.constant 0.000000e+00 : f32
    %cst_14 = arith.constant -1.000000e+30 : f32
    %39 = vector.broadcast %cst_13 : f32 to vector<16x16xf32>
    %40 = vector.broadcast %cst_14 : f32 to vector<16x16xf32>
    %41 = arith.select %38, %39, %40 : vector<16x16xi1>, vector<16x16xf32>
    %c0_15 = arith.constant 0 : index
    %c0_16 = arith.constant 0 : index
    %c0_17 = arith.constant 0 : index
    %42 = vector.load %arg2[%c0_15, %c0_16, %c0_17] : memref<2x8x32xf32, #tpu.memory_space<vmem>>, vector<2x8x32xf32>
    %43 = vector.shape_cast %42 : vector<2x8x32xf32> to vector<16x32xf32>
    %c0_18 = arith.constant 0 : index
    %c0_19 = arith.constant 0 : index
    %44 = vector.load %arg11[%c0_18, %c0_19] : memref<32x128xf32, #tpu.memory_space<vmem>>, vector<32x128xf32>
    %cst_20 = arith.constant dense<0.000000e+00> : vector<16x128xf32>
    %45 = tpu.matmul %43, %44, %cst_20 {dimension_numbers = #tpu.dot_dimension_numbers<[1], [0], [0], [1], [0, 0, 1, 1], [], []>} : vector<16x32xf32>, vector<32x128xf32>, vector<16x128xf32> -> vector<16x128xf32>
    %c0_21 = arith.constant 0 : index
    %c0_22 = arith.constant 0 : index
    %46 = vector.load %arg12[%c0_21, %c0_22] : memref<1x128xf32, #tpu.memory_space<vmem>>, vector<1x128xf32>
    %47 = vector.broadcast %46 : vector<1x128xf32> to vector<16x128xf32>
    %48 = arith.addf %45, %47 : vector<16x128xf32>
    %c0_23 = arith.constant 0 : index
    %c0_24 = arith.constant 0 : index
    %c0_25 = arith.constant 0 : index
    %49 = vector.load %arg5[%c0_23, %c0_24, %c0_25] : memref<2x32x96xf32, #tpu.memory_space<vmem>>, vector<1x32x96xf32>
    %50 = vector.shape_cast %49 : vector<1x32x96xf32> to vector<32x96xf32>
    %cst_26 = arith.constant dense<0.000000e+00> : vector<16x96xf32>
    %51 = tpu.matmul %10, %50, %cst_26 {dimension_numbers = #tpu.dot_dimension_numbers<[1], [0], [0], [1], [0, 0, 1, 1], [], []>} : vector<16x32xf32>, vector<32x96xf32>, vector<16x96xf32> -> vector<16x96xf32>
    %c0_27 = arith.constant 0 : index
    %c0_28 = arith.constant 0 : index
    %c0_29 = arith.constant 0 : index
    %52 = vector.load %arg6[%c0_27, %c0_28, %c0_29] : memref<2x1x96xf32, #tpu.memory_space<vmem>>, vector<1x1x96xf32>
    %53 = vector.shape_cast %52 : vector<1x1x96xf32> to vector<1x96xf32>
    %54 = vector.broadcast %53 : vector<1x96xf32> to vector<16x96xf32>
    %55 = arith.addf %51, %54 : vector<16x96xf32>
    %56 = vector.extract_strided_slice %55 {offsets = [0, 0], sizes = [16, 32], strides = [1, 1]} : vector<16x96xf32> to vector<16x32xf32>
    %57 = vector.extract_strided_slice %55 {offsets = [0, 32], sizes = [16, 32], strides = [1, 1]} : vector<16x96xf32> to vector<16x32xf32>
    %58 = vector.extract_strided_slice %55 {offsets = [0, 64], sizes = [16, 32], strides = [1, 1]} : vector<16x96xf32> to vector<16x32xf32>
    %c0_30 = arith.constant 0 : index
    %c0_31 = arith.constant 0 : index
    %c0_32 = arith.constant 0 : index
    %59 = vector.load %arg7[%c0_30, %c0_31, %c0_32] : memref<2x32x32xf32, #tpu.memory_space<vmem>>, vector<1x32x32xf32>
    %60 = vector.shape_cast %59 : vector<1x32x32xf32> to vector<32x32xf32>
    %c0_33 = arith.constant 0 : index
    %c0_34 = arith.constant 0 : index
    %c0_35 = arith.constant 0 : index
    %61 = vector.load %arg8[%c0_33, %c0_34, %c0_35] : memref<2x1x32xf32, #tpu.memory_space<vmem>>, vector<1x1x32xf32>
    %62 = vector.shape_cast %61 : vector<1x1x32xf32> to vector<1x32xf32>
    %63 = vector.extract_strided_slice %56 {offsets = [0, 0], sizes = [16, 8], strides = [1, 1]} : vector<16x32xf32> to vector<16x8xf32>
    %64 = vector.extract_strided_slice %57 {offsets = [0, 0], sizes = [16, 8], strides = [1, 1]} : vector<16x32xf32> to vector<16x8xf32>
    %cst_36 = arith.constant dense<0.000000e+00> : vector<16x16xf32>
    %65 = tpu.matmul %63, %64, %cst_36 {dimension_numbers = #tpu.dot_dimension_numbers<[1], [1], [0], [0], [0, 0, 1, 0], [], []>} : vector<16x8xf32>, vector<16x8xf32>, vector<16x16xf32> -> vector<16x16xf32>
    %cst_37 = arith.constant 0.353553385 : f32
    %66 = vector.broadcast %cst_37 : f32 to vector<16x16xf32>
    %67 = arith.mulf %65, %66 : vector<16x16xf32>
    %68 = arith.addf %67, %31 : vector<16x16xf32>
    %cst_38 = arith.constant dense<0xFF800000> : vector<16xf32>
    %69 = vector.multi_reduction <maximumf>, %68, %cst_38 [1] : vector<16x16xf32> to vector<16xf32>
    %70 = vector.shape_cast %69 : vector<16xf32> to vector<16x1xf32>
    %71 = vector.broadcast %70 : vector<16x1xf32> to vector<16x16xf32>
    %72 = arith.subf %68, %71 : vector<16x16xf32>
    %73 = math.exp %72 : vector<16x16xf32>
    %cst_39 = arith.constant dense<0.000000e+00> : vector<16xf32>
    %74 = vector.multi_reduction <add>, %73, %cst_39 [1] : vector<16x16xf32> to vector<16xf32>
    %75 = vector.shape_cast %74 : vector<16xf32> to vector<16x1xf32>
    %76 = vector.broadcast %75 : vector<16x1xf32> to vector<16x16xf32>
    %77 = arith.divf %73, %76 : vector<16x16xf32>
    %78 = vector.extract_strided_slice %58 {offsets = [0, 0], sizes = [16, 8], strides = [1, 1]} : vector<16x32xf32> to vector<16x8xf32>
    %cst_40 = arith.constant dense<0.000000e+00> : vector<16x8xf32>
    %79 = tpu.matmul %77, %78, %cst_40 {dimension_numbers = #tpu.dot_dimension_numbers<[1], [0], [0], [1], [0, 0, 1, 1], [], []>} : vector<16x16xf32>, vector<16x8xf32>, vector<16x8xf32> -> vector<16x8xf32>
    %80 = vector.extract_strided_slice %56 {offsets = [0, 8], sizes = [16, 8], strides = [1, 1]} : vector<16x32xf32> to vector<16x8xf32>
    %81 = vector.extract_strided_slice %57 {offsets = [0, 8], sizes = [16, 8], strides = [1, 1]} : vector<16x32xf32> to vector<16x8xf32>
    %cst_41 = arith.constant dense<0.000000e+00> : vector<16x16xf32>
    %82 = tpu.matmul %80, %81, %cst_41 {dimension_numbers = #tpu.dot_dimension_numbers<[1], [1], [0], [0], [0, 0, 1, 0], [], []>} : vector<16x8xf32>, vector<16x8xf32>, vector<16x16xf32> -> vector<16x16xf32>
    %cst_42 = arith.constant 0.353553385 : f32
    %83 = vector.broadcast %cst_42 : f32 to vector<16x16xf32>
    %84 = arith.mulf %82, %83 : vector<16x16xf32>
    %85 = arith.addf %84, %31 : vector<16x16xf32>
    %cst_43 = arith.constant dense<0xFF800000> : vector<16xf32>
    %86 = vector.multi_reduction <maximumf>, %85, %cst_43 [1] : vector<16x16xf32> to vector<16xf32>
    %87 = vector.shape_cast %86 : vector<16xf32> to vector<16x1xf32>
    %88 = vector.broadcast %87 : vector<16x1xf32> to vector<16x16xf32>
    %89 = arith.subf %85, %88 : vector<16x16xf32>
    %90 = math.exp %89 : vector<16x16xf32>
    %cst_44 = arith.constant dense<0.000000e+00> : vector<16xf32>
    %91 = vector.multi_reduction <add>, %90, %cst_44 [1] : vector<16x16xf32> to vector<16xf32>
    %92 = vector.shape_cast %91 : vector<16xf32> to vector<16x1xf32>
    %93 = vector.broadcast %92 : vector<16x1xf32> to vector<16x16xf32>
    %94 = arith.divf %90, %93 : vector<16x16xf32>
    %95 = vector.extract_strided_slice %58 {offsets = [0, 8], sizes = [16, 8], strides = [1, 1]} : vector<16x32xf32> to vector<16x8xf32>
    %cst_45 = arith.constant dense<0.000000e+00> : vector<16x8xf32>
    %96 = tpu.matmul %94, %95, %cst_45 {dimension_numbers = #tpu.dot_dimension_numbers<[1], [0], [0], [1], [0, 0, 1, 1], [], []>} : vector<16x16xf32>, vector<16x8xf32>, vector<16x8xf32> -> vector<16x8xf32>
    %97 = vector.extract_strided_slice %56 {offsets = [0, 16], sizes = [16, 8], strides = [1, 1]} : vector<16x32xf32> to vector<16x8xf32>
    %98 = vector.extract_strided_slice %57 {offsets = [0, 16], sizes = [16, 8], strides = [1, 1]} : vector<16x32xf32> to vector<16x8xf32>
    %cst_46 = arith.constant dense<0.000000e+00> : vector<16x16xf32>
    %99 = tpu.matmul %97, %98, %cst_46 {dimension_numbers = #tpu.dot_dimension_numbers<[1], [1], [0], [0], [0, 0, 1, 0], [], []>} : vector<16x8xf32>, vector<16x8xf32>, vector<16x16xf32> -> vector<16x16xf32>
    %cst_47 = arith.constant 0.353553385 : f32
    %100 = vector.broadcast %cst_47 : f32 to vector<16x16xf32>
    %101 = arith.mulf %99, %100 : vector<16x16xf32>
    %102 = arith.addf %101, %31 : vector<16x16xf32>
    %cst_48 = arith.constant dense<0xFF800000> : vector<16xf32>
    %103 = vector.multi_reduction <maximumf>, %102, %cst_48 [1] : vector<16x16xf32> to vector<16xf32>
    %104 = vector.shape_cast %103 : vector<16xf32> to vector<16x1xf32>
    %105 = vector.broadcast %104 : vector<16x1xf32> to vector<16x16xf32>
    %106 = arith.subf %102, %105 : vector<16x16xf32>
    %107 = math.exp %106 : vector<16x16xf32>
    %cst_49 = arith.constant dense<0.000000e+00> : vector<16xf32>
    %108 = vector.multi_reduction <add>, %107, %cst_49 [1] : vector<16x16xf32> to vector<16xf32>
    %109 = vector.shape_cast %108 : vector<16xf32> to vector<16x1xf32>
    %110 = vector.broadcast %109 : vector<16x1xf32> to vector<16x16xf32>
    %111 = arith.divf %107, %110 : vector<16x16xf32>
    %112 = vector.extract_strided_slice %58 {offsets = [0, 16], sizes = [16, 8], strides = [1, 1]} : vector<16x32xf32> to vector<16x8xf32>
    %cst_50 = arith.constant dense<0.000000e+00> : vector<16x8xf32>
    %113 = tpu.matmul %111, %112, %cst_50 {dimension_numbers = #tpu.dot_dimension_numbers<[1], [0], [0], [1], [0, 0, 1, 1], [], []>} : vector<16x16xf32>, vector<16x8xf32>, vector<16x8xf32> -> vector<16x8xf32>
    %114 = vector.extract_strided_slice %56 {offsets = [0, 24], sizes = [16, 8], strides = [1, 1]} : vector<16x32xf32> to vector<16x8xf32>
    %115 = vector.extract_strided_slice %57 {offsets = [0, 24], sizes = [16, 8], strides = [1, 1]} : vector<16x32xf32> to vector<16x8xf32>
    %cst_51 = arith.constant dense<0.000000e+00> : vector<16x16xf32>
    %116 = tpu.matmul %114, %115, %cst_51 {dimension_numbers = #tpu.dot_dimension_numbers<[1], [1], [0], [0], [0, 0, 1, 0], [], []>} : vector<16x8xf32>, vector<16x8xf32>, vector<16x16xf32> -> vector<16x16xf32>
    %cst_52 = arith.constant 0.353553385 : f32
    %117 = vector.broadcast %cst_52 : f32 to vector<16x16xf32>
    %118 = arith.mulf %116, %117 : vector<16x16xf32>
    %119 = arith.addf %118, %31 : vector<16x16xf32>
    %cst_53 = arith.constant dense<0xFF800000> : vector<16xf32>
    %120 = vector.multi_reduction <maximumf>, %119, %cst_53 [1] : vector<16x16xf32> to vector<16xf32>
    %121 = vector.shape_cast %120 : vector<16xf32> to vector<16x1xf32>
    %122 = vector.broadcast %121 : vector<16x1xf32> to vector<16x16xf32>
    %123 = arith.subf %119, %122 : vector<16x16xf32>
    %124 = math.exp %123 : vector<16x16xf32>
    %cst_54 = arith.constant dense<0.000000e+00> : vector<16xf32>
    %125 = vector.multi_reduction <add>, %124, %cst_54 [1] : vector<16x16xf32> to vector<16xf32>
    %126 = vector.shape_cast %125 : vector<16xf32> to vector<16x1xf32>
    %127 = vector.broadcast %126 : vector<16x1xf32> to vector<16x16xf32>
    %128 = arith.divf %124, %127 : vector<16x16xf32>
    %129 = vector.extract_strided_slice %58 {offsets = [0, 24], sizes = [16, 8], strides = [1, 1]} : vector<16x32xf32> to vector<16x8xf32>
    %cst_55 = arith.constant dense<0.000000e+00> : vector<16x8xf32>
    %130 = tpu.matmul %128, %129, %cst_55 {dimension_numbers = #tpu.dot_dimension_numbers<[1], [0], [0], [1], [0, 0, 1, 1], [], []>} : vector<16x16xf32>, vector<16x8xf32>, vector<16x8xf32> -> vector<16x8xf32>
    %131 = tpu.concatenate %79, %96, %113, %130 in 1 : vector<16x8xf32>, vector<16x8xf32>, vector<16x8xf32>, vector<16x8xf32> -> vector<16x32xf32>
    %cst_56 = arith.constant dense<0.000000e+00> : vector<16x32xf32>
    %132 = tpu.matmul %131, %60, %cst_56 {dimension_numbers = #tpu.dot_dimension_numbers<[1], [0], [0], [1], [0, 0, 1, 1], [], []>} : vector<16x32xf32>, vector<32x32xf32>, vector<16x32xf32> -> vector<16x32xf32>
    %133 = vector.broadcast %62 : vector<1x32xf32> to vector<16x32xf32>
    %134 = arith.addf %132, %133 : vector<16x32xf32>
    %135 = arith.addf %10, %134 : vector<16x32xf32>
    %c0_57 = arith.constant 0 : index
    %c0_58 = arith.constant 0 : index
    %c0_59 = arith.constant 0 : index
    %136 = vector.load %arg15[%c0_57, %c0_58, %c0_59] : memref<2x1x32xf32, #tpu.memory_space<vmem>>, vector<1x1x32xf32>
    %137 = vector.shape_cast %136 : vector<1x1x32xf32> to vector<1x32xf32>
    %c0_60 = arith.constant 0 : index
    %c0_61 = arith.constant 0 : index
    %c0_62 = arith.constant 0 : index
    %138 = vector.load %arg16[%c0_60, %c0_61, %c0_62] : memref<2x1x32xf32, #tpu.memory_space<vmem>>, vector<1x1x32xf32>
    %139 = vector.shape_cast %138 : vector<1x1x32xf32> to vector<1x32xf32>
    %cst_63 = arith.constant dense<0.000000e+00> : vector<16xf32>
    %140 = vector.multi_reduction <add>, %135, %cst_63 [1] : vector<16x32xf32> to vector<16xf32>
    %141 = vector.shape_cast %140 : vector<16xf32> to vector<16x1xf32>
    %cst_64 = arith.constant 3.200000e+01 : f32
    %142 = vector.broadcast %cst_64 : f32 to vector<16x1xf32>
    %143 = arith.divf %141, %142 : vector<16x1xf32>
    %144 = vector.broadcast %143 : vector<16x1xf32> to vector<16x32xf32>
    %145 = arith.subf %135, %144 : vector<16x32xf32>
    %146 = arith.mulf %145, %145 : vector<16x32xf32>
    %cst_65 = arith.constant dense<0.000000e+00> : vector<16xf32>
    %147 = vector.multi_reduction <add>, %146, %cst_65 [1] : vector<16x32xf32> to vector<16xf32>
    %148 = vector.shape_cast %147 : vector<16xf32> to vector<16x1xf32>
    %cst_66 = arith.constant 3.200000e+01 : f32
    %149 = vector.broadcast %cst_66 : f32 to vector<16x1xf32>
    %150 = arith.divf %148, %149 : vector<16x1xf32>
    %151 = vector.broadcast %143 : vector<16x1xf32> to vector<16x32xf32>
    %152 = arith.subf %135, %151 : vector<16x32xf32>
    %cst_67 = arith.constant 9.99999974E-6 : f32
    %153 = vector.broadcast %cst_67 : f32 to vector<16x1xf32>
    %154 = arith.addf %150, %153 : vector<16x1xf32>
    %155 = math.rsqrt %154 : vector<16x1xf32>
    %156 = vector.broadcast %155 : vector<16x1xf32> to vector<16x32xf32>
    %157 = arith.mulf %152, %156 : vector<16x32xf32>
    %158 = vector.broadcast %137 : vector<1x32xf32> to vector<16x32xf32>
    %159 = arith.mulf %157, %158 : vector<16x32xf32>
    %160 = vector.broadcast %139 : vector<1x32xf32> to vector<16x32xf32>
    %161 = arith.addf %159, %160 : vector<16x32xf32>
    %c0_68 = arith.constant 0 : index
    %c0_69 = arith.constant 0 : index
    %c0_70 = arith.constant 0 : index
    %162 = vector.load %arg9[%c0_68, %c0_69, %c0_70] : memref<2x32x32xf32, #tpu.memory_space<vmem>>, vector<1x32x32xf32>
    %163 = vector.shape_cast %162 : vector<1x32x32xf32> to vector<32x32xf32>
    %cst_71 = arith.constant dense<0.000000e+00> : vector<16x32xf32>
    %164 = tpu.matmul %161, %163, %cst_71 {dimension_numbers = #tpu.dot_dimension_numbers<[1], [0], [0], [1], [0, 0, 1, 1], [], []>} : vector<16x32xf32>, vector<32x32xf32>, vector<16x32xf32> -> vector<16x32xf32>
    %c0_72 = arith.constant 0 : index
    %c0_73 = arith.constant 0 : index
    %c0_74 = arith.constant 0 : index
    %165 = vector.load %arg10[%c0_72, %c0_73, %c0_74] : memref<2x1x32xf32, #tpu.memory_space<vmem>>, vector<1x1x32xf32>
    %166 = vector.shape_cast %165 : vector<1x1x32xf32> to vector<1x32xf32>
    %167 = vector.broadcast %166 : vector<1x32xf32> to vector<16x32xf32>
    %168 = arith.addf %164, %167 : vector<16x32xf32>
    %169 = vector.extract_strided_slice %48 {offsets = [0, 0], sizes = [16, 32], strides = [1, 1]} : vector<16x128xf32> to vector<16x32xf32>
    %170 = vector.extract_strided_slice %48 {offsets = [0, 32], sizes = [16, 32], strides = [1, 1]} : vector<16x128xf32> to vector<16x32xf32>
    %c0_75 = arith.constant 0 : index
    %c0_76 = arith.constant 0 : index
    %c0_77 = arith.constant 0 : index
    %171 = vector.load %arg13[%c0_75, %c0_76, %c0_77] : memref<2x32x32xf32, #tpu.memory_space<vmem>>, vector<1x32x32xf32>
    %172 = vector.shape_cast %171 : vector<1x32x32xf32> to vector<32x32xf32>
    %c0_78 = arith.constant 0 : index
    %c0_79 = arith.constant 0 : index
    %c0_80 = arith.constant 0 : index
    %173 = vector.load %arg14[%c0_78, %c0_79, %c0_80] : memref<2x1x32xf32, #tpu.memory_space<vmem>>, vector<1x1x32xf32>
    %174 = vector.shape_cast %173 : vector<1x1x32xf32> to vector<1x32xf32>
    %175 = vector.extract_strided_slice %168 {offsets = [0, 0], sizes = [16, 8], strides = [1, 1]} : vector<16x32xf32> to vector<16x8xf32>
    %176 = vector.extract_strided_slice %169 {offsets = [0, 0], sizes = [16, 8], strides = [1, 1]} : vector<16x32xf32> to vector<16x8xf32>
    %cst_81 = arith.constant dense<0.000000e+00> : vector<16x16xf32>
    %177 = tpu.matmul %175, %176, %cst_81 {dimension_numbers = #tpu.dot_dimension_numbers<[1], [1], [0], [0], [0, 0, 1, 0], [], []>} : vector<16x8xf32>, vector<16x8xf32>, vector<16x16xf32> -> vector<16x16xf32>
    %cst_82 = arith.constant 0.353553385 : f32
    %178 = vector.broadcast %cst_82 : f32 to vector<16x16xf32>
    %179 = arith.mulf %177, %178 : vector<16x16xf32>
    %180 = arith.addf %179, %41 : vector<16x16xf32>
    %cst_83 = arith.constant dense<0xFF800000> : vector<16xf32>
    %181 = vector.multi_reduction <maximumf>, %180, %cst_83 [1] : vector<16x16xf32> to vector<16xf32>
    %182 = vector.shape_cast %181 : vector<16xf32> to vector<16x1xf32>
    %183 = vector.broadcast %182 : vector<16x1xf32> to vector<16x16xf32>
    %184 = arith.subf %180, %183 : vector<16x16xf32>
    %185 = math.exp %184 : vector<16x16xf32>
    %cst_84 = arith.constant dense<0.000000e+00> : vector<16xf32>
    %186 = vector.multi_reduction <add>, %185, %cst_84 [1] : vector<16x16xf32> to vector<16xf32>
    %187 = vector.shape_cast %186 : vector<16xf32> to vector<16x1xf32>
    %188 = vector.broadcast %187 : vector<16x1xf32> to vector<16x16xf32>
    %189 = arith.divf %185, %188 : vector<16x16xf32>
    %190 = vector.extract_strided_slice %170 {offsets = [0, 0], sizes = [16, 8], strides = [1, 1]} : vector<16x32xf32> to vector<16x8xf32>
    %cst_85 = arith.constant dense<0.000000e+00> : vector<16x8xf32>
    %191 = tpu.matmul %189, %190, %cst_85 {dimension_numbers = #tpu.dot_dimension_numbers<[1], [0], [0], [1], [0, 0, 1, 1], [], []>} : vector<16x16xf32>, vector<16x8xf32>, vector<16x8xf32> -> vector<16x8xf32>
    %192 = vector.extract_strided_slice %168 {offsets = [0, 8], sizes = [16, 8], strides = [1, 1]} : vector<16x32xf32> to vector<16x8xf32>
    %193 = vector.extract_strided_slice %169 {offsets = [0, 8], sizes = [16, 8], strides = [1, 1]} : vector<16x32xf32> to vector<16x8xf32>
    %cst_86 = arith.constant dense<0.000000e+00> : vector<16x16xf32>
    %194 = tpu.matmul %192, %193, %cst_86 {dimension_numbers = #tpu.dot_dimension_numbers<[1], [1], [0], [0], [0, 0, 1, 0], [], []>} : vector<16x8xf32>, vector<16x8xf32>, vector<16x16xf32> -> vector<16x16xf32>
    %cst_87 = arith.constant 0.353553385 : f32
    %195 = vector.broadcast %cst_87 : f32 to vector<16x16xf32>
    %196 = arith.mulf %194, %195 : vector<16x16xf32>
    %197 = arith.addf %196, %41 : vector<16x16xf32>
    %cst_88 = arith.constant dense<0xFF800000> : vector<16xf32>
    %198 = vector.multi_reduction <maximumf>, %197, %cst_88 [1] : vector<16x16xf32> to vector<16xf32>
    %199 = vector.shape_cast %198 : vector<16xf32> to vector<16x1xf32>
    %200 = vector.broadcast %199 : vector<16x1xf32> to vector<16x16xf32>
    %201 = arith.subf %197, %200 : vector<16x16xf32>
    %202 = math.exp %201 : vector<16x16xf32>
    %cst_89 = arith.constant dense<0.000000e+00> : vector<16xf32>
    %203 = vector.multi_reduction <add>, %202, %cst_89 [1] : vector<16x16xf32> to vector<16xf32>
    %204 = vector.shape_cast %203 : vector<16xf32> to vector<16x1xf32>
    %205 = vector.broadcast %204 : vector<16x1xf32> to vector<16x16xf32>
    %206 = arith.divf %202, %205 : vector<16x16xf32>
    %207 = vector.extract_strided_slice %170 {offsets = [0, 8], sizes = [16, 8], strides = [1, 1]} : vector<16x32xf32> to vector<16x8xf32>
    %cst_90 = arith.constant dense<0.000000e+00> : vector<16x8xf32>
    %208 = tpu.matmul %206, %207, %cst_90 {dimension_numbers = #tpu.dot_dimension_numbers<[1], [0], [0], [1], [0, 0, 1, 1], [], []>} : vector<16x16xf32>, vector<16x8xf32>, vector<16x8xf32> -> vector<16x8xf32>
    %209 = vector.extract_strided_slice %168 {offsets = [0, 16], sizes = [16, 8], strides = [1, 1]} : vector<16x32xf32> to vector<16x8xf32>
    %210 = vector.extract_strided_slice %169 {offsets = [0, 16], sizes = [16, 8], strides = [1, 1]} : vector<16x32xf32> to vector<16x8xf32>
    %cst_91 = arith.constant dense<0.000000e+00> : vector<16x16xf32>
    %211 = tpu.matmul %209, %210, %cst_91 {dimension_numbers = #tpu.dot_dimension_numbers<[1], [1], [0], [0], [0, 0, 1, 0], [], []>} : vector<16x8xf32>, vector<16x8xf32>, vector<16x16xf32> -> vector<16x16xf32>
    %cst_92 = arith.constant 0.353553385 : f32
    %212 = vector.broadcast %cst_92 : f32 to vector<16x16xf32>
    %213 = arith.mulf %211, %212 : vector<16x16xf32>
    %214 = arith.addf %213, %41 : vector<16x16xf32>
    %cst_93 = arith.constant dense<0xFF800000> : vector<16xf32>
    %215 = vector.multi_reduction <maximumf>, %214, %cst_93 [1] : vector<16x16xf32> to vector<16xf32>
    %216 = vector.shape_cast %215 : vector<16xf32> to vector<16x1xf32>
    %217 = vector.broadcast %216 : vector<16x1xf32> to vector<16x16xf32>
    %218 = arith.subf %214, %217 : vector<16x16xf32>
    %219 = math.exp %218 : vector<16x16xf32>
    %cst_94 = arith.constant dense<0.000000e+00> : vector<16xf32>
    %220 = vector.multi_reduction <add>, %219, %cst_94 [1] : vector<16x16xf32> to vector<16xf32>
    %221 = vector.shape_cast %220 : vector<16xf32> to vector<16x1xf32>
    %222 = vector.broadcast %221 : vector<16x1xf32> to vector<16x16xf32>
    %223 = arith.divf %219, %222 : vector<16x16xf32>
    %224 = vector.extract_strided_slice %170 {offsets = [0, 16], sizes = [16, 8], strides = [1, 1]} : vector<16x32xf32> to vector<16x8xf32>
    %cst_95 = arith.constant dense<0.000000e+00> : vector<16x8xf32>
    %225 = tpu.matmul %223, %224, %cst_95 {dimension_numbers = #tpu.dot_dimension_numbers<[1], [0], [0], [1], [0, 0, 1, 1], [], []>} : vector<16x16xf32>, vector<16x8xf32>, vector<16x8xf32> -> vector<16x8xf32>
    %226 = vector.extract_strided_slice %168 {offsets = [0, 24], sizes = [16, 8], strides = [1, 1]} : vector<16x32xf32> to vector<16x8xf32>
    %227 = vector.extract_strided_slice %169 {offsets = [0, 24], sizes = [16, 8], strides = [1, 1]} : vector<16x32xf32> to vector<16x8xf32>
    %cst_96 = arith.constant dense<0.000000e+00> : vector<16x16xf32>
    %228 = tpu.matmul %226, %227, %cst_96 {dimension_numbers = #tpu.dot_dimension_numbers<[1], [1], [0], [0], [0, 0, 1, 0], [], []>} : vector<16x8xf32>, vector<16x8xf32>, vector<16x16xf32> -> vector<16x16xf32>
    %cst_97 = arith.constant 0.353553385 : f32
    %229 = vector.broadcast %cst_97 : f32 to vector<16x16xf32>
    %230 = arith.mulf %228, %229 : vector<16x16xf32>
    %231 = arith.addf %230, %41 : vector<16x16xf32>
    %cst_98 = arith.constant dense<0xFF800000> : vector<16xf32>
    %232 = vector.multi_reduction <maximumf>, %231, %cst_98 [1] : vector<16x16xf32> to vector<16xf32>
    %233 = vector.shape_cast %232 : vector<16xf32> to vector<16x1xf32>
    %234 = vector.broadcast %233 : vector<16x1xf32> to vector<16x16xf32>
    %235 = arith.subf %231, %234 : vector<16x16xf32>
    %236 = math.exp %235 : vector<16x16xf32>
    %cst_99 = arith.constant dense<0.000000e+00> : vector<16xf32>
    %237 = vector.multi_reduction <add>, %236, %cst_99 [1] : vector<16x16xf32> to vector<16xf32>
    %238 = vector.shape_cast %237 : vector<16xf32> to vector<16x1xf32>
    %239 = vector.broadcast %238 : vector<16x1xf32> to vector<16x16xf32>
    %240 = arith.divf %236, %239 : vector<16x16xf32>
    %241 = vector.extract_strided_slice %170 {offsets = [0, 24], sizes = [16, 8], strides = [1, 1]} : vector<16x32xf32> to vector<16x8xf32>
    %cst_100 = arith.constant dense<0.000000e+00> : vector<16x8xf32>
    %242 = tpu.matmul %240, %241, %cst_100 {dimension_numbers = #tpu.dot_dimension_numbers<[1], [0], [0], [1], [0, 0, 1, 1], [], []>} : vector<16x16xf32>, vector<16x8xf32>, vector<16x8xf32> -> vector<16x8xf32>
    %243 = tpu.concatenate %191, %208, %225, %242 in 1 : vector<16x8xf32>, vector<16x8xf32>, vector<16x8xf32>, vector<16x8xf32> -> vector<16x32xf32>
    %cst_101 = arith.constant dense<0.000000e+00> : vector<16x32xf32>
    %244 = tpu.matmul %243, %172, %cst_101 {dimension_numbers = #tpu.dot_dimension_numbers<[1], [0], [0], [1], [0, 0, 1, 1], [], []>} : vector<16x32xf32>, vector<32x32xf32>, vector<16x32xf32> -> vector<16x32xf32>
    %245 = vector.broadcast %174 : vector<1x32xf32> to vector<16x32xf32>
    %246 = arith.addf %244, %245 : vector<16x32xf32>
    %247 = arith.addf %161, %246 : vector<16x32xf32>
    %c0_102 = arith.constant 0 : index
    %c0_103 = arith.constant 0 : index
    %c0_104 = arith.constant 0 : index
    %248 = vector.load %arg17[%c0_102, %c0_103, %c0_104] : memref<2x1x32xf32, #tpu.memory_space<vmem>>, vector<1x1x32xf32>
    %249 = vector.shape_cast %248 : vector<1x1x32xf32> to vector<1x32xf32>
    %c0_105 = arith.constant 0 : index
    %c0_106 = arith.constant 0 : index
    %c0_107 = arith.constant 0 : index
    %250 = vector.load %arg18[%c0_105, %c0_106, %c0_107] : memref<2x1x32xf32, #tpu.memory_space<vmem>>, vector<1x1x32xf32>
    %251 = vector.shape_cast %250 : vector<1x1x32xf32> to vector<1x32xf32>
    %cst_108 = arith.constant dense<0.000000e+00> : vector<16xf32>
    %252 = vector.multi_reduction <add>, %247, %cst_108 [1] : vector<16x32xf32> to vector<16xf32>
    %253 = vector.shape_cast %252 : vector<16xf32> to vector<16x1xf32>
    %cst_109 = arith.constant 3.200000e+01 : f32
    %254 = vector.broadcast %cst_109 : f32 to vector<16x1xf32>
    %255 = arith.divf %253, %254 : vector<16x1xf32>
    %256 = vector.broadcast %255 : vector<16x1xf32> to vector<16x32xf32>
    %257 = arith.subf %247, %256 : vector<16x32xf32>
    %258 = arith.mulf %257, %257 : vector<16x32xf32>
    %cst_110 = arith.constant dense<0.000000e+00> : vector<16xf32>
    %259 = vector.multi_reduction <add>, %258, %cst_110 [1] : vector<16x32xf32> to vector<16xf32>
    %260 = vector.shape_cast %259 : vector<16xf32> to vector<16x1xf32>
    %cst_111 = arith.constant 3.200000e+01 : f32
    %261 = vector.broadcast %cst_111 : f32 to vector<16x1xf32>
    %262 = arith.divf %260, %261 : vector<16x1xf32>
    %263 = vector.broadcast %255 : vector<16x1xf32> to vector<16x32xf32>
    %264 = arith.subf %247, %263 : vector<16x32xf32>
    %cst_112 = arith.constant 9.99999974E-6 : f32
    %265 = vector.broadcast %cst_112 : f32 to vector<16x1xf32>
    %266 = arith.addf %262, %265 : vector<16x1xf32>
    %267 = math.rsqrt %266 : vector<16x1xf32>
    %268 = vector.broadcast %267 : vector<16x1xf32> to vector<16x32xf32>
    %269 = arith.mulf %264, %268 : vector<16x32xf32>
    %270 = vector.broadcast %249 : vector<1x32xf32> to vector<16x32xf32>
    %271 = arith.mulf %269, %270 : vector<16x32xf32>
    %272 = vector.broadcast %251 : vector<1x32xf32> to vector<16x32xf32>
    %273 = arith.addf %271, %272 : vector<16x32xf32>
    %274 = arith.truncf %273 : vector<16x32xf32> to vector<16x32xbf16>
    %c0_113 = arith.constant 0 : index
    %c0_114 = arith.constant 0 : index
    %c0_115 = arith.constant 0 : index
    %275 = vector.load %arg21[%c0_113, %c0_114, %c0_115] : memref<8x32x512xbf16, #tpu.memory_space<vmem>>, vector<1x32x512xbf16>
    %276 = vector.shape_cast %275 : vector<1x32x512xbf16> to vector<32x512xbf16>
    %cst_116 = arith.constant dense<0.000000e+00> : vector<16x512xf32>
    %277 = tpu.matmul %274, %276, %cst_116 {dimension_numbers = #tpu.dot_dimension_numbers<[1], [0], [0], [1], [0, 0, 1, 1], [], []>} : vector<16x32xbf16>, vector<32x512xbf16>, vector<16x512xf32> -> vector<16x512xf32>
    %c0_117 = arith.constant 0 : index
    %c0_118 = arith.constant 0 : index
    %c0_119 = arith.constant 0 : index
    %278 = vector.load %arg22[%c0_117, %c0_118, %c0_119] : memref<8x1x512xf32, #tpu.memory_space<vmem>>, vector<1x1x512xf32>
    %279 = vector.shape_cast %278 : vector<1x1x512xf32> to vector<1x512xf32>
    %280 = vector.broadcast %279 : vector<1x512xf32> to vector<16x512xf32>
    %281 = arith.addf %277, %280 : vector<16x512xf32>
    %cst_120 = arith.constant 0.000000e+00 : f32
    %282 = vector.broadcast %cst_120 : f32 to vector<16x512xf32>
    %283 = arith.maximumf %281, %282 : vector<16x512xf32>
    %284 = arith.truncf %283 : vector<16x512xf32> to vector<16x512xbf16>
    %c0_121 = arith.constant 0 : index
    %c0_122 = arith.constant 0 : index
    %c0_123 = arith.constant 0 : index
    %285 = vector.load %arg23[%c0_121, %c0_122, %c0_123] : memref<8x512x32xbf16, #tpu.memory_space<vmem>>, vector<1x512x32xbf16>
    %286 = vector.shape_cast %285 : vector<1x512x32xbf16> to vector<512x32xbf16>
    %cst_124 = arith.constant dense<0.000000e+00> : vector<16x32xf32>
    %287 = tpu.matmul %284, %286, %cst_124 {dimension_numbers = #tpu.dot_dimension_numbers<[1], [0], [0], [1], [0, 0, 1, 1], [], []>} : vector<16x512xbf16>, vector<512x32xbf16>, vector<16x32xf32> -> vector<16x32xf32>
    %c1 = arith.constant 1 : index
    %c0_125 = arith.constant 0 : index
    %c0_126 = arith.constant 0 : index
    %288 = vector.load %arg21[%c1, %c0_125, %c0_126] : memref<8x32x512xbf16, #tpu.memory_space<vmem>>, vector<1x32x512xbf16>
    %289 = vector.shape_cast %288 : vector<1x32x512xbf16> to vector<32x512xbf16>
    %cst_127 = arith.constant dense<0.000000e+00> : vector<16x512xf32>
    %290 = tpu.matmul %274, %289, %cst_127 {dimension_numbers = #tpu.dot_dimension_numbers<[1], [0], [0], [1], [0, 0, 1, 1], [], []>} : vector<16x32xbf16>, vector<32x512xbf16>, vector<16x512xf32> -> vector<16x512xf32>
    %c1_128 = arith.constant 1 : index
    %c0_129 = arith.constant 0 : index
    %c0_130 = arith.constant 0 : index
    %291 = vector.load %arg22[%c1_128, %c0_129, %c0_130] : memref<8x1x512xf32, #tpu.memory_space<vmem>>, vector<1x1x512xf32>
    %292 = vector.shape_cast %291 : vector<1x1x512xf32> to vector<1x512xf32>
    %293 = vector.broadcast %292 : vector<1x512xf32> to vector<16x512xf32>
    %294 = arith.addf %290, %293 : vector<16x512xf32>
    %cst_131 = arith.constant 0.000000e+00 : f32
    %295 = vector.broadcast %cst_131 : f32 to vector<16x512xf32>
    %296 = arith.maximumf %294, %295 : vector<16x512xf32>
    %297 = arith.truncf %296 : vector<16x512xf32> to vector<16x512xbf16>
    %c1_132 = arith.constant 1 : index
    %c0_133 = arith.constant 0 : index
    %c0_134 = arith.constant 0 : index
    %298 = vector.load %arg23[%c1_132, %c0_133, %c0_134] : memref<8x512x32xbf16, #tpu.memory_space<vmem>>, vector<1x512x32xbf16>
    %299 = vector.shape_cast %298 : vector<1x512x32xbf16> to vector<512x32xbf16>
    %cst_135 = arith.constant dense<0.000000e+00> : vector<16x32xf32>
    %300 = tpu.matmul %297, %299, %cst_135 {dimension_numbers = #tpu.dot_dimension_numbers<[1], [0], [0], [1], [0, 0, 1, 1], [], []>} : vector<16x512xbf16>, vector<512x32xbf16>, vector<16x32xf32> -> vector<16x32xf32>
    %301 = arith.addf %287, %300 : vector<16x32xf32>
    %c2 = arith.constant 2 : index
    %c0_136 = arith.constant 0 : index
    %c0_137 = arith.constant 0 : index
    %302 = vector.load %arg21[%c2, %c0_136, %c0_137] : memref<8x32x512xbf16, #tpu.memory_space<vmem>>, vector<1x32x512xbf16>
    %303 = vector.shape_cast %302 : vector<1x32x512xbf16> to vector<32x512xbf16>
    %cst_138 = arith.constant dense<0.000000e+00> : vector<16x512xf32>
    %304 = tpu.matmul %274, %303, %cst_138 {dimension_numbers = #tpu.dot_dimension_numbers<[1], [0], [0], [1], [0, 0, 1, 1], [], []>} : vector<16x32xbf16>, vector<32x512xbf16>, vector<16x512xf32> -> vector<16x512xf32>
    %c2_139 = arith.constant 2 : index
    %c0_140 = arith.constant 0 : index
    %c0_141 = arith.constant 0 : index
    %305 = vector.load %arg22[%c2_139, %c0_140, %c0_141] : memref<8x1x512xf32, #tpu.memory_space<vmem>>, vector<1x1x512xf32>
    %306 = vector.shape_cast %305 : vector<1x1x512xf32> to vector<1x512xf32>
    %307 = vector.broadcast %306 : vector<1x512xf32> to vector<16x512xf32>
    %308 = arith.addf %304, %307 : vector<16x512xf32>
    %cst_142 = arith.constant 0.000000e+00 : f32
    %309 = vector.broadcast %cst_142 : f32 to vector<16x512xf32>
    %310 = arith.maximumf %308, %309 : vector<16x512xf32>
    %311 = arith.truncf %310 : vector<16x512xf32> to vector<16x512xbf16>
    %c2_143 = arith.constant 2 : index
    %c0_144 = arith.constant 0 : index
    %c0_145 = arith.constant 0 : index
    %312 = vector.load %arg23[%c2_143, %c0_144, %c0_145] : memref<8x512x32xbf16, #tpu.memory_space<vmem>>, vector<1x512x32xbf16>
    %313 = vector.shape_cast %312 : vector<1x512x32xbf16> to vector<512x32xbf16>
    %cst_146 = arith.constant dense<0.000000e+00> : vector<16x32xf32>
    %314 = tpu.matmul %311, %313, %cst_146 {dimension_numbers = #tpu.dot_dimension_numbers<[1], [0], [0], [1], [0, 0, 1, 1], [], []>} : vector<16x512xbf16>, vector<512x32xbf16>, vector<16x32xf32> -> vector<16x32xf32>
    %315 = arith.addf %301, %314 : vector<16x32xf32>
    %c3 = arith.constant 3 : index
    %c0_147 = arith.constant 0 : index
    %c0_148 = arith.constant 0 : index
    %316 = vector.load %arg21[%c3, %c0_147, %c0_148] : memref<8x32x512xbf16, #tpu.memory_space<vmem>>, vector<1x32x512xbf16>
    %317 = vector.shape_cast %316 : vector<1x32x512xbf16> to vector<32x512xbf16>
    %cst_149 = arith.constant dense<0.000000e+00> : vector<16x512xf32>
    %318 = tpu.matmul %274, %317, %cst_149 {dimension_numbers = #tpu.dot_dimension_numbers<[1], [0], [0], [1], [0, 0, 1, 1], [], []>} : vector<16x32xbf16>, vector<32x512xbf16>, vector<16x512xf32> -> vector<16x512xf32>
    %c3_150 = arith.constant 3 : index
    %c0_151 = arith.constant 0 : index
    %c0_152 = arith.constant 0 : index
    %319 = vector.load %arg22[%c3_150, %c0_151, %c0_152] : memref<8x1x512xf32, #tpu.memory_space<vmem>>, vector<1x1x512xf32>
    %320 = vector.shape_cast %319 : vector<1x1x512xf32> to vector<1x512xf32>
    %321 = vector.broadcast %320 : vector<1x512xf32> to vector<16x512xf32>
    %322 = arith.addf %318, %321 : vector<16x512xf32>
    %cst_153 = arith.constant 0.000000e+00 : f32
    %323 = vector.broadcast %cst_153 : f32 to vector<16x512xf32>
    %324 = arith.maximumf %322, %323 : vector<16x512xf32>
    %325 = arith.truncf %324 : vector<16x512xf32> to vector<16x512xbf16>
    %c3_154 = arith.constant 3 : index
    %c0_155 = arith.constant 0 : index
    %c0_156 = arith.constant 0 : index
    %326 = vector.load %arg23[%c3_154, %c0_155, %c0_156] : memref<8x512x32xbf16, #tpu.memory_space<vmem>>, vector<1x512x32xbf16>
    %327 = vector.shape_cast %326 : vector<1x512x32xbf16> to vector<512x32xbf16>
    %cst_157 = arith.constant dense<0.000000e+00> : vector<16x32xf32>
    %328 = tpu.matmul %325, %327, %cst_157 {dimension_numbers = #tpu.dot_dimension_numbers<[1], [0], [0], [1], [0, 0, 1, 1], [], []>} : vector<16x512xbf16>, vector<512x32xbf16>, vector<16x32xf32> -> vector<16x32xf32>
    %329 = arith.addf %315, %328 : vector<16x32xf32>
    %330 = arith.addf %273, %329 : vector<16x32xf32>
    %c0_158 = arith.constant 0 : index
    %c0_159 = arith.constant 0 : index
    %c0_160 = arith.constant 0 : index
    %331 = vector.load %arg24[%c0_158, %c0_159, %c0_160] : memref<2x1x32xf32, #tpu.memory_space<vmem>>, vector<1x1x32xf32>
    %332 = vector.shape_cast %331 : vector<1x1x32xf32> to vector<1x32xf32>
    %333 = vector.broadcast %332 : vector<1x32xf32> to vector<16x32xf32>
    %334 = arith.addf %330, %333 : vector<16x32xf32>
    %c0_161 = arith.constant 0 : index
    %c0_162 = arith.constant 0 : index
    %c0_163 = arith.constant 0 : index
    %335 = vector.load %arg19[%c0_161, %c0_162, %c0_163] : memref<2x1x32xf32, #tpu.memory_space<vmem>>, vector<1x1x32xf32>
    %336 = vector.shape_cast %335 : vector<1x1x32xf32> to vector<1x32xf32>
    %c0_164 = arith.constant 0 : index
    %c0_165 = arith.constant 0 : index
    %c0_166 = arith.constant 0 : index
    %337 = vector.load %arg20[%c0_164, %c0_165, %c0_166] : memref<2x1x32xf32, #tpu.memory_space<vmem>>, vector<1x1x32xf32>
    %338 = vector.shape_cast %337 : vector<1x1x32xf32> to vector<1x32xf32>
    %cst_167 = arith.constant dense<0.000000e+00> : vector<16xf32>
    %339 = vector.multi_reduction <add>, %334, %cst_167 [1] : vector<16x32xf32> to vector<16xf32>
    %340 = vector.shape_cast %339 : vector<16xf32> to vector<16x1xf32>
    %cst_168 = arith.constant 3.200000e+01 : f32
    %341 = vector.broadcast %cst_168 : f32 to vector<16x1xf32>
    %342 = arith.divf %340, %341 : vector<16x1xf32>
    %343 = vector.broadcast %342 : vector<16x1xf32> to vector<16x32xf32>
    %344 = arith.subf %334, %343 : vector<16x32xf32>
    %345 = arith.mulf %344, %344 : vector<16x32xf32>
    %cst_169 = arith.constant dense<0.000000e+00> : vector<16xf32>
    %346 = vector.multi_reduction <add>, %345, %cst_169 [1] : vector<16x32xf32> to vector<16xf32>
    %347 = vector.shape_cast %346 : vector<16xf32> to vector<16x1xf32>
    %cst_170 = arith.constant 3.200000e+01 : f32
    %348 = vector.broadcast %cst_170 : f32 to vector<16x1xf32>
    %349 = arith.divf %347, %348 : vector<16x1xf32>
    %350 = vector.broadcast %342 : vector<16x1xf32> to vector<16x32xf32>
    %351 = arith.subf %334, %350 : vector<16x32xf32>
    %cst_171 = arith.constant 9.99999974E-6 : f32
    %352 = vector.broadcast %cst_171 : f32 to vector<16x1xf32>
    %353 = arith.addf %349, %352 : vector<16x1xf32>
    %354 = math.rsqrt %353 : vector<16x1xf32>
    %355 = vector.broadcast %354 : vector<16x1xf32> to vector<16x32xf32>
    %356 = arith.mulf %351, %355 : vector<16x32xf32>
    %357 = vector.broadcast %336 : vector<1x32xf32> to vector<16x32xf32>
    %358 = arith.mulf %356, %357 : vector<16x32xf32>
    %359 = vector.broadcast %338 : vector<1x32xf32> to vector<16x32xf32>
    %360 = arith.addf %358, %359 : vector<16x32xf32>
    %c1_172 = arith.constant 1 : index
    %c0_173 = arith.constant 0 : index
    %c0_174 = arith.constant 0 : index
    %361 = vector.load %arg5[%c1_172, %c0_173, %c0_174] : memref<2x32x96xf32, #tpu.memory_space<vmem>>, vector<1x32x96xf32>
    %362 = vector.shape_cast %361 : vector<1x32x96xf32> to vector<32x96xf32>
    %cst_175 = arith.constant dense<0.000000e+00> : vector<16x96xf32>
    %363 = tpu.matmul %360, %362, %cst_175 {dimension_numbers = #tpu.dot_dimension_numbers<[1], [0], [0], [1], [0, 0, 1, 1], [], []>} : vector<16x32xf32>, vector<32x96xf32>, vector<16x96xf32> -> vector<16x96xf32>
    %c1_176 = arith.constant 1 : index
    %c0_177 = arith.constant 0 : index
    %c0_178 = arith.constant 0 : index
    %364 = vector.load %arg6[%c1_176, %c0_177, %c0_178] : memref<2x1x96xf32, #tpu.memory_space<vmem>>, vector<1x1x96xf32>
    %365 = vector.shape_cast %364 : vector<1x1x96xf32> to vector<1x96xf32>
    %366 = vector.broadcast %365 : vector<1x96xf32> to vector<16x96xf32>
    %367 = arith.addf %363, %366 : vector<16x96xf32>
    %368 = vector.extract_strided_slice %367 {offsets = [0, 0], sizes = [16, 32], strides = [1, 1]} : vector<16x96xf32> to vector<16x32xf32>
    %369 = vector.extract_strided_slice %367 {offsets = [0, 32], sizes = [16, 32], strides = [1, 1]} : vector<16x96xf32> to vector<16x32xf32>
    %370 = vector.extract_strided_slice %367 {offsets = [0, 64], sizes = [16, 32], strides = [1, 1]} : vector<16x96xf32> to vector<16x32xf32>
    %c1_179 = arith.constant 1 : index
    %c0_180 = arith.constant 0 : index
    %c0_181 = arith.constant 0 : index
    %371 = vector.load %arg7[%c1_179, %c0_180, %c0_181] : memref<2x32x32xf32, #tpu.memory_space<vmem>>, vector<1x32x32xf32>
    %372 = vector.shape_cast %371 : vector<1x32x32xf32> to vector<32x32xf32>
    %c1_182 = arith.constant 1 : index
    %c0_183 = arith.constant 0 : index
    %c0_184 = arith.constant 0 : index
    %373 = vector.load %arg8[%c1_182, %c0_183, %c0_184] : memref<2x1x32xf32, #tpu.memory_space<vmem>>, vector<1x1x32xf32>
    %374 = vector.shape_cast %373 : vector<1x1x32xf32> to vector<1x32xf32>
    %375 = vector.extract_strided_slice %368 {offsets = [0, 0], sizes = [16, 8], strides = [1, 1]} : vector<16x32xf32> to vector<16x8xf32>
    %376 = vector.extract_strided_slice %369 {offsets = [0, 0], sizes = [16, 8], strides = [1, 1]} : vector<16x32xf32> to vector<16x8xf32>
    %cst_185 = arith.constant dense<0.000000e+00> : vector<16x16xf32>
    %377 = tpu.matmul %375, %376, %cst_185 {dimension_numbers = #tpu.dot_dimension_numbers<[1], [1], [0], [0], [0, 0, 1, 0], [], []>} : vector<16x8xf32>, vector<16x8xf32>, vector<16x16xf32> -> vector<16x16xf32>
    %cst_186 = arith.constant 0.353553385 : f32
    %378 = vector.broadcast %cst_186 : f32 to vector<16x16xf32>
    %379 = arith.mulf %377, %378 : vector<16x16xf32>
    %380 = arith.addf %379, %31 : vector<16x16xf32>
    %cst_187 = arith.constant dense<0xFF800000> : vector<16xf32>
    %381 = vector.multi_reduction <maximumf>, %380, %cst_187 [1] : vector<16x16xf32> to vector<16xf32>
    %382 = vector.shape_cast %381 : vector<16xf32> to vector<16x1xf32>
    %383 = vector.broadcast %382 : vector<16x1xf32> to vector<16x16xf32>
    %384 = arith.subf %380, %383 : vector<16x16xf32>
    %385 = math.exp %384 : vector<16x16xf32>
    %cst_188 = arith.constant dense<0.000000e+00> : vector<16xf32>
    %386 = vector.multi_reduction <add>, %385, %cst_188 [1] : vector<16x16xf32> to vector<16xf32>
    %387 = vector.shape_cast %386 : vector<16xf32> to vector<16x1xf32>
    %388 = vector.broadcast %387 : vector<16x1xf32> to vector<16x16xf32>
    %389 = arith.divf %385, %388 : vector<16x16xf32>
    %390 = vector.extract_strided_slice %370 {offsets = [0, 0], sizes = [16, 8], strides = [1, 1]} : vector<16x32xf32> to vector<16x8xf32>
    %cst_189 = arith.constant dense<0.000000e+00> : vector<16x8xf32>
    %391 = tpu.matmul %389, %390, %cst_189 {dimension_numbers = #tpu.dot_dimension_numbers<[1], [0], [0], [1], [0, 0, 1, 1], [], []>} : vector<16x16xf32>, vector<16x8xf32>, vector<16x8xf32> -> vector<16x8xf32>
    %392 = vector.extract_strided_slice %368 {offsets = [0, 8], sizes = [16, 8], strides = [1, 1]} : vector<16x32xf32> to vector<16x8xf32>
    %393 = vector.extract_strided_slice %369 {offsets = [0, 8], sizes = [16, 8], strides = [1, 1]} : vector<16x32xf32> to vector<16x8xf32>
    %cst_190 = arith.constant dense<0.000000e+00> : vector<16x16xf32>
    %394 = tpu.matmul %392, %393, %cst_190 {dimension_numbers = #tpu.dot_dimension_numbers<[1], [1], [0], [0], [0, 0, 1, 0], [], []>} : vector<16x8xf32>, vector<16x8xf32>, vector<16x16xf32> -> vector<16x16xf32>
    %cst_191 = arith.constant 0.353553385 : f32
    %395 = vector.broadcast %cst_191 : f32 to vector<16x16xf32>
    %396 = arith.mulf %394, %395 : vector<16x16xf32>
    %397 = arith.addf %396, %31 : vector<16x16xf32>
    %cst_192 = arith.constant dense<0xFF800000> : vector<16xf32>
    %398 = vector.multi_reduction <maximumf>, %397, %cst_192 [1] : vector<16x16xf32> to vector<16xf32>
    %399 = vector.shape_cast %398 : vector<16xf32> to vector<16x1xf32>
    %400 = vector.broadcast %399 : vector<16x1xf32> to vector<16x16xf32>
    %401 = arith.subf %397, %400 : vector<16x16xf32>
    %402 = math.exp %401 : vector<16x16xf32>
    %cst_193 = arith.constant dense<0.000000e+00> : vector<16xf32>
    %403 = vector.multi_reduction <add>, %402, %cst_193 [1] : vector<16x16xf32> to vector<16xf32>
    %404 = vector.shape_cast %403 : vector<16xf32> to vector<16x1xf32>
    %405 = vector.broadcast %404 : vector<16x1xf32> to vector<16x16xf32>
    %406 = arith.divf %402, %405 : vector<16x16xf32>
    %407 = vector.extract_strided_slice %370 {offsets = [0, 8], sizes = [16, 8], strides = [1, 1]} : vector<16x32xf32> to vector<16x8xf32>
    %cst_194 = arith.constant dense<0.000000e+00> : vector<16x8xf32>
    %408 = tpu.matmul %406, %407, %cst_194 {dimension_numbers = #tpu.dot_dimension_numbers<[1], [0], [0], [1], [0, 0, 1, 1], [], []>} : vector<16x16xf32>, vector<16x8xf32>, vector<16x8xf32> -> vector<16x8xf32>
    %409 = vector.extract_strided_slice %368 {offsets = [0, 16], sizes = [16, 8], strides = [1, 1]} : vector<16x32xf32> to vector<16x8xf32>
    %410 = vector.extract_strided_slice %369 {offsets = [0, 16], sizes = [16, 8], strides = [1, 1]} : vector<16x32xf32> to vector<16x8xf32>
    %cst_195 = arith.constant dense<0.000000e+00> : vector<16x16xf32>
    %411 = tpu.matmul %409, %410, %cst_195 {dimension_numbers = #tpu.dot_dimension_numbers<[1], [1], [0], [0], [0, 0, 1, 0], [], []>} : vector<16x8xf32>, vector<16x8xf32>, vector<16x16xf32> -> vector<16x16xf32>
    %cst_196 = arith.constant 0.353553385 : f32
    %412 = vector.broadcast %cst_196 : f32 to vector<16x16xf32>
    %413 = arith.mulf %411, %412 : vector<16x16xf32>
    %414 = arith.addf %413, %31 : vector<16x16xf32>
    %cst_197 = arith.constant dense<0xFF800000> : vector<16xf32>
    %415 = vector.multi_reduction <maximumf>, %414, %cst_197 [1] : vector<16x16xf32> to vector<16xf32>
    %416 = vector.shape_cast %415 : vector<16xf32> to vector<16x1xf32>
    %417 = vector.broadcast %416 : vector<16x1xf32> to vector<16x16xf32>
    %418 = arith.subf %414, %417 : vector<16x16xf32>
    %419 = math.exp %418 : vector<16x16xf32>
    %cst_198 = arith.constant dense<0.000000e+00> : vector<16xf32>
    %420 = vector.multi_reduction <add>, %419, %cst_198 [1] : vector<16x16xf32> to vector<16xf32>
    %421 = vector.shape_cast %420 : vector<16xf32> to vector<16x1xf32>
    %422 = vector.broadcast %421 : vector<16x1xf32> to vector<16x16xf32>
    %423 = arith.divf %419, %422 : vector<16x16xf32>
    %424 = vector.extract_strided_slice %370 {offsets = [0, 16], sizes = [16, 8], strides = [1, 1]} : vector<16x32xf32> to vector<16x8xf32>
    %cst_199 = arith.constant dense<0.000000e+00> : vector<16x8xf32>
    %425 = tpu.matmul %423, %424, %cst_199 {dimension_numbers = #tpu.dot_dimension_numbers<[1], [0], [0], [1], [0, 0, 1, 1], [], []>} : vector<16x16xf32>, vector<16x8xf32>, vector<16x8xf32> -> vector<16x8xf32>
    %426 = vector.extract_strided_slice %368 {offsets = [0, 24], sizes = [16, 8], strides = [1, 1]} : vector<16x32xf32> to vector<16x8xf32>
    %427 = vector.extract_strided_slice %369 {offsets = [0, 24], sizes = [16, 8], strides = [1, 1]} : vector<16x32xf32> to vector<16x8xf32>
    %cst_200 = arith.constant dense<0.000000e+00> : vector<16x16xf32>
    %428 = tpu.matmul %426, %427, %cst_200 {dimension_numbers = #tpu.dot_dimension_numbers<[1], [1], [0], [0], [0, 0, 1, 0], [], []>} : vector<16x8xf32>, vector<16x8xf32>, vector<16x16xf32> -> vector<16x16xf32>
    %cst_201 = arith.constant 0.353553385 : f32
    %429 = vector.broadcast %cst_201 : f32 to vector<16x16xf32>
    %430 = arith.mulf %428, %429 : vector<16x16xf32>
    %431 = arith.addf %430, %31 : vector<16x16xf32>
    %cst_202 = arith.constant dense<0xFF800000> : vector<16xf32>
    %432 = vector.multi_reduction <maximumf>, %431, %cst_202 [1] : vector<16x16xf32> to vector<16xf32>
    %433 = vector.shape_cast %432 : vector<16xf32> to vector<16x1xf32>
    %434 = vector.broadcast %433 : vector<16x1xf32> to vector<16x16xf32>
    %435 = arith.subf %431, %434 : vector<16x16xf32>
    %436 = math.exp %435 : vector<16x16xf32>
    %cst_203 = arith.constant dense<0.000000e+00> : vector<16xf32>
    %437 = vector.multi_reduction <add>, %436, %cst_203 [1] : vector<16x16xf32> to vector<16xf32>
    %438 = vector.shape_cast %437 : vector<16xf32> to vector<16x1xf32>
    %439 = vector.broadcast %438 : vector<16x1xf32> to vector<16x16xf32>
    %440 = arith.divf %436, %439 : vector<16x16xf32>
    %441 = vector.extract_strided_slice %370 {offsets = [0, 24], sizes = [16, 8], strides = [1, 1]} : vector<16x32xf32> to vector<16x8xf32>
    %cst_204 = arith.constant dense<0.000000e+00> : vector<16x8xf32>
    %442 = tpu.matmul %440, %441, %cst_204 {dimension_numbers = #tpu.dot_dimension_numbers<[1], [0], [0], [1], [0, 0, 1, 1], [], []>} : vector<16x16xf32>, vector<16x8xf32>, vector<16x8xf32> -> vector<16x8xf32>
    %443 = tpu.concatenate %391, %408, %425, %442 in 1 : vector<16x8xf32>, vector<16x8xf32>, vector<16x8xf32>, vector<16x8xf32> -> vector<16x32xf32>
    %cst_205 = arith.constant dense<0.000000e+00> : vector<16x32xf32>
    %444 = tpu.matmul %443, %372, %cst_205 {dimension_numbers = #tpu.dot_dimension_numbers<[1], [0], [0], [1], [0, 0, 1, 1], [], []>} : vector<16x32xf32>, vector<32x32xf32>, vector<16x32xf32> -> vector<16x32xf32>
    %445 = vector.broadcast %374 : vector<1x32xf32> to vector<16x32xf32>
    %446 = arith.addf %444, %445 : vector<16x32xf32>
    %447 = arith.addf %360, %446 : vector<16x32xf32>
    %c1_206 = arith.constant 1 : index
    %c0_207 = arith.constant 0 : index
    %c0_208 = arith.constant 0 : index
    %448 = vector.load %arg15[%c1_206, %c0_207, %c0_208] : memref<2x1x32xf32, #tpu.memory_space<vmem>>, vector<1x1x32xf32>
    %449 = vector.shape_cast %448 : vector<1x1x32xf32> to vector<1x32xf32>
    %c1_209 = arith.constant 1 : index
    %c0_210 = arith.constant 0 : index
    %c0_211 = arith.constant 0 : index
    %450 = vector.load %arg16[%c1_209, %c0_210, %c0_211] : memref<2x1x32xf32, #tpu.memory_space<vmem>>, vector<1x1x32xf32>
    %451 = vector.shape_cast %450 : vector<1x1x32xf32> to vector<1x32xf32>
    %cst_212 = arith.constant dense<0.000000e+00> : vector<16xf32>
    %452 = vector.multi_reduction <add>, %447, %cst_212 [1] : vector<16x32xf32> to vector<16xf32>
    %453 = vector.shape_cast %452 : vector<16xf32> to vector<16x1xf32>
    %cst_213 = arith.constant 3.200000e+01 : f32
    %454 = vector.broadcast %cst_213 : f32 to vector<16x1xf32>
    %455 = arith.divf %453, %454 : vector<16x1xf32>
    %456 = vector.broadcast %455 : vector<16x1xf32> to vector<16x32xf32>
    %457 = arith.subf %447, %456 : vector<16x32xf32>
    %458 = arith.mulf %457, %457 : vector<16x32xf32>
    %cst_214 = arith.constant dense<0.000000e+00> : vector<16xf32>
    %459 = vector.multi_reduction <add>, %458, %cst_214 [1] : vector<16x32xf32> to vector<16xf32>
    %460 = vector.shape_cast %459 : vector<16xf32> to vector<16x1xf32>
    %cst_215 = arith.constant 3.200000e+01 : f32
    %461 = vector.broadcast %cst_215 : f32 to vector<16x1xf32>
    %462 = arith.divf %460, %461 : vector<16x1xf32>
    %463 = vector.broadcast %455 : vector<16x1xf32> to vector<16x32xf32>
    %464 = arith.subf %447, %463 : vector<16x32xf32>
    %cst_216 = arith.constant 9.99999974E-6 : f32
    %465 = vector.broadcast %cst_216 : f32 to vector<16x1xf32>
    %466 = arith.addf %462, %465 : vector<16x1xf32>
    %467 = math.rsqrt %466 : vector<16x1xf32>
    %468 = vector.broadcast %467 : vector<16x1xf32> to vector<16x32xf32>
    %469 = arith.mulf %464, %468 : vector<16x32xf32>
    %470 = vector.broadcast %449 : vector<1x32xf32> to vector<16x32xf32>
    %471 = arith.mulf %469, %470 : vector<16x32xf32>
    %472 = vector.broadcast %451 : vector<1x32xf32> to vector<16x32xf32>
    %473 = arith.addf %471, %472 : vector<16x32xf32>
    %c1_217 = arith.constant 1 : index
    %c0_218 = arith.constant 0 : index
    %c0_219 = arith.constant 0 : index
    %474 = vector.load %arg9[%c1_217, %c0_218, %c0_219] : memref<2x32x32xf32, #tpu.memory_space<vmem>>, vector<1x32x32xf32>
    %475 = vector.shape_cast %474 : vector<1x32x32xf32> to vector<32x32xf32>
    %cst_220 = arith.constant dense<0.000000e+00> : vector<16x32xf32>
    %476 = tpu.matmul %473, %475, %cst_220 {dimension_numbers = #tpu.dot_dimension_numbers<[1], [0], [0], [1], [0, 0, 1, 1], [], []>} : vector<16x32xf32>, vector<32x32xf32>, vector<16x32xf32> -> vector<16x32xf32>
    %c1_221 = arith.constant 1 : index
    %c0_222 = arith.constant 0 : index
    %c0_223 = arith.constant 0 : index
    %477 = vector.load %arg10[%c1_221, %c0_222, %c0_223] : memref<2x1x32xf32, #tpu.memory_space<vmem>>, vector<1x1x32xf32>
    %478 = vector.shape_cast %477 : vector<1x1x32xf32> to vector<1x32xf32>
    %479 = vector.broadcast %478 : vector<1x32xf32> to vector<16x32xf32>
    %480 = arith.addf %476, %479 : vector<16x32xf32>
    %481 = vector.extract_strided_slice %48 {offsets = [0, 64], sizes = [16, 32], strides = [1, 1]} : vector<16x128xf32> to vector<16x32xf32>
    %482 = vector.extract_strided_slice %48 {offsets = [0, 96], sizes = [16, 32], strides = [1, 1]} : vector<16x128xf32> to vector<16x32xf32>
    %c1_224 = arith.constant 1 : index
    %c0_225 = arith.constant 0 : index
    %c0_226 = arith.constant 0 : index
    %483 = vector.load %arg13[%c1_224, %c0_225, %c0_226] : memref<2x32x32xf32, #tpu.memory_space<vmem>>, vector<1x32x32xf32>
    %484 = vector.shape_cast %483 : vector<1x32x32xf32> to vector<32x32xf32>
    %c1_227 = arith.constant 1 : index
    %c0_228 = arith.constant 0 : index
    %c0_229 = arith.constant 0 : index
    %485 = vector.load %arg14[%c1_227, %c0_228, %c0_229] : memref<2x1x32xf32, #tpu.memory_space<vmem>>, vector<1x1x32xf32>
    %486 = vector.shape_cast %485 : vector<1x1x32xf32> to vector<1x32xf32>
    %487 = vector.extract_strided_slice %480 {offsets = [0, 0], sizes = [16, 8], strides = [1, 1]} : vector<16x32xf32> to vector<16x8xf32>
    %488 = vector.extract_strided_slice %481 {offsets = [0, 0], sizes = [16, 8], strides = [1, 1]} : vector<16x32xf32> to vector<16x8xf32>
    %cst_230 = arith.constant dense<0.000000e+00> : vector<16x16xf32>
    %489 = tpu.matmul %487, %488, %cst_230 {dimension_numbers = #tpu.dot_dimension_numbers<[1], [1], [0], [0], [0, 0, 1, 0], [], []>} : vector<16x8xf32>, vector<16x8xf32>, vector<16x16xf32> -> vector<16x16xf32>
    %cst_231 = arith.constant 0.353553385 : f32
    %490 = vector.broadcast %cst_231 : f32 to vector<16x16xf32>
    %491 = arith.mulf %489, %490 : vector<16x16xf32>
    %492 = arith.addf %491, %41 : vector<16x16xf32>
    %cst_232 = arith.constant dense<0xFF800000> : vector<16xf32>
    %493 = vector.multi_reduction <maximumf>, %492, %cst_232 [1] : vector<16x16xf32> to vector<16xf32>
    %494 = vector.shape_cast %493 : vector<16xf32> to vector<16x1xf32>
    %495 = vector.broadcast %494 : vector<16x1xf32> to vector<16x16xf32>
    %496 = arith.subf %492, %495 : vector<16x16xf32>
    %497 = math.exp %496 : vector<16x16xf32>
    %cst_233 = arith.constant dense<0.000000e+00> : vector<16xf32>
    %498 = vector.multi_reduction <add>, %497, %cst_233 [1] : vector<16x16xf32> to vector<16xf32>
    %499 = vector.shape_cast %498 : vector<16xf32> to vector<16x1xf32>
    %500 = vector.broadcast %499 : vector<16x1xf32> to vector<16x16xf32>
    %501 = arith.divf %497, %500 : vector<16x16xf32>
    %502 = vector.extract_strided_slice %482 {offsets = [0, 0], sizes = [16, 8], strides = [1, 1]} : vector<16x32xf32> to vector<16x8xf32>
    %cst_234 = arith.constant dense<0.000000e+00> : vector<16x8xf32>
    %503 = tpu.matmul %501, %502, %cst_234 {dimension_numbers = #tpu.dot_dimension_numbers<[1], [0], [0], [1], [0, 0, 1, 1], [], []>} : vector<16x16xf32>, vector<16x8xf32>, vector<16x8xf32> -> vector<16x8xf32>
    %504 = vector.extract_strided_slice %480 {offsets = [0, 8], sizes = [16, 8], strides = [1, 1]} : vector<16x32xf32> to vector<16x8xf32>
    %505 = vector.extract_strided_slice %481 {offsets = [0, 8], sizes = [16, 8], strides = [1, 1]} : vector<16x32xf32> to vector<16x8xf32>
    %cst_235 = arith.constant dense<0.000000e+00> : vector<16x16xf32>
    %506 = tpu.matmul %504, %505, %cst_235 {dimension_numbers = #tpu.dot_dimension_numbers<[1], [1], [0], [0], [0, 0, 1, 0], [], []>} : vector<16x8xf32>, vector<16x8xf32>, vector<16x16xf32> -> vector<16x16xf32>
    %cst_236 = arith.constant 0.353553385 : f32
    %507 = vector.broadcast %cst_236 : f32 to vector<16x16xf32>
    %508 = arith.mulf %506, %507 : vector<16x16xf32>
    %509 = arith.addf %508, %41 : vector<16x16xf32>
    %cst_237 = arith.constant dense<0xFF800000> : vector<16xf32>
    %510 = vector.multi_reduction <maximumf>, %509, %cst_237 [1] : vector<16x16xf32> to vector<16xf32>
    %511 = vector.shape_cast %510 : vector<16xf32> to vector<16x1xf32>
    %512 = vector.broadcast %511 : vector<16x1xf32> to vector<16x16xf32>
    %513 = arith.subf %509, %512 : vector<16x16xf32>
    %514 = math.exp %513 : vector<16x16xf32>
    %cst_238 = arith.constant dense<0.000000e+00> : vector<16xf32>
    %515 = vector.multi_reduction <add>, %514, %cst_238 [1] : vector<16x16xf32> to vector<16xf32>
    %516 = vector.shape_cast %515 : vector<16xf32> to vector<16x1xf32>
    %517 = vector.broadcast %516 : vector<16x1xf32> to vector<16x16xf32>
    %518 = arith.divf %514, %517 : vector<16x16xf32>
    %519 = vector.extract_strided_slice %482 {offsets = [0, 8], sizes = [16, 8], strides = [1, 1]} : vector<16x32xf32> to vector<16x8xf32>
    %cst_239 = arith.constant dense<0.000000e+00> : vector<16x8xf32>
    %520 = tpu.matmul %518, %519, %cst_239 {dimension_numbers = #tpu.dot_dimension_numbers<[1], [0], [0], [1], [0, 0, 1, 1], [], []>} : vector<16x16xf32>, vector<16x8xf32>, vector<16x8xf32> -> vector<16x8xf32>
    %521 = vector.extract_strided_slice %480 {offsets = [0, 16], sizes = [16, 8], strides = [1, 1]} : vector<16x32xf32> to vector<16x8xf32>
    %522 = vector.extract_strided_slice %481 {offsets = [0, 16], sizes = [16, 8], strides = [1, 1]} : vector<16x32xf32> to vector<16x8xf32>
    %cst_240 = arith.constant dense<0.000000e+00> : vector<16x16xf32>
    %523 = tpu.matmul %521, %522, %cst_240 {dimension_numbers = #tpu.dot_dimension_numbers<[1], [1], [0], [0], [0, 0, 1, 0], [], []>} : vector<16x8xf32>, vector<16x8xf32>, vector<16x16xf32> -> vector<16x16xf32>
    %cst_241 = arith.constant 0.353553385 : f32
    %524 = vector.broadcast %cst_241 : f32 to vector<16x16xf32>
    %525 = arith.mulf %523, %524 : vector<16x16xf32>
    %526 = arith.addf %525, %41 : vector<16x16xf32>
    %cst_242 = arith.constant dense<0xFF800000> : vector<16xf32>
    %527 = vector.multi_reduction <maximumf>, %526, %cst_242 [1] : vector<16x16xf32> to vector<16xf32>
    %528 = vector.shape_cast %527 : vector<16xf32> to vector<16x1xf32>
    %529 = vector.broadcast %528 : vector<16x1xf32> to vector<16x16xf32>
    %530 = arith.subf %526, %529 : vector<16x16xf32>
    %531 = math.exp %530 : vector<16x16xf32>
    %cst_243 = arith.constant dense<0.000000e+00> : vector<16xf32>
    %532 = vector.multi_reduction <add>, %531, %cst_243 [1] : vector<16x16xf32> to vector<16xf32>
    %533 = vector.shape_cast %532 : vector<16xf32> to vector<16x1xf32>
    %534 = vector.broadcast %533 : vector<16x1xf32> to vector<16x16xf32>
    %535 = arith.divf %531, %534 : vector<16x16xf32>
    %536 = vector.extract_strided_slice %482 {offsets = [0, 16], sizes = [16, 8], strides = [1, 1]} : vector<16x32xf32> to vector<16x8xf32>
    %cst_244 = arith.constant dense<0.000000e+00> : vector<16x8xf32>
    %537 = tpu.matmul %535, %536, %cst_244 {dimension_numbers = #tpu.dot_dimension_numbers<[1], [0], [0], [1], [0, 0, 1, 1], [], []>} : vector<16x16xf32>, vector<16x8xf32>, vector<16x8xf32> -> vector<16x8xf32>
    %538 = vector.extract_strided_slice %480 {offsets = [0, 24], sizes = [16, 8], strides = [1, 1]} : vector<16x32xf32> to vector<16x8xf32>
    %539 = vector.extract_strided_slice %481 {offsets = [0, 24], sizes = [16, 8], strides = [1, 1]} : vector<16x32xf32> to vector<16x8xf32>
    %cst_245 = arith.constant dense<0.000000e+00> : vector<16x16xf32>
    %540 = tpu.matmul %538, %539, %cst_245 {dimension_numbers = #tpu.dot_dimension_numbers<[1], [1], [0], [0], [0, 0, 1, 0], [], []>} : vector<16x8xf32>, vector<16x8xf32>, vector<16x16xf32> -> vector<16x16xf32>
    %cst_246 = arith.constant 0.353553385 : f32
    %541 = vector.broadcast %cst_246 : f32 to vector<16x16xf32>
    %542 = arith.mulf %540, %541 : vector<16x16xf32>
    %543 = arith.addf %542, %41 : vector<16x16xf32>
    %cst_247 = arith.constant dense<0xFF800000> : vector<16xf32>
    %544 = vector.multi_reduction <maximumf>, %543, %cst_247 [1] : vector<16x16xf32> to vector<16xf32>
    %545 = vector.shape_cast %544 : vector<16xf32> to vector<16x1xf32>
    %546 = vector.broadcast %545 : vector<16x1xf32> to vector<16x16xf32>
    %547 = arith.subf %543, %546 : vector<16x16xf32>
    %548 = math.exp %547 : vector<16x16xf32>
    %cst_248 = arith.constant dense<0.000000e+00> : vector<16xf32>
    %549 = vector.multi_reduction <add>, %548, %cst_248 [1] : vector<16x16xf32> to vector<16xf32>
    %550 = vector.shape_cast %549 : vector<16xf32> to vector<16x1xf32>
    %551 = vector.broadcast %550 : vector<16x1xf32> to vector<16x16xf32>
    %552 = arith.divf %548, %551 : vector<16x16xf32>
    %553 = vector.extract_strided_slice %482 {offsets = [0, 24], sizes = [16, 8], strides = [1, 1]} : vector<16x32xf32> to vector<16x8xf32>
    %cst_249 = arith.constant dense<0.000000e+00> : vector<16x8xf32>
    %554 = tpu.matmul %552, %553, %cst_249 {dimension_numbers = #tpu.dot_dimension_numbers<[1], [0], [0], [1], [0, 0, 1, 1], [], []>} : vector<16x16xf32>, vector<16x8xf32>, vector<16x8xf32> -> vector<16x8xf32>
    %555 = tpu.concatenate %503, %520, %537, %554 in 1 : vector<16x8xf32>, vector<16x8xf32>, vector<16x8xf32>, vector<16x8xf32> -> vector<16x32xf32>
    %cst_250 = arith.constant dense<0.000000e+00> : vector<16x32xf32>
    %556 = tpu.matmul %555, %484, %cst_250 {dimension_numbers = #tpu.dot_dimension_numbers<[1], [0], [0], [1], [0, 0, 1, 1], [], []>} : vector<16x32xf32>, vector<32x32xf32>, vector<16x32xf32> -> vector<16x32xf32>
    %557 = vector.broadcast %486 : vector<1x32xf32> to vector<16x32xf32>
    %558 = arith.addf %556, %557 : vector<16x32xf32>
    %559 = arith.addf %473, %558 : vector<16x32xf32>
    %c1_251 = arith.constant 1 : index
    %c0_252 = arith.constant 0 : index
    %c0_253 = arith.constant 0 : index
    %560 = vector.load %arg17[%c1_251, %c0_252, %c0_253] : memref<2x1x32xf32, #tpu.memory_space<vmem>>, vector<1x1x32xf32>
    %561 = vector.shape_cast %560 : vector<1x1x32xf32> to vector<1x32xf32>
    %c1_254 = arith.constant 1 : index
    %c0_255 = arith.constant 0 : index
    %c0_256 = arith.constant 0 : index
    %562 = vector.load %arg18[%c1_254, %c0_255, %c0_256] : memref<2x1x32xf32, #tpu.memory_space<vmem>>, vector<1x1x32xf32>
    %563 = vector.shape_cast %562 : vector<1x1x32xf32> to vector<1x32xf32>
    %cst_257 = arith.constant dense<0.000000e+00> : vector<16xf32>
    %564 = vector.multi_reduction <add>, %559, %cst_257 [1] : vector<16x32xf32> to vector<16xf32>
    %565 = vector.shape_cast %564 : vector<16xf32> to vector<16x1xf32>
    %cst_258 = arith.constant 3.200000e+01 : f32
    %566 = vector.broadcast %cst_258 : f32 to vector<16x1xf32>
    %567 = arith.divf %565, %566 : vector<16x1xf32>
    %568 = vector.broadcast %567 : vector<16x1xf32> to vector<16x32xf32>
    %569 = arith.subf %559, %568 : vector<16x32xf32>
    %570 = arith.mulf %569, %569 : vector<16x32xf32>
    %cst_259 = arith.constant dense<0.000000e+00> : vector<16xf32>
    %571 = vector.multi_reduction <add>, %570, %cst_259 [1] : vector<16x32xf32> to vector<16xf32>
    %572 = vector.shape_cast %571 : vector<16xf32> to vector<16x1xf32>
    %cst_260 = arith.constant 3.200000e+01 : f32
    %573 = vector.broadcast %cst_260 : f32 to vector<16x1xf32>
    %574 = arith.divf %572, %573 : vector<16x1xf32>
    %575 = vector.broadcast %567 : vector<16x1xf32> to vector<16x32xf32>
    %576 = arith.subf %559, %575 : vector<16x32xf32>
    %cst_261 = arith.constant 9.99999974E-6 : f32
    %577 = vector.broadcast %cst_261 : f32 to vector<16x1xf32>
    %578 = arith.addf %574, %577 : vector<16x1xf32>
    %579 = math.rsqrt %578 : vector<16x1xf32>
    %580 = vector.broadcast %579 : vector<16x1xf32> to vector<16x32xf32>
    %581 = arith.mulf %576, %580 : vector<16x32xf32>
    %582 = vector.broadcast %561 : vector<1x32xf32> to vector<16x32xf32>
    %583 = arith.mulf %581, %582 : vector<16x32xf32>
    %584 = vector.broadcast %563 : vector<1x32xf32> to vector<16x32xf32>
    %585 = arith.addf %583, %584 : vector<16x32xf32>
    %586 = arith.truncf %585 : vector<16x32xf32> to vector<16x32xbf16>
    %c4 = arith.constant 4 : index
    %c0_262 = arith.constant 0 : index
    %c0_263 = arith.constant 0 : index
    %587 = vector.load %arg21[%c4, %c0_262, %c0_263] : memref<8x32x512xbf16, #tpu.memory_space<vmem>>, vector<1x32x512xbf16>
    %588 = vector.shape_cast %587 : vector<1x32x512xbf16> to vector<32x512xbf16>
    %cst_264 = arith.constant dense<0.000000e+00> : vector<16x512xf32>
    %589 = tpu.matmul %586, %588, %cst_264 {dimension_numbers = #tpu.dot_dimension_numbers<[1], [0], [0], [1], [0, 0, 1, 1], [], []>} : vector<16x32xbf16>, vector<32x512xbf16>, vector<16x512xf32> -> vector<16x512xf32>
    %c4_265 = arith.constant 4 : index
    %c0_266 = arith.constant 0 : index
    %c0_267 = arith.constant 0 : index
    %590 = vector.load %arg22[%c4_265, %c0_266, %c0_267] : memref<8x1x512xf32, #tpu.memory_space<vmem>>, vector<1x1x512xf32>
    %591 = vector.shape_cast %590 : vector<1x1x512xf32> to vector<1x512xf32>
    %592 = vector.broadcast %591 : vector<1x512xf32> to vector<16x512xf32>
    %593 = arith.addf %589, %592 : vector<16x512xf32>
    %cst_268 = arith.constant 0.000000e+00 : f32
    %594 = vector.broadcast %cst_268 : f32 to vector<16x512xf32>
    %595 = arith.maximumf %593, %594 : vector<16x512xf32>
    %596 = arith.truncf %595 : vector<16x512xf32> to vector<16x512xbf16>
    %c4_269 = arith.constant 4 : index
    %c0_270 = arith.constant 0 : index
    %c0_271 = arith.constant 0 : index
    %597 = vector.load %arg23[%c4_269, %c0_270, %c0_271] : memref<8x512x32xbf16, #tpu.memory_space<vmem>>, vector<1x512x32xbf16>
    %598 = vector.shape_cast %597 : vector<1x512x32xbf16> to vector<512x32xbf16>
    %cst_272 = arith.constant dense<0.000000e+00> : vector<16x32xf32>
    %599 = tpu.matmul %596, %598, %cst_272 {dimension_numbers = #tpu.dot_dimension_numbers<[1], [0], [0], [1], [0, 0, 1, 1], [], []>} : vector<16x512xbf16>, vector<512x32xbf16>, vector<16x32xf32> -> vector<16x32xf32>
    %c5 = arith.constant 5 : index
    %c0_273 = arith.constant 0 : index
    %c0_274 = arith.constant 0 : index
    %600 = vector.load %arg21[%c5, %c0_273, %c0_274] : memref<8x32x512xbf16, #tpu.memory_space<vmem>>, vector<1x32x512xbf16>
    %601 = vector.shape_cast %600 : vector<1x32x512xbf16> to vector<32x512xbf16>
    %cst_275 = arith.constant dense<0.000000e+00> : vector<16x512xf32>
    %602 = tpu.matmul %586, %601, %cst_275 {dimension_numbers = #tpu.dot_dimension_numbers<[1], [0], [0], [1], [0, 0, 1, 1], [], []>} : vector<16x32xbf16>, vector<32x512xbf16>, vector<16x512xf32> -> vector<16x512xf32>
    %c5_276 = arith.constant 5 : index
    %c0_277 = arith.constant 0 : index
    %c0_278 = arith.constant 0 : index
    %603 = vector.load %arg22[%c5_276, %c0_277, %c0_278] : memref<8x1x512xf32, #tpu.memory_space<vmem>>, vector<1x1x512xf32>
    %604 = vector.shape_cast %603 : vector<1x1x512xf32> to vector<1x512xf32>
    %605 = vector.broadcast %604 : vector<1x512xf32> to vector<16x512xf32>
    %606 = arith.addf %602, %605 : vector<16x512xf32>
    %cst_279 = arith.constant 0.000000e+00 : f32
    %607 = vector.broadcast %cst_279 : f32 to vector<16x512xf32>
    %608 = arith.maximumf %606, %607 : vector<16x512xf32>
    %609 = arith.truncf %608 : vector<16x512xf32> to vector<16x512xbf16>
    %c5_280 = arith.constant 5 : index
    %c0_281 = arith.constant 0 : index
    %c0_282 = arith.constant 0 : index
    %610 = vector.load %arg23[%c5_280, %c0_281, %c0_282] : memref<8x512x32xbf16, #tpu.memory_space<vmem>>, vector<1x512x32xbf16>
    %611 = vector.shape_cast %610 : vector<1x512x32xbf16> to vector<512x32xbf16>
    %cst_283 = arith.constant dense<0.000000e+00> : vector<16x32xf32>
    %612 = tpu.matmul %609, %611, %cst_283 {dimension_numbers = #tpu.dot_dimension_numbers<[1], [0], [0], [1], [0, 0, 1, 1], [], []>} : vector<16x512xbf16>, vector<512x32xbf16>, vector<16x32xf32> -> vector<16x32xf32>
    %613 = arith.addf %599, %612 : vector<16x32xf32>
    %c6 = arith.constant 6 : index
    %c0_284 = arith.constant 0 : index
    %c0_285 = arith.constant 0 : index
    %614 = vector.load %arg21[%c6, %c0_284, %c0_285] : memref<8x32x512xbf16, #tpu.memory_space<vmem>>, vector<1x32x512xbf16>
    %615 = vector.shape_cast %614 : vector<1x32x512xbf16> to vector<32x512xbf16>
    %cst_286 = arith.constant dense<0.000000e+00> : vector<16x512xf32>
    %616 = tpu.matmul %586, %615, %cst_286 {dimension_numbers = #tpu.dot_dimension_numbers<[1], [0], [0], [1], [0, 0, 1, 1], [], []>} : vector<16x32xbf16>, vector<32x512xbf16>, vector<16x512xf32> -> vector<16x512xf32>
    %c6_287 = arith.constant 6 : index
    %c0_288 = arith.constant 0 : index
    %c0_289 = arith.constant 0 : index
    %617 = vector.load %arg22[%c6_287, %c0_288, %c0_289] : memref<8x1x512xf32, #tpu.memory_space<vmem>>, vector<1x1x512xf32>
    %618 = vector.shape_cast %617 : vector<1x1x512xf32> to vector<1x512xf32>
    %619 = vector.broadcast %618 : vector<1x512xf32> to vector<16x512xf32>
    %620 = arith.addf %616, %619 : vector<16x512xf32>
    %cst_290 = arith.constant 0.000000e+00 : f32
    %621 = vector.broadcast %cst_290 : f32 to vector<16x512xf32>
    %622 = arith.maximumf %620, %621 : vector<16x512xf32>
    %623 = arith.truncf %622 : vector<16x512xf32> to vector<16x512xbf16>
    %c6_291 = arith.constant 6 : index
    %c0_292 = arith.constant 0 : index
    %c0_293 = arith.constant 0 : index
    %624 = vector.load %arg23[%c6_291, %c0_292, %c0_293] : memref<8x512x32xbf16, #tpu.memory_space<vmem>>, vector<1x512x32xbf16>
    %625 = vector.shape_cast %624 : vector<1x512x32xbf16> to vector<512x32xbf16>
    %cst_294 = arith.constant dense<0.000000e+00> : vector<16x32xf32>
    %626 = tpu.matmul %623, %625, %cst_294 {dimension_numbers = #tpu.dot_dimension_numbers<[1], [0], [0], [1], [0, 0, 1, 1], [], []>} : vector<16x512xbf16>, vector<512x32xbf16>, vector<16x32xf32> -> vector<16x32xf32>
    %627 = arith.addf %613, %626 : vector<16x32xf32>
    %c7 = arith.constant 7 : index
    %c0_295 = arith.constant 0 : index
    %c0_296 = arith.constant 0 : index
    %628 = vector.load %arg21[%c7, %c0_295, %c0_296] : memref<8x32x512xbf16, #tpu.memory_space<vmem>>, vector<1x32x512xbf16>
    %629 = vector.shape_cast %628 : vector<1x32x512xbf16> to vector<32x512xbf16>
    %cst_297 = arith.constant dense<0.000000e+00> : vector<16x512xf32>
    %630 = tpu.matmul %586, %629, %cst_297 {dimension_numbers = #tpu.dot_dimension_numbers<[1], [0], [0], [1], [0, 0, 1, 1], [], []>} : vector<16x32xbf16>, vector<32x512xbf16>, vector<16x512xf32> -> vector<16x512xf32>
    %c7_298 = arith.constant 7 : index
    %c0_299 = arith.constant 0 : index
    %c0_300 = arith.constant 0 : index
    %631 = vector.load %arg22[%c7_298, %c0_299, %c0_300] : memref<8x1x512xf32, #tpu.memory_space<vmem>>, vector<1x1x512xf32>
    %632 = vector.shape_cast %631 : vector<1x1x512xf32> to vector<1x512xf32>
    %633 = vector.broadcast %632 : vector<1x512xf32> to vector<16x512xf32>
    %634 = arith.addf %630, %633 : vector<16x512xf32>
    %cst_301 = arith.constant 0.000000e+00 : f32
    %635 = vector.broadcast %cst_301 : f32 to vector<16x512xf32>
    %636 = arith.maximumf %634, %635 : vector<16x512xf32>
    %637 = arith.truncf %636 : vector<16x512xf32> to vector<16x512xbf16>
    %c7_302 = arith.constant 7 : index
    %c0_303 = arith.constant 0 : index
    %c0_304 = arith.constant 0 : index
    %638 = vector.load %arg23[%c7_302, %c0_303, %c0_304] : memref<8x512x32xbf16, #tpu.memory_space<vmem>>, vector<1x512x32xbf16>
    %639 = vector.shape_cast %638 : vector<1x512x32xbf16> to vector<512x32xbf16>
    %cst_305 = arith.constant dense<0.000000e+00> : vector<16x32xf32>
    %640 = tpu.matmul %637, %639, %cst_305 {dimension_numbers = #tpu.dot_dimension_numbers<[1], [0], [0], [1], [0, 0, 1, 1], [], []>} : vector<16x512xbf16>, vector<512x32xbf16>, vector<16x32xf32> -> vector<16x32xf32>
    %641 = arith.addf %627, %640 : vector<16x32xf32>
    %642 = arith.addf %585, %641 : vector<16x32xf32>
    %c1_306 = arith.constant 1 : index
    %c0_307 = arith.constant 0 : index
    %c0_308 = arith.constant 0 : index
    %643 = vector.load %arg24[%c1_306, %c0_307, %c0_308] : memref<2x1x32xf32, #tpu.memory_space<vmem>>, vector<1x1x32xf32>
    %644 = vector.shape_cast %643 : vector<1x1x32xf32> to vector<1x32xf32>
    %645 = vector.broadcast %644 : vector<1x32xf32> to vector<16x32xf32>
    %646 = arith.addf %642, %645 : vector<16x32xf32>
    %c1_309 = arith.constant 1 : index
    %c0_310 = arith.constant 0 : index
    %c0_311 = arith.constant 0 : index
    %647 = vector.load %arg19[%c1_309, %c0_310, %c0_311] : memref<2x1x32xf32, #tpu.memory_space<vmem>>, vector<1x1x32xf32>
    %648 = vector.shape_cast %647 : vector<1x1x32xf32> to vector<1x32xf32>
    %c1_312 = arith.constant 1 : index
    %c0_313 = arith.constant 0 : index
    %c0_314 = arith.constant 0 : index
    %649 = vector.load %arg20[%c1_312, %c0_313, %c0_314] : memref<2x1x32xf32, #tpu.memory_space<vmem>>, vector<1x1x32xf32>
    %650 = vector.shape_cast %649 : vector<1x1x32xf32> to vector<1x32xf32>
    %cst_315 = arith.constant dense<0.000000e+00> : vector<16xf32>
    %651 = vector.multi_reduction <add>, %646, %cst_315 [1] : vector<16x32xf32> to vector<16xf32>
    %652 = vector.shape_cast %651 : vector<16xf32> to vector<16x1xf32>
    %cst_316 = arith.constant 3.200000e+01 : f32
    %653 = vector.broadcast %cst_316 : f32 to vector<16x1xf32>
    %654 = arith.divf %652, %653 : vector<16x1xf32>
    %655 = vector.broadcast %654 : vector<16x1xf32> to vector<16x32xf32>
    %656 = arith.subf %646, %655 : vector<16x32xf32>
    %657 = arith.mulf %656, %656 : vector<16x32xf32>
    %cst_317 = arith.constant dense<0.000000e+00> : vector<16xf32>
    %658 = vector.multi_reduction <add>, %657, %cst_317 [1] : vector<16x32xf32> to vector<16xf32>
    %659 = vector.shape_cast %658 : vector<16xf32> to vector<16x1xf32>
    %cst_318 = arith.constant 3.200000e+01 : f32
    %660 = vector.broadcast %cst_318 : f32 to vector<16x1xf32>
    %661 = arith.divf %659, %660 : vector<16x1xf32>
    %662 = vector.broadcast %654 : vector<16x1xf32> to vector<16x32xf32>
    %663 = arith.subf %646, %662 : vector<16x32xf32>
    %cst_319 = arith.constant 9.99999974E-6 : f32
    %664 = vector.broadcast %cst_319 : f32 to vector<16x1xf32>
    %665 = arith.addf %661, %664 : vector<16x1xf32>
    %666 = math.rsqrt %665 : vector<16x1xf32>
    %667 = vector.broadcast %666 : vector<16x1xf32> to vector<16x32xf32>
    %668 = arith.mulf %663, %667 : vector<16x32xf32>
    %669 = vector.broadcast %648 : vector<1x32xf32> to vector<16x32xf32>
    %670 = arith.mulf %668, %669 : vector<16x32xf32>
    %671 = vector.broadcast %650 : vector<1x32xf32> to vector<16x32xf32>
    %672 = arith.addf %670, %671 : vector<16x32xf32>
    %c0_320 = arith.constant 0 : index
    %c0_321 = arith.constant 0 : index
    %673 = vector.load %arg25[%c0_320, %c0_321] : memref<32x128xf32, #tpu.memory_space<vmem>>, vector<32x128xf32>
    %cst_322 = arith.constant dense<0.000000e+00> : vector<16x128xf32>
    %674 = tpu.matmul %672, %673, %cst_322 {dimension_numbers = #tpu.dot_dimension_numbers<[1], [0], [0], [1], [0, 0, 1, 1], [], []>} : vector<16x32xf32>, vector<32x128xf32>, vector<16x128xf32> -> vector<16x128xf32>
    %c0_323 = arith.constant 0 : index
    %c0_324 = arith.constant 0 : index
    %675 = vector.load %arg26[%c0_323, %c0_324] : memref<1x128xf32, #tpu.memory_space<vmem>>, vector<1x128xf32>
    %676 = vector.broadcast %675 : vector<1x128xf32> to vector<16x128xf32>
    %677 = arith.addf %674, %676 : vector<16x128xf32>
    %c0_325 = arith.constant 0 : index
    %c0_326 = arith.constant 0 : index
    %678 = vector.load %arg27[%c0_325, %c0_326] : memref<16x128xf32, #tpu.memory_space<vmem>>, vector<16x128xf32>
    tpu.vector_store %arg27[%c0_325, %c0_326], %677 {strides = array<i32>} : memref<16x128xf32, #tpu.memory_space<vmem>>, vector<16x128xf32>,
    return
  }
}

</mosaic_0001>

<llo_original>
// kernel: control_predict_forward_pallas.1
$region0: #{control_predict_forward_pallas.1}
  #allocation0 [shape = 'u32[]', space=smem, size = 0x4, offset = 0x4, fixed_abs, tag = 'smem constant byte address 0x4 - core index']
  #allocation1 [shape = 'u32[144,128]{1,0:T(1,128)}', space=vmem, size = 0x12000, scoped, tag = 'internal scratch']
  %s0 = inlined_call_operand.vmem [shape: s32[16,1], index: 0, kind: input, shape index: {}]
  %s1 = inlined_call_operand.vmem [shape: s32[1,16], index: 1, kind: input, shape index: {}]
  %s2 = inlined_call_operand.vmem [shape: f32[2,8,32], index: 2, kind: input, shape index: {}]
  %s3 = inlined_call_operand.vmem [shape: f32[16,32], index: 3, kind: input, shape index: {}]
  %s4 = inlined_call_operand.vmem [shape: f32[8,32], index: 4, kind: input, shape index: {}]
  %s5 = inlined_call_operand.vmem [shape: f32[2,32,96], index: 5, kind: input, shape index: {}]
  %s6 = inlined_call_operand.vmem [shape: f32[2,1,96], index: 6, kind: input, shape index: {}]
  %s7 = inlined_call_operand.vmem [shape: f32[2,32,32], index: 7, kind: input, shape index: {}]
  %s8 = inlined_call_operand.vmem [shape: f32[2,1,32], index: 8, kind: input, shape index: {}]
  %s9 = inlined_call_operand.vmem [shape: f32[2,32,32], index: 9, kind: input, shape index: {}]
  %s10 = inlined_call_operand.vmem [shape: f32[2,1,32], index: 10, kind: input, shape index: {}]
  %s11 = inlined_call_operand.vmem [shape: f32[32,128], index: 11, kind: input, shape index: {}]
  %s12 = inlined_call_operand.vmem [shape: f32[1,128], index: 12, kind: input, shape index: {}]
  %s13 = inlined_call_operand.vmem [shape: f32[2,32,32], index: 13, kind: input, shape index: {}]
  %s14 = inlined_call_operand.vmem [shape: f32[2,1,32], index: 14, kind: input, shape index: {}]
  %s15 = inlined_call_operand.vmem [shape: f32[2,1,32], index: 15, kind: input, shape index: {}]
  %s16 = inlined_call_operand.vmem [shape: f32[2,1,32], index: 16, kind: input, shape index: {}]
  %s17 = inlined_call_operand.vmem [shape: f32[2,1,32], index: 17, kind: input, shape index: {}]
  %s18 = inlined_call_operand.vmem [shape: f32[2,1,32], index: 18, kind: input, shape index: {}]
  %s19 = inlined_call_operand.vmem [shape: f32[2,1,32], index: 19, kind: input, shape index: {}]
  %s20 = inlined_call_operand.vmem [shape: f32[2,1,32], index: 20, kind: input, shape index: {}]
  %s21 = inlined_call_operand.vmem [shape: bf16[8,32,512], index: 21, kind: input, shape index: {}]
  %s22 = inlined_call_operand.vmem [shape: f32[8,1,512], index: 22, kind: input, shape index: {}]
  %s23 = inlined_call_operand.vmem [shape: bf16[8,512,32], index: 23, kind: input, shape index: {}]
  %s24 = inlined_call_operand.vmem [shape: f32[2,1,32], index: 24, kind: input, shape index: {}]
  %s25 = inlined_call_operand.vmem [shape: f32[32,128], index: 25, kind: input, shape index: {}]
  %s26 = inlined_call_operand.vmem [shape: f32[1,128], index: 26, kind: input, shape index: {}]
  %s27 = inlined_call_operand.vmem [shape: f32[16,128], index: 27, kind: output, shape index: {}]
  %s28 = sld [smem:[#allocation0]]
  $region118: #{control_predict_forward_pallas.1} parent=0
    _
  %s30 = ssub.s32 1, %s28
  %s31 = scalar_select 0, %s30, %s28
  // Predicated region
  $region2: #{control_predict_forward_pallas.1} parent=0 // pred_check
    _
  $region3: #{control_predict_forward_pallas.1} parent=0 // pred_check_branch
    %33 = sbr.rel (0) target = $region5
  $region4: #{control_predict_forward_pallas.1} parent=0 // pred_region
    _
  $region5: #{control_predict_forward_pallas.1} parent=0 // pred_fallthru
    _
  // Predicated region
  $region6: #{control_predict_forward_pallas.1} parent=0 // pred_check
    _
  $region7: #{control_predict_forward_pallas.1} parent=0 // pred_check_branch
    %35 = sbr.rel (0) target = $region9
  $region8: #{control_predict_forward_pallas.1} parent=0 // pred_region
    _
  $region9: #{control_predict_forward_pallas.1} parent=0 // pred_fallthru
    _
  // Predicated region
  $region10: #{control_predict_forward_pallas.1} parent=0 // pred_check
    _
  $region11: #{control_predict_forward_pallas.1} parent=0 // pred_check_branch
    %37 = sbr.rel (0) target = $region13
  $region12: #{control_predict_forward_pallas.1} parent=0 // pred_region
    _
  $region13: #{control_predict_forward_pallas.1} parent=0 // pred_fallthru
    _
  // Predicated region
  $region14: #{control_predict_forward_pallas.1} parent=0 // pred_check
    _
  $region15: #{control_predict_forward_pallas.1} parent=0 // pred_check_branch
    %39 = sbr.rel (0) target = $region17
  $region16: #{control_predict_forward_pallas.1} parent=0 // pred_region
    _
  $region17: #{control_predict_forward_pallas.1} parent=0 // pred_fallthru
    _
  // Predicated region
  $region18: #{control_predict_forward_pallas.1} parent=0 // pred_check
    _
  $region19: #{control_predict_forward_pallas.1} parent=0 // pred_check_branch
    %41 = sbr.rel (0) target = $region21
  $region20: #{control_predict_forward_pallas.1} parent=0 // pred_region
    _
  $region21: #{control_predict_forward_pallas.1} parent=0 // pred_fallthru
    _
  // Predicated region
  $region22: #{control_predict_forward_pallas.1} parent=0 // pred_check
    _
  $region23: #{control_predict_forward_pallas.1} parent=0 // pred_check_branch
    %43 = sbr.rel (0) target = $region25
  $region24: #{control_predict_forward_pallas.1} parent=0 // pred_region
    _
  $region25: #{control_predict_forward_pallas.1} parent=0 // pred_fallthru
    _
  // Predicated region
  $region26: #{control_predict_forward_pallas.1} parent=0 // pred_check
    _
  $region27: #{control_predict_forward_pallas.1} parent=0 // pred_check_branch
    %45 = sbr.rel (0) target = $region29
  $region28: #{control_predict_forward_pallas.1} parent=0 // pred_region
    _
  $region29: #{control_predict_forward_pallas.1} parent=0 // pred_fallthru
    _
  // Predicated region
  $region30: #{control_predict_forward_pallas.1} parent=0 // pred_check
    _
  $region31: #{control_predict_forward_pallas.1} parent=0 // pred_check_branch
    %47 = sbr.rel (0) target = $region33
  $region32: #{control_predict_forward_pallas.1} parent=0 // pred_region
    _
  $region33: #{control_predict_forward_pallas.1} parent=0 // pred_fallthru
    _
  // Predicated region
  $region34: #{control_predict_forward_pallas.1} parent=0 // pred_check
    _
  $region35: #{control_predict_forward_pallas.1} parent=0 // pred_check_branch
    %49 = sbr.rel (0) target = $region37
  $region36: #{control_predict_forward_pallas.1} parent=0 // pred_region
    _
  $region37: #{control_predict_forward_pallas.1} parent=0 // pred_fallthru
    _
  // Predicated region
  $region38: #{control_predict_forward_pallas.1} parent=0 // pred_check
    _
  $region39: #{control_predict_forward_pallas.1} parent=0 // pred_check_branch
    %51 = sbr.rel (0) target = $region41
  $region40: #{control_predict_forward_pallas.1} parent=0 // pred_region
    _
  $region41: #{control_predict_forward_pallas.1} parent=0 // pred_fallthru
    _
  // Predicated region
  $region42: #{control_predict_forward_pallas.1} parent=0 // pred_check
    _
  $region43: #{control_predict_forward_pallas.1} parent=0 // pred_check_branch
    %53 = sbr.rel (0) target = $region45
  $region44: #{control_predict_forward_pallas.1} parent=0 // pred_region
    _
  $region45: #{control_predict_forward_pallas.1} parent=0 // pred_fallthru
    _
  // Predicated region
  $region46: #{control_predict_forward_pallas.1} parent=0 // pred_check
    _
  $region47: #{control_predict_forward_pallas.1} parent=0 // pred_check_branch
    %55 = sbr.rel (0) target = $region49
  $region48: #{control_predict_forward_pallas.1} parent=0 // pred_region
    _
  $region49: #{control_predict_forward_pallas.1} parent=0 // pred_fallthru
    _
  // Predicated region
  $region50: #{control_predict_forward_pallas.1} parent=0 // pred_check
    _
  $region51: #{control_predict_forward_pallas.1} parent=0 // pred_check_branch
    %57 = sbr.rel (0) target = $region53
  $region52: #{control_predict_forward_pallas.1} parent=0 // pred_region
    _
  $region53: #{control_predict_forward_pallas.1} parent=0 // pred_fallthru
    _
  // Predicated region
  $region54: #{control_predict_forward_pallas.1} parent=0 // pred_check
    _
  $region55: #{control_predict_forward_pallas.1} parent=0 // pred_check_branch
    %59 = sbr.rel (0) target = $region57
  $region56: #{control_predict_forward_pallas.1} parent=0 // pred_region
    _
  $region57: #{control_predict_forward_pallas.1} parent=0 // pred_fallthru
    _
  // Predicated region
  $region58: #{control_predict_forward_pallas.1} parent=0 // pred_check
    _
  $region59: #{control_predict_forward_pallas.1} parent=0 // pred_check_branch
    %61 = sbr.rel (0) target = $region61
  $region60: #{control_predict_forward_pallas.1} parent=0 // pred_region
    _
  $region61: #{control_predict_forward_pallas.1} parent=0 // pred_fallthru
    _
  // Predicated region
  $region62: #{control_predict_forward_pallas.1} parent=0 // pred_check
    _
  $region63: #{control_predict_forward_pallas.1} parent=0 // pred_check_branch
    %63 = sbr.rel (0) target = $region65
  $region64: #{control_predict_forward_pallas.1} parent=0 // pred_region
    _
  $region65: #{control_predict_forward_pallas.1} parent=0 // pred_fallthru
    _
  // Predicated region
  $region66: #{control_predict_forward_pallas.1} parent=0 // pred_check
    _
  $region67: #{control_predict_forward_pallas.1} parent=0 // pred_check_branch
    %65 = sbr.rel (0) target = $region69
  $region68: #{control_predict_forward_pallas.1} parent=0 // pred_region
    _
  $region69: #{control_predict_forward_pallas.1} parent=0 // pred_fallthru
    _
  // Predicated region
  $region70: #{control_predict_forward_pallas.1} parent=0 // pred_check
    _
  $region71: #{control_predict_forward_pallas.1} parent=0 // pred_check_branch
    %67 = sbr.rel (0) target = $region73
  $region72: #{control_predict_forward_pallas.1} parent=0 // pred_region
    _
  $region73: #{control_predict_forward_pallas.1} parent=0 // pred_fallthru
    _
  // Predicated region
  $region74: #{control_predict_forward_pallas.1} parent=0 // pred_check
    _
  $region75: #{control_predict_forward_pallas.1} parent=0 // pred_check_branch
    %69 = sbr.rel (0) target = $region77
  $region76: #{control_predict_forward_pallas.1} parent=0 // pred_region
    _
  $region77: #{control_predict_forward_pallas.1} parent=0 // pred_fallthru
    _
  // Predicated region
  $region78: #{control_predict_forward_pallas.1} parent=0 // pred_check
    _
  $region79: #{control_predict_forward_pallas.1} parent=0 // pred_check_branch
    %71 = sbr.rel (0) target = $region81
  $region80: #{control_predict_forward_pallas.1} parent=0 // pred_region
    _
  $region81: #{control_predict_forward_pallas.1} parent=0 // pred_fallthru
    _
  // Predicated region
  $region82: #{control_predict_forward_pallas.1} parent=0 // pred_check
    _
  $region83: #{control_predict_forward_pallas.1} parent=0 // pred_check_branch
    %73 = sbr.rel (0) target = $region85
  $region84: #{control_predict_forward_pallas.1} parent=0 // pred_region
    _
  $region85: #{control_predict_forward_pallas.1} parent=0 // pred_fallthru
    _
  // Predicated region
  $region86: #{control_predict_forward_pallas.1} parent=0 // pred_check
    _
  $region87: #{control_predict_forward_pallas.1} parent=0 // pred_check_branch
    %75 = sbr.rel (0) target = $region89
  $region88: #{control_predict_forward_pallas.1} parent=0 // pred_region
    _
  $region89: #{control_predict_forward_pallas.1} parent=0 // pred_fallthru
    _
  // Predicated region
  $region90: #{control_predict_forward_pallas.1} parent=0 // pred_check
    _
  $region91: #{control_predict_forward_pallas.1} parent=0 // pred_check_branch
    %77 = sbr.rel (0) target = $region93
  $region92: #{control_predict_forward_pallas.1} parent=0 // pred_region
    _
  $region93: #{control_predict_forward_pallas.1} parent=0 // pred_fallthru
    _
  // Predicated region
  $region94: #{control_predict_forward_pallas.1} parent=0 // pred_check
    _
  $region95: #{control_predict_forward_pallas.1} parent=0 // pred_check_branch
    %79 = sbr.rel (0) target = $region97
  $region96: #{control_predict_forward_pallas.1} parent=0 // pred_region
    _
  $region97: #{control_predict_forward_pallas.1} parent=0 // pred_fallthru
    _
  // Predicated region
  $region98: #{control_predict_forward_pallas.1} parent=0 // pred_check
    _
  $region99: #{control_predict_forward_pallas.1} parent=0 // pred_check_branch
    %81 = sbr.rel (0) target = $region101
  $region100: #{control_predict_forward_pallas.1} parent=0 // pred_region
    _
  $region101: #{control_predict_forward_pallas.1} parent=0 // pred_fallthru
    _
  // Predicated region
  $region102: #{control_predict_forward_pallas.1} parent=0 // pred_check
    _
  $region103: #{control_predict_forward_pallas.1} parent=0 // pred_check_branch
    %83 = sbr.rel (0) target = $region105
  $region104: #{control_predict_forward_pallas.1} parent=0 // pred_region
    _
  $region105: #{control_predict_forward_pallas.1} parent=0 // pred_fallthru
    _
  // Predicated region
  $region106: #{control_predict_forward_pallas.1} parent=0 // pred_check
    _
  $region107: #{control_predict_forward_pallas.1} parent=0 // pred_check_branch
    %85 = sbr.rel (0) target = $region109
  $region108: #{control_predict_forward_pallas.1} parent=0 // pred_region
    _
  $region109: #{control_predict_forward_pallas.1} parent=0 // pred_fallthru
    _
  %v87 = vld [vmem:[%s0] sm:$0xff]
  %v88 = vld [vmem:[%s0 + $0x8] sm:$0xff]
  %v89 = vlaneseq
  %v90 = vand.u32 %v89, 127
  %91 = vset.pattern.permute.xlu0 0
  %92 = vperm.xlu0 %91, %v87
  %v93 = vpop.permute.xlu0 %92
  %94 = vset.pattern.permute.xlu0 0
  %95 = vperm.xlu0 %94, %v88
  %v96 = vpop.permute.xlu0 %95
  %vm97 = vcmp.eq.s32.totalorder %v93, %v90
  %vm98 = vcmp.eq.s32.totalorder %v96, %v90
  %v99 = vsel %vm97, 1, 0
  %v100 = vsel %vm98, 1, 0
  %v101 = vcvt.s32.f32 %v99
  %v102 = vcvt.s32.f32 %v100
  %v103 = vld [vmem:[%s3] sm:$0xff]
  %v104 = vld [vmem:[%s3 + $0x8] sm:$0xff]
  %v105 = vld [vmem:[%s4] sm:$0xff]
  %vm106 = vcmask 130048
  %v108 = vsel %vm106, %v101, 0
  %v111 = vsel %vm106, %v102, 0
  %113 = vmatprep.subr.mxu0 0.0
  %114 = vmatpush1.msra.mxu0 %v103
  %115 = vmatprep.subr.mxu0 0.0
  %116 = vmatpush1.msra.mxu0 %v104
  %117 = vmatprep.subr.mxu0 0.0
  %118 = vmatpush1.msra.mxu0 0.0
  %119 = vmatprep.subr.mxu0 0.0
  %120 = vmatpush1.msra.mxu0 0.0
  %121 = vmatprep.subr.mxu0 0.0
  %122 = vmatpush1.msra.mxu0 0.0
  %123 = vmatprep.subr.mxu0 0.0
  %124 = vmatpush1.msra.mxu0 0.0
  %125 = vmatprep.subr.mxu0 0.0
  %126 = vmatpush1.msra.mxu0 0.0
  %127 = vmatprep.subr.mxu0 0.0
  %128 = vmatpush1.msra.mxu0 0.0
  %129 = vmatprep.subr.mxu0 0.0
  %130 = vmatpush1.msra.mxu0 0.0
  %131 = vmatprep.subr.mxu0 0.0
  %132 = vmatpush1.msra.mxu0 0.0
  %133 = vmatprep.subr.mxu0 0.0
  %134 = vmatpush1.msra.mxu0 0.0
  %135 = vmatprep.subr.mxu0 0.0
  %136 = vmatpush1.msra.mxu0 0.0
  %137 = vmatprep.subr.mxu0 0.0
  %138 = vmatpush1.msra.mxu0 0.0
  %139 = vmatprep.subr.mxu0 0.0
  %140 = vmatpush1.msra.mxu0 0.0
  %141 = vmatprep.subr.mxu0 0.0
  %142 = vmatpush1.msra.mxu0 0.0
  %143 = vmatprep.subr.mxu0 0.0
  %144 = vmatpush1.msra.mxu0 0.0
  %145 = vmatprep.subr.mxu0 0.0
  %146 = vmatpush1.msra.mxu0 0.0
  %147 = vmatprep.subr.mxu0 0.0
  %148 = vmatpush1.msra.mxu0 0.0
  %149 = vmatprep.subr.mxu0 0.0
  %150 = vmatpush1.msra.mxu0 0.0
  %151 = vmatprep.subr.mxu0 0.0
  %152 = vmatpush1.msra.mxu0 0.0
  %153 = vmatprep.subr.mxu0 0.0
  %154 = vmatpush1.msra.mxu0 0.0
  %155 = vmatprep.subr.mxu0 0.0
  %156 = vmatpush1.msra.mxu0 0.0
  %157 = vmatprep.subr.mxu0 0.0
  %158 = vmatpush1.msra.mxu0 0.0
  %159 = vmatprep.subr.mxu0 0.0
  %160 = vmatpush1.msra.mxu0 0.0
  %161 = vmatprep.subr.mxu0 0.0
  %162 = vmatpush1.msra.mxu0 0.0
  %163 = vmatprep.subr.mxu0 0.0
  %164 = vmatpush1.msra.mxu0 0.0
  %165 = vmatprep.subr.mxu0 0.0
  %166 = vmatpush1.msra.mxu0 0.0
  %167 = vmatprep.subr.mxu0 0.0
  %168 = vmatpush1.msra.mxu0 0.0
  %169 = vmatprep.subr.mxu0 0.0
  %170 = vmatpush1.msra.mxu0 0.0
  %171 = vmatprep.subr.mxu0 0.0
  %172 = vmatpush1.msra.mxu0 0.0
  %173 = vmatprep.subr.mxu0 0.0
  %174 = vmatpush1.msra.mxu0 0.0
  %175 = vmatprep.subr.mxu0 0.0
  %176 = vmatpush1.msra.mxu0 0.0
  %177 = vmatprep.mubr.f32.mxu0 0.0
  %178 = vmatmul.mubr.f32.gmra.mrb[0].mxu0 %v108
  %v179 = vpop.f32.mrb[0].mxu0
  %v180 = vadd.f32 %v105, %v179
  %v181 = vpop.f32.mrb[0].mxu0
  %182 = vmatprep.mubr.f32.mxu0 0.0
  %183 = vmatmul.mubr.f32.gmra.mrb[0].mxu0 %v111
  %v184 = vpop.f32.mrb[0].mxu0
  %v185 = vadd.f32 %v105, %v184
  %v186 = vpop.f32.mrb[0].mxu0
  %187 = vdwg.mxu0
  %v188 = vlaneseq
  %v189 = vshrl.u32 %v188, 7
  %v190 = vadd.s32 %v189, 8
  %v191 = vshra.s32 %v189, 3
  %v192 = vshra.s32 %v190, 3
  %v193 = vand.u32 %v189, 7
  %v194 = vand.u32 %v190, 7
  %v195 = vshra.s32 %v90, 3
  %v196 = vand.u32 %v90, 7
  %v197 = vld [vmem:[%s1] sm:$0x1]
  %vm198 = vcmp.ne.s32.totalorder %v197, 15
  %vm199 = vcmp.eq.s32.totalorder %v191, %v195
  %vm200 = vcmp.eq.s32.totalorder %v192, %v195
  %vm201 = vcmp.le.s32.totalorder %v196, %v193
  %vm202 = vcmp.le.s32.totalorder %v196, %v194
  %vm203 = vmand %vm199, %vm201
  %vm204 = vmand %vm200, %vm202
  %v205 = vsel %vm198, 1, 0
  %v206 = vlaneseq
  %v207 = vshrl.u32 %v206, 7
  %v208 = vsub.s32 0, %v207
  %v209 = vrot.slane %v205, %v208
  %vm210 = vcmp.eq.s32.totalorder %v209, 1
  %vm211 = vmand %vm203, %vm210
  %vm212 = vmand %vm204, %vm210
  %v213 = vsel %vm211, 0.0, -1e+30
  %v214 = vsel %vm212, 0.0, -1e+30
  %v215 = vsel %vm199, 0.0, -1e+30
  %v216 = vsel %vm200, 0.0, -1e+30
  %v217 = vld [vmem:[%s2] sm:$0xff]
  %v218 = vld [vmem:[%s2 + $0x8] sm:$0xff]
  %v219 = vld [vmem:[%s11] sm:$0xff]
  %v220 = vld [vmem:[%s11 + $0x8] sm:$0xff]
  %v221 = vld [vmem:[%s11 + $0x10] sm:$0xff]
  %v222 = vld [vmem:[%s11 + $0x18] sm:$0xff]
  %v223 = vld [vmem:[%s12] sm:$0x1]
  %v225 = vlaneseq
  %v226 = vshrl.u32 %v225, 7
  %v227 = vsub.s32 0, %v226
  %v228 = vrot.slane %v223, %v227
  %vm230 = vcmask 261120
  %v232 = vsel %vm230, %v217, 0
  %v235 = vsel %vm230, %v218, 0
  %237 = vmatprep.subr.mxu0 0.0
  %238 = vmatpush1.msra.mxu0 %v219
  %239 = vmatprep.subr.mxu0 0.0
  %240 = vmatpush1.msra.mxu0 %v220
  %241 = vmatprep.subr.mxu0 0.0
  %242 = vmatpush1.msra.mxu0 %v221
  %243 = vmatprep.subr.mxu0 0.0
  %244 = vmatpush1.msra.mxu0 %v222
  %245 = vmatprep.subr.mxu0 0.0
  %246 = vmatpush1.msra.mxu0 0.0
  %247 = vmatprep.subr.mxu0 0.0
  %248 = vmatpush1.msra.mxu0 0.0
  %249 = vmatprep.subr.mxu0 0.0
  %250 = vmatpush1.msra.mxu0 0.0
  %251 = vmatprep.subr.mxu0 0.0
  %252 = vmatpush1.msra.mxu0 0.0
  %253 = vmatprep.subr.mxu0 0.0
  %254 = vmatpush1.msra.mxu0 0.0
  %255 = vmatprep.subr.mxu0 0.0
  %256 = vmatpush1.msra.mxu0 0.0
  %257 = vmatprep.subr.mxu0 0.0
  %258 = vmatpush1.msra.mxu0 0.0
  %259 = vmatprep.subr.mxu0 0.0
  %260 = vmatpush1.msra.mxu0 0.0
  %261 = vmatprep.subr.mxu0 0.0
  %262 = vmatpush1.msra.mxu0 0.0
  %263 = vmatprep.subr.mxu0 0.0
  %264 = vmatpush1.msra.mxu0 0.0
  %265 = vmatprep.subr.mxu0 0.0
  %266 = vmatpush1.msra.mxu0 0.0
  %267 = vmatprep.subr.mxu0 0.0
  %268 = vmatpush1.msra.mxu0 0.0
  %269 = vmatprep.subr.mxu0 0.0
  %270 = vmatpush1.msra.mxu0 0.0
  %271 = vmatprep.subr.mxu0 0.0
  %272 = vmatpush1.msra.mxu0 0.0
  %273 = vmatprep.subr.mxu0 0.0
  %274 = vmatpush1.msra.mxu0 0.0
  %275 = vmatprep.subr.mxu0 0.0
  %276 = vmatpush1.msra.mxu0 0.0
  %277 = vmatprep.subr.mxu0 0.0
  %278 = vmatpush1.msra.mxu0 0.0
  %279 = vmatprep.subr.mxu0 0.0
  %280 = vmatpush1.msra.mxu0 0.0
  %281 = vmatprep.subr.mxu0 0.0
  %282 = vmatpush1.msra.mxu0 0.0
  %283 = vmatprep.subr.mxu0 0.0
  %284 = vmatpush1.msra.mxu0 0.0
  %285 = vmatprep.subr.mxu0 0.0
  %286 = vmatpush1.msra.mxu0 0.0
  %287 = vmatprep.subr.mxu0 0.0
  %288 = vmatpush1.msra.mxu0 0.0
  %289 = vmatprep.subr.mxu0 0.0
  %290 = vmatpush1.msra.mxu0 0.0
  %291 = vmatprep.subr.mxu0 0.0
  %292 = vmatpush1.msra.mxu0 0.0
  %293 = vmatprep.subr.mxu0 0.0
  %294 = vmatpush1.msra.mxu0 0.0
  %295 = vmatprep.subr.mxu0 0.0
  %296 = vmatpush1.msra.mxu0 0.0
  %297 = vmatprep.subr.mxu0 0.0
  %298 = vmatpush1.msra.mxu0 0.0
  %299 = vmatprep.subr.mxu0 0.0
  %300 = vmatpush1.msra.mxu0 0.0
  %301 = vmatprep.mubr.f32.mxu0 0.0
  %302 = vmatmul.mubr.f32.gmra.mrb[0].mxu0 %v232
  %v303 = vpop.f32.mrb[0].mxu0
  %v304 = vadd.f32 %v228, %v303
  %v305 = vpop.f32.mrb[0].mxu0
  %306 = vmatprep.mubr.f32.mxu0 0.0
  %307 = vmatmul.mubr.f32.gmra.mrb[0].mxu0 %v235
  %v308 = vpop.f32.mrb[0].mxu0
  %v309 = vadd.f32 %v228, %v308
  %v310 = vpop.f32.mrb[0].mxu0
  %311 = vdwg.mxu0
  %v312 = vld [vmem:[%s5] sm:$0xff]
  %v313 = vld [vmem:[%s5 + $0x8] sm:$0xff]
  %v314 = vld [vmem:[%s5 + $0x10] sm:$0xff]
  %v315 = vld [vmem:[%s5 + $0x18] sm:$0xff]
  %v316 = vld [vmem:[%s6] sm:$0x1]
  %v318 = vlaneseq
  %v319 = vshrl.u32 %v318, 7
  %v320 = vsub.s32 0, %v319
  %v321 = vrot.slane %v316, %v320
  %v324 = vsel %vm230, %v180, 0
  %v327 = vsel %vm230, %v185, 0
  %329 = vmatprep.subr.mxu0 0.0
  %330 = vmatpush1.msra.mxu0 %v312
  %331 = vmatprep.subr.mxu0 0.0
  %332 = vmatpush1.msra.mxu0 %v313
  %333 = vmatprep.subr.mxu0 0.0
  %334 = vmatpush1.msra.mxu0 %v314
  %335 = vmatprep.subr.mxu0 0.0
  %336 = vmatpush1.msra.mxu0 %v315
  %337 = vmatprep.subr.mxu0 0.0
  %338 = vmatpush1.msra.mxu0 0.0
  %339 = vmatprep.subr.mxu0 0.0
  %340 = vmatpush1.msra.mxu0 0.0
  %341 = vmatprep.subr.mxu0 0.0
  %342 = vmatpush1.msra.mxu0 0.0
  %343 = vmatprep.subr.mxu0 0.0
  %344 = vmatpush1.msra.mxu0 0.0
  %345 = vmatprep.subr.mxu0 0.0
  %346 = vmatpush1.msra.mxu0 0.0
  %347 = vmatprep.subr.mxu0 0.0
  %348 = vmatpush1.msra.mxu0 0.0
  %349 = vmatprep.subr.mxu0 0.0
  %350 = vmatpush1.msra.mxu0 0.0
  %351 = vmatprep.subr.mxu0 0.0
  %352 = vmatpush1.msra.mxu0 0.0
  %353 = vmatprep.subr.mxu0 0.0
  %354 = vmatpush1.msra.mxu0 0.0
  %355 = vmatprep.subr.mxu0 0.0
  %356 = vmatpush1.msra.mxu0 0.0
  %357 = vmatprep.subr.mxu0 0.0
  %358 = vmatpush1.msra.mxu0 0.0
  %359 = vmatprep.subr.mxu0 0.0
  %360 = vmatpush1.msra.mxu0 0.0
  %361 = vmatprep.subr.mxu0 0.0
  %362 = vmatpush1.msra.mxu0 0.0
  %363 = vmatprep.subr.mxu0 0.0
  %364 = vmatpush1.msra.mxu0 0.0
  %365 = vmatprep.subr.mxu0 0.0
  %366 = vmatpush1.msra.mxu0 0.0
  %367 = vmatprep.subr.mxu0 0.0
  %368 = vmatpush1.msra.mxu0 0.0
  %369 = vmatprep.subr.mxu0 0.0
  %370 = vmatpush1.msra.mxu0 0.0
  %371 = vmatprep.subr.mxu0 0.0
  %372 = vmatpush1.msra.mxu0 0.0
  %373 = vmatprep.subr.mxu0 0.0
  %374 = vmatpush1.msra.mxu0 0.0
  %375 = vmatprep.subr.mxu0 0.0
  %376 = vmatpush1.msra.mxu0 0.0
  %377 = vmatprep.subr.mxu0 0.0
  %378 = vmatpush1.msra.mxu0 0.0
  %379 = vmatprep.subr.mxu0 0.0
  %380 = vmatpush1.msra.mxu0 0.0
  %381 = vmatprep.subr.mxu0 0.0
  %382 = vmatpush1.msra.mxu0 0.0
  %383 = vmatprep.subr.mxu0 0.0
  %384 = vmatpush1.msra.mxu0 0.0
  %385 = vmatprep.subr.mxu0 0.0
  %386 = vmatpush1.msra.mxu0 0.0
  %387 = vmatprep.subr.mxu0 0.0
  %388 = vmatpush1.msra.mxu0 0.0
  %389 = vmatprep.subr.mxu0 0.0
  %390 = vmatpush1.msra.mxu0 0.0
  %391 = vmatprep.subr.mxu0 0.0
  %392 = vmatpush1.msra.mxu0 0.0
  %393 = vmatprep.mubr.f32.mxu0 0.0
  %394 = vmatmul.mubr.f32.gmra.mrb[0].mxu0 %v324
  %v395 = vpop.f32.mrb[0].mxu0
  %v396 = vadd.f32 %v321, %v395
  %v397 = vpop.f32.mrb[0].mxu0
  %398 = vmatprep.mubr.f32.mxu0 0.0
  %399 = vmatmul.mubr.f32.gmra.mrb[0].mxu0 %v327
  %v400 = vpop.f32.mrb[0].mxu0
  %v401 = vadd.f32 %v321, %v400
  %v402 = vpop.f32.mrb[0].mxu0
  %403 = vdwg.mxu0
  %v404 = vld [vmem:[%s7] sm:$0xff]
  %v405 = vld [vmem:[%s7 + $0x8] sm:$0xff]
  %v406 = vld [vmem:[%s7 + $0x10] sm:$0xff]
  %v407 = vld [vmem:[%s7 + $0x18] sm:$0xff]
  %v408 = vld [vmem:[%s8] sm:$0x1]
  %411 = vrot.lane.b32.xlu0 %v396, 96
  %v412 = vpop.permute.xlu0 %411
  %413 = vrot.lane.b32.xlu0 %v401, 96
  %v414 = vpop.permute.xlu0 %413
  %vm415 = vcmask 64512
  %v416 = vsel %vm415, %v396, 0
  %v418 = vsel %vm415, %v401, 0
  %v420 = vsel %vm415, %v412, 0
  %v422 = vsel %vm415, %v414, 0
  %424 = vmatprep.subr.mxu0 0.0
  %425 = vmatpush1.xpose.msra.mxu0 %v420
  %426 = vmatprep.subr.mxu0 0.0
  %427 = vmatpush1.xpose.msra.mxu0 %v422
  %428 = vmatprep.subr.mxu0 0.0
  %429 = vmatpush1.xpose.msra.mxu0 0.0
  %430 = vmatprep.subr.mxu0 0.0
  %431 = vmatpush1.xpose.msra.mxu0 0.0
  %432 = vmatprep.subr.mxu0 0.0
  %433 = vmatpush1.xpose.msra.mxu0 0.0
  %434 = vmatprep.subr.mxu0 0.0
  %435 = vmatpush1.xpose.msra.mxu0 0.0
  %436 = vmatprep.subr.mxu0 0.0
  %437 = vmatpush1.xpose.msra.mxu0 0.0
  %438 = vmatprep.subr.mxu0 0.0
  %439 = vmatpush1.xpose.msra.mxu0 0.0
  %440 = vmatprep.subr.mxu0 0.0
  %441 = vmatpush1.xpose.msra.mxu0 0.0
  %442 = vmatprep.subr.mxu0 0.0
  %443 = vmatpush1.xpose.msra.mxu0 0.0
  %444 = vmatprep.subr.mxu0 0.0
  %445 = vmatpush1.xpose.msra.mxu0 0.0
  %446 = vmatprep.subr.mxu0 0.0
  %447 = vmatpush1.xpose.msra.mxu0 0.0
  %448 = vmatprep.subr.mxu0 0.0
  %449 = vmatpush1.xpose.msra.mxu0 0.0
  %450 = vmatprep.subr.mxu0 0.0
  %451 = vmatpush1.xpose.msra.mxu0 0.0
  %452 = vmatprep.subr.mxu0 0.0
  %453 = vmatpush1.xpose.msra.mxu0 0.0
  %454 = vmatprep.subr.mxu0 0.0
  %455 = vmatpush1.xpose.msra.mxu0 0.0
  %456 = vmatprep.subr.mxu0 0.0
  %457 = vmatpush1.xpose.msra.mxu0 0.0
  %458 = vmatprep.subr.mxu0 0.0
  %459 = vmatpush1.xpose.msra.mxu0 0.0
  %460 = vmatprep.subr.mxu0 0.0
  %461 = vmatpush1.xpose.msra.mxu0 0.0
  %462 = vmatprep.subr.mxu0 0.0
  %463 = vmatpush1.xpose.msra.mxu0 0.0
  %464 = vmatprep.subr.mxu0 0.0
  %465 = vmatpush1.xpose.msra.mxu0 0.0
  %466 = vmatprep.subr.mxu0 0.0
  %467 = vmatpush1.xpose.msra.mxu0 0.0
  %468 = vmatprep.subr.mxu0 0.0
  %469 = vmatpush1.xpose.msra.mxu0 0.0
  %470 = vmatprep.subr.mxu0 0.0
  %471 = vmatpush1.xpose.msra.mxu0 0.0
  %472 = vmatprep.subr.mxu0 0.0
  %473 = vmatpush1.xpose.msra.mxu0 0.0
  %474 = vmatprep.subr.mxu0 0.0
  %475 = vmatpush1.xpose.msra.mxu0 0.0
  %476 = vmatprep.subr.mxu0 0.0
  %477 = vmatpush1.xpose.msra.mxu0 0.0
  %478 = vmatprep.subr.mxu0 0.0
  %479 = vmatpush1.xpose.msra.mxu0 0.0
  %480 = vmatprep.subr.mxu0 0.0
  %481 = vmatpush1.xpose.msra.mxu0 0.0
  %482 = vmatprep.subr.mxu0 0.0
  %483 = vmatpush1.xpose.msra.mxu0 0.0
  %484 = vmatprep.subr.mxu0 0.0
  %485 = vmatpush1.xpose.msra.mxu0 0.0
  %486 = vmatprep.subr.mxu0 0.0
  %487 = vmatpush1.xpose.msra.mxu0 0.0
  %488 = vmatprep.mubr.f32.mxu0 0.0
  %489 = vmatmul.mubr.f32.gmra.mrb[0].mxu0 %v416
  %v490 = vpop.f32.mrb[0].mxu0
  %v491 = vadd.f32 0.0, %v490
  %v492 = vpop.f32.mrb[0].mxu0
  %493 = vmatprep.mubr.f32.mxu0 0.0
  %494 = vmatmul.mubr.f32.gmra.mrb[0].mxu0 %v418
  %v495 = vpop.f32.mrb[0].mxu0
  %v496 = vadd.f32 0.0, %v495
  %v497 = vpop.f32.mrb[0].mxu0
  %498 = vdwg.mxu0
  %v499 = vmul.f32 %v491, 0.35355338
  %v500 = vmul.f32 %v496, 0.35355338
  %v501 = vadd.f32 %v499, %v213
  %v502 = vadd.f32 %v500, %v214
  %v503 = vsel %vm106, %v501, -inf
  %504 = vmax.xlane.f32.xlu0 %v503
  %v505 = vpop.xlane.xlu0 %504
  %v506 = vsel %vm106, %v502, -inf
  %507 = vmax.xlane.f32.xlu0 %v506
  %v508 = vpop.xlane.xlu0 %507
  %v509 = vsub.f32 %v501, %v505
  %v510 = vsub.f32 %v502, %v508
  %v511 = vmul.f32 %v509, 1.442695
  %v512 = vpow.pop %v511
  %v513 = vmul.f32 %v510, 1.442695
  %v514 = vpow.pop %v513
  %v515 = vsel %vm106, %v512, 0.0
  %516 = vadd.xlane.f32.xlu0 %v515
  %v517 = vpop.xlane.xlu0 %516
  %v518 = vsel %vm106, %v514, 0.0
  %519 = vadd.xlane.f32.xlu0 %v518
  %v520 = vpop.xlane.xlu0 %519
  %v521 = vrcp.pop %v517
  %v522 = vmul.f32 %v512, %v521
  %v523 = vrcp.pop %v520
  %v524 = vmul.f32 %v514, %v523
  %525 = vrot.lane.b32.xlu0 %v396, 64
  %v526 = vpop.permute.xlu0 %525
  %527 = vrot.lane.b32.xlu0 %v401, 64
  %v528 = vpop.permute.xlu0 %527
  %v532 = vsel %vm106, %v522, 0
  %v535 = vsel %vm106, %v524, 0
  %537 = vmatprep.subr.mxu0 0.0
  %538 = vmatpush1.msra.mxu0 %v526
  %539 = vmatprep.subr.mxu0 0.0
  %540 = vmatpush1.msra.mxu0 %v528
  %541 = vmatprep.subr.mxu0 0.0
  %542 = vmatpush1.msra.mxu0 0.0
  %543 = vmatprep.subr.mxu0 0.0
  %544 = vmatpush1.msra.mxu0 0.0
  %545 = vmatprep.subr.mxu0 0.0
  %546 = vmatpush1.msra.mxu0 0.0
  %547 = vmatprep.subr.mxu0 0.0
  %548 = vmatpush1.msra.mxu0 0.0
  %549 = vmatprep.subr.mxu0 0.0
  %550 = vmatpush1.msra.mxu0 0.0
  %551 = vmatprep.subr.mxu0 0.0
  %552 = vmatpush1.msra.mxu0 0.0
  %553 = vmatprep.subr.mxu0 0.0
  %554 = vmatpush1.msra.mxu0 0.0
  %555 = vmatprep.subr.mxu0 0.0
  %556 = vmatpush1.msra.mxu0 0.0
  %557 = vmatprep.subr.mxu0 0.0
  %558 = vmatpush1.msra.mxu0 0.0
  %559 = vmatprep.subr.mxu0 0.0
  %560 = vmatpush1.msra.mxu0 0.0
  %561 = vmatprep.subr.mxu0 0.0
  %562 = vmatpush1.msra.mxu0 0.0
  %563 = vmatprep.subr.mxu0 0.0
  %564 = vmatpush1.msra.mxu0 0.0
  %565 = vmatprep.subr.mxu0 0.0
  %566 = vmatpush1.msra.mxu0 0.0
  %567 = vmatprep.subr.mxu0 0.0
  %568 = vmatpush1.msra.mxu0 0.0
  %569 = vmatprep.subr.mxu0 0.0
  %570 = vmatpush1.msra.mxu0 0.0
  %571 = vmatprep.subr.mxu0 0.0
  %572 = vmatpush1.msra.mxu0 0.0
  %573 = vmatprep.subr.mxu0 0.0
  %574 = vmatpush1.msra.mxu0 0.0
  %575 = vmatprep.subr.mxu0 0.0
  %576 = vmatpush1.msra.mxu0 0.0
  %577 = vmatprep.subr.mxu0 0.0
  %578 = vmatpush1.msra.mxu0 0.0
  %579 = vmatprep.subr.mxu0 0.0
  %580 = vmatpush1.msra.mxu0 0.0
  %581 = vmatprep.subr.mxu0 0.0
  %582 = vmatpush1.msra.mxu0 0.0
  %583 = vmatprep.subr.mxu0 0.0
  %584 = vmatpush1.msra.mxu0 0.0
  %585 = vmatprep.subr.mxu0 0.0
  %586 = vmatpush1.msra.mxu0 0.0
  %587 = vmatprep.subr.mxu0 0.0
  %588 = vmatpush1.msra.mxu0 0.0
  %589 = vmatprep.subr.mxu0 0.0
  %590 = vmatpush1.msra.mxu0 0.0
  %591 = vmatprep.subr.mxu0 0.0
  %592 = vmatpush1.msra.mxu0 0.0
  %593 = vmatprep.subr.mxu0 0.0
  %594 = vmatpush1.msra.mxu0 0.0
  %595 = vmatprep.subr.mxu0 0.0
  %596 = vmatpush1.msra.mxu0 0.0
  %597 = vmatprep.subr.mxu0 0.0
  %598 = vmatpush1.msra.mxu0 0.0
  %599 = vmatprep.subr.mxu0 0.0
  %600 = vmatpush1.msra.mxu0 0.0
  %601 = vmatprep.mubr.f32.mxu0 0.0
  %602 = vmatmul.mubr.f32.gmra.mrb[0].mxu0 %v532
  %v603 = vpop.f32.mrb[0].mxu0
  %v604 = vadd.f32 0.0, %v603
  %v605 = vpop.f32.mrb[0].mxu0
  %606 = vmatprep.mubr.f32.mxu0 0.0
  %607 = vmatmul.mubr.f32.gmra.mrb[0].mxu0 %v535
  %v608 = vpop.f32.mrb[0].mxu0
  %v609 = vadd.f32 0.0, %v608
  %v610 = vpop.f32.mrb[0].mxu0
  %611 = vdwg.mxu0
  %612 = vrot.lane.b32.xlu0 %v396, 120
  %v613 = vpop.permute.xlu0 %612
  %614 = vrot.lane.b32.xlu0 %v401, 120
  %v615 = vpop.permute.xlu0 %614
  %616 = vrot.lane.b32.xlu0 %v396, 88
  %v617 = vpop.permute.xlu0 %616
  %618 = vrot.lane.b32.xlu0 %v401, 88
  %v619 = vpop.permute.xlu0 %618
  %v620 = vsel %vm415, %v613, 0
  %v622 = vsel %vm415, %v615, 0
  %v624 = vsel %vm415, %v617, 0
  %v626 = vsel %vm415, %v619, 0
  %628 = vmatprep.subr.mxu0 0.0
  %629 = vmatpush1.xpose.msra.mxu0 %v624
  %630 = vmatprep.subr.mxu0 0.0
  %631 = vmatpush1.xpose.msra.mxu0 %v626
  %632 = vmatprep.subr.mxu0 0.0
  %633 = vmatpush1.xpose.msra.mxu0 0.0
  %634 = vmatprep.subr.mxu0 0.0
  %635 = vmatpush1.xpose.msra.mxu0 0.0
  %636 = vmatprep.subr.mxu0 0.0
  %637 = vmatpush1.xpose.msra.mxu0 0.0
  %638 = vmatprep.subr.mxu0 0.0
  %639 = vmatpush1.xpose.msra.mxu0 0.0
  %640 = vmatprep.subr.mxu0 0.0
  %641 = vmatpush1.xpose.msra.mxu0 0.0
  %642 = vmatprep.subr.mxu0 0.0
  %643 = vmatpush1.xpose.msra.mxu0 0.0
  %644 = vmatprep.subr.mxu0 0.0
  %645 = vmatpush1.xpose.msra.mxu0 0.0
  %646 = vmatprep.subr.mxu0 0.0
  %647 = vmatpush1.xpose.msra.mxu0 0.0
  %648 = vmatprep.subr.mxu0 0.0
  %649 = vmatpush1.xpose.msra.mxu0 0.0
  %650 = vmatprep.subr.mxu0 0.0
  %651 = vmatpush1.xpose.msra.mxu0 0.0
  %652 = vmatprep.subr.mxu0 0.0
  %653 = vmatpush1.xpose.msra.mxu0 0.0
  %654 = vmatprep.subr.mxu0 0.0
  %655 = vmatpush1.xpose.msra.mxu0 0.0
  %656 = vmatprep.subr.mxu0 0.0
  %657 = vmatpush1.xpose.msra.mxu0 0.0
  %658 = vmatprep.subr.mxu0 0.0
  %659 = vmatpush1.xpose.msra.mxu0 0.0
  %660 = vmatprep.subr.mxu0 0.0
  %661 = vmatpush1.xpose.msra.mxu0 0.0
  %662 = vmatprep.subr.mxu0 0.0
  %663 = vmatpush1.xpose.msra.mxu0 0.0
  %664 = vmatprep.subr.mxu0 0.0
  %665 = vmatpush1.xpose.msra.mxu0 0.0
  %666 = vmatprep.subr.mxu0 0.0
  %667 = vmatpush1.xpose.msra.mxu0 0.0
  %668 = vmatprep.subr.mxu0 0.0
  %669 = vmatpush1.xpose.msra.mxu0 0.0
  %670 = vmatprep.subr.mxu0 0.0
  %671 = vmatpush1.xpose.msra.mxu0 0.0
  %672 = vmatprep.subr.mxu0 0.0
  %673 = vmatpush1.xpose.msra.mxu0 0.0
  %674 = vmatprep.subr.mxu0 0.0
  %675 = vmatpush1.xpose.msra.mxu0 0.0
  %676 = vmatprep.subr.mxu0 0.0
  %677 = vmatpush1.xpose.msra.mxu0 0.0
  %678 = vmatprep.subr.mxu0 0.0
  %679 = vmatpush1.xpose.msra.mxu0 0.0
  %680 = vmatprep.subr.mxu0 0.0
  %681 = vmatpush1.xpose.msra.mxu0 0.0
  %682 = vmatprep.subr.mxu0 0.0
  %683 = vmatpush1.xpose.msra.mxu0 0.0
  %684 = vmatprep.subr.mxu0 0.0
  %685 = vmatpush1.xpose.msra.mxu0 0.0
  %686 = vmatprep.subr.mxu0 0.0
  %687 = vmatpush1.xpose.msra.mxu0 0.0
  %688 = vmatprep.subr.mxu0 0.0
  %689 = vmatpush1.xpose.msra.mxu0 0.0
  %690 = vmatprep.subr.mxu0 0.0
  %691 = vmatpush1.xpose.msra.mxu0 0.0
  %692 = vmatprep.mubr.f32.mxu0 0.0
  %693 = vmatmul.mubr.f32.gmra.mrb[0].mxu0 %v620
  %v694 = vpop.f32.mrb[0].mxu0
  %v695 = vadd.f32 0.0, %v694
  %v696 = vpop.f32.mrb[0].mxu0
  %697 = vmatprep.mubr.f32.mxu0 0.0
  %698 = vmatmul.mubr.f32.gmra.mrb[0].mxu0 %v622
  %v699 = vpop.f32.mrb[0].mxu0
  %v700 = vadd.f32 0.0, %v699
  %v701 = vpop.f32.mrb[0].mxu0
  %702 = vdwg.mxu0
  %v703 = vmul.f32 %v695, 0.35355338
  %v704 = vmul.f32 %v700, 0.35355338
  %v705 = vadd.f32 %v703, %v213
  %v706 = vadd.f32 %v704, %v214
  %v707 = vsel %vm106, %v705, -inf
  %708 = vmax.xlane.f32.xlu0 %v707
  %v709 = vpop.xlane.xlu0 %708
  %v710 = vsel %vm106, %v706, -inf
  %711 = vmax.xlane.f32.xlu0 %v710
  %v712 = vpop.xlane.xlu0 %711
  %v713 = vsub.f32 %v705, %v709
  %v714 = vsub.f32 %v706, %v712
  %v715 = vmul.f32 %v713, 1.442695
  %v716 = vpow.pop %v715
  %v717 = vmul.f32 %v714, 1.442695
  %v718 = vpow.pop %v717
  %v719 = vsel %vm106, %v716, 0.0
  %720 = vadd.xlane.f32.xlu0 %v719
  %v721 = vpop.xlane.xlu0 %720
  %v722 = vsel %vm106, %v718, 0.0
  %723 = vadd.xlane.f32.xlu0 %v722
  %v724 = vpop.xlane.xlu0 %723
  %v725 = vrcp.pop %v721
  %v726 = vmul.f32 %v716, %v725
  %v727 = vrcp.pop %v724
  %v728 = vmul.f32 %v718, %v727
  %729 = vrot.lane.b32.xlu0 %v396, 56
  %v730 = vpop.permute.xlu0 %729
  %731 = vrot.lane.b32.xlu0 %v401, 56
  %v732 = vpop.permute.xlu0 %731
  %v736 = vsel %vm106, %v726, 0
  %v739 = vsel %vm106, %v728, 0
  %741 = vmatprep.subr.mxu0 0.0
  %742 = vmatpush1.msra.mxu0 %v730
  %743 = vmatprep.subr.mxu0 0.0
  %744 = vmatpush1.msra.mxu0 %v732
  %745 = vmatprep.subr.mxu0 0.0
  %746 = vmatpush1.msra.mxu0 0.0
  %747 = vmatprep.subr.mxu0 0.0
  %748 = vmatpush1.msra.mxu0 0.0
  %749 = vmatprep.subr.mxu0 0.0
  %750 = vmatpush1.msra.mxu0 0.0
  %751 = vmatprep.subr.mxu0 0.0
  %752 = vmatpush1.msra.mxu0 0.0
  %753 = vmatprep.subr.mxu0 0.0
  %754 = vmatpush1.msra.mxu0 0.0
  %755 = vmatprep.subr.mxu0 0.0
  %756 = vmatpush1.msra.mxu0 0.0
  %757 = vmatprep.subr.mxu0 0.0
  %758 = vmatpush1.msra.mxu0 0.0
  %759 = vmatprep.subr.mxu0 0.0
  %760 = vmatpush1.msra.mxu0 0.0
  %761 = vmatprep.subr.mxu0 0.0
  %762 = vmatpush1.msra.mxu0 0.0
  %763 = vmatprep.subr.mxu0 0.0
  %764 = vmatpush1.msra.mxu0 0.0
  %765 = vmatprep.subr.mxu0 0.0
  %766 = vmatpush1.msra.mxu0 0.0
  %767 = vmatprep.subr.mxu0 0.0
  %768 = vmatpush1.msra.mxu0 0.0
  %769 = vmatprep.subr.mxu0 0.0
  %770 = vmatpush1.msra.mxu0 0.0
  %771 = vmatprep.subr.mxu0 0.0
  %772 = vmatpush1.msra.mxu0 0.0
  %773 = vmatprep.subr.mxu0 0.0
  %774 = vmatpush1.msra.mxu0 0.0
  %775 = vmatprep.subr.mxu0 0.0
  %776 = vmatpush1.msra.mxu0 0.0
  %777 = vmatprep.subr.mxu0 0.0
  %778 = vmatpush1.msra.mxu0 0.0
  %779 = vmatprep.subr.mxu0 0.0
  %780 = vmatpush1.msra.mxu0 0.0
  %781 = vmatprep.subr.mxu0 0.0
  %782 = vmatpush1.msra.mxu0 0.0
  %783 = vmatprep.subr.mxu0 0.0
  %784 = vmatpush1.msra.mxu0 0.0
  %785 = vmatprep.subr.mxu0 0.0
  %786 = vmatpush1.msra.mxu0 0.0
  %787 = vmatprep.subr.mxu0 0.0
  %788 = vmatpush1.msra.mxu0 0.0
  %789 = vmatprep.subr.mxu0 0.0
  %790 = vmatpush1.msra.mxu0 0.0
  %791 = vmatprep.subr.mxu0 0.0
  %792 = vmatpush1.msra.mxu0 0.0
  %793 = vmatprep.subr.mxu0 0.0
  %794 = vmatpush1.msra.mxu0 0.0
  %795 = vmatprep.subr.mxu0 0.0
  %796 = vmatpush1.msra.mxu0 0.0
  %797 = vmatprep.subr.mxu0 0.0
  %798 = vmatpush1.msra.mxu0 0.0
  %799 = vmatprep.subr.mxu0 0.0
  %800 = vmatpush1.msra.mxu0 0.0
  %801 = vmatprep.subr.mxu0 0.0
  %802 = vmatpush1.msra.mxu0 0.0
  %803 = vmatprep.subr.mxu0 0.0
  %804 = vmatpush1.msra.mxu0 0.0
  %805 = vmatprep.mubr.f32.mxu0 0.0
  %806 = vmatmul.mubr.f32.gmra.mrb[0].mxu0 %v736
  %v807 = vpop.f32.mrb[0].mxu0
  %v808 = vadd.f32 0.0, %v807
  %v809 = vpop.f32.mrb[0].mxu0
  %810 = vmatprep.mubr.f32.mxu0 0.0
  %811 = vmatmul.mubr.f32.gmra.mrb[0].mxu0 %v739
  %v812 = vpop.f32.mrb[0].mxu0
  %v813 = vadd.f32 0.0, %v812
  %v814 = vpop.f32.mrb[0].mxu0
  %815 = vdwg.mxu0
  %816 = vrot.lane.b32.xlu0 %v396, 112
  %v817 = vpop.permute.xlu0 %816
  %818 = vrot.lane.b32.xlu0 %v401, 112
  %v819 = vpop.permute.xlu0 %818
  %820 = vrot.lane.b32.xlu0 %v396, 80
  %v821 = vpop.permute.xlu0 %820
  %822 = vrot.lane.b32.xlu0 %v401, 80
  %v823 = vpop.permute.xlu0 %822
  %v824 = vsel %vm415, %v817, 0
  %v826 = vsel %vm415, %v819, 0
  %v828 = vsel %vm415, %v821, 0
  %v830 = vsel %vm415, %v823, 0
  %832 = vmatprep.subr.mxu0 0.0
  %833 = vmatpush1.xpose.msra.mxu0 %v828
  %834 = vmatprep.subr.mxu0 0.0
  %835 = vmatpush1.xpose.msra.mxu0 %v830
  %836 = vmatprep.subr.mxu0 0.0
  %837 = vmatpush1.xpose.msra.mxu0 0.0
  %838 = vmatprep.subr.mxu0 0.0
  %839 = vmatpush1.xpose.msra.mxu0 0.0
  %840 = vmatprep.subr.mxu0 0.0
  %841 = vmatpush1.xpose.msra.mxu0 0.0
  %842 = vmatprep.subr.mxu0 0.0
  %843 = vmatpush1.xpose.msra.mxu0 0.0
  %844 = vmatprep.subr.mxu0 0.0
  %845 = vmatpush1.xpose.msra.mxu0 0.0
  %846 = vmatprep.subr.mxu0 0.0
  %847 = vmatpush1.xpose.msra.mxu0 0.0
  %848 = vmatprep.subr.mxu0 0.0
  %849 = vmatpush1.xpose.msra.mxu0 0.0
  %850 = vmatprep.subr.mxu0 0.0
  %851 = vmatpush1.xpose.msra.mxu0 0.0
  %852 = vmatprep.subr.mxu0 0.0
  %853 = vmatpush1.xpose.msra.mxu0 0.0
  %854 = vmatprep.subr.mxu0 0.0
  %855 = vmatpush1.xpose.msra.mxu0 0.0
  %856 = vmatprep.subr.mxu0 0.0
  %857 = vmatpush1.xpose.msra.mxu0 0.0
  %858 = vmatprep.subr.mxu0 0.0
  %859 = vmatpush1.xpose.msra.mxu0 0.0
  %860 = vmatprep.subr.mxu0 0.0
  %861 = vmatpush1.xpose.msra.mxu0 0.0
  %862 = vmatprep.subr.mxu0 0.0
  %863 = vmatpush1.xpose.msra.mxu0 0.0
  %864 = vmatprep.subr.mxu0 0.0
  %865 = vmatpush1.xpose.msra.mxu0 0.0
  %866 = vmatprep.subr.mxu0 0.0
  %867 = vmatpush1.xpose.msra.mxu0 0.0
  %868 = vmatprep.subr.mxu0 0.0
  %869 = vmatpush1.xpose.msra.mxu0 0.0
  %870 = vmatprep.subr.mxu0 0.0
  %871 = vmatpush1.xpose.msra.mxu0 0.0
  %872 = vmatprep.subr.mxu0 0.0
  %873 = vmatpush1.xpose.msra.mxu0 0.0
  %874 = vmatprep.subr.mxu0 0.0
  %875 = vmatpush1.xpose.msra.mxu0 0.0
  %876 = vmatprep.subr.mxu0 0.0
  %877 = vmatpush1.xpose.msra.mxu0 0.0
  %878 = vmatprep.subr.mxu0 0.0
  %879 = vmatpush1.xpose.msra.mxu0 0.0
  %880 = vmatprep.subr.mxu0 0.0
  %881 = vmatpush1.xpose.msra.mxu0 0.0
  %882 = vmatprep.subr.mxu0 0.0
  %883 = vmatpush1.xpose.msra.mxu0 0.0
  %884 = vmatprep.subr.mxu0 0.0
  %885 = vmatpush1.xpose.msra.mxu0 0.0
  %886 = vmatprep.subr.mxu0 0.0
  %887 = vmatpush1.xpose.msra.mxu0 0.0
  %888 = vmatprep.subr.mxu0 0.0
  %889 = vmatpush1.xpose.msra.mxu0 0.0
  %890 = vmatprep.subr.mxu0 0.0
  %891 = vmatpush1.xpose.msra.mxu0 0.0
  %892 = vmatprep.subr.mxu0 0.0
  %893 = vmatpush1.xpose.msra.mxu0 0.0
  %894 = vmatprep.subr.mxu0 0.0
  %895 = vmatpush1.xpose.msra.mxu0 0.0
  %896 = vmatprep.mubr.f32.mxu0 0.0
  %897 = vmatmul.mubr.f32.gmra.mrb[0].mxu0 %v824
  %v898 = vpop.f32.mrb[0].mxu0
  %v899 = vadd.f32 0.0, %v898
  %v900 = vpop.f32.mrb[0].mxu0
  %901 = vmatprep.mubr.f32.mxu0 0.0
  %902 = vmatmul.mubr.f32.gmra.mrb[0].mxu0 %v826
  %v903 = vpop.f32.mrb[0].mxu0
  %v904 = vadd.f32 0.0, %v903
  %v905 = vpop.f32.mrb[0].mxu0
  %906 = vdwg.mxu0
  %v907 = vmul.f32 %v899, 0.35355338
  %v908 = vmul.f32 %v904, 0.35355338
  %v909 = vadd.f32 %v907, %v213
  %v910 = vadd.f32 %v908, %v214
  %v911 = vsel %vm106, %v909, -inf
  %912 = vmax.xlane.f32.xlu0 %v911
  %v913 = vpop.xlane.xlu0 %912
  %v914 = vsel %vm106, %v910, -inf
  %915 = vmax.xlane.f32.xlu0 %v914
  %v916 = vpop.xlane.xlu0 %915
  %v917 = vsub.f32 %v909, %v913
  %v918 = vsub.f32 %v910, %v916
  %v919 = vmul.f32 %v917, 1.442695
  %v920 = vpow.pop %v919
  %v921 = vmul.f32 %v918, 1.442695
  %v922 = vpow.pop %v921
  %v923 = vsel %vm106, %v920, 0.0
  %924 = vadd.xlane.f32.xlu0 %v923
  %v925 = vpop.xlane.xlu0 %924
  %v926 = vsel %vm106, %v922, 0.0
  %927 = vadd.xlane.f32.xlu0 %v926
  %v928 = vpop.xlane.xlu0 %927
  %v929 = vrcp.pop %v925
  %v930 = vmul.f32 %v920, %v929
  %v931 = vrcp.pop %v928
  %v932 = vmul.f32 %v922, %v931
  %933 = vrot.lane.b32.xlu0 %v396, 48
  %v934 = vpop.permute.xlu0 %933
  %935 = vrot.lane.b32.xlu0 %v401, 48
  %v936 = vpop.permute.xlu0 %935
  %v940 = vsel %vm106, %v930, 0
  %v943 = vsel %vm106, %v932, 0
  %945 = vmatprep.subr.mxu0 0.0
  %946 = vmatpush1.msra.mxu0 %v934
  %947 = vmatprep.subr.mxu0 0.0
  %948 = vmatpush1.msra.mxu0 %v936
  %949 = vmatprep.subr.mxu0 0.0
  %950 = vmatpush1.msra.mxu0 0.0
  %951 = vmatprep.subr.mxu0 0.0
  %952 = vmatpush1.msra.mxu0 0.0
  %953 = vmatprep.subr.mxu0 0.0
  %954 = vmatpush1.msra.mxu0 0.0
  %955 = vmatprep.subr.mxu0 0.0
  %956 = vmatpush1.msra.mxu0 0.0
  %957 = vmatprep.subr.mxu0 0.0
  %958 = vmatpush1.msra.mxu0 0.0
  %959 = vmatprep.subr.mxu0 0.0
  %960 = vmatpush1.msra.mxu0 0.0
  %961 = vmatprep.subr.mxu0 0.0
  %962 = vmatpush1.msra.mxu0 0.0
  %963 = vmatprep.subr.mxu0 0.0
  %964 = vmatpush1.msra.mxu0 0.0
  %965 = vmatprep.subr.mxu0 0.0
  %966 = vmatpush1.msra.mxu0 0.0
  %967 = vmatprep.subr.mxu0 0.0
  %968 = vmatpush1.msra.mxu0 0.0
  %969 = vmatprep.subr.mxu0 0.0
  %970 = vmatpush1.msra.mxu0 0.0
  %971 = vmatprep.subr.mxu0 0.0
  %972 = vmatpush1.msra.mxu0 0.0
  %973 = vmatprep.subr.mxu0 0.0
  %974 = vmatpush1.msra.mxu0 0.0
  %975 = vmatprep.subr.mxu0 0.0
  %976 = vmatpush1.msra.mxu0 0.0
  %977 = vmatprep.subr.mxu0 0.0
  %978 = vmatpush1.msra.mxu0 0.0
  %979 = vmatprep.subr.mxu0 0.0
  %980 = vmatpush1.msra.mxu0 0.0
  %981 = vmatprep.subr.mxu0 0.0
  %982 = vmatpush1.msra.mxu0 0.0
  %983 = vmatprep.subr.mxu0 0.0
  %984 = vmatpush1.msra.mxu0 0.0
  %985 = vmatprep.subr.mxu0 0.0
  %986 = vmatpush1.msra.mxu0 0.0
  %987 = vmatprep.subr.mxu0 0.0
  %988 = vmatpush1.msra.mxu0 0.0
  %989 = vmatprep.subr.mxu0 0.0
  %990 = vmatpush1.msra.mxu0 0.0
  %991 = vmatprep.subr.mxu0 0.0
  %992 = vmatpush1.msra.mxu0 0.0
  %993 = vmatprep.subr.mxu0 0.0
  %994 = vmatpush1.msra.mxu0 0.0
  %995 = vmatprep.subr.mxu0 0.0
  %996 = vmatpush1.msra.mxu0 0.0
  %997 = vmatprep.subr.mxu0 0.0
  %998 = vmatpush1.msra.mxu0 0.0
  %999 = vmatprep.subr.mxu0 0.0
  %1000 = vmatpush1.msra.mxu0 0.0
  %1001 = vmatprep.subr.mxu0 0.0
  %1002 = vmatpush1.msra.mxu0 0.0
  %1003 = vmatprep.subr.mxu0 0.0
  %1004 = vmatpush1.msra.mxu0 0.0
  %1005 = vmatprep.subr.mxu0 0.0
  %1006 = vmatpush1.msra.mxu0 0.0
  %1007 = vmatprep.subr.mxu0 0.0
  %1008 = vmatpush1.msra.mxu0 0.0
  %1009 = vmatprep.mubr.f32.mxu0 0.0
  %1010 = vmatmul.mubr.f32.gmra.mrb[0].mxu0 %v940
  %v1011 = vpop.f32.mrb[0].mxu0
  %v1012 = vadd.f32 0.0, %v1011
  %v1013 = vpop.f32.mrb[0].mxu0
  %1014 = vmatprep.mubr.f32.mxu0 0.0
  %1015 = vmatmul.mubr.f32.gmra.mrb[0].mxu0 %v943
  %v1016 = vpop.f32.mrb[0].mxu0
  %v1017 = vadd.f32 0.0, %v1016
  %v1018 = vpop.f32.mrb[0].mxu0
  %1019 = vdwg.mxu0
  %1020 = vrot.lane.b32.xlu0 %v396, 104
  %v1021 = vpop.permute.xlu0 %1020
  %1022 = vrot.lane.b32.xlu0 %v401, 104
  %v1023 = vpop.permute.xlu0 %1022
  %1024 = vrot.lane.b32.xlu0 %v396, 72
  %v1025 = vpop.permute.xlu0 %1024
  %1026 = vrot.lane.b32.xlu0 %v401, 72
  %v1027 = vpop.permute.xlu0 %1026
  %v1028 = vsel %vm415, %v1021, 0
  %v1030 = vsel %vm415, %v1023, 0
  %v1032 = vsel %vm415, %v1025, 0
  %v1034 = vsel %vm415, %v1027, 0
  %1036 = vmatprep.subr.mxu0 0.0
  %1037 = vmatpush1.xpose.msra.mxu0 %v1032
  %1038 = vmatprep.subr.mxu0 0.0
  %1039 = vmatpush1.xpose.msra.mxu0 %v1034
  %1040 = vmatprep.subr.mxu0 0.0
  %1041 = vmatpush1.xpose.msra.mxu0 0.0
  %1042 = vmatprep.subr.mxu0 0.0
  %1043 = vmatpush1.xpose.msra.mxu0 0.0
  %1044 = vmatprep.subr.mxu0 0.0
  %1045 = vmatpush1.xpose.msra.mxu0 0.0
  %1046 = vmatprep.subr.mxu0 0.0
  %1047 = vmatpush1.xpose.msra.mxu0 0.0
  %1048 = vmatprep.subr.mxu0 0.0
  %1049 = vmatpush1.xpose.msra.mxu0 0.0
  %1050 = vmatprep.subr.mxu0 0.0
  %1051 = vmatpush1.xpose.msra.mxu0 0.0
  %1052 = vmatprep.subr.mxu0 0.0
  %1053 = vmatpush1.xpose.msra.mxu0 0.0
  %1054 = vmatprep.subr.mxu0 0.0
  %1055 = vmatpush1.xpose.msra.mxu0 0.0
  %1056 = vmatprep.subr.mxu0 0.0
  %1057 = vmatpush1.xpose.msra.mxu0 0.0
  %1058 = vmatprep.subr.mxu0 0.0
  %1059 = vmatpush1.xpose.msra.mxu0 0.0
  %1060 = vmatprep.subr.mxu0 0.0
  %1061 = vmatpush1.xpose.msra.mxu0 0.0
  %1062 = vmatprep.subr.mxu0 0.0
  %1063 = vmatpush1.xpose.msra.mxu0 0.0
  %1064 = vmatprep.subr.mxu0 0.0
  %1065 = vmatpush1.xpose.msra.mxu0 0.0
  %1066 = vmatprep.subr.mxu0 0.0
  %1067 = vmatpush1.xpose.msra.mxu0 0.0
  %1068 = vmatprep.subr.mxu0 0.0
  %1069 = vmatpush1.xpose.msra.mxu0 0.0
  %1070 = vmatprep.subr.mxu0 0.0
  %1071 = vmatpush1.xpose.msra.mxu0 0.0
  %1072 = vmatprep.subr.mxu0 0.0
  %1073 = vmatpush1.xpose.msra.mxu0 0.0
  %1074 = vmatprep.subr.mxu0 0.0
  %1075 = vmatpush1.xpose.msra.mxu0 0.0
  %1076 = vmatprep.subr.mxu0 0.0
  %1077 = vmatpush1.xpose.msra.mxu0 0.0
  %1078 = vmatprep.subr.mxu0 0.0
  %1079 = vmatpush1.xpose.msra.mxu0 0.0
  %1080 = vmatprep.subr.mxu0 0.0
  %1081 = vmatpush1.xpose.msra.mxu0 0.0
  %1082 = vmatprep.subr.mxu0 0.0
  %1083 = vmatpush1.xpose.msra.mxu0 0.0
  %1084 = vmatprep.subr.mxu0 0.0
  %1085 = vmatpush1.xpose.msra.mxu0 0.0
  %1086 = vmatprep.subr.mxu0 0.0
  %1087 = vmatpush1.xpose.msra.mxu0 0.0
  %1088 = vmatprep.subr.mxu0 0.0
  %1089 = vmatpush1.xpose.msra.mxu0 0.0
  %1090 = vmatprep.subr.mxu0 0.0
  %1091 = vmatpush1.xpose.msra.mxu0 0.0
  %1092 = vmatprep.subr.mxu0 0.0
  %1093 = vmatpush1.xpose.msra.mxu0 0.0
  %1094 = vmatprep.subr.mxu0 0.0
  %1095 = vmatpush1.xpose.msra.mxu0 0.0
  %1096 = vmatprep.subr.mxu0 0.0
  %1097 = vmatpush1.xpose.msra.mxu0 0.0
  %1098 = vmatprep.subr.mxu0 0.0
  %1099 = vmatpush1.xpose.msra.mxu0 0.0
  %1100 = vmatprep.mubr.f32.mxu0 0.0
  %1101 = vmatmul.mubr.f32.gmra.mrb[0].mxu0 %v1028
  %v1102 = vpop.f32.mrb[0].mxu0
  %v1103 = vadd.f32 0.0, %v1102
  %v1104 = vpop.f32.mrb[0].mxu0
  %1105 = vmatprep.mubr.f32.mxu0 0.0
  %1106 = vmatmul.mubr.f32.gmra.mrb[0].mxu0 %v1030
  %v1107 = vpop.f32.mrb[0].mxu0
  %v1108 = vadd.f32 0.0, %v1107
  %v1109 = vpop.f32.mrb[0].mxu0
  %1110 = vdwg.mxu0
  %v1111 = vmul.f32 %v1103, 0.35355338
  %v1112 = vmul.f32 %v1108, 0.35355338
  %v1113 = vadd.f32 %v1111, %v213
  %v1114 = vadd.f32 %v1112, %v214
  %v1115 = vsel %vm106, %v1113, -inf
  %1116 = vmax.xlane.f32.xlu0 %v1115
  %v1117 = vpop.xlane.xlu0 %1116
  %v1118 = vsel %vm106, %v1114, -inf
  %1119 = vmax.xlane.f32.xlu0 %v1118
  %v1120 = vpop.xlane.xlu0 %1119
  %v1121 = vsub.f32 %v1113, %v1117
  %v1122 = vsub.f32 %v1114, %v1120
  %v1123 = vmul.f32 %v1121, 1.442695
  %v1124 = vpow.pop %v1123
  %v1125 = vmul.f32 %v1122, 1.442695
  %v1126 = vpow.pop %v1125
  %v1127 = vsel %vm106, %v1124, 0.0
  %1128 = vadd.xlane.f32.xlu0 %v1127
  %v1129 = vpop.xlane.xlu0 %1128
  %v1130 = vsel %vm106, %v1126, 0.0
  %1131 = vadd.xlane.f32.xlu0 %v1130
  %v1132 = vpop.xlane.xlu0 %1131
  %v1133 = vrcp.pop %v1129
  %v1134 = vmul.f32 %v1124, %v1133
  %v1135 = vrcp.pop %v1132
  %v1136 = vmul.f32 %v1126, %v1135
  %1137 = vrot.lane.b32.xlu0 %v396, 40
  %v1138 = vpop.permute.xlu0 %1137
  %1139 = vrot.lane.b32.xlu0 %v401, 40
  %v1140 = vpop.permute.xlu0 %1139
  %v1144 = vsel %vm106, %v1134, 0
  %v1147 = vsel %vm106, %v1136, 0
  %1149 = vmatprep.subr.mxu0 0.0
  %1150 = vmatpush1.msra.mxu0 %v1138
  %1151 = vmatprep.subr.mxu0 0.0
  %1152 = vmatpush1.msra.mxu0 %v1140
  %1153 = vmatprep.subr.mxu0 0.0
  %1154 = vmatpush1.msra.mxu0 0.0
  %1155 = vmatprep.subr.mxu0 0.0
  %1156 = vmatpush1.msra.mxu0 0.0
  %1157 = vmatprep.subr.mxu0 0.0
  %1158 = vmatpush1.msra.mxu0 0.0
  %1159 = vmatprep.subr.mxu0 0.0
  %1160 = vmatpush1.msra.mxu0 0.0
  %1161 = vmatprep.subr.mxu0 0.0
  %1162 = vmatpush1.msra.mxu0 0.0
  %1163 = vmatprep.subr.mxu0 0.0
  %1164 = vmatpush1.msra.mxu0 0.0
  %1165 = vmatprep.subr.mxu0 0.0
  %1166 = vmatpush1.msra.mxu0 0.0
  %1167 = vmatprep.subr.mxu0 0.0
  %1168 = vmatpush1.msra.mxu0 0.0
  %1169 = vmatprep.subr.mxu0 0.0
  %1170 = vmatpush1.msra.mxu0 0.0
  %1171 = vmatprep.subr.mxu0 0.0
  %1172 = vmatpush1.msra.mxu0 0.0
  %1173 = vmatprep.subr.mxu0 0.0
  %1174 = vmatpush1.msra.mxu0 0.0
  %1175 = vmatprep.subr.mxu0 0.0
  %1176 = vmatpush1.msra.mxu0 0.0
  %1177 = vmatprep.subr.mxu0 0.0
  %1178 = vmatpush1.msra.mxu0 0.0
  %1179 = vmatprep.subr.mxu0 0.0
  %1180 = vmatpush1.msra.mxu0 0.0
  %1181 = vmatprep.subr.mxu0 0.0
  %1182 = vmatpush1.msra.mxu0 0.0
  %1183 = vmatprep.subr.mxu0 0.0
  %1184 = vmatpush1.msra.mxu0 0.0
  %1185 = vmatprep.subr.mxu0 0.0
  %1186 = vmatpush1.msra.mxu0 0.0
  %1187 = vmatprep.subr.mxu0 0.0
  %1188 = vmatpush1.msra.mxu0 0.0
  %1189 = vmatprep.subr.mxu0 0.0
  %1190 = vmatpush1.msra.mxu0 0.0
  %1191 = vmatprep.subr.mxu0 0.0
  %1192 = vmatpush1.msra.mxu0 0.0
  %1193 = vmatprep.subr.mxu0 0.0
  %1194 = vmatpush1.msra.mxu0 0.0
  %1195 = vmatprep.subr.mxu0 0.0
  %1196 = vmatpush1.msra.mxu0 0.0
  %1197 = vmatprep.subr.mxu0 0.0
  %1198 = vmatpush1.msra.mxu0 0.0
  %1199 = vmatprep.subr.mxu0 0.0
  %1200 = vmatpush1.msra.mxu0 0.0
  %1201 = vmatprep.subr.mxu0 0.0
  %1202 = vmatpush1.msra.mxu0 0.0
  %1203 = vmatprep.subr.mxu0 0.0
  %1204 = vmatpush1.msra.mxu0 0.0
  %1205 = vmatprep.subr.mxu0 0.0
  %1206 = vmatpush1.msra.mxu0 0.0
  %1207 = vmatprep.subr.mxu0 0.0
  %1208 = vmatpush1.msra.mxu0 0.0
  %1209 = vmatprep.subr.mxu0 0.0
  %1210 = vmatpush1.msra.mxu0 0.0
  %1211 = vmatprep.subr.mxu0 0.0
  %1212 = vmatpush1.msra.mxu0 0.0
  %1213 = vmatprep.mubr.f32.mxu0 0.0
  %1214 = vmatmul.mubr.f32.gmra.mrb[0].mxu0 %v1144
  %v1215 = vpop.f32.mrb[0].mxu0
  %v1216 = vadd.f32 0.0, %v1215
  %v1217 = vpop.f32.mrb[0].mxu0
  %1218 = vmatprep.mubr.f32.mxu0 0.0
  %1219 = vmatmul.mubr.f32.gmra.mrb[0].mxu0 %v1147
  %v1220 = vpop.f32.mrb[0].mxu0
  %v1221 = vadd.f32 0.0, %v1220
  %v1222 = vpop.f32.mrb[0].mxu0
  %1223 = vdwg.mxu0
  %1226 = vrot.lane.b32.xlu0 %v808, 8
  %v1227 = vpop.permute.xlu0 %1226
  %1228 = vrot.lane.b32.xlu0 %v813, 8
  %v1229 = vpop.permute.xlu0 %1228
  %1234 = vrot.lane.b32.xlu0 %v1012, 16
  %v1235 = vpop.permute.xlu0 %1234
  %1236 = vrot.lane.b32.xlu0 %v1017, 16
  %v1237 = vpop.permute.xlu0 %1236
  %1242 = vrot.lane.b32.xlu0 %v1216, 24
  %v1243 = vpop.permute.xlu0 %1242
  %1244 = vrot.lane.b32.xlu0 %v1221, 24
  %v1245 = vpop.permute.xlu0 %1244
  %v1248 = vsel %vm415, %v604, %v1227
  %v1249 = vsel %vm415, %v609, %v1229
  %v1250 = vsel %vm106, %v1248, %v1235
  %v1251 = vsel %vm106, %v1249, %v1237
  %vm1252 = vcmask 195584
  %v1253 = vsel %vm1252, %v1250, %v1243
  %v1254 = vsel %vm1252, %v1251, %v1245
  %v1256 = vlaneseq
  %v1257 = vshrl.u32 %v1256, 7
  %v1258 = vsub.s32 0, %v1257
  %v1259 = vrot.slane %v408, %v1258
  %v1262 = vsel %vm230, %v1253, 0
  %v1265 = vsel %vm230, %v1254, 0
  %1267 = vmatprep.subr.mxu0 0.0
  %1268 = vmatpush1.msra.mxu0 %v404
  %1269 = vmatprep.subr.mxu0 0.0
  %1270 = vmatpush1.msra.mxu0 %v405
  %1271 = vmatprep.subr.mxu0 0.0
  %1272 = vmatpush1.msra.mxu0 %v406
  %1273 = vmatprep.subr.mxu0 0.0
  %1274 = vmatpush1.msra.mxu0 %v407
  %1275 = vmatprep.subr.mxu0 0.0
  %1276 = vmatpush1.msra.mxu0 0.0
  %1277 = vmatprep.subr.mxu0 0.0
  %1278 = vmatpush1.msra.mxu0 0.0
  %1279 = vmatprep.subr.mxu0 0.0
  %1280 = vmatpush1.msra.mxu0 0.0
  %1281 = vmatprep.subr.mxu0 0.0
  %1282 = vmatpush1.msra.mxu0 0.0
  %1283 = vmatprep.subr.mxu0 0.0
  %1284 = vmatpush1.msra.mxu0 0.0
  %1285 = vmatprep.subr.mxu0 0.0
  %1286 = vmatpush1.msra.mxu0 0.0
  %1287 = vmatprep.subr.mxu0 0.0
  %1288 = vmatpush1.msra.mxu0 0.0
  %1289 = vmatprep.subr.mxu0 0.0
  %1290 = vmatpush1.msra.mxu0 0.0
  %1291 = vmatprep.subr.mxu0 0.0
  %1292 = vmatpush1.msra.mxu0 0.0
  %1293 = vmatprep.subr.mxu0 0.0
  %1294 = vmatpush1.msra.mxu0 0.0
  %1295 = vmatprep.subr.mxu0 0.0
  %1296 = vmatpush1.msra.mxu0 0.0
  %1297 = vmatprep.subr.mxu0 0.0
  %1298 = vmatpush1.msra.mxu0 0.0
  %1299 = vmatprep.subr.mxu0 0.0
  %1300 = vmatpush1.msra.mxu0 0.0
  %1301 = vmatprep.subr.mxu0 0.0
  %1302 = vmatpush1.msra.mxu0 0.0
  %1303 = vmatprep.subr.mxu0 0.0
  %1304 = vmatpush1.msra.mxu0 0.0
  %1305 = vmatprep.subr.mxu0 0.0
  %1306 = vmatpush1.msra.mxu0 0.0
  %1307 = vmatprep.subr.mxu0 0.0
  %1308 = vmatpush1.msra.mxu0 0.0
  %1309 = vmatprep.subr.mxu0 0.0
  %1310 = vmatpush1.msra.mxu0 0.0
  %1311 = vmatprep.subr.mxu0 0.0
  %1312 = vmatpush1.msra.mxu0 0.0
  %1313 = vmatprep.subr.mxu0 0.0
  %1314 = vmatpush1.msra.mxu0 0.0
  %1315 = vmatprep.subr.mxu0 0.0
  %1316 = vmatpush1.msra.mxu0 0.0
  %1317 = vmatprep.subr.mxu0 0.0
  %1318 = vmatpush1.msra.mxu0 0.0
  %1319 = vmatprep.subr.mxu0 0.0
  %1320 = vmatpush1.msra.mxu0 0.0
  %1321 = vmatprep.subr.mxu0 0.0
  %1322 = vmatpush1.msra.mxu0 0.0
  %1323 = vmatprep.subr.mxu0 0.0
  %1324 = vmatpush1.msra.mxu0 0.0
  %1325 = vmatprep.subr.mxu0 0.0
  %1326 = vmatpush1.msra.mxu0 0.0
  %1327 = vmatprep.subr.mxu0 0.0
  %1328 = vmatpush1.msra.mxu0 0.0
  %1329 = vmatprep.subr.mxu0 0.0
  %1330 = vmatpush1.msra.mxu0 0.0
  %1331 = vmatprep.mubr.f32.mxu0 0.0
  %1332 = vmatmul.mubr.f32.gmra.mrb[0].mxu0 %v1262
  %v1333 = vpop.f32.mrb[0].mxu0
  %v1334 = vadd.f32 %v1259, %v1333
  %v1335 = vpop.f32.mrb[0].mxu0
  %1336 = vmatprep.mubr.f32.mxu0 0.0
  %1337 = vmatmul.mubr.f32.gmra.mrb[0].mxu0 %v1265
  %v1338 = vpop.f32.mrb[0].mxu0
  %v1339 = vadd.f32 %v1259, %v1338
  %v1340 = vpop.f32.mrb[0].mxu0
  %1341 = vdwg.mxu0
  %v1342 = vadd.f32 %v180, %v1334
  %v1343 = vadd.f32 %v185, %v1339
  %v1344 = vld [vmem:[%s15] sm:$0x1]
  %v1345 = vld [vmem:[%s16] sm:$0x1]
  %v1346 = vsel %vm230, %v1342, 0.0
  %1347 = vadd.xlane.f32.xlu0 %v1346
  %v1348 = vpop.xlane.xlu0 %1347
  %v1349 = vsel %vm230, %v1343, 0.0
  %1350 = vadd.xlane.f32.xlu0 %v1349
  %v1351 = vpop.xlane.xlu0 %1350
  %v1352 = vrcp.pop 32.0
  %v1353 = vmul.f32 %v1348, %v1352
  %v1354 = vmul.f32 %v1351, %v1352
  %v1355 = vsub.f32 %v1342, %v1353
  %v1356 = vsub.f32 %v1343, %v1354
  %v1357 = vmul.f32 %v1355, %v1355
  %v1358 = vmul.f32 %v1356, %v1356
  %v1359 = vsel %vm230, %v1357, 0.0
  %1360 = vadd.xlane.f32.xlu0 %v1359
  %v1361 = vpop.xlane.xlu0 %1360
  %v1362 = vsel %vm230, %v1358, 0.0
  %1363 = vadd.xlane.f32.xlu0 %v1362
  %v1364 = vpop.xlane.xlu0 %1363
  %v1365 = vmul.f32 %v1361, %v1352
  %v1366 = vmul.f32 %v1364, %v1352
  %v1367 = vadd.f32 %v1365, 1e-05
  %v1368 = vadd.f32 %v1366, 1e-05
  %v1369 = vrsqrt.pop %v1367
  %v1370 = vrsqrt.pop %v1368
  %v1371 = vmul.f32 %v1355, %v1369
  %v1372 = vmul.f32 %v1356, %v1370
  %v1374 = vlaneseq
  %v1375 = vshrl.u32 %v1374, 7
  %v1376 = vsub.s32 0, %v1375
  %v1377 = vrot.slane %v1344, %v1376
  %v1379 = vmul.f32 %v1371, %v1377
  %v1380 = vmul.f32 %v1372, %v1377
  %v1382 = vlaneseq
  %v1383 = vshrl.u32 %v1382, 7
  %v1384 = vsub.s32 0, %v1383
  %v1385 = vrot.slane %v1345, %v1384
  %v1387 = vadd.f32 %v1379, %v1385
  %v1388 = vadd.f32 %v1380, %v1385
  %v1389 = vld [vmem:[%s9] sm:$0xff]
  %v1390 = vld [vmem:[%s9 + $0x8] sm:$0xff]
  %v1391 = vld [vmem:[%s9 + $0x10] sm:$0xff]
  %v1392 = vld [vmem:[%s9 + $0x18] sm:$0xff]
  %v1393 = vld [vmem:[%s10] sm:$0x1]
  %v1395 = vlaneseq
  %v1396 = vshrl.u32 %v1395, 7
  %v1397 = vsub.s32 0, %v1396
  %v1398 = vrot.slane %v1393, %v1397
  %v1401 = vsel %vm230, %v1387, 0
  %v1404 = vsel %vm230, %v1388, 0
  %1406 = vmatprep.subr.mxu0 0.0
  %1407 = vmatpush1.msra.mxu0 %v1389
  %1408 = vmatprep.subr.mxu0 0.0
  %1409 = vmatpush1.msra.mxu0 %v1390
  %1410 = vmatprep.subr.mxu0 0.0
  %1411 = vmatpush1.msra.mxu0 %v1391
  %1412 = vmatprep.subr.mxu0 0.0
  %1413 = vmatpush1.msra.mxu0 %v1392
  %1414 = vmatprep.subr.mxu0 0.0
  %1415 = vmatpush1.msra.mxu0 0.0
  %1416 = vmatprep.subr.mxu0 0.0
  %1417 = vmatpush1.msra.mxu0 0.0
  %1418 = vmatprep.subr.mxu0 0.0
  %1419 = vmatpush1.msra.mxu0 0.0
  %1420 = vmatprep.subr.mxu0 0.0
  %1421 = vmatpush1.msra.mxu0 0.0
  %1422 = vmatprep.subr.mxu0 0.0
  %1423 = vmatpush1.msra.mxu0 0.0
  %1424 = vmatprep.subr.mxu0 0.0
  %1425 = vmatpush1.msra.mxu0 0.0
  %1426 = vmatprep.subr.mxu0 0.0
  %1427 = vmatpush1.msra.mxu0 0.0
  %1428 = vmatprep.subr.mxu0 0.0
  %1429 = vmatpush1.msra.mxu0 0.0
  %1430 = vmatprep.subr.mxu0 0.0
  %1431 = vmatpush1.msra.mxu0 0.0
  %1432 = vmatprep.subr.mxu0 0.0
  %1433 = vmatpush1.msra.mxu0 0.0
  %1434 = vmatprep.subr.mxu0 0.0
  %1435 = vmatpush1.msra.mxu0 0.0
  %1436 = vmatprep.subr.mxu0 0.0
  %1437 = vmatpush1.msra.mxu0 0.0
  %1438 = vmatprep.subr.mxu0 0.0
  %1439 = vmatpush1.msra.mxu0 0.0
  %1440 = vmatprep.subr.mxu0 0.0
  %1441 = vmatpush1.msra.mxu0 0.0
  %1442 = vmatprep.subr.mxu0 0.0
  %1443 = vmatpush1.msra.mxu0 0.0
  %1444 = vmatprep.subr.mxu0 0.0
  %1445 = vmatpush1.msra.mxu0 0.0
  %1446 = vmatprep.subr.mxu0 0.0
  %1447 = vmatpush1.msra.mxu0 0.0
  %1448 = vmatprep.subr.mxu0 0.0
  %1449 = vmatpush1.msra.mxu0 0.0
  %1450 = vmatprep.subr.mxu0 0.0
  %1451 = vmatpush1.msra.mxu0 0.0
  %1452 = vmatprep.subr.mxu0 0.0
  %1453 = vmatpush1.msra.mxu0 0.0
  %1454 = vmatprep.subr.mxu0 0.0
  %1455 = vmatpush1.msra.mxu0 0.0
  %1456 = vmatprep.subr.mxu0 0.0
  %1457 = vmatpush1.msra.mxu0 0.0
  %1458 = vmatprep.subr.mxu0 0.0
  %1459 = vmatpush1.msra.mxu0 0.0
  %1460 = vmatprep.subr.mxu0 0.0
  %1461 = vmatpush1.msra.mxu0 0.0
  %1462 = vmatprep.subr.mxu0 0.0
  %1463 = vmatpush1.msra.mxu0 0.0
  %1464 = vmatprep.subr.mxu0 0.0
  %1465 = vmatpush1.msra.mxu0 0.0
  %1466 = vmatprep.subr.mxu0 0.0
  %1467 = vmatpush1.msra.mxu0 0.0
  %1468 = vmatprep.subr.mxu0 0.0
  %1469 = vmatpush1.msra.mxu0 0.0
  %1470 = vmatprep.mubr.f32.mxu0 0.0
  %1471 = vmatmul.mubr.f32.gmra.mrb[0].mxu0 %v1401
  %v1472 = vpop.f32.mrb[0].mxu0
  %v1473 = vadd.f32 %v1398, %v1472
  %v1474 = vpop.f32.mrb[0].mxu0
  %1475 = vmatprep.mubr.f32.mxu0 0.0
  %1476 = vmatmul.mubr.f32.gmra.mrb[0].mxu0 %v1404
  %v1477 = vpop.f32.mrb[0].mxu0
  %v1478 = vadd.f32 %v1398, %v1477
  %v1479 = vpop.f32.mrb[0].mxu0
  %1480 = vdwg.mxu0
  %v1481 = vld [vmem:[%s13] sm:$0xff]
  %v1482 = vld [vmem:[%s13 + $0x8] sm:$0xff]
  %v1483 = vld [vmem:[%s13 + $0x10] sm:$0xff]
  %v1484 = vld [vmem:[%s13 + $0x18] sm:$0xff]
  %v1485 = vld [vmem:[%s14] sm:$0x1]
  %v1487 = vsel %vm415, %v1473, 0
  %v1490 = vsel %vm415, %v1478, 0
  %v1493 = vsel %vm415, %v304, 0
  %v1496 = vsel %vm415, %v309, 0
  %1498 = vmatprep.subr.mxu0 0.0
  %1499 = vmatpush1.xpose.msra.mxu0 %v1493
  %1500 = vmatprep.subr.mxu0 0.0
  %1501 = vmatpush1.xpose.msra.mxu0 %v1496
  %1502 = vmatprep.subr.mxu0 0.0
  %1503 = vmatpush1.xpose.msra.mxu0 0.0
  %1504 = vmatprep.subr.mxu0 0.0
  %1505 = vmatpush1.xpose.msra.mxu0 0.0
  %1506 = vmatprep.subr.mxu0 0.0
  %1507 = vmatpush1.xpose.msra.mxu0 0.0
  %1508 = vmatprep.subr.mxu0 0.0
  %1509 = vmatpush1.xpose.msra.mxu0 0.0
  %1510 = vmatprep.subr.mxu0 0.0
  %1511 = vmatpush1.xpose.msra.mxu0 0.0
  %1512 = vmatprep.subr.mxu0 0.0
  %1513 = vmatpush1.xpose.msra.mxu0 0.0
  %1514 = vmatprep.subr.mxu0 0.0
  %1515 = vmatpush1.xpose.msra.mxu0 0.0
  %1516 = vmatprep.subr.mxu0 0.0
  %1517 = vmatpush1.xpose.msra.mxu0 0.0
  %1518 = vmatprep.subr.mxu0 0.0
  %1519 = vmatpush1.xpose.msra.mxu0 0.0
  %1520 = vmatprep.subr.mxu0 0.0
  %1521 = vmatpush1.xpose.msra.mxu0 0.0
  %1522 = vmatprep.subr.mxu0 0.0
  %1523 = vmatpush1.xpose.msra.mxu0 0.0
  %1524 = vmatprep.subr.mxu0 0.0
  %1525 = vmatpush1.xpose.msra.mxu0 0.0
  %1526 = vmatprep.subr.mxu0 0.0
  %1527 = vmatpush1.xpose.msra.mxu0 0.0
  %1528 = vmatprep.subr.mxu0 0.0
  %1529 = vmatpush1.xpose.msra.mxu0 0.0
  %1530 = vmatprep.subr.mxu0 0.0
  %1531 = vmatpush1.xpose.msra.mxu0 0.0
  %1532 = vmatprep.subr.mxu0 0.0
  %1533 = vmatpush1.xpose.msra.mxu0 0.0
  %1534 = vmatprep.subr.mxu0 0.0
  %1535 = vmatpush1.xpose.msra.mxu0 0.0
  %1536 = vmatprep.subr.mxu0 0.0
  %1537 = vmatpush1.xpose.msra.mxu0 0.0
  %1538 = vmatprep.subr.mxu0 0.0
  %1539 = vmatpush1.xpose.msra.mxu0 0.0
  %1540 = vmatprep.subr.mxu0 0.0
  %1541 = vmatpush1.xpose.msra.mxu0 0.0
  %1542 = vmatprep.subr.mxu0 0.0
  %1543 = vmatpush1.xpose.msra.mxu0 0.0
  %1544 = vmatprep.subr.mxu0 0.0
  %1545 = vmatpush1.xpose.msra.mxu0 0.0
  %1546 = vmatprep.subr.mxu0 0.0
  %1547 = vmatpush1.xpose.msra.mxu0 0.0
  %1548 = vmatprep.subr.mxu0 0.0
  %1549 = vmatpush1.xpose.msra.mxu0 0.0
  %1550 = vmatprep.subr.mxu0 0.0
  %1551 = vmatpush1.xpose.msra.mxu0 0.0
  %1552 = vmatprep.subr.mxu0 0.0
  %1553 = vmatpush1.xpose.msra.mxu0 0.0
  %1554 = vmatprep.subr.mxu0 0.0
  %1555 = vmatpush1.xpose.msra.mxu0 0.0
  %1556 = vmatprep.subr.mxu0 0.0
  %1557 = vmatpush1.xpose.msra.mxu0 0.0
  %1558 = vmatprep.subr.mxu0 0.0
  %1559 = vmatpush1.xpose.msra.mxu0 0.0
  %1560 = vmatprep.subr.mxu0 0.0
  %1561 = vmatpush1.xpose.msra.mxu0 0.0
  %1562 = vmatprep.mubr.f32.mxu0 0.0
  %1563 = vmatmul.mubr.f32.gmra.mrb[0].mxu0 %v1487
  %v1564 = vpop.f32.mrb[0].mxu0
  %v1565 = vadd.f32 0.0, %v1564
  %v1566 = vpop.f32.mrb[0].mxu0
  %1567 = vmatprep.mubr.f32.mxu0 0.0
  %1568 = vmatmul.mubr.f32.gmra.mrb[0].mxu0 %v1490
  %v1569 = vpop.f32.mrb[0].mxu0
  %v1570 = vadd.f32 0.0, %v1569
  %v1571 = vpop.f32.mrb[0].mxu0
  %1572 = vdwg.mxu0
  %v1573 = vmul.f32 %v1565, 0.35355338
  %v1574 = vmul.f32 %v1570, 0.35355338
  %v1575 = vadd.f32 %v1573, %v215
  %v1576 = vadd.f32 %v1574, %v216
  %v1577 = vsel %vm106, %v1575, -inf
  %1578 = vmax.xlane.f32.xlu0 %v1577
  %v1579 = vpop.xlane.xlu0 %1578
  %v1580 = vsel %vm106, %v1576, -inf
  %1581 = vmax.xlane.f32.xlu0 %v1580
  %v1582 = vpop.xlane.xlu0 %1581
  %v1583 = vsub.f32 %v1575, %v1579
  %v1584 = vsub.f32 %v1576, %v1582
  %v1585 = vmul.f32 %v1583, 1.442695
  %v1586 = vpow.pop %v1585
  %v1587 = vmul.f32 %v1584, 1.442695
  %v1588 = vpow.pop %v1587
  %v1589 = vsel %vm106, %v1586, 0.0
  %1590 = vadd.xlane.f32.xlu0 %v1589
  %v1591 = vpop.xlane.xlu0 %1590
  %v1592 = vsel %vm106, %v1588, 0.0
  %1593 = vadd.xlane.f32.xlu0 %v1592
  %v1594 = vpop.xlane.xlu0 %1593
  %v1595 = vrcp.pop %v1591
  %v1596 = vmul.f32 %v1586, %v1595
  %v1597 = vrcp.pop %v1594
  %v1598 = vmul.f32 %v1588, %v1597
  %1599 = vrot.lane.b32.xlu0 %v304, 96
  %v1600 = vpop.permute.xlu0 %1599
  %1601 = vrot.lane.b32.xlu0 %v309, 96
  %v1602 = vpop.permute.xlu0 %1601
  %v1606 = vsel %vm106, %v1596, 0
  %v1609 = vsel %vm106, %v1598, 0
  %1611 = vmatprep.subr.mxu0 0.0
  %1612 = vmatpush1.msra.mxu0 %v1600
  %1613 = vmatprep.subr.mxu0 0.0
  %1614 = vmatpush1.msra.mxu0 %v1602
  %1615 = vmatprep.subr.mxu0 0.0
  %1616 = vmatpush1.msra.mxu0 0.0
  %1617 = vmatprep.subr.mxu0 0.0
  %1618 = vmatpush1.msra.mxu0 0.0
  %1619 = vmatprep.subr.mxu0 0.0
  %1620 = vmatpush1.msra.mxu0 0.0
  %1621 = vmatprep.subr.mxu0 0.0
  %1622 = vmatpush1.msra.mxu0 0.0
  %1623 = vmatprep.subr.mxu0 0.0
  %1624 = vmatpush1.msra.mxu0 0.0
  %1625 = vmatprep.subr.mxu0 0.0
  %1626 = vmatpush1.msra.mxu0 0.0
  %1627 = vmatprep.subr.mxu0 0.0
  %1628 = vmatpush1.msra.mxu0 0.0
  %1629 = vmatprep.subr.mxu0 0.0
  %1630 = vmatpush1.msra.mxu0 0.0
  %1631 = vmatprep.subr.mxu0 0.0
  %1632 = vmatpush1.msra.mxu0 0.0
  %1633 = vmatprep.subr.mxu0 0.0
  %1634 = vmatpush1.msra.mxu0 0.0
  %1635 = vmatprep.subr.mxu0 0.0
  %1636 = vmatpush1.msra.mxu0 0.0
  %1637 = vmatprep.subr.mxu0 0.0
  %1638 = vmatpush1.msra.mxu0 0.0
  %1639 = vmatprep.subr.mxu0 0.0
  %1640 = vmatpush1.msra.mxu0 0.0
  %1641 = vmatprep.subr.mxu0 0.0
  %1642 = vmatpush1.msra.mxu0 0.0
  %1643 = vmatprep.subr.mxu0 0.0
  %1644 = vmatpush1.msra.mxu0 0.0
  %1645 = vmatprep.subr.mxu0 0.0
  %1646 = vmatpush1.msra.mxu0 0.0
  %1647 = vmatprep.subr.mxu0 0.0
  %1648 = vmatpush1.msra.mxu0 0.0
  %1649 = vmatprep.subr.mxu0 0.0
  %1650 = vmatpush1.msra.mxu0 0.0
  %1651 = vmatprep.subr.mxu0 0.0
  %1652 = vmatpush1.msra.mxu0 0.0
  %1653 = vmatprep.subr.mxu0 0.0
  %1654 = vmatpush1.msra.mxu0 0.0
  %1655 = vmatprep.subr.mxu0 0.0
  %1656 = vmatpush1.msra.mxu0 0.0
  %1657 = vmatprep.subr.mxu0 0.0
  %1658 = vmatpush1.msra.mxu0 0.0
  %1659 = vmatprep.subr.mxu0 0.0
  %1660 = vmatpush1.msra.mxu0 0.0
  %1661 = vmatprep.subr.mxu0 0.0
  %1662 = vmatpush1.msra.mxu0 0.0
  %1663 = vmatprep.subr.mxu0 0.0
  %1664 = vmatpush1.msra.mxu0 0.0
  %1665 = vmatprep.subr.mxu0 0.0
  %1666 = vmatpush1.msra.mxu0 0.0
  %1667 = vmatprep.subr.mxu0 0.0
  %1668 = vmatpush1.msra.mxu0 0.0
  %1669 = vmatprep.subr.mxu0 0.0
  %1670 = vmatpush1.msra.mxu0 0.0
  %1671 = vmatprep.subr.mxu0 0.0
  %1672 = vmatpush1.msra.mxu0 0.0
  %1673 = vmatprep.subr.mxu0 0.0
  %1674 = vmatpush1.msra.mxu0 0.0
  %1675 = vmatprep.mubr.f32.mxu0 0.0
  %1676 = vmatmul.mubr.f32.gmra.mrb[0].mxu0 %v1606
  %v1677 = vpop.f32.mrb[0].mxu0
  %v1678 = vadd.f32 0.0, %v1677
  %v1679 = vpop.f32.mrb[0].mxu0
  %1680 = vmatprep.mubr.f32.mxu0 0.0
  %1681 = vmatmul.mubr.f32.gmra.mrb[0].mxu0 %v1609
  %v1682 = vpop.f32.mrb[0].mxu0
  %v1683 = vadd.f32 0.0, %v1682
  %v1684 = vpop.f32.mrb[0].mxu0
  %1685 = vdwg.mxu0
  %1686 = vrot.lane.b32.xlu0 %v1473, 120
  %v1687 = vpop.permute.xlu0 %1686
  %1688 = vrot.lane.b32.xlu0 %v1478, 120
  %v1689 = vpop.permute.xlu0 %1688
  %1690 = vrot.lane.b32.xlu0 %v304, 120
  %v1691 = vpop.permute.xlu0 %1690
  %1692 = vrot.lane.b32.xlu0 %v309, 120
  %v1693 = vpop.permute.xlu0 %1692
  %v1694 = vsel %vm415, %v1687, 0
  %v1696 = vsel %vm415, %v1689, 0
  %v1698 = vsel %vm415, %v1691, 0
  %v1700 = vsel %vm415, %v1693, 0
  %1702 = vmatprep.subr.mxu0 0.0
  %1703 = vmatpush1.xpose.msra.mxu0 %v1698
  %1704 = vmatprep.subr.mxu0 0.0
  %1705 = vmatpush1.xpose.msra.mxu0 %v1700
  %1706 = vmatprep.subr.mxu0 0.0
  %1707 = vmatpush1.xpose.msra.mxu0 0.0
  %1708 = vmatprep.subr.mxu0 0.0
  %1709 = vmatpush1.xpose.msra.mxu0 0.0
  %1710 = vmatprep.subr.mxu0 0.0
  %1711 = vmatpush1.xpose.msra.mxu0 0.0
  %1712 = vmatprep.subr.mxu0 0.0
  %1713 = vmatpush1.xpose.msra.mxu0 0.0
  %1714 = vmatprep.subr.mxu0 0.0
  %1715 = vmatpush1.xpose.msra.mxu0 0.0
  %1716 = vmatprep.subr.mxu0 0.0
  %1717 = vmatpush1.xpose.msra.mxu0 0.0
  %1718 = vmatprep.subr.mxu0 0.0
  %1719 = vmatpush1.xpose.msra.mxu0 0.0
  %1720 = vmatprep.subr.mxu0 0.0
  %1721 = vmatpush1.xpose.msra.mxu0 0.0
  %1722 = vmatprep.subr.mxu0 0.0
  %1723 = vmatpush1.xpose.msra.mxu0 0.0
  %1724 = vmatprep.subr.mxu0 0.0
  %1725 = vmatpush1.xpose.msra.mxu0 0.0
  %1726 = vmatprep.subr.mxu0 0.0
  %1727 = vmatpush1.xpose.msra.mxu0 0.0
  %1728 = vmatprep.subr.mxu0 0.0
  %1729 = vmatpush1.xpose.msra.mxu0 0.0
  %1730 = vmatprep.subr.mxu0 0.0
  %1731 = vmatpush1.xpose.msra.mxu0 0.0
  %1732 = vmatprep.subr.mxu0 0.0
  %1733 = vmatpush1.xpose.msra.mxu0 0.0
  %1734 = vmatprep.subr.mxu0 0.0
  %1735 = vmatpush1.xpose.msra.mxu0 0.0
  %1736 = vmatprep.subr.mxu0 0.0
  %1737 = vmatpush1.xpose.msra.mxu0 0.0
  %1738 = vmatprep.subr.mxu0 0.0
  %1739 = vmatpush1.xpose.msra.mxu0 0.0
  %1740 = vmatprep.subr.mxu0 0.0
  %1741 = vmatpush1.xpose.msra.mxu0 0.0
  %1742 = vmatprep.subr.mxu0 0.0
  %1743 = vmatpush1.xpose.msra.mxu0 0.0
  %1744 = vmatprep.subr.mxu0 0.0
  %1745 = vmatpush1.xpose.msra.mxu0 0.0
  %1746 = vmatprep.subr.mxu0 0.0
  %1747 = vmatpush1.xpose.msra.mxu0 0.0
  %1748 = vmatprep.subr.mxu0 0.0
  %1749 = vmatpush1.xpose.msra.mxu0 0.0
  %1750 = vmatprep.subr.mxu0 0.0
  %1751 = vmatpush1.xpose.msra.mxu0 0.0
  %1752 = vmatprep.subr.mxu0 0.0
  %1753 = vmatpush1.xpose.msra.mxu0 0.0
  %1754 = vmatprep.subr.mxu0 0.0
  %1755 = vmatpush1.xpose.msra.mxu0 0.0
  %1756 = vmatprep.subr.mxu0 0.0
  %1757 = vmatpush1.xpose.msra.mxu0 0.0
  %1758 = vmatprep.subr.mxu0 0.0
  %1759 = vmatpush1.xpose.msra.mxu0 0.0
  %1760 = vmatprep.subr.mxu0 0.0
  %1761 = vmatpush1.xpose.msra.mxu0 0.0
  %1762 = vmatprep.subr.mxu0 0.0
  %1763 = vmatpush1.xpose.msra.mxu0 0.0
  %1764 = vmatprep.subr.mxu0 0.0
  %1765 = vmatpush1.xpose.msra.mxu0 0.0
  %1766 = vmatprep.mubr.f32.mxu0 0.0
  %1767 = vmatmul.mubr.f32.gmra.mrb[0].mxu0 %v1694
  %v1768 = vpop.f32.mrb[0].mxu0
  %v1769 = vadd.f32 0.0, %v1768
  %v1770 = vpop.f32.mrb[0].mxu0
  %1771 = vmatprep.mubr.f32.mxu0 0.0
  %1772 = vmatmul.mubr.f32.gmra.mrb[0].mxu0 %v1696
  %v1773 = vpop.f32.mrb[0].mxu0
  %v1774 = vadd.f32 0.0, %v1773
  %v1775 = vpop.f32.mrb[0].mxu0
  %1776 = vdwg.mxu0
  %v1777 = vmul.f32 %v1769, 0.35355338
  %v1778 = vmul.f32 %v1774, 0.35355338
  %v1779 = vadd.f32 %v1777, %v215
  %v1780 = vadd.f32 %v1778, %v216
  %v1781 = vsel %vm106, %v1779, -inf
  %1782 = vmax.xlane.f32.xlu0 %v1781
  %v1783 = vpop.xlane.xlu0 %1782
  %v1784 = vsel %vm106, %v1780, -inf
  %1785 = vmax.xlane.f32.xlu0 %v1784
  %v1786 = vpop.xlane.xlu0 %1785
  %v1787 = vsub.f32 %v1779, %v1783
  %v1788 = vsub.f32 %v1780, %v1786
  %v1789 = vmul.f32 %v1787, 1.442695
  %v1790 = vpow.pop %v1789
  %v1791 = vmul.f32 %v1788, 1.442695
  %v1792 = vpow.pop %v1791
  %v1793 = vsel %vm106, %v1790, 0.0
  %1794 = vadd.xlane.f32.xlu0 %v1793
  %v1795 = vpop.xlane.xlu0 %1794
  %v1796 = vsel %vm106, %v1792, 0.0
  %1797 = vadd.xlane.f32.xlu0 %v1796
  %v1798 = vpop.xlane.xlu0 %1797
  %v1799 = vrcp.pop %v1795
  %v1800 = vmul.f32 %v1790, %v1799
  %v1801 = vrcp.pop %v1798
  %v1802 = vmul.f32 %v1792, %v1801
  %1803 = vrot.lane.b32.xlu0 %v304, 88
  %v1804 = vpop.permute.xlu0 %1803
  %1805 = vrot.lane.b32.xlu0 %v309, 88
  %v1806 = vpop.permute.xlu0 %1805
  %v1810 = vsel %vm106, %v1800, 0
  %v1813 = vsel %vm106, %v1802, 0
  %1815 = vmatprep.subr.mxu0 0.0
  %1816 = vmatpush1.msra.mxu0 %v1804
  %1817 = vmatprep.subr.mxu0 0.0
  %1818 = vmatpush1.msra.mxu0 %v1806
  %1819 = vmatprep.subr.mxu0 0.0
  %1820 = vmatpush1.msra.mxu0 0.0
  %1821 = vmatprep.subr.mxu0 0.0
  %1822 = vmatpush1.msra.mxu0 0.0
  %1823 = vmatprep.subr.mxu0 0.0
  %1824 = vmatpush1.msra.mxu0 0.0
  %1825 = vmatprep.subr.mxu0 0.0
  %1826 = vmatpush1.msra.mxu0 0.0
  %1827 = vmatprep.subr.mxu0 0.0
  %1828 = vmatpush1.msra.mxu0 0.0
  %1829 = vmatprep.subr.mxu0 0.0
  %1830 = vmatpush1.msra.mxu0 0.0
  %1831 = vmatprep.subr.mxu0 0.0
  %1832 = vmatpush1.msra.mxu0 0.0
  %1833 = vmatprep.subr.mxu0 0.0
  %1834 = vmatpush1.msra.mxu0 0.0
  %1835 = vmatprep.subr.mxu0 0.0
  %1836 = vmatpush1.msra.mxu0 0.0
  %1837 = vmatprep.subr.mxu0 0.0
  %1838 = vmatpush1.msra.mxu0 0.0
  %1839 = vmatprep.subr.mxu0 0.0
  %1840 = vmatpush1.msra.mxu0 0.0
  %1841 = vmatprep.subr.mxu0 0.0
  %1842 = vmatpush1.msra.mxu0 0.0
  %1843 = vmatprep.subr.mxu0 0.0
  %1844 = vmatpush1.msra.mxu0 0.0
  %1845 = vmatprep.subr.mxu0 0.0
  %1846 = vmatpush1.msra.mxu0 0.0
  %1847 = vmatprep.subr.mxu0 0.0
  %1848 = vmatpush1.msra.mxu0 0.0
  %1849 = vmatprep.subr.mxu0 0.0
  %1850 = vmatpush1.msra.mxu0 0.0
  %1851 = vmatprep.subr.mxu0 0.0
  %1852 = vmatpush1.msra.mxu0 0.0
  %1853 = vmatprep.subr.mxu0 0.0
  %1854 = vmatpush1.msra.mxu0 0.0
  %1855 = vmatprep.subr.mxu0 0.0
  %1856 = vmatpush1.msra.mxu0 0.0
  %1857 = vmatprep.subr.mxu0 0.0
  %1858 = vmatpush1.msra.mxu0 0.0
  %1859 = vmatprep.subr.mxu0 0.0
  %1860 = vmatpush1.msra.mxu0 0.0
  %1861 = vmatprep.subr.mxu0 0.0
  %1862 = vmatpush1.msra.mxu0 0.0
  %1863 = vmatprep.subr.mxu0 0.0
  %1864 = vmatpush1.msra.mxu0 0.0
  %1865 = vmatprep.subr.mxu0 0.0
  %1866 = vmatpush1.msra.mxu0 0.0
  %1867 = vmatprep.subr.mxu0 0.0
  %1868 = vmatpush1.msra.mxu0 0.0
  %1869 = vmatprep.subr.mxu0 0.0
  %1870 = vmatpush1.msra.mxu0 0.0
  %1871 = vmatprep.subr.mxu0 0.0
  %1872 = vmatpush1.msra.mxu0 0.0
  %1873 = vmatprep.subr.mxu0 0.0
  %1874 = vmatpush1.msra.mxu0 0.0
  %1875 = vmatprep.subr.mxu0 0.0
  %1876 = vmatpush1.msra.mxu0 0.0
  %1877 = vmatprep.subr.mxu0 0.0
  %1878 = vmatpush1.msra.mxu0 0.0
  %1879 = vmatprep.mubr.f32.mxu0 0.0
  %1880 = vmatmul.mubr.f32.gmra.mrb[0].mxu0 %v1810
  %v1881 = vpop.f32.mrb[0].mxu0
  %v1882 = vadd.f32 0.0, %v1881
  %v1883 = vpop.f32.mrb[0].mxu0
  %1884 = vmatprep.mubr.f32.mxu0 0.0
  %1885 = vmatmul.mubr.f32.gmra.mrb[0].mxu0 %v1813
  %v1886 = vpop.f32.mrb[0].mxu0
  %v1887 = vadd.f32 0.0, %v1886
  %v1888 = vpop.f32.mrb[0].mxu0
  %1889 = vdwg.mxu0
  %1890 = vrot.lane.b32.xlu0 %v1473, 112
  %v1891 = vpop.permute.xlu0 %1890
  %1892 = vrot.lane.b32.xlu0 %v1478, 112
  %v1893 = vpop.permute.xlu0 %1892
  %1894 = vrot.lane.b32.xlu0 %v304, 112
  %v1895 = vpop.permute.xlu0 %1894
  %1896 = vrot.lane.b32.xlu0 %v309, 112
  %v1897 = vpop.permute.xlu0 %1896
  %v1898 = vsel %vm415, %v1891, 0
  %v1900 = vsel %vm415, %v1893, 0
  %v1902 = vsel %vm415, %v1895, 0
  %v1904 = vsel %vm415, %v1897, 0
  %1906 = vmatprep.subr.mxu0 0.0
  %1907 = vmatpush1.xpose.msra.mxu0 %v1902
  %1908 = vmatprep.subr.mxu0 0.0
  %1909 = vmatpush1.xpose.msra.mxu0 %v1904
  %1910 = vmatprep.subr.mxu0 0.0
  %1911 = vmatpush1.xpose.msra.mxu0 0.0
  %1912 = vmatprep.subr.mxu0 0.0
  %1913 = vmatpush1.xpose.msra.mxu0 0.0
  %1914 = vmatprep.subr.mxu0 0.0
  %1915 = vmatpush1.xpose.msra.mxu0 0.0
  %1916 = vmatprep.subr.mxu0 0.0
  %1917 = vmatpush1.xpose.msra.mxu0 0.0
  %1918 = vmatprep.subr.mxu0 0.0
  %1919 = vmatpush1.xpose.msra.mxu0 0.0
  %1920 = vmatprep.subr.mxu0 0.0
  %1921 = vmatpush1.xpose.msra.mxu0 0.0
  %1922 = vmatprep.subr.mxu0 0.0
  %1923 = vmatpush1.xpose.msra.mxu0 0.0
  %1924 = vmatprep.subr.mxu0 0.0
  %1925 = vmatpush1.xpose.msra.mxu0 0.0
  %1926 = vmatprep.subr.mxu0 0.0
  %1927 = vmatpush1.xpose.msra.mxu0 0.0
  %1928 = vmatprep.subr.mxu0 0.0
  %1929 = vmatpush1.xpose.msra.mxu0 0.0
  %1930 = vmatprep.subr.mxu0 0.0
  %1931 = vmatpush1.xpose.msra.mxu0 0.0
  %1932 = vmatprep.subr.mxu0 0.0
  %1933 = vmatpush1.xpose.msra.mxu0 0.0
  %1934 = vmatprep.subr.mxu0 0.0
  %1935 = vmatpush1.xpose.msra.mxu0 0.0
  %1936 = vmatprep.subr.mxu0 0.0
  %1937 = vmatpush1.xpose.msra.mxu0 0.0
  %1938 = vmatprep.subr.mxu0 0.0
  %1939 = vmatpush1.xpose.msra.mxu0 0.0
  %1940 = vmatprep.subr.mxu0 0.0
  %1941 = vmatpush1.xpose.msra.mxu0 0.0
  %1942 = vmatprep.subr.mxu0 0.0
  %1943 = vmatpush1.xpose.msra.mxu0 0.0
  %1944 = vmatprep.subr.mxu0 0.0
  %1945 = vmatpush1.xpose.msra.mxu0 0.0
  %1946 = vmatprep.subr.mxu0 0.0
  %1947 = vmatpush1.xpose.msra.mxu0 0.0
  %1948 = vmatprep.subr.mxu0 0.0
  %1949 = vmatpush1.xpose.msra.mxu0 0.0
  %1950 = vmatprep.subr.mxu0 0.0
  %1951 = vmatpush1.xpose.msra.mxu0 0.0
  %1952 = vmatprep.subr.mxu0 0.0
  %1953 = vmatpush1.xpose.msra.mxu0 0.0
  %1954 = vmatprep.subr.mxu0 0.0
  %1955 = vmatpush1.xpose.msra.mxu0 0.0
  %1956 = vmatprep.subr.mxu0 0.0
  %1957 = vmatpush1.xpose.msra.mxu0 0.0
  %1958 = vmatprep.subr.mxu0 0.0
  %1959 = vmatpush1.xpose.msra.mxu0 0.0
  %1960 = vmatprep.subr.mxu0 0.0
  %1961 = vmatpush1.xpose.msra.mxu0 0.0
  %1962 = vmatprep.subr.mxu0 0.0
  %1963 = vmatpush1.xpose.msra.mxu0 0.0
  %1964 = vmatprep.subr.mxu0 0.0
  %1965 = vmatpush1.xpose.msra.mxu0 0.0
  %1966 = vmatprep.subr.mxu0 0.0
  %1967 = vmatpush1.xpose.msra.mxu0 0.0
  %1968 = vmatprep.subr.mxu0 0.0
  %1969 = vmatpush1.xpose.msra.mxu0 0.0
  %1970 = vmatprep.mubr.f32.mxu0 0.0
  %1971 = vmatmul.mubr.f32.gmra.mrb[0].mxu0 %v1898
  %v1972 = vpop.f32.mrb[0].mxu0
  %v1973 = vadd.f32 0.0, %v1972
  %v1974 = vpop.f32.mrb[0].mxu0
  %1975 = vmatprep.mubr.f32.mxu0 0.0
  %1976 = vmatmul.mubr.f32.gmra.mrb[0].mxu0 %v1900
  %v1977 = vpop.f32.mrb[0].mxu0
  %v1978 = vadd.f32 0.0, %v1977
  %v1979 = vpop.f32.mrb[0].mxu0
  %1980 = vdwg.mxu0
  %v1981 = vmul.f32 %v1973, 0.35355338
  %v1982 = vmul.f32 %v1978, 0.35355338
  %v1983 = vadd.f32 %v1981, %v215
  %v1984 = vadd.f32 %v1982, %v216
  %v1985 = vsel %vm106, %v1983, -inf
  %1986 = vmax.xlane.f32.xlu0 %v1985
  %v1987 = vpop.xlane.xlu0 %1986
  %v1988 = vsel %vm106, %v1984, -inf
  %1989 = vmax.xlane.f32.xlu0 %v1988
  %v1990 = vpop.xlane.xlu0 %1989
  %v1991 = vsub.f32 %v1983, %v1987
  %v1992 = vsub.f32 %v1984, %v1990
  %v1993 = vmul.f32 %v1991, 1.442695
  %v1994 = vpow.pop %v1993
  %v1995 = vmul.f32 %v1992, 1.442695
  %v1996 = vpow.pop %v1995
  %v1997 = vsel %vm106, %v1994, 0.0
  %1998 = vadd.xlane.f32.xlu0 %v1997
  %v1999 = vpop.xlane.xlu0 %1998
  %v2000 = vsel %vm106, %v1996, 0.0
  %2001 = vadd.xlane.f32.xlu0 %v2000
  %v2002 = vpop.xlane.xlu0 %2001
  %v2003 = vrcp.pop %v1999
  %v2004 = vmul.f32 %v1994, %v2003
  %v2005 = vrcp.pop %v2002
  %v2006 = vmul.f32 %v1996, %v2005
  %2007 = vrot.lane.b32.xlu0 %v304, 80
  %v2008 = vpop.permute.xlu0 %2007
  %2009 = vrot.lane.b32.xlu0 %v309, 80
  %v2010 = vpop.permute.xlu0 %2009
  %v2014 = vsel %vm106, %v2004, 0
  %v2017 = vsel %vm106, %v2006, 0
  %2019 = vmatprep.subr.mxu0 0.0
  %2020 = vmatpush1.msra.mxu0 %v2008
  %2021 = vmatprep.subr.mxu0 0.0
  %2022 = vmatpush1.msra.mxu0 %v2010
  %2023 = vmatprep.subr.mxu0 0.0
  %2024 = vmatpush1.msra.mxu0 0.0
  %2025 = vmatprep.subr.mxu0 0.0
  %2026 = vmatpush1.msra.mxu0 0.0
  %2027 = vmatprep.subr.mxu0 0.0
  %2028 = vmatpush1.msra.mxu0 0.0
  %2029 = vmatprep.subr.mxu0 0.0
  %2030 = vmatpush1.msra.mxu0 0.0
  %2031 = vmatprep.subr.mxu0 0.0
  %2032 = vmatpush1.msra.mxu0 0.0
  %2033 = vmatprep.subr.mxu0 0.0
  %2034 = vmatpush1.msra.mxu0 0.0
  %2035 = vmatprep.subr.mxu0 0.0
  %2036 = vmatpush1.msra.mxu0 0.0
  %2037 = vmatprep.subr.mxu0 0.0
  %2038 = vmatpush1.msra.mxu0 0.0
  %2039 = vmatprep.subr.mxu0 0.0
  %2040 = vmatpush1.msra.mxu0 0.0
  %2041 = vmatprep.subr.mxu0 0.0
  %2042 = vmatpush1.msra.mxu0 0.0
  %2043 = vmatprep.subr.mxu0 0.0
  %2044 = vmatpush1.msra.mxu0 0.0
  %2045 = vmatprep.subr.mxu0 0.0
  %2046 = vmatpush1.msra.mxu0 0.0
  %2047 = vmatprep.subr.mxu0 0.0
  %2048 = vmatpush1.msra.mxu0 0.0
  %2049 = vmatprep.subr.mxu0 0.0
  %2050 = vmatpush1.msra.mxu0 0.0
  %2051 = vmatprep.subr.mxu0 0.0
  %2052 = vmatpush1.msra.mxu0 0.0
  %2053 = vmatprep.subr.mxu0 0.0
  %2054 = vmatpush1.msra.mxu0 0.0
  %2055 = vmatprep.subr.mxu0 0.0
  %2056 = vmatpush1.msra.mxu0 0.0
  %2057 = vmatprep.subr.mxu0 0.0
  %2058 = vmatpush1.msra.mxu0 0.0
  %2059 = vmatprep.subr.mxu0 0.0
  %2060 = vmatpush1.msra.mxu0 0.0
  %2061 = vmatprep.subr.mxu0 0.0
  %2062 = vmatpush1.msra.mxu0 0.0
  %2063 = vmatprep.subr.mxu0 0.0
  %2064 = vmatpush1.msra.mxu0 0.0
  %2065 = vmatprep.subr.mxu0 0.0
  %2066 = vmatpush1.msra.mxu0 0.0
  %2067 = vmatprep.subr.mxu0 0.0
  %2068 = vmatpush1.msra.mxu0 0.0
  %2069 = vmatprep.subr.mxu0 0.0
  %2070 = vmatpush1.msra.mxu0 0.0
  %2071 = vmatprep.subr.mxu0 0.0
  %2072 = vmatpush1.msra.mxu0 0.0
  %2073 = vmatprep.subr.mxu0 0.0
  %2074 = vmatpush1.msra.mxu0 0.0
  %2075 = vmatprep.subr.mxu0 0.0
  %2076 = vmatpush1.msra.mxu0 0.0
  %2077 = vmatprep.subr.mxu0 0.0
  %2078 = vmatpush1.msra.mxu0 0.0
  %2079 = vmatprep.subr.mxu0 0.0
  %2080 = vmatpush1.msra.mxu0 0.0
  %2081 = vmatprep.subr.mxu0 0.0
  %2082 = vmatpush1.msra.mxu0 0.0
  %2083 = vmatprep.mubr.f32.mxu0 0.0
  %2084 = vmatmul.mubr.f32.gmra.mrb[0].mxu0 %v2014
  %v2085 = vpop.f32.mrb[0].mxu0
  %v2086 = vadd.f32 0.0, %v2085
  %v2087 = vpop.f32.mrb[0].mxu0
  %2088 = vmatprep.mubr.f32.mxu0 0.0
  %2089 = vmatmul.mubr.f32.gmra.mrb[0].mxu0 %v2017
  %v2090 = vpop.f32.mrb[0].mxu0
  %v2091 = vadd.f32 0.0, %v2090
  %v2092 = vpop.f32.mrb[0].mxu0
  %2093 = vdwg.mxu0
  %2094 = vrot.lane.b32.xlu0 %v1473, 104
  %v2095 = vpop.permute.xlu0 %2094
  %2096 = vrot.lane.b32.xlu0 %v1478, 104
  %v2097 = vpop.permute.xlu0 %2096
  %2098 = vrot.lane.b32.xlu0 %v304, 104
  %v2099 = vpop.permute.xlu0 %2098
  %2100 = vrot.lane.b32.xlu0 %v309, 104
  %v2101 = vpop.permute.xlu0 %2100
  %v2102 = vsel %vm415, %v2095, 0
  %v2104 = vsel %vm415, %v2097, 0
  %v2106 = vsel %vm415, %v2099, 0
  %v2108 = vsel %vm415, %v2101, 0
  %2110 = vmatprep.subr.mxu0 0.0
  %2111 = vmatpush1.xpose.msra.mxu0 %v2106
  %2112 = vmatprep.subr.mxu0 0.0
  %2113 = vmatpush1.xpose.msra.mxu0 %v2108
  %2114 = vmatprep.subr.mxu0 0.0
  %2115 = vmatpush1.xpose.msra.mxu0 0.0
  %2116 = vmatprep.subr.mxu0 0.0
  %2117 = vmatpush1.xpose.msra.mxu0 0.0
  %2118 = vmatprep.subr.mxu0 0.0
  %2119 = vmatpush1.xpose.msra.mxu0 0.0
  %2120 = vmatprep.subr.mxu0 0.0
  %2121 = vmatpush1.xpose.msra.mxu0 0.0
  %2122 = vmatprep.subr.mxu0 0.0
  %2123 = vmatpush1.xpose.msra.mxu0 0.0
  %2124 = vmatprep.subr.mxu0 0.0
  %2125 = vmatpush1.xpose.msra.mxu0 0.0
  %2126 = vmatprep.subr.mxu0 0.0
  %2127 = vmatpush1.xpose.msra.mxu0 0.0
  %2128 = vmatprep.subr.mxu0 0.0
  %2129 = vmatpush1.xpose.msra.mxu0 0.0
  %2130 = vmatprep.subr.mxu0 0.0
  %2131 = vmatpush1.xpose.msra.mxu0 0.0
  %2132 = vmatprep.subr.mxu0 0.0
  %2133 = vmatpush1.xpose.msra.mxu0 0.0
  %2134 = vmatprep.subr.mxu0 0.0
  %2135 = vmatpush1.xpose.msra.mxu0 0.0
  %2136 = vmatprep.subr.mxu0 0.0
  %2137 = vmatpush1.xpose.msra.mxu0 0.0
  %2138 = vmatprep.subr.mxu0 0.0
  %2139 = vmatpush1.xpose.msra.mxu0 0.0
  %2140 = vmatprep.subr.mxu0 0.0
  %2141 = vmatpush1.xpose.msra.mxu0 0.0
  %2142 = vmatprep.subr.mxu0 0.0
  %2143 = vmatpush1.xpose.msra.mxu0 0.0
  %2144 = vmatprep.subr.mxu0 0.0
  %2145 = vmatpush1.xpose.msra.mxu0 0.0
  %2146 = vmatprep.subr.mxu0 0.0
  %2147 = vmatpush1.xpose.msra.mxu0 0.0
  %2148 = vmatprep.subr.mxu0 0.0
  %2149 = vmatpush1.xpose.msra.mxu0 0.0
  %2150 = vmatprep.subr.mxu0 0.0
  %2151 = vmatpush1.xpose.msra.mxu0 0.0
  %2152 = vmatprep.subr.mxu0 0.0
  %2153 = vmatpush1.xpose.msra.mxu0 0.0
  %2154 = vmatprep.subr.mxu0 0.0
  %2155 = vmatpush1.xpose.msra.mxu0 0.0
  %2156 = vmatprep.subr.mxu0 0.0
  %2157 = vmatpush1.xpose.msra.mxu0 0.0
  %2158 = vmatprep.subr.mxu0 0.0
  %2159 = vmatpush1.xpose.msra.mxu0 0.0
  %2160 = vmatprep.subr.mxu0 0.0
  %2161 = vmatpush1.xpose.msra.mxu0 0.0
  %2162 = vmatprep.subr.mxu0 0.0
  %2163 = vmatpush1.xpose.msra.mxu0 0.0
  %2164 = vmatprep.subr.mxu0 0.0
  %2165 = vmatpush1.xpose.msra.mxu0 0.0
  %2166 = vmatprep.subr.mxu0 0.0
  %2167 = vmatpush1.xpose.msra.mxu0 0.0
  %2168 = vmatprep.subr.mxu0 0.0
  %2169 = vmatpush1.xpose.msra.mxu0 0.0
  %2170 = vmatprep.subr.mxu0 0.0
  %2171 = vmatpush1.xpose.msra.mxu0 0.0
  %2172 = vmatprep.subr.mxu0 0.0
  %2173 = vmatpush1.xpose.msra.mxu0 0.0
  %2174 = vmatprep.mubr.f32.mxu0 0.0
  %2175 = vmatmul.mubr.f32.gmra.mrb[0].mxu0 %v2102
  %v2176 = vpop.f32.mrb[0].mxu0
  %v2177 = vadd.f32 0.0, %v2176
  %v2178 = vpop.f32.mrb[0].mxu0
  %2179 = vmatprep.mubr.f32.mxu0 0.0
  %2180 = vmatmul.mubr.f32.gmra.mrb[0].mxu0 %v2104
  %v2181 = vpop.f32.mrb[0].mxu0
  %v2182 = vadd.f32 0.0, %v2181
  %v2183 = vpop.f32.mrb[0].mxu0
  %2184 = vdwg.mxu0
  %v2185 = vmul.f32 %v2177, 0.35355338
  %v2186 = vmul.f32 %v2182, 0.35355338
  %v2187 = vadd.f32 %v2185, %v215
  %v2188 = vadd.f32 %v2186, %v216
  %v2189 = vsel %vm106, %v2187, -inf
  %2190 = vmax.xlane.f32.xlu0 %v2189
  %v2191 = vpop.xlane.xlu0 %2190
  %v2192 = vsel %vm106, %v2188, -inf
  %2193 = vmax.xlane.f32.xlu0 %v2192
  %v2194 = vpop.xlane.xlu0 %2193
  %v2195 = vsub.f32 %v2187, %v2191
  %v2196 = vsub.f32 %v2188, %v2194
  %v2197 = vmul.f32 %v2195, 1.442695
  %v2198 = vpow.pop %v2197
  %v2199 = vmul.f32 %v2196, 1.442695
  %v2200 = vpow.pop %v2199
  %v2201 = vsel %vm106, %v2198, 0.0
  %2202 = vadd.xlane.f32.xlu0 %v2201
  %v2203 = vpop.xlane.xlu0 %2202
  %v2204 = vsel %vm106, %v2200, 0.0
  %2205 = vadd.xlane.f32.xlu0 %v2204
  %v2206 = vpop.xlane.xlu0 %2205
  %v2207 = vrcp.pop %v2203
  %v2208 = vmul.f32 %v2198, %v2207
  %v2209 = vrcp.pop %v2206
  %v2210 = vmul.f32 %v2200, %v2209
  %2211 = vrot.lane.b32.xlu0 %v304, 72
  %v2212 = vpop.permute.xlu0 %2211
  %2213 = vrot.lane.b32.xlu0 %v309, 72
  %v2214 = vpop.permute.xlu0 %2213
  %v2218 = vsel %vm106, %v2208, 0
  %v2221 = vsel %vm106, %v2210, 0
  %2223 = vmatprep.subr.mxu0 0.0
  %2224 = vmatpush1.msra.mxu0 %v2212
  %2225 = vmatprep.subr.mxu0 0.0
  %2226 = vmatpush1.msra.mxu0 %v2214
  %2227 = vmatprep.subr.mxu0 0.0
  %2228 = vmatpush1.msra.mxu0 0.0
  %2229 = vmatprep.subr.mxu0 0.0
  %2230 = vmatpush1.msra.mxu0 0.0
  %2231 = vmatprep.subr.mxu0 0.0
  %2232 = vmatpush1.msra.mxu0 0.0
  %2233 = vmatprep.subr.mxu0 0.0
  %2234 = vmatpush1.msra.mxu0 0.0
  %2235 = vmatprep.subr.mxu0 0.0
  %2236 = vmatpush1.msra.mxu0 0.0
  %2237 = vmatprep.subr.mxu0 0.0
  %2238 = vmatpush1.msra.mxu0 0.0
  %2239 = vmatprep.subr.mxu0 0.0
  %2240 = vmatpush1.msra.mxu0 0.0
  %2241 = vmatprep.subr.mxu0 0.0
  %2242 = vmatpush1.msra.mxu0 0.0
  %2243 = vmatprep.subr.mxu0 0.0
  %2244 = vmatpush1.msra.mxu0 0.0
  %2245 = vmatprep.subr.mxu0 0.0
  %2246 = vmatpush1.msra.mxu0 0.0
  %2247 = vmatprep.subr.mxu0 0.0
  %2248 = vmatpush1.msra.mxu0 0.0
  %2249 = vmatprep.subr.mxu0 0.0
  %2250 = vmatpush1.msra.mxu0 0.0
  %2251 = vmatprep.subr.mxu0 0.0
  %2252 = vmatpush1.msra.mxu0 0.0
  %2253 = vmatprep.subr.mxu0 0.0
  %2254 = vmatpush1.msra.mxu0 0.0
  %2255 = vmatprep.subr.mxu0 0.0
  %2256 = vmatpush1.msra.mxu0 0.0
  %2257 = vmatprep.subr.mxu0 0.0
  %2258 = vmatpush1.msra.mxu0 0.0
  %2259 = vmatprep.subr.mxu0 0.0
  %2260 = vmatpush1.msra.mxu0 0.0
  %2261 = vmatprep.subr.mxu0 0.0
  %2262 = vmatpush1.msra.mxu0 0.0
  %2263 = vmatprep.subr.mxu0 0.0
  %2264 = vmatpush1.msra.mxu0 0.0
  %2265 = vmatprep.subr.mxu0 0.0
  %2266 = vmatpush1.msra.mxu0 0.0
  %2267 = vmatprep.subr.mxu0 0.0
  %2268 = vmatpush1.msra.mxu0 0.0
  %2269 = vmatprep.subr.mxu0 0.0
  %2270 = vmatpush1.msra.mxu0 0.0
  %2271 = vmatprep.subr.mxu0 0.0
  %2272 = vmatpush1.msra.mxu0 0.0
  %2273 = vmatprep.subr.mxu0 0.0
  %2274 = vmatpush1.msra.mxu0 0.0
  %2275 = vmatprep.subr.mxu0 0.0
  %2276 = vmatpush1.msra.mxu0 0.0
  %2277 = vmatprep.subr.mxu0 0.0
  %2278 = vmatpush1.msra.mxu0 0.0
  %2279 = vmatprep.subr.mxu0 0.0
  %2280 = vmatpush1.msra.mxu0 0.0
  %2281 = vmatprep.subr.mxu0 0.0
  %2282 = vmatpush1.msra.mxu0 0.0
  %2283 = vmatprep.subr.mxu0 0.0
  %2284 = vmatpush1.msra.mxu0 0.0
  %2285 = vmatprep.subr.mxu0 0.0
  %2286 = vmatpush1.msra.mxu0 0.0
  %2287 = vmatprep.mubr.f32.mxu0 0.0
  %2288 = vmatmul.mubr.f32.gmra.mrb[0].mxu0 %v2218
  %v2289 = vpop.f32.mrb[0].mxu0
  %v2290 = vadd.f32 0.0, %v2289
  %v2291 = vpop.f32.mrb[0].mxu0
  %2292 = vmatprep.mubr.f32.mxu0 0.0
  %2293 = vmatmul.mubr.f32.gmra.mrb[0].mxu0 %v2221
  %v2294 = vpop.f32.mrb[0].mxu0
  %v2295 = vadd.f32 0.0, %v2294
  %v2296 = vpop.f32.mrb[0].mxu0
  %2297 = vdwg.mxu0
  %2300 = vrot.lane.b32.xlu0 %v1882, 8
  %v2301 = vpop.permute.xlu0 %2300
  %2302 = vrot.lane.b32.xlu0 %v1887, 8
  %v2303 = vpop.permute.xlu0 %2302
  %2308 = vrot.lane.b32.xlu0 %v2086, 16
  %v2309 = vpop.permute.xlu0 %2308
  %2310 = vrot.lane.b32.xlu0 %v2091, 16
  %v2311 = vpop.permute.xlu0 %2310
  %2316 = vrot.lane.b32.xlu0 %v2290, 24
  %v2317 = vpop.permute.xlu0 %2316
  %2318 = vrot.lane.b32.xlu0 %v2295, 24
  %v2319 = vpop.permute.xlu0 %2318
  %v2322 = vsel %vm415, %v1678, %v2301
  %v2323 = vsel %vm415, %v1683, %v2303
  %v2324 = vsel %vm106, %v2322, %v2309
  %v2325 = vsel %vm106, %v2323, %v2311
  %v2326 = vsel %vm1252, %v2324, %v2317
  %v2327 = vsel %vm1252, %v2325, %v2319
  %v2329 = vlaneseq
  %v2330 = vshrl.u32 %v2329, 7
  %v2331 = vsub.s32 0, %v2330
  %v2332 = vrot.slane %v1485, %v2331
  %v2335 = vsel %vm230, %v2326, 0
  %v2338 = vsel %vm230, %v2327, 0
  %2340 = vmatprep.subr.mxu0 0.0
  %2341 = vmatpush1.msra.mxu0 %v1481
  %2342 = vmatprep.subr.mxu0 0.0
  %2343 = vmatpush1.msra.mxu0 %v1482
  %2344 = vmatprep.subr.mxu0 0.0
  %2345 = vmatpush1.msra.mxu0 %v1483
  %2346 = vmatprep.subr.mxu0 0.0
  %2347 = vmatpush1.msra.mxu0 %v1484
  %2348 = vmatprep.subr.mxu0 0.0
  %2349 = vmatpush1.msra.mxu0 0.0
  %2350 = vmatprep.subr.mxu0 0.0
  %2351 = vmatpush1.msra.mxu0 0.0
  %2352 = vmatprep.subr.mxu0 0.0
  %2353 = vmatpush1.msra.mxu0 0.0
  %2354 = vmatprep.subr.mxu0 0.0
  %2355 = vmatpush1.msra.mxu0 0.0
  %2356 = vmatprep.subr.mxu0 0.0
  %2357 = vmatpush1.msra.mxu0 0.0
  %2358 = vmatprep.subr.mxu0 0.0
  %2359 = vmatpush1.msra.mxu0 0.0
  %2360 = vmatprep.subr.mxu0 0.0
  %2361 = vmatpush1.msra.mxu0 0.0
  %2362 = vmatprep.subr.mxu0 0.0
  %2363 = vmatpush1.msra.mxu0 0.0
  %2364 = vmatprep.subr.mxu0 0.0
  %2365 = vmatpush1.msra.mxu0 0.0
  %2366 = vmatprep.subr.mxu0 0.0
  %2367 = vmatpush1.msra.mxu0 0.0
  %2368 = vmatprep.subr.mxu0 0.0
  %2369 = vmatpush1.msra.mxu0 0.0
  %2370 = vmatprep.subr.mxu0 0.0
  %2371 = vmatpush1.msra.mxu0 0.0
  %2372 = vmatprep.subr.mxu0 0.0
  %2373 = vmatpush1.msra.mxu0 0.0
  %2374 = vmatprep.subr.mxu0 0.0
  %2375 = vmatpush1.msra.mxu0 0.0
  %2376 = vmatprep.subr.mxu0 0.0
  %2377 = vmatpush1.msra.mxu0 0.0
  %2378 = vmatprep.subr.mxu0 0.0
  %2379 = vmatpush1.msra.mxu0 0.0
  %2380 = vmatprep.subr.mxu0 0.0
  %2381 = vmatpush1.msra.mxu0 0.0
  %2382 = vmatprep.subr.mxu0 0.0
  %2383 = vmatpush1.msra.mxu0 0.0
  %2384 = vmatprep.subr.mxu0 0.0
  %2385 = vmatpush1.msra.mxu0 0.0
  %2386 = vmatprep.subr.mxu0 0.0
  %2387 = vmatpush1.msra.mxu0 0.0
  %2388 = vmatprep.subr.mxu0 0.0
  %2389 = vmatpush1.msra.mxu0 0.0
  %2390 = vmatprep.subr.mxu0 0.0
  %2391 = vmatpush1.msra.mxu0 0.0
  %2392 = vmatprep.subr.mxu0 0.0
  %2393 = vmatpush1.msra.mxu0 0.0
  %2394 = vmatprep.subr.mxu0 0.0
  %2395 = vmatpush1.msra.mxu0 0.0
  %2396 = vmatprep.subr.mxu0 0.0
  %2397 = vmatpush1.msra.mxu0 0.0
  %2398 = vmatprep.subr.mxu0 0.0
  %2399 = vmatpush1.msra.mxu0 0.0
  %2400 = vmatprep.subr.mxu0 0.0
  %2401 = vmatpush1.msra.mxu0 0.0
  %2402 = vmatprep.subr.mxu0 0.0
  %2403 = vmatpush1.msra.mxu0 0.0
  %2404 = vmatprep.mubr.f32.mxu0 0.0
  %2405 = vmatmul.mubr.f32.gmra.mrb[0].mxu0 %v2335
  %v2406 = vpop.f32.mrb[0].mxu0
  %v2407 = vadd.f32 %v2332, %v2406
  %v2408 = vpop.f32.mrb[0].mxu0
  %2409 = vmatprep.mubr.f32.mxu0 0.0
  %2410 = vmatmul.mubr.f32.gmra.mrb[0].mxu0 %v2338
  %v2411 = vpop.f32.mrb[0].mxu0
  %v2412 = vadd.f32 %v2332, %v2411
  %v2413 = vpop.f32.mrb[0].mxu0
  %2414 = vdwg.mxu0
  %v2415 = vadd.f32 %v1387, %v2407
  %v2416 = vadd.f32 %v1388, %v2412
  %v2417 = vld [vmem:[%s17] sm:$0x1]
  %v2418 = vld [vmem:[%s18] sm:$0x1]
  %v2419 = vsel %vm230, %v2415, 0.0
  %2420 = vadd.xlane.f32.xlu0 %v2419
  %v2421 = vpop.xlane.xlu0 %2420
  %v2422 = vsel %vm230, %v2416, 0.0
  %2423 = vadd.xlane.f32.xlu0 %v2422
  %v2424 = vpop.xlane.xlu0 %2423
  %v2425 = vmul.f32 %v2421, %v1352
  %v2426 = vmul.f32 %v2424, %v1352
  %v2427 = vsub.f32 %v2415, %v2425
  %v2428 = vsub.f32 %v2416, %v2426
  %v2429 = vmul.f32 %v2427, %v2427
  %v2430 = vmul.f32 %v2428, %v2428
  %v2431 = vsel %vm230, %v2429, 0.0
  %2432 = vadd.xlane.f32.xlu0 %v2431
  %v2433 = vpop.xlane.xlu0 %2432
  %v2434 = vsel %vm230, %v2430, 0.0
  %2435 = vadd.xlane.f32.xlu0 %v2434
  %v2436 = vpop.xlane.xlu0 %2435
  %v2437 = vmul.f32 %v2433, %v1352
  %v2438 = vmul.f32 %v2436, %v1352
  %v2439 = vadd.f32 %v2437, 1e-05
  %v2440 = vadd.f32 %v2438, 1e-05
  %v2441 = vrsqrt.pop %v2439
  %v2442 = vrsqrt.pop %v2440
  %v2443 = vmul.f32 %v2427, %v2441
  %v2444 = vmul.f32 %v2428, %v2442
  %v2446 = vlaneseq
  %v2447 = vshrl.u32 %v2446, 7
  %v2448 = vsub.s32 0, %v2447
  %v2449 = vrot.slane %v2417, %v2448
  %v2451 = vmul.f32 %v2443, %v2449
  %v2452 = vmul.f32 %v2444, %v2449
  %v2454 = vlaneseq
  %v2455 = vshrl.u32 %v2454, 7
  %v2456 = vsub.s32 0, %v2455
  %v2457 = vrot.slane %v2418, %v2456
  %v2459 = vadd.f32 %v2451, %v2457
  %v2460 = vadd.f32 %v2452, %v2457
  %v2461 = vpack.c.bf16 %v2460, %v2459
  %v2462 = vld [vmem:[%s21] sm:$0xff]
  %v2463 = vld [vmem:[%s21 + $0x8] sm:$0xff]
  %v2464 = vld [vmem:[%s21 + $0x10] sm:$0xff]
  %v2465 = vld [vmem:[%s21 + $0x18] sm:$0xff]
  %v2466 = vld [vmem:[%s21 + $0x20] sm:$0xff]
  %v2467 = vld [vmem:[%s21 + $0x28] sm:$0xff]
  %v2468 = vld [vmem:[%s21 + $0x30] sm:$0xff]
  %v2469 = vld [vmem:[%s21 + $0x38] sm:$0xff]
  %v2470 = vld [vmem:[%s22] sm:$0xf]
  %v2472 = vlaneseq
  %v2473 = vshrl.u32 %v2472, 7
  %v2474 = vsub.s32 0, %v2473
  %v2475 = vrot.slane %v2470, %v2474
  %v2476 = vlaneseq
  %v2477 = vshrl.u32 %v2476, 7
  %v2478 = vsub.s32 1, %v2477
  %v2479 = vrot.slane %v2470, %v2478
  %v2480 = vlaneseq
  %v2481 = vshrl.u32 %v2480, 7
  %v2482 = vsub.s32 2, %v2481
  %v2483 = vrot.slane %v2470, %v2482
  %v2484 = vlaneseq
  %v2485 = vshrl.u32 %v2484, 7
  %v2486 = vsub.s32 3, %v2485
  %v2487 = vrot.slane %v2470, %v2486
  %v2500 = vunpack.c.l.b16 %v2462
  %v2501 = vunpack.c.h.b16 %v2462
  %v2502 = vunpack.c.l.b16 %v2463
  %v2503 = vunpack.c.h.b16 %v2463
  %v2504 = vunpack.c.l.b16 %v2464
  %v2505 = vunpack.c.h.b16 %v2464
  %v2506 = vunpack.c.l.b16 %v2465
  %v2507 = vunpack.c.h.b16 %v2465
  %v2508 = vunpack.c.l.b16 %v2466
  %v2509 = vunpack.c.h.b16 %v2466
  %v2510 = vunpack.c.l.b16 %v2467
  %v2511 = vunpack.c.h.b16 %v2467
  %v2512 = vunpack.c.l.b16 %v2468
  %v2513 = vunpack.c.h.b16 %v2468
  %v2514 = vunpack.c.l.b16 %v2469
  %v2515 = vunpack.c.h.b16 %v2469
  %v2516 = vpack.c.b16 %v2504, %v2500
  %v2517 = vpack.c.b16 %v2505, %v2501
  %v2518 = vpack.c.b16 %v2506, %v2502
  %v2519 = vpack.c.b16 %v2507, %v2503
  %v2520 = vpack.c.b16 %v2512, %v2508
  %v2521 = vpack.c.b16 %v2513, %v2509
  %v2522 = vpack.c.b16 %v2514, %v2510
  %v2523 = vpack.c.b16 %v2515, %v2511
  %v2533 = vsel %vm230, %v2461, 0
  %2535 = vmatprep.subr.bf16.mxu0 %v2517
  %2536 = vmatpush1.bf16.msra.mxu0 %v2516
  %2537 = vmatprep.subr.bf16.mxu0 %v2521
  %2538 = vmatpush1.bf16.msra.mxu0 %v2520
  %2539 = vmatprep.subr.bf16.mxu0 0
  %2540 = vmatpush1.bf16.msra.mxu0 0
  %2541 = vmatprep.subr.bf16.mxu0 0
  %2542 = vmatpush1.bf16.msra.mxu0 0
  %2543 = vmatprep.subr.bf16.mxu0 0
  %2544 = vmatpush1.bf16.msra.mxu0 0
  %2545 = vmatprep.subr.bf16.mxu0 0
  %2546 = vmatpush1.bf16.msra.mxu0 0
  %2547 = vmatprep.subr.bf16.mxu0 0
  %2548 = vmatpush1.bf16.msra.mxu0 0
  %2549 = vmatprep.subr.bf16.mxu0 0
  %2550 = vmatpush1.bf16.msra.mxu0 0
  %2551 = vmatprep.subr.bf16.mxu0 0
  %2552 = vmatpush1.bf16.msra.mxu0 0
  %2553 = vmatprep.subr.bf16.mxu0 0
  %2554 = vmatpush1.bf16.msra.mxu0 0
  %2555 = vmatprep.subr.bf16.mxu0 0
  %2556 = vmatpush1.bf16.msra.mxu0 0
  %2557 = vmatprep.subr.bf16.mxu0 0
  %2558 = vmatpush1.bf16.msra.mxu0 0
  %2559 = vmatprep.subr.bf16.mxu0 0
  %2560 = vmatpush1.bf16.msra.mxu0 0
  %2561 = vmatprep.subr.bf16.mxu0 0
  %2562 = vmatpush1.bf16.msra.mxu0 0
  %2563 = vmatprep.subr.bf16.mxu0 0
  %2564 = vmatpush1.bf16.msra.mxu0 0
  %2565 = vmatprep.subr.bf16.mxu0 0
  %2566 = vmatpush1.bf16.msra.mxu0 0
  %2567 = vmatprep.mubr.bf16.mxu0 0
  %2568 = vmatmul.mubr.bf16.gmra.mrb[0].mxu0 %v2533
  %v2569 = vpop.f32.mrb[0].mxu0
  %v2570 = vadd.f32 %v2475, %v2569
  %v2571 = vpop.f32.mrb[0].mxu0
  %v2572 = vadd.f32 %v2479, %v2571
  %v2573 = vpop.f32.mrb[0].mxu0
  %v2574 = vadd.f32 %v2475, %v2573
  %v2575 = vpop.f32.mrb[0].mxu0
  %v2576 = vadd.f32 %v2479, %v2575
  %2577 = vdwg.mxu0
  %2578 = vmatprep.subr.bf16.mxu0 %v2519
  %2579 = vmatpush1.bf16.msra.mxu0 %v2518
  %2580 = vmatprep.subr.bf16.mxu0 %v2523
  %2581 = vmatpush1.bf16.msra.mxu0 %v2522
  %2582 = vmatprep.subr.bf16.mxu0 0
  %2583 = vmatpush1.bf16.msra.mxu0 0
  %2584 = vmatprep.subr.bf16.mxu0 0
  %2585 = vmatpush1.bf16.msra.mxu0 0
  %2586 = vmatprep.subr.bf16.mxu0 0
  %2587 = vmatpush1.bf16.msra.mxu0 0
  %2588 = vmatprep.subr.bf16.mxu0 0
  %2589 = vmatpush1.bf16.msra.mxu0 0
  %2590 = vmatprep.subr.bf16.mxu0 0
  %2591 = vmatpush1.bf16.msra.mxu0 0
  %2592 = vmatprep.subr.bf16.mxu0 0
  %2593 = vmatpush1.bf16.msra.mxu0 0
  %2594 = vmatprep.subr.bf16.mxu0 0
  %2595 = vmatpush1.bf16.msra.mxu0 0
  %2596 = vmatprep.subr.bf16.mxu0 0
  %2597 = vmatpush1.bf16.msra.mxu0 0
  %2598 = vmatprep.subr.bf16.mxu0 0
  %2599 = vmatpush1.bf16.msra.mxu0 0
  %2600 = vmatprep.subr.bf16.mxu0 0
  %2601 = vmatpush1.bf16.msra.mxu0 0
  %2602 = vmatprep.subr.bf16.mxu0 0
  %2603 = vmatpush1.bf16.msra.mxu0 0
  %2604 = vmatprep.subr.bf16.mxu0 0
  %2605 = vmatpush1.bf16.msra.mxu0 0
  %2606 = vmatprep.subr.bf16.mxu0 0
  %2607 = vmatpush1.bf16.msra.mxu0 0
  %2608 = vmatprep.subr.bf16.mxu0 0
  %2609 = vmatpush1.bf16.msra.mxu0 0
  %2610 = vmatprep.mubr.bf16.mxu0 0
  %2611 = vmatmul.mubr.bf16.gmra.mrb[0].mxu0 %v2533
  %v2612 = vpop.f32.mrb[0].mxu0
  %v2613 = vadd.f32 %v2483, %v2612
  %v2614 = vpop.f32.mrb[0].mxu0
  %v2615 = vadd.f32 %v2487, %v2614
  %v2616 = vpop.f32.mrb[0].mxu0
  %v2617 = vadd.f32 %v2483, %v2616
  %v2618 = vpop.f32.mrb[0].mxu0
  %v2619 = vadd.f32 %v2487, %v2618
  %2620 = vdwg.mxu0
  %v2621 = vmax.f32 %v2570, 0.0
  %v2622 = vmax.f32 %v2572, 0.0
  %v2623 = vmax.f32 %v2613, 0.0
  %v2624 = vmax.f32 %v2615, 0.0
  %v2625 = vmax.f32 %v2574, 0.0
  %v2626 = vmax.f32 %v2576, 0.0
  %v2627 = vmax.f32 %v2617, 0.0
  %v2628 = vmax.f32 %v2619, 0.0
  %v2629 = vpack.c.bf16 %v2625, %v2621
  %v2630 = vpack.c.bf16 %v2626, %v2622
  %v2631 = vpack.c.bf16 %v2627, %v2623
  %v2632 = vpack.c.bf16 %v2628, %v2624
  %v2633 = vld [vmem:[%s23] sm:$0xf]
  %v2634 = vld [vmem:[%s23 + $0x4] sm:$0xf]
  %v2635 = vld [vmem:[%s23 + $0x8] sm:$0xf]
  %v2636 = vld [vmem:[%s23 + $0xc] sm:$0xf]
  %v2637 = vld [vmem:[%s23 + $0x10] sm:$0xf]
  %v2638 = vld [vmem:[%s23 + $0x14] sm:$0xf]
  %v2639 = vld [vmem:[%s23 + $0x18] sm:$0xf]
  %v2640 = vld [vmem:[%s23 + $0x1c] sm:$0xf]
  %v2641 = vld [vmem:[%s23 + $0x20] sm:$0xf]
  %v2642 = vld [vmem:[%s23 + $0x24] sm:$0xf]
  %v2643 = vld [vmem:[%s23 + $0x28] sm:$0xf]
  %v2644 = vld [vmem:[%s23 + $0x2c] sm:$0xf]
  %v2645 = vld [vmem:[%s23 + $0x30] sm:$0xf]
  %v2646 = vld [vmem:[%s23 + $0x34] sm:$0xf]
  %v2647 = vld [vmem:[%s23 + $0x38] sm:$0xf]
  %v2648 = vld [vmem:[%s23 + $0x3c] sm:$0xf]
  %v2649 = vld [vmem:[%s23 + $0x40] sm:$0xf]
  %v2650 = vld [vmem:[%s23 + $0x44] sm:$0xf]
  %v2651 = vld [vmem:[%s23 + $0x48] sm:$0xf]
  %v2652 = vld [vmem:[%s23 + $0x4c] sm:$0xf]
  %v2653 = vld [vmem:[%s23 + $0x50] sm:$0xf]
  %v2654 = vld [vmem:[%s23 + $0x54] sm:$0xf]
  %v2655 = vld [vmem:[%s23 + $0x58] sm:$0xf]
  %v2656 = vld [vmem:[%s23 + $0x5c] sm:$0xf]
  %v2657 = vld [vmem:[%s23 + $0x60] sm:$0xf]
  %v2658 = vld [vmem:[%s23 + $0x64] sm:$0xf]
  %v2659 = vld [vmem:[%s23 + $0x68] sm:$0xf]
  %v2660 = vld [vmem:[%s23 + $0x6c] sm:$0xf]
  %v2661 = vld [vmem:[%s23 + $0x70] sm:$0xf]
  %v2662 = vld [vmem:[%s23 + $0x74] sm:$0xf]
  %v2663 = vld [vmem:[%s23 + $0x78] sm:$0xf]
  %v2664 = vld [vmem:[%s23 + $0x7c] sm:$0xf]
  %v2665 = vld [vmem:[%s23 + $0x80] sm:$0xf]
  %v2666 = vld [vmem:[%s23 + $0x84] sm:$0xf]
  %v2667 = vld [vmem:[%s23 + $0x88] sm:$0xf]
  %v2668 = vld [vmem:[%s23 + $0x8c] sm:$0xf]
  %v2669 = vld [vmem:[%s23 + $0x90] sm:$0xf]
  %v2670 = vld [vmem:[%s23 + $0x94] sm:$0xf]
  %v2671 = vld [vmem:[%s23 + $0x98] sm:$0xf]
  %v2672 = vld [vmem:[%s23 + $0x9c] sm:$0xf]
  %v2673 = vld [vmem:[%s23 + $0xa0] sm:$0xf]
  %v2674 = vld [vmem:[%s23 + $0xa4] sm:$0xf]
  %v2675 = vld [vmem:[%s23 + $0xa8] sm:$0xf]
  %v2676 = vld [vmem:[%s23 + $0xac] sm:$0xf]
  %v2677 = vld [vmem:[%s23 + $0xb0] sm:$0xf]
  %v2678 = vld [vmem:[%s23 + $0xb4] sm:$0xf]
  %v2679 = vld [vmem:[%s23 + $0xb8] sm:$0xf]
  %v2680 = vld [vmem:[%s23 + $0xbc] sm:$0xf]
  %v2681 = vld [vmem:[%s23 + $0xc0] sm:$0xf]
  %v2682 = vld [vmem:[%s23 + $0xc4] sm:$0xf]
  %v2683 = vld [vmem:[%s23 + $0xc8] sm:$0xf]
  %v2684 = vld [vmem:[%s23 + $0xcc] sm:$0xf]
  %v2685 = vld [vmem:[%s23 + $0xd0] sm:$0xf]
  %v2686 = vld [vmem:[%s23 + $0xd4] sm:$0xf]
  %v2687 = vld [vmem:[%s23 + $0xd8] sm:$0xf]
  %v2688 = vld [vmem:[%s23 + $0xdc] sm:$0xf]
  %v2689 = vld [vmem:[%s23 + $0xe0] sm:$0xf]
  %v2690 = vld [vmem:[%s23 + $0xe4] sm:$0xf]
  %v2691 = vld [vmem:[%s23 + $0xe8] sm:$0xf]
  %v2692 = vld [vmem:[%s23 + $0xec] sm:$0xf]
  %v2693 = vld [vmem:[%s23 + $0xf0] sm:$0xf]
  %v2694 = vld [vmem:[%s23 + $0xf4] sm:$0xf]
  %v2695 = vld [vmem:[%s23 + $0xf8] sm:$0xf]
  %v2696 = vld [vmem:[%s23 + $0xfc] sm:$0xf]
  %s2697 = scalar_lea.vmem %s21, 64
  %v2698 = vld [vmem:[%s2697] sm:$0xff]
  %v2699 = vld [vmem:[%s2697 + $0x8] sm:$0xff]
  %v2700 = vld [vmem:[%s2697 + $0x10] sm:$0xff]
  %v2701 = vld [vmem:[%s2697 + $0x18] sm:$0xff]
  %v2702 = vld [vmem:[%s2697 + $0x20] sm:$0xff]
  %v2703 = vld [vmem:[%s2697 + $0x28] sm:$0xff]
  %v2704 = vld [vmem:[%s2697 + $0x30] sm:$0xff]
  %v2705 = vld [vmem:[%s2697 + $0x38] sm:$0xff]
  %s2706 = scalar_lea.vmem %s22, 4
  %v2707 = vld [vmem:[%s2706] sm:$0xf]
  %v2709 = vlaneseq
  %v2710 = vshrl.u32 %v2709, 7
  %v2711 = vsub.s32 0, %v2710
  %v2712 = vrot.slane %v2707, %v2711
  %v2713 = vlaneseq
  %v2714 = vshrl.u32 %v2713, 7
  %v2715 = vsub.s32 1, %v2714
  %v2716 = vrot.slane %v2707, %v2715
  %v2717 = vlaneseq
  %v2718 = vshrl.u32 %v2717, 7
  %v2719 = vsub.s32 2, %v2718
  %v2720 = vrot.slane %v2707, %v2719
  %v2721 = vlaneseq
  %v2722 = vshrl.u32 %v2721, 7
  %v2723 = vsub.s32 3, %v2722
  %v2724 = vrot.slane %v2707, %v2723
  %v2737 = vunpack.c.l.b16 %v2698
  %v2738 = vunpack.c.h.b16 %v2698
  %v2739 = vunpack.c.l.b16 %v2699
  %v2740 = vunpack.c.h.b16 %v2699
  %v2741 = vunpack.c.l.b16 %v2700
  %v2742 = vunpack.c.h.b16 %v2700
  %v2743 = vunpack.c.l.b16 %v2701
  %v2744 = vunpack.c.h.b16 %v2701
  %v2745 = vunpack.c.l.b16 %v2702
  %v2746 = vunpack.c.h.b16 %v2702
  %v2747 = vunpack.c.l.b16 %v2703
  %v2748 = vunpack.c.h.b16 %v2703
  %v2749 = vunpack.c.l.b16 %v2704
  %v2750 = vunpack.c.h.b16 %v2704
  %v2751 = vunpack.c.l.b16 %v2705
  %v2752 = vunpack.c.h.b16 %v2705
  %v2753 = vpack.c.b16 %v2741, %v2737
  %v2754 = vpack.c.b16 %v2742, %v2738
  %v2755 = vpack.c.b16 %v2743, %v2739
  %v2756 = vpack.c.b16 %v2744, %v2740
  %v2757 = vpack.c.b16 %v2749, %v2745
  %v2758 = vpack.c.b16 %v2750, %v2746
  %v2759 = vpack.c.b16 %v2751, %v2747
  %v2760 = vpack.c.b16 %v2752, %v2748
  %2769 = vmatprep.subr.bf16.mxu0 %v2754
  %2770 = vmatpush1.bf16.msra.mxu0 %v2753
  %2771 = vmatprep.subr.bf16.mxu0 %v2758
  %2772 = vmatpush1.bf16.msra.mxu0 %v2757
  %2773 = vmatprep.subr.bf16.mxu0 0
  %2774 = vmatpush1.bf16.msra.mxu0 0
  %2775 = vmatprep.subr.bf16.mxu0 0
  %2776 = vmatpush1.bf16.msra.mxu0 0
  %2777 = vmatprep.subr.bf16.mxu0 0
  %2778 = vmatpush1.bf16.msra.mxu0 0
  %2779 = vmatprep.subr.bf16.mxu0 0
  %2780 = vmatpush1.bf16.msra.mxu0 0
  %2781 = vmatprep.subr.bf16.mxu0 0
  %2782 = vmatpush1.bf16.msra.mxu0 0
  %2783 = vmatprep.subr.bf16.mxu0 0
  %2784 = vmatpush1.bf16.msra.mxu0 0
  %2785 = vmatprep.subr.bf16.mxu0 0
  %2786 = vmatpush1.bf16.msra.mxu0 0
  %2787 = vmatprep.subr.bf16.mxu0 0
  %2788 = vmatpush1.bf16.msra.mxu0 0
  %2789 = vmatprep.subr.bf16.mxu0 0
  %2790 = vmatpush1.bf16.msra.mxu0 0
  %2791 = vmatprep.subr.bf16.mxu0 0
  %2792 = vmatpush1.bf16.msra.mxu0 0
  %2793 = vmatprep.subr.bf16.mxu0 0
  %2794 = vmatpush1.bf16.msra.mxu0 0
  %2795 = vmatprep.subr.bf16.mxu0 0
  %2796 = vmatpush1.bf16.msra.mxu0 0
  %2797 = vmatprep.subr.bf16.mxu0 0
  %2798 = vmatpush1.bf16.msra.mxu0 0
  %2799 = vmatprep.subr.bf16.mxu0 0
  %2800 = vmatpush1.bf16.msra.mxu0 0
  %2801 = vmatprep.mubr.bf16.mxu0 0
  %2802 = vmatmul.mubr.bf16.gmra.mrb[0].mxu0 %v2533
  %v2803 = vpop.f32.mrb[0].mxu0
  %v2804 = vadd.f32 %v2712, %v2803
  %v2805 = vpop.f32.mrb[0].mxu0
  %v2806 = vadd.f32 %v2716, %v2805
  %v2807 = vpop.f32.mrb[0].mxu0
  %v2808 = vadd.f32 %v2712, %v2807
  %v2809 = vpop.f32.mrb[0].mxu0
  %v2810 = vadd.f32 %v2716, %v2809
  %2811 = vdwg.mxu0
  %2812 = vmatprep.subr.bf16.mxu0 %v2756
  %2813 = vmatpush1.bf16.msra.mxu0 %v2755
  %2814 = vmatprep.subr.bf16.mxu0 %v2760
  %2815 = vmatpush1.bf16.msra.mxu0 %v2759
  %2816 = vmatprep.subr.bf16.mxu0 0
  %2817 = vmatpush1.bf16.msra.mxu0 0
  %2818 = vmatprep.subr.bf16.mxu0 0
  %2819 = vmatpush1.bf16.msra.mxu0 0
  %2820 = vmatprep.subr.bf16.mxu0 0
  %2821 = vmatpush1.bf16.msra.mxu0 0
  %2822 = vmatprep.subr.bf16.mxu0 0
  %2823 = vmatpush1.bf16.msra.mxu0 0
  %2824 = vmatprep.subr.bf16.mxu0 0
  %2825 = vmatpush1.bf16.msra.mxu0 0
  %2826 = vmatprep.subr.bf16.mxu0 0
  %2827 = vmatpush1.bf16.msra.mxu0 0
  %2828 = vmatprep.subr.bf16.mxu0 0
  %2829 = vmatpush1.bf16.msra.mxu0 0
  %2830 = vmatprep.subr.bf16.mxu0 0
  %2831 = vmatpush1.bf16.msra.mxu0 0
  %2832 = vmatprep.subr.bf16.mxu0 0
  %2833 = vmatpush1.bf16.msra.mxu0 0
  %2834 = vmatprep.subr.bf16.mxu0 0
  %2835 = vmatpush1.bf16.msra.mxu0 0
  %2836 = vmatprep.subr.bf16.mxu0 0
  %2837 = vmatpush1.bf16.msra.mxu0 0
  %2838 = vmatprep.subr.bf16.mxu0 0
  %2839 = vmatpush1.bf16.msra.mxu0 0
  %2840 = vmatprep.subr.bf16.mxu0 0
  %2841 = vmatpush1.bf16.msra.mxu0 0
  %2842 = vmatprep.subr.bf16.mxu0 0
  %2843 = vmatpush1.bf16.msra.mxu0 0
  %2844 = vmatprep.mubr.bf16.mxu0 0
  %2845 = vmatmul.mubr.bf16.gmra.mrb[0].mxu0 %v2533
  %v2846 = vpop.f32.mrb[0].mxu0
  %v2847 = vadd.f32 %v2720, %v2846
  %v2848 = vpop.f32.mrb[0].mxu0
  %v2849 = vadd.f32 %v2724, %v2848
  %v2850 = vpop.f32.mrb[0].mxu0
  %v2851 = vadd.f32 %v2720, %v2850
  %v2852 = vpop.f32.mrb[0].mxu0
  %v2853 = vadd.f32 %v2724, %v2852
  %2854 = vdwg.mxu0
  %v2855 = vmax.f32 %v2804, 0.0
  %v2856 = vmax.f32 %v2806, 0.0
  %v2857 = vmax.f32 %v2847, 0.0
  %v2858 = vmax.f32 %v2849, 0.0
  %v2859 = vmax.f32 %v2808, 0.0
  %v2860 = vmax.f32 %v2810, 0.0
  %v2861 = vmax.f32 %v2851, 0.0
  %v2862 = vmax.f32 %v2853, 0.0
  %v2863 = vpack.c.bf16 %v2859, %v2855
  %v2864 = vpack.c.bf16 %v2860, %v2856
  %v2865 = vpack.c.bf16 %v2861, %v2857
  %v2866 = vpack.c.bf16 %v2862, %v2858
  %s2867 = scalar_lea.vmem %s23, 256
  %v2868 = vld [vmem:[%s2867] sm:$0xf]
  %v2869 = vld [vmem:[%s2867 + $0x4] sm:$0xf]
  %v2870 = vld [vmem:[%s2867 + $0x8] sm:$0xf]
  %v2871 = vld [vmem:[%s2867 + $0xc] sm:$0xf]
  %v2872 = vld [vmem:[%s2867 + $0x10] sm:$0xf]
  %v2873 = vld [vmem:[%s2867 + $0x14] sm:$0xf]
  %v2874 = vld [vmem:[%s2867 + $0x18] sm:$0xf]
  %v2875 = vld [vmem:[%s2867 + $0x1c] sm:$0xf]
  %v2876 = vld [vmem:[%s2867 + $0x20] sm:$0xf]
  %v2877 = vld [vmem:[%s2867 + $0x24] sm:$0xf]
  %v2878 = vld [vmem:[%s2867 + $0x28] sm:$0xf]
  %v2879 = vld [vmem:[%s2867 + $0x2c] sm:$0xf]
  %v2880 = vld [vmem:[%s2867 + $0x30] sm:$0xf]
  %v2881 = vld [vmem:[%s2867 + $0x34] sm:$0xf]
  %v2882 = vld [vmem:[%s2867 + $0x38] sm:$0xf]
  %v2883 = vld [vmem:[%s2867 + $0x3c] sm:$0xf]
  %v2884 = vld [vmem:[%s2867 + $0x40] sm:$0xf]
  %v2885 = vld [vmem:[%s2867 + $0x44] sm:$0xf]
  %v2886 = vld [vmem:[%s2867 + $0x48] sm:$0xf]
  %v2887 = vld [vmem:[%s2867 + $0x4c] sm:$0xf]
  %v2888 = vld [vmem:[%s2867 + $0x50] sm:$0xf]
  %v2889 = vld [vmem:[%s2867 + $0x54] sm:$0xf]
  %v2890 = vld [vmem:[%s2867 + $0x58] sm:$0xf]
  %v2891 = vld [vmem:[%s2867 + $0x5c] sm:$0xf]
  %v2892 = vld [vmem:[%s2867 + $0x60] sm:$0xf]
  %v2893 = vld [vmem:[%s2867 + $0x64] sm:$0xf]
  %v2894 = vld [vmem:[%s2867 + $0x68] sm:$0xf]
  %v2895 = vld [vmem:[%s2867 + $0x6c] sm:$0xf]
  %v2896 = vld [vmem:[%s2867 + $0x70] sm:$0xf]
  %v2897 = vld [vmem:[%s2867 + $0x74] sm:$0xf]
  %v2898 = vld [vmem:[%s2867 + $0x78] sm:$0xf]
  %v2899 = vld [vmem:[%s2867 + $0x7c] sm:$0xf]
  %v2900 = vld [vmem:[%s2867 + $0x80] sm:$0xf]
  %v2901 = vld [vmem:[%s2867 + $0x84] sm:$0xf]
  %v2902 = vld [vmem:[%s2867 + $0x88] sm:$0xf]
  %v2903 = vld [vmem:[%s2867 + $0x8c] sm:$0xf]
  %v2904 = vld [vmem:[%s2867 + $0x90] sm:$0xf]
  %v2905 = vld [vmem:[%s2867 + $0x94] sm:$0xf]
  %v2906 = vld [vmem:[%s2867 + $0x98] sm:$0xf]
  %v2907 = vld [vmem:[%s2867 + $0x9c] sm:$0xf]
  %v2908 = vld [vmem:[%s2867 + $0xa0] sm:$0xf]
  %v2909 = vld [vmem:[%s2867 + $0xa4] sm:$0xf]
  %v2910 = vld [vmem:[%s2867 + $0xa8] sm:$0xf]
  %v2911 = vld [vmem:[%s2867 + $0xac] sm:$0xf]
  %v2912 = vld [vmem:[%s2867 + $0xb0] sm:$0xf]
  %v2913 = vld [vmem:[%s2867 + $0xb4] sm:$0xf]
  %v2914 = vld [vmem:[%s2867 + $0xb8] sm:$0xf]
  %v2915 = vld [vmem:[%s2867 + $0xbc] sm:$0xf]
  %v2916 = vld [vmem:[%s2867 + $0xc0] sm:$0xf]
  %v2917 = vld [vmem:[%s2867 + $0xc4] sm:$0xf]
  %v2918 = vld [vmem:[%s2867 + $0xc8] sm:$0xf]
  %v2919 = vld [vmem:[%s2867 + $0xcc] sm:$0xf]
  %v2920 = vld [vmem:[%s2867 + $0xd0] sm:$0xf]
  %v2921 = vld [vmem:[%s2867 + $0xd4] sm:$0xf]
  %v2922 = vld [vmem:[%s2867 + $0xd8] sm:$0xf]
  %v2923 = vld [vmem:[%s2867 + $0xdc] sm:$0xf]
  %v2924 = vld [vmem:[%s2867 + $0xe0] sm:$0xf]
  %v2925 = vld [vmem:[%s2867 + $0xe4] sm:$0xf]
  %v2926 = vld [vmem:[%s2867 + $0xe8] sm:$0xf]
  %v2927 = vld [vmem:[%s2867 + $0xec] sm:$0xf]
  %v2928 = vld [vmem:[%s2867 + $0xf0] sm:$0xf]
  %v2929 = vld [vmem:[%s2867 + $0xf4] sm:$0xf]
  %v2930 = vld [vmem:[%s2867 + $0xf8] sm:$0xf]
  %v2931 = vld [vmem:[%s2867 + $0xfc] sm:$0xf]
  %v2996 = vunpack.c.l.b16 %v2868
  %v2997 = vunpack.c.l.b16 %v2869
  %v2998 = vunpack.c.l.b16 %v2870
  %v2999 = vunpack.c.l.b16 %v2871
  %v3000 = vunpack.c.l.b16 %v2872
  %v3001 = vunpack.c.l.b16 %v2873
  %v3002 = vunpack.c.l.b16 %v2874
  %v3003 = vunpack.c.l.b16 %v2875
  %v3004 = vunpack.c.l.b16 %v2876
  %v3005 = vunpack.c.l.b16 %v2877
  %v3006 = vunpack.c.l.b16 %v2878
  %v3007 = vunpack.c.l.b16 %v2879
  %v3008 = vunpack.c.l.b16 %v2880
  %v3009 = vunpack.c.l.b16 %v2881
  %v3010 = vunpack.c.l.b16 %v2882
  %v3011 = vunpack.c.l.b16 %v2883
  %v3012 = vunpack.c.l.b16 %v2884
  %v3013 = vunpack.c.l.b16 %v2885
  %v3014 = vunpack.c.l.b16 %v2886
  %v3015 = vunpack.c.l.b16 %v2887
  %v3016 = vunpack.c.l.b16 %v2888
  %v3017 = vunpack.c.l.b16 %v2889
  %v3018 = vunpack.c.l.b16 %v2890
  %v3019 = vunpack.c.l.b16 %v2891
  %v3020 = vunpack.c.l.b16 %v2892
  %v3021 = vunpack.c.l.b16 %v2893
  %v3022 = vunpack.c.l.b16 %v2894
  %v3023 = vunpack.c.l.b16 %v2895
  %v3024 = vunpack.c.l.b16 %v2896
  %v3025 = vunpack.c.l.b16 %v2897
  %v3026 = vunpack.c.l.b16 %v2898
  %v3027 = vunpack.c.l.b16 %v2899
  %v3028 = vunpack.c.l.b16 %v2900
  %v3029 = vunpack.c.l.b16 %v2901
  %v3030 = vunpack.c.l.b16 %v2902
  %v3031 = vunpack.c.l.b16 %v2903
  %v3032 = vunpack.c.l.b16 %v2904
  %v3033 = vunpack.c.l.b16 %v2905
  %v3034 = vunpack.c.l.b16 %v2906
  %v3035 = vunpack.c.l.b16 %v2907
  %v3036 = vunpack.c.l.b16 %v2908
  %v3037 = vunpack.c.l.b16 %v2909
  %v3038 = vunpack.c.l.b16 %v2910
  %v3039 = vunpack.c.l.b16 %v2911
  %v3040 = vunpack.c.l.b16 %v2912
  %v3041 = vunpack.c.l.b16 %v2913
  %v3042 = vunpack.c.l.b16 %v2914
  %v3043 = vunpack.c.l.b16 %v2915
  %v3044 = vunpack.c.l.b16 %v2916
  %v3045 = vunpack.c.l.b16 %v2917
  %v3046 = vunpack.c.l.b16 %v2918
  %v3047 = vunpack.c.l.b16 %v2919
  %v3048 = vunpack.c.l.b16 %v2920
  %v3049 = vunpack.c.l.b16 %v2921
  %v3050 = vunpack.c.l.b16 %v2922
  %v3051 = vunpack.c.l.b16 %v2923
  %v3052 = vunpack.c.l.b16 %v2924
  %v3053 = vunpack.c.l.b16 %v2925
  %v3054 = vunpack.c.l.b16 %v2926
  %v3055 = vunpack.c.l.b16 %v2927
  %v3056 = vunpack.c.l.b16 %v2928
  %v3057 = vunpack.c.l.b16 %v2929
  %v3058 = vunpack.c.l.b16 %v2930
  %v3059 = vunpack.c.l.b16 %v2931
  %v3060 = vpack.c.b16 %v2997, %v2996
  %v3061 = vpack.c.b16 %v2999, %v2998
  %v3062 = vpack.c.b16 %v3001, %v3000
  %v3063 = vpack.c.b16 %v3003, %v3002
  %v3064 = vpack.c.b16 %v3005, %v3004
  %v3065 = vpack.c.b16 %v3007, %v3006
  %v3066 = vpack.c.b16 %v3009, %v3008
  %v3067 = vpack.c.b16 %v3011, %v3010
  %v3068 = vpack.c.b16 %v3013, %v3012
  %v3069 = vpack.c.b16 %v3015, %v3014
  %v3070 = vpack.c.b16 %v3017, %v3016
  %v3071 = vpack.c.b16 %v3019, %v3018
  %v3072 = vpack.c.b16 %v3021, %v3020
  %v3073 = vpack.c.b16 %v3023, %v3022
  %v3074 = vpack.c.b16 %v3025, %v3024
  %v3075 = vpack.c.b16 %v3027, %v3026
  %v3076 = vpack.c.b16 %v3029, %v3028
  %v3077 = vpack.c.b16 %v3031, %v3030
  %v3078 = vpack.c.b16 %v3033, %v3032
  %v3079 = vpack.c.b16 %v3035, %v3034
  %v3080 = vpack.c.b16 %v3037, %v3036
  %v3081 = vpack.c.b16 %v3039, %v3038
  %v3082 = vpack.c.b16 %v3041, %v3040
  %v3083 = vpack.c.b16 %v3043, %v3042
  %v3084 = vpack.c.b16 %v3045, %v3044
  %v3085 = vpack.c.b16 %v3047, %v3046
  %v3086 = vpack.c.b16 %v3049, %v3048
  %v3087 = vpack.c.b16 %v3051, %v3050
  %v3088 = vpack.c.b16 %v3053, %v3052
  %v3089 = vpack.c.b16 %v3055, %v3054
  %v3090 = vpack.c.b16 %v3057, %v3056
  %v3091 = vpack.c.b16 %v3059, %v3058
  %3124 = vmatprep.subr.bf16.mxu0 0
  %3125 = vmatpush1.bf16.msra.mxu0 %v3060
  %3126 = vmatprep.subr.bf16.mxu0 0
  %3127 = vmatpush1.bf16.msra.mxu0 %v3061
  %3128 = vmatprep.subr.bf16.mxu0 0
  %3129 = vmatpush1.bf16.msra.mxu0 %v3062
  %3130 = vmatprep.subr.bf16.mxu0 0
  %3131 = vmatpush1.bf16.msra.mxu0 %v3063
  %3132 = vmatprep.subr.bf16.mxu0 0
  %3133 = vmatpush1.bf16.msra.mxu0 %v3064
  %3134 = vmatprep.subr.bf16.mxu0 0
  %3135 = vmatpush1.bf16.msra.mxu0 %v3065
  %3136 = vmatprep.subr.bf16.mxu0 0
  %3137 = vmatpush1.bf16.msra.mxu0 %v3066
  %3138 = vmatprep.subr.bf16.mxu0 0
  %3139 = vmatpush1.bf16.msra.mxu0 %v3067
  %3140 = vmatprep.subr.bf16.mxu0 0
  %3141 = vmatpush1.bf16.msra.mxu0 %v3068
  %3142 = vmatprep.subr.bf16.mxu0 0
  %3143 = vmatpush1.bf16.msra.mxu0 %v3069
  %3144 = vmatprep.subr.bf16.mxu0 0
  %3145 = vmatpush1.bf16.msra.mxu0 %v3070
  %3146 = vmatprep.subr.bf16.mxu0 0
  %3147 = vmatpush1.bf16.msra.mxu0 %v3071
  %3148 = vmatprep.subr.bf16.mxu0 0
  %3149 = vmatpush1.bf16.msra.mxu0 %v3072
  %3150 = vmatprep.subr.bf16.mxu0 0
  %3151 = vmatpush1.bf16.msra.mxu0 %v3073
  %3152 = vmatprep.subr.bf16.mxu0 0
  %3153 = vmatpush1.bf16.msra.mxu0 %v3074
  %3154 = vmatprep.subr.bf16.mxu0 0
  %3155 = vmatpush1.bf16.msra.mxu0 %v3075
  %3156 = vmatprep.mubr.bf16.mxu0 %v2864
  %3157 = vmatmul.mubr.bf16.gmra.mrb[0].mxu0 %v2863
  %v3158 = vpop.f32.mrb[0].mxu0
  %v3159 = vadd.f32 0.0, %v3158
  %v3160 = vpop.f32.mrb[0].mxu0
  %v3161 = vpop.f32.mrb[0].mxu0
  %v3162 = vadd.f32 0.0, %v3161
  %v3163 = vpop.f32.mrb[0].mxu0
  %3164 = vdwg.mxu0
  %3165 = vmatprep.subr.bf16.mxu0 0
  %3166 = vmatpush1.bf16.msra.mxu0 %v3076
  %3167 = vmatprep.subr.bf16.mxu0 0
  %3168 = vmatpush1.bf16.msra.mxu0 %v3077
  %3169 = vmatprep.subr.bf16.mxu0 0
  %3170 = vmatpush1.bf16.msra.mxu0 %v3078
  %3171 = vmatprep.subr.bf16.mxu0 0
  %3172 = vmatpush1.bf16.msra.mxu0 %v3079
  %3173 = vmatprep.subr.bf16.mxu0 0
  %3174 = vmatpush1.bf16.msra.mxu0 %v3080
  %3175 = vmatprep.subr.bf16.mxu0 0
  %3176 = vmatpush1.bf16.msra.mxu0 %v3081
  %3177 = vmatprep.subr.bf16.mxu0 0
  %3178 = vmatpush1.bf16.msra.mxu0 %v3082
  %3179 = vmatprep.subr.bf16.mxu0 0
  %3180 = vmatpush1.bf16.msra.mxu0 %v3083
  %3181 = vmatprep.subr.bf16.mxu0 0
  %3182 = vmatpush1.bf16.msra.mxu0 %v3084
  %3183 = vmatprep.subr.bf16.mxu0 0
  %3184 = vmatpush1.bf16.msra.mxu0 %v3085
  %3185 = vmatprep.subr.bf16.mxu0 0
  %3186 = vmatpush1.bf16.msra.mxu0 %v3086
  %3187 = vmatprep.subr.bf16.mxu0 0
  %3188 = vmatpush1.bf16.msra.mxu0 %v3087
  %3189 = vmatprep.subr.bf16.mxu0 0
  %3190 = vmatpush1.bf16.msra.mxu0 %v3088
  %3191 = vmatprep.subr.bf16.mxu0 0
  %3192 = vmatpush1.bf16.msra.mxu0 %v3089
  %3193 = vmatprep.subr.bf16.mxu0 0
  %3194 = vmatpush1.bf16.msra.mxu0 %v3090
  %3195 = vmatprep.subr.bf16.mxu0 0
  %3196 = vmatpush1.bf16.msra.mxu0 %v3091
  %3197 = vmatprep.mubr.bf16.mxu0 %v2866
  %3198 = vmatmul.mubr.bf16.gmra.mrb[0].mxu0 %v2865
  %v3199 = vpop.f32.mrb[0].mxu0
  %v3200 = vadd.f32 %v3159, %v3199
  %v3201 = vpop.f32.mrb[0].mxu0
  %v3202 = vpop.f32.mrb[0].mxu0
  %v3203 = vadd.f32 %v3162, %v3202
  %v3204 = vpop.f32.mrb[0].mxu0
  %3205 = vdwg.mxu0
  %v3270 = vunpack.c.l.b16 %v2633
  %v3271 = vunpack.c.l.b16 %v2634
  %v3272 = vunpack.c.l.b16 %v2635
  %v3273 = vunpack.c.l.b16 %v2636
  %v3274 = vunpack.c.l.b16 %v2637
  %v3275 = vunpack.c.l.b16 %v2638
  %v3276 = vunpack.c.l.b16 %v2639
  %v3277 = vunpack.c.l.b16 %v2640
  %v3278 = vunpack.c.l.b16 %v2641
  %v3279 = vunpack.c.l.b16 %v2642
  %v3280 = vunpack.c.l.b16 %v2643
  %v3281 = vunpack.c.l.b16 %v2644
  %v3282 = vunpack.c.l.b16 %v2645
  %v3283 = vunpack.c.l.b16 %v2646
  %v3284 = vunpack.c.l.b16 %v2647
  %v3285 = vunpack.c.l.b16 %v2648
  %v3286 = vunpack.c.l.b16 %v2649
  %v3287 = vunpack.c.l.b16 %v2650
  %v3288 = vunpack.c.l.b16 %v2651
  %v3289 = vunpack.c.l.b16 %v2652
  %v3290 = vunpack.c.l.b16 %v2653
  %v3291 = vunpack.c.l.b16 %v2654
  %v3292 = vunpack.c.l.b16 %v2655
  %v3293 = vunpack.c.l.b16 %v2656
  %v3294 = vunpack.c.l.b16 %v2657
  %v3295 = vunpack.c.l.b16 %v2658
  %v3296 = vunpack.c.l.b16 %v2659
  %v3297 = vunpack.c.l.b16 %v2660
  %v3298 = vunpack.c.l.b16 %v2661
  %v3299 = vunpack.c.l.b16 %v2662
  %v3300 = vunpack.c.l.b16 %v2663
  %v3301 = vunpack.c.l.b16 %v2664
  %v3302 = vunpack.c.l.b16 %v2665
  %v3303 = vunpack.c.l.b16 %v2666
  %v3304 = vunpack.c.l.b16 %v2667
  %v3305 = vunpack.c.l.b16 %v2668
  %v3306 = vunpack.c.l.b16 %v2669
  %v3307 = vunpack.c.l.b16 %v2670
  %v3308 = vunpack.c.l.b16 %v2671
  %v3309 = vunpack.c.l.b16 %v2672
  %v3310 = vunpack.c.l.b16 %v2673
  %v3311 = vunpack.c.l.b16 %v2674
  %v3312 = vunpack.c.l.b16 %v2675
  %v3313 = vunpack.c.l.b16 %v2676
  %v3314 = vunpack.c.l.b16 %v2677
  %v3315 = vunpack.c.l.b16 %v2678
  %v3316 = vunpack.c.l.b16 %v2679
  %v3317 = vunpack.c.l.b16 %v2680
  %v3318 = vunpack.c.l.b16 %v2681
  %v3319 = vunpack.c.l.b16 %v2682
  %v3320 = vunpack.c.l.b16 %v2683
  %v3321 = vunpack.c.l.b16 %v2684
  %v3322 = vunpack.c.l.b16 %v2685
  %v3323 = vunpack.c.l.b16 %v2686
  %v3324 = vunpack.c.l.b16 %v2687
  %v3325 = vunpack.c.l.b16 %v2688
  %v3326 = vunpack.c.l.b16 %v2689
  %v3327 = vunpack.c.l.b16 %v2690
  %v3328 = vunpack.c.l.b16 %v2691
  %v3329 = vunpack.c.l.b16 %v2692
  %v3330 = vunpack.c.l.b16 %v2693
  %v3331 = vunpack.c.l.b16 %v2694
  %v3332 = vunpack.c.l.b16 %v2695
  %v3333 = vunpack.c.l.b16 %v2696
  %v3334 = vpack.c.b16 %v3271, %v3270
  %v3335 = vpack.c.b16 %v3273, %v3272
  %v3336 = vpack.c.b16 %v3275, %v3274
  %v3337 = vpack.c.b16 %v3277, %v3276
  %v3338 = vpack.c.b16 %v3279, %v3278
  %v3339 = vpack.c.b16 %v3281, %v3280
  %v3340 = vpack.c.b16 %v3283, %v3282
  %v3341 = vpack.c.b16 %v3285, %v3284
  %v3342 = vpack.c.b16 %v3287, %v3286
  %v3343 = vpack.c.b16 %v3289, %v3288
  %v3344 = vpack.c.b16 %v3291, %v3290
  %v3345 = vpack.c.b16 %v3293, %v3292
  %v3346 = vpack.c.b16 %v3295, %v3294
  %v3347 = vpack.c.b16 %v3297, %v3296
  %v3348 = vpack.c.b16 %v3299, %v3298
  %v3349 = vpack.c.b16 %v3301, %v3300
  %v3350 = vpack.c.b16 %v3303, %v3302
  %v3351 = vpack.c.b16 %v3305, %v3304
  %v3352 = vpack.c.b16 %v3307, %v3306
  %v3353 = vpack.c.b16 %v3309, %v3308
  %v3354 = vpack.c.b16 %v3311, %v3310
  %v3355 = vpack.c.b16 %v3313, %v3312
  %v3356 = vpack.c.b16 %v3315, %v3314
  %v3357 = vpack.c.b16 %v3317, %v3316
  %v3358 = vpack.c.b16 %v3319, %v3318
  %v3359 = vpack.c.b16 %v3321, %v3320
  %v3360 = vpack.c.b16 %v3323, %v3322
  %v3361 = vpack.c.b16 %v3325, %v3324
  %v3362 = vpack.c.b16 %v3327, %v3326
  %v3363 = vpack.c.b16 %v3329, %v3328
  %v3364 = vpack.c.b16 %v3331, %v3330
  %v3365 = vpack.c.b16 %v3333, %v3332
  %3398 = vmatprep.subr.bf16.mxu0 0
  %3399 = vmatpush1.bf16.msra.mxu0 %v3334
  %3400 = vmatprep.subr.bf16.mxu0 0
  %3401 = vmatpush1.bf16.msra.mxu0 %v3335
  %3402 = vmatprep.subr.bf16.mxu0 0
  %3403 = vmatpush1.bf16.msra.mxu0 %v3336
  %3404 = vmatprep.subr.bf16.mxu0 0
  %3405 = vmatpush1.bf16.msra.mxu0 %v3337
  %3406 = vmatprep.subr.bf16.mxu0 0
  %3407 = vmatpush1.bf16.msra.mxu0 %v3338
  %3408 = vmatprep.subr.bf16.mxu0 0
  %3409 = vmatpush1.bf16.msra.mxu0 %v3339
  %3410 = vmatprep.subr.bf16.mxu0 0
  %3411 = vmatpush1.bf16.msra.mxu0 %v3340
  %3412 = vmatprep.subr.bf16.mxu0 0
  %3413 = vmatpush1.bf16.msra.mxu0 %v3341
  %3414 = vmatprep.subr.bf16.mxu0 0
  %3415 = vmatpush1.bf16.msra.mxu0 %v3342
  %3416 = vmatprep.subr.bf16.mxu0 0
  %3417 = vmatpush1.bf16.msra.mxu0 %v3343
  %3418 = vmatprep.subr.bf16.mxu0 0
  %3419 = vmatpush1.bf16.msra.mxu0 %v3344
  %3420 = vmatprep.subr.bf16.mxu0 0
  %3421 = vmatpush1.bf16.msra.mxu0 %v3345
  %3422 = vmatprep.subr.bf16.mxu0 0
  %3423 = vmatpush1.bf16.msra.mxu0 %v3346
  %3424 = vmatprep.subr.bf16.mxu0 0
  %3425 = vmatpush1.bf16.msra.mxu0 %v3347
  %3426 = vmatprep.subr.bf16.mxu0 0
  %3427 = vmatpush1.bf16.msra.mxu0 %v3348
  %3428 = vmatprep.subr.bf16.mxu0 0
  %3429 = vmatpush1.bf16.msra.mxu0 %v3349
  %3430 = vmatprep.mubr.bf16.mxu0 %v2630
  %3431 = vmatmul.mubr.bf16.gmra.mrb[0].mxu0 %v2629
  %v3432 = vpop.f32.mrb[0].mxu0
  %v3433 = vadd.f32 %v3200, %v3432
  %v3434 = vpop.f32.mrb[0].mxu0
  %v3435 = vpop.f32.mrb[0].mxu0
  %v3436 = vadd.f32 %v3203, %v3435
  %v3437 = vpop.f32.mrb[0].mxu0
  %3438 = vdwg.mxu0
  %3439 = vmatprep.subr.bf16.mxu0 0
  %3440 = vmatpush1.bf16.msra.mxu0 %v3350
  %3441 = vmatprep.subr.bf16.mxu0 0
  %3442 = vmatpush1.bf16.msra.mxu0 %v3351
  %3443 = vmatprep.subr.bf16.mxu0 0
  %3444 = vmatpush1.bf16.msra.mxu0 %v3352
  %3445 = vmatprep.subr.bf16.mxu0 0
  %3446 = vmatpush1.bf16.msra.mxu0 %v3353
  %3447 = vmatprep.subr.bf16.mxu0 0
  %3448 = vmatpush1.bf16.msra.mxu0 %v3354
  %3449 = vmatprep.subr.bf16.mxu0 0
  %3450 = vmatpush1.bf16.msra.mxu0 %v3355
  %3451 = vmatprep.subr.bf16.mxu0 0
  %3452 = vmatpush1.bf16.msra.mxu0 %v3356
  %3453 = vmatprep.subr.bf16.mxu0 0
  %3454 = vmatpush1.bf16.msra.mxu0 %v3357
  %3455 = vmatprep.subr.bf16.mxu0 0
  %3456 = vmatpush1.bf16.msra.mxu0 %v3358
  %3457 = vmatprep.subr.bf16.mxu0 0
  %3458 = vmatpush1.bf16.msra.mxu0 %v3359
  %3459 = vmatprep.subr.bf16.mxu0 0
  %3460 = vmatpush1.bf16.msra.mxu0 %v3360
  %3461 = vmatprep.subr.bf16.mxu0 0
  %3462 = vmatpush1.bf16.msra.mxu0 %v3361
  %3463 = vmatprep.subr.bf16.mxu0 0
  %3464 = vmatpush1.bf16.msra.mxu0 %v3362
  %3465 = vmatprep.subr.bf16.mxu0 0
  %3466 = vmatpush1.bf16.msra.mxu0 %v3363
  %3467 = vmatprep.subr.bf16.mxu0 0
  %3468 = vmatpush1.bf16.msra.mxu0 %v3364
  %3469 = vmatprep.subr.bf16.mxu0 0
  %3470 = vmatpush1.bf16.msra.mxu0 %v3365
  %3471 = vmatprep.mubr.bf16.mxu0 %v2632
  %3472 = vmatmul.mubr.bf16.gmra.mrb[0].mxu0 %v2631
  %v3473 = vpop.f32.mrb[0].mxu0
  %v3474 = vadd.f32 %v3433, %v3473
  %v3475 = vpop.f32.mrb[0].mxu0
  %v3476 = vpop.f32.mrb[0].mxu0
  %v3477 = vadd.f32 %v3436, %v3476
  %v3478 = vpop.f32.mrb[0].mxu0
  %3479 = vdwg.mxu0
  %s3480 = scalar_lea.vmem %s21, 128
  %v3481 = vld [vmem:[%s3480] sm:$0xff]
  %v3482 = vld [vmem:[%s3480 + $0x8] sm:$0xff]
  %v3483 = vld [vmem:[%s3480 + $0x10] sm:$0xff]
  %v3484 = vld [vmem:[%s3480 + $0x18] sm:$0xff]
  %v3485 = vld [vmem:[%s3480 + $0x20] sm:$0xff]
  %v3486 = vld [vmem:[%s3480 + $0x28] sm:$0xff]
  %v3487 = vld [vmem:[%s3480 + $0x30] sm:$0xff]
  %v3488 = vld [vmem:[%s3480 + $0x38] sm:$0xff]
  %s3489 = scalar_lea.vmem %s22, 8
  %v3490 = vld [vmem:[%s3489] sm:$0xf]
  %v3492 = vlaneseq
  %v3493 = vshrl.u32 %v3492, 7
  %v3494 = vsub.s32 0, %v3493
  %v3495 = vrot.slane %v3490, %v3494
  %v3496 = vlaneseq
  %v3497 = vshrl.u32 %v3496, 7
  %v3498 = vsub.s32 1, %v3497
  %v3499 = vrot.slane %v3490, %v3498
  %v3500 = vlaneseq
  %v3501 = vshrl.u32 %v3500, 7
  %v3502 = vsub.s32 2, %v3501
  %v3503 = vrot.slane %v3490, %v3502
  %v3504 = vlaneseq
  %v3505 = vshrl.u32 %v3504, 7
  %v3506 = vsub.s32 3, %v3505
  %v3507 = vrot.slane %v3490, %v3506
  %v3520 = vunpack.c.l.b16 %v3481
  %v3521 = vunpack.c.h.b16 %v3481
  %v3522 = vunpack.c.l.b16 %v3482
  %v3523 = vunpack.c.h.b16 %v3482
  %v3524 = vunpack.c.l.b16 %v3483
  %v3525 = vunpack.c.h.b16 %v3483
  %v3526 = vunpack.c.l.b16 %v3484
  %v3527 = vunpack.c.h.b16 %v3484
  %v3528 = vunpack.c.l.b16 %v3485
  %v3529 = vunpack.c.h.b16 %v3485
  %v3530 = vunpack.c.l.b16 %v3486
  %v3531 = vunpack.c.h.b16 %v3486
  %v3532 = vunpack.c.l.b16 %v3487
  %v3533 = vunpack.c.h.b16 %v3487
  %v3534 = vunpack.c.l.b16 %v3488
  %v3535 = vunpack.c.h.b16 %v3488
  %v3536 = vpack.c.b16 %v3524, %v3520
  %v3537 = vpack.c.b16 %v3525, %v3521
  %v3538 = vpack.c.b16 %v3526, %v3522
  %v3539 = vpack.c.b16 %v3527, %v3523
  %v3540 = vpack.c.b16 %v3532, %v3528
  %v3541 = vpack.c.b16 %v3533, %v3529
  %v3542 = vpack.c.b16 %v3534, %v3530
  %v3543 = vpack.c.b16 %v3535, %v3531
  %3552 = vmatprep.subr.bf16.mxu0 %v3537
  %3553 = vmatpush1.bf16.msra.mxu0 %v3536
  %3554 = vmatprep.subr.bf16.mxu0 %v3541
  %3555 = vmatpush1.bf16.msra.mxu0 %v3540
  %3556 = vmatprep.subr.bf16.mxu0 0
  %3557 = vmatpush1.bf16.msra.mxu0 0
  %3558 = vmatprep.subr.bf16.mxu0 0
  %3559 = vmatpush1.bf16.msra.mxu0 0
  %3560 = vmatprep.subr.bf16.mxu0 0
  %3561 = vmatpush1.bf16.msra.mxu0 0
  %3562 = vmatprep.subr.bf16.mxu0 0
  %3563 = vmatpush1.bf16.msra.mxu0 0
  %3564 = vmatprep.subr.bf16.mxu0 0
  %3565 = vmatpush1.bf16.msra.mxu0 0
  %3566 = vmatprep.subr.bf16.mxu0 0
  %3567 = vmatpush1.bf16.msra.mxu0 0
  %3568 = vmatprep.subr.bf16.mxu0 0
  %3569 = vmatpush1.bf16.msra.mxu0 0
  %3570 = vmatprep.subr.bf16.mxu0 0
  %3571 = vmatpush1.bf16.msra.mxu0 0
  %3572 = vmatprep.subr.bf16.mxu0 0
  %3573 = vmatpush1.bf16.msra.mxu0 0
  %3574 = vmatprep.subr.bf16.mxu0 0
  %3575 = vmatpush1.bf16.msra.mxu0 0
  %3576 = vmatprep.subr.bf16.mxu0 0
  %3577 = vmatpush1.bf16.msra.mxu0 0
  %3578 = vmatprep.subr.bf16.mxu0 0
  %3579 = vmatpush1.bf16.msra.mxu0 0
  %3580 = vmatprep.subr.bf16.mxu0 0
  %3581 = vmatpush1.bf16.msra.mxu0 0
  %3582 = vmatprep.subr.bf16.mxu0 0
  %3583 = vmatpush1.bf16.msra.mxu0 0
  %3584 = vmatprep.mubr.bf16.mxu0 0
  %3585 = vmatmul.mubr.bf16.gmra.mrb[0].mxu0 %v2533
  %v3586 = vpop.f32.mrb[0].mxu0
  %v3587 = vadd.f32 %v3495, %v3586
  %v3588 = vpop.f32.mrb[0].mxu0
  %v3589 = vadd.f32 %v3499, %v3588
  %v3590 = vpop.f32.mrb[0].mxu0
  %v3591 = vadd.f32 %v3495, %v3590
  %v3592 = vpop.f32.mrb[0].mxu0
  %v3593 = vadd.f32 %v3499, %v3592
  %3594 = vdwg.mxu0
  %3595 = vmatprep.subr.bf16.mxu0 %v3539
  %3596 = vmatpush1.bf16.msra.mxu0 %v3538
  %3597 = vmatprep.subr.bf16.mxu0 %v3543
  %3598 = vmatpush1.bf16.msra.mxu0 %v3542
  %3599 = vmatprep.subr.bf16.mxu0 0
  %3600 = vmatpush1.bf16.msra.mxu0 0
  %3601 = vmatprep.subr.bf16.mxu0 0
  %3602 = vmatpush1.bf16.msra.mxu0 0
  %3603 = vmatprep.subr.bf16.mxu0 0
  %3604 = vmatpush1.bf16.msra.mxu0 0
  %3605 = vmatprep.subr.bf16.mxu0 0
  %3606 = vmatpush1.bf16.msra.mxu0 0
  %3607 = vmatprep.subr.bf16.mxu0 0
  %3608 = vmatpush1.bf16.msra.mxu0 0
  %3609 = vmatprep.subr.bf16.mxu0 0
  %3610 = vmatpush1.bf16.msra.mxu0 0
  %3611 = vmatprep.subr.bf16.mxu0 0
  %3612 = vmatpush1.bf16.msra.mxu0 0
  %3613 = vmatprep.subr.bf16.mxu0 0
  %3614 = vmatpush1.bf16.msra.mxu0 0
  %3615 = vmatprep.subr.bf16.mxu0 0
  %3616 = vmatpush1.bf16.msra.mxu0 0
  %3617 = vmatprep.subr.bf16.mxu0 0
  %3618 = vmatpush1.bf16.msra.mxu0 0
  %3619 = vmatprep.subr.bf16.mxu0 0
  %3620 = vmatpush1.bf16.msra.mxu0 0
  %3621 = vmatprep.subr.bf16.mxu0 0
  %3622 = vmatpush1.bf16.msra.mxu0 0
  %3623 = vmatprep.subr.bf16.mxu0 0
  %3624 = vmatpush1.bf16.msra.mxu0 0
  %3625 = vmatprep.subr.bf16.mxu0 0
  %3626 = vmatpush1.bf16.msra.mxu0 0
  %3627 = vmatprep.mubr.bf16.mxu0 0
  %3628 = vmatmul.mubr.bf16.gmra.mrb[0].mxu0 %v2533
  %v3629 = vpop.f32.mrb[0].mxu0
  %v3630 = vadd.f32 %v3503, %v3629
  %v3631 = vpop.f32.mrb[0].mxu0
  %v3632 = vadd.f32 %v3507, %v3631
  %v3633 = vpop.f32.mrb[0].mxu0
  %v3634 = vadd.f32 %v3503, %v3633
  %v3635 = vpop.f32.mrb[0].mxu0
  %v3636 = vadd.f32 %v3507, %v3635
  %3637 = vdwg.mxu0
  %v3638 = vmax.f32 %v3587, 0.0
  %v3639 = vmax.f32 %v3589, 0.0
  %v3640 = vmax.f32 %v3630, 0.0
  %v3641 = vmax.f32 %v3632, 0.0
  %v3642 = vmax.f32 %v3591, 0.0
  %v3643 = vmax.f32 %v3593, 0.0
  %v3644 = vmax.f32 %v3634, 0.0
  %v3645 = vmax.f32 %v3636, 0.0
  %v3646 = vpack.c.bf16 %v3642, %v3638
  %v3647 = vpack.c.bf16 %v3643, %v3639
  %v3648 = vpack.c.bf16 %v3644, %v3640
  %v3649 = vpack.c.bf16 %v3645, %v3641
  %s3650 = scalar_lea.vmem %s23, 512
  %v3651 = vld [vmem:[%s3650] sm:$0xf]
  %v3652 = vld [vmem:[%s3650 + $0x4] sm:$0xf]
  %v3653 = vld [vmem:[%s3650 + $0x8] sm:$0xf]
  %v3654 = vld [vmem:[%s3650 + $0xc] sm:$0xf]
  %v3655 = vld [vmem:[%s3650 + $0x10] sm:$0xf]
  %v3656 = vld [vmem:[%s3650 + $0x14] sm:$0xf]
  %v3657 = vld [vmem:[%s3650 + $0x18] sm:$0xf]
  %v3658 = vld [vmem:[%s3650 + $0x1c] sm:$0xf]
  %v3659 = vld [vmem:[%s3650 + $0x20] sm:$0xf]
  %v3660 = vld [vmem:[%s3650 + $0x24] sm:$0xf]
  %v3661 = vld [vmem:[%s3650 + $0x28] sm:$0xf]
  %v3662 = vld [vmem:[%s3650 + $0x2c] sm:$0xf]
  %v3663 = vld [vmem:[%s3650 + $0x30] sm:$0xf]
  %v3664 = vld [vmem:[%s3650 + $0x34] sm:$0xf]
  %v3665 = vld [vmem:[%s3650 + $0x38] sm:$0xf]
  %v3666 = vld [vmem:[%s3650 + $0x3c] sm:$0xf]
  %v3667 = vld [vmem:[%s3650 + $0x40] sm:$0xf]
  %v3668 = vld [vmem:[%s3650 + $0x44] sm:$0xf]
  %v3669 = vld [vmem:[%s3650 + $0x48] sm:$0xf]
  %v3670 = vld [vmem:[%s3650 + $0x4c] sm:$0xf]
  %v3671 = vld [vmem:[%s3650 + $0x50] sm:$0xf]
  %v3672 = vld [vmem:[%s3650 + $0x54] sm:$0xf]
  %v3673 = vld [vmem:[%s3650 + $0x58] sm:$0xf]
  %v3674 = vld [vmem:[%s3650 + $0x5c] sm:$0xf]
  %v3675 = vld [vmem:[%s3650 + $0x60] sm:$0xf]
  %v3676 = vld [vmem:[%s3650 + $0x64] sm:$0xf]
  %v3677 = vld [vmem:[%s3650 + $0x68] sm:$0xf]
  %v3678 = vld [vmem:[%s3650 + $0x6c] sm:$0xf]
  %v3679 = vld [vmem:[%s3650 + $0x70] sm:$0xf]
  %v3680 = vld [vmem:[%s3650 + $0x74] sm:$0xf]
  %v3681 = vld [vmem:[%s3650 + $0x78] sm:$0xf]
  %v3682 = vld [vmem:[%s3650 + $0x7c] sm:$0xf]
  %v3683 = vld [vmem:[%s3650 + $0x80] sm:$0xf]
  %v3684 = vld [vmem:[%s3650 + $0x84] sm:$0xf]
  %v3685 = vld [vmem:[%s3650 + $0x88] sm:$0xf]
  %v3686 = vld [vmem:[%s3650 + $0x8c] sm:$0xf]
  %v3687 = vld [vmem:[%s3650 + $0x90] sm:$0xf]
  %v3688 = vld [vmem:[%s3650 + $0x94] sm:$0xf]
  %v3689 = vld [vmem:[%s3650 + $0x98] sm:$0xf]
  %v3690 = vld [vmem:[%s3650 + $0x9c] sm:$0xf]
  %v3691 = vld [vmem:[%s3650 + $0xa0] sm:$0xf]
  %v3692 = vld [vmem:[%s3650 + $0xa4] sm:$0xf]
  %v3693 = vld [vmem:[%s3650 + $0xa8] sm:$0xf]
  %v3694 = vld [vmem:[%s3650 + $0xac] sm:$0xf]
  %v3695 = vld [vmem:[%s3650 + $0xb0] sm:$0xf]
  %v3696 = vld [vmem:[%s3650 + $0xb4] sm:$0xf]
  %v3697 = vld [vmem:[%s3650 + $0xb8] sm:$0xf]
  %v3698 = vld [vmem:[%s3650 + $0xbc] sm:$0xf]
  %v3699 = vld [vmem:[%s3650 + $0xc0] sm:$0xf]
  %v3700 = vld [vmem:[%s3650 + $0xc4] sm:$0xf]
  %v3701 = vld [vmem:[%s3650 + $0xc8] sm:$0xf]
  %v3702 = vld [vmem:[%s3650 + $0xcc] sm:$0xf]
  %v3703 = vld [vmem:[%s3650 + $0xd0] sm:$0xf]
  %v3704 = vld [vmem:[%s3650 + $0xd4] sm:$0xf]
  %v3705 = vld [vmem:[%s3650 + $0xd8] sm:$0xf]
  %v3706 = vld [vmem:[%s3650 + $0xdc] sm:$0xf]
  %v3707 = vld [vmem:[%s3650 + $0xe0] sm:$0xf]
  %v3708 = vld [vmem:[%s3650 + $0xe4] sm:$0xf]
  %v3709 = vld [vmem:[%s3650 + $0xe8] sm:$0xf]
  %v3710 = vld [vmem:[%s3650 + $0xec] sm:$0xf]
  %v3711 = vld [vmem:[%s3650 + $0xf0] sm:$0xf]
  %v3712 = vld [vmem:[%s3650 + $0xf4] sm:$0xf]
  %v3713 = vld [vmem:[%s3650 + $0xf8] sm:$0xf]
  %v3714 = vld [vmem:[%s3650 + $0xfc] sm:$0xf]
  %v3779 = vunpack.c.l.b16 %v3651
  %v3780 = vunpack.c.l.b16 %v3652
  %v3781 = vunpack.c.l.b16 %v3653
  %v3782 = vunpack.c.l.b16 %v3654
  %v3783 = vunpack.c.l.b16 %v3655
  %v3784 = vunpack.c.l.b16 %v3656
  %v3785 = vunpack.c.l.b16 %v3657
  %v3786 = vunpack.c.l.b16 %v3658
  %v3787 = vunpack.c.l.b16 %v3659
  %v3788 = vunpack.c.l.b16 %v3660
  %v3789 = vunpack.c.l.b16 %v3661
  %v3790 = vunpack.c.l.b16 %v3662
  %v3791 = vunpack.c.l.b16 %v3663
  %v3792 = vunpack.c.l.b16 %v3664
  %v3793 = vunpack.c.l.b16 %v3665
  %v3794 = vunpack.c.l.b16 %v3666
  %v3795 = vunpack.c.l.b16 %v3667
  %v3796 = vunpack.c.l.b16 %v3668
  %v3797 = vunpack.c.l.b16 %v3669
  %v3798 = vunpack.c.l.b16 %v3670
  %v3799 = vunpack.c.l.b16 %v3671
  %v3800 = vunpack.c.l.b16 %v3672
  %v3801 = vunpack.c.l.b16 %v3673
  %v3802 = vunpack.c.l.b16 %v3674
  %v3803 = vunpack.c.l.b16 %v3675
  %v3804 = vunpack.c.l.b16 %v3676
  %v3805 = vunpack.c.l.b16 %v3677
  %v3806 = vunpack.c.l.b16 %v3678
  %v3807 = vunpack.c.l.b16 %v3679
  %v3808 = vunpack.c.l.b16 %v3680
  %v3809 = vunpack.c.l.b16 %v3681
  %v3810 = vunpack.c.l.b16 %v3682
  %v3811 = vunpack.c.l.b16 %v3683
  %v3812 = vunpack.c.l.b16 %v3684
  %v3813 = vunpack.c.l.b16 %v3685
  %v3814 = vunpack.c.l.b16 %v3686
  %v3815 = vunpack.c.l.b16 %v3687
  %v3816 = vunpack.c.l.b16 %v3688
  %v3817 = vunpack.c.l.b16 %v3689
  %v3818 = vunpack.c.l.b16 %v3690
  %v3819 = vunpack.c.l.b16 %v3691
  %v3820 = vunpack.c.l.b16 %v3692
  %v3821 = vunpack.c.l.b16 %v3693
  %v3822 = vunpack.c.l.b16 %v3694
  %v3823 = vunpack.c.l.b16 %v3695
  %v3824 = vunpack.c.l.b16 %v3696
  %v3825 = vunpack.c.l.b16 %v3697
  %v3826 = vunpack.c.l.b16 %v3698
  %v3827 = vunpack.c.l.b16 %v3699
  %v3828 = vunpack.c.l.b16 %v3700
  %v3829 = vunpack.c.l.b16 %v3701
  %v3830 = vunpack.c.l.b16 %v3702
  %v3831 = vunpack.c.l.b16 %v3703
  %v3832 = vunpack.c.l.b16 %v3704
  %v3833 = vunpack.c.l.b16 %v3705
  %v3834 = vunpack.c.l.b16 %v3706
  %v3835 = vunpack.c.l.b16 %v3707
  %v3836 = vunpack.c.l.b16 %v3708
  %v3837 = vunpack.c.l.b16 %v3709
  %v3838 = vunpack.c.l.b16 %v3710
  %v3839 = vunpack.c.l.b16 %v3711
  %v3840 = vunpack.c.l.b16 %v3712
  %v3841 = vunpack.c.l.b16 %v3713
  %v3842 = vunpack.c.l.b16 %v3714
  %v3843 = vpack.c.b16 %v3780, %v3779
  %v3844 = vpack.c.b16 %v3782, %v3781
  %v3845 = vpack.c.b16 %v3784, %v3783
  %v3846 = vpack.c.b16 %v3786, %v3785
  %v3847 = vpack.c.b16 %v3788, %v3787
  %v3848 = vpack.c.b16 %v3790, %v3789
  %v3849 = vpack.c.b16 %v3792, %v3791
  %v3850 = vpack.c.b16 %v3794, %v3793
  %v3851 = vpack.c.b16 %v3796, %v3795
  %v3852 = vpack.c.b16 %v3798, %v3797
  %v3853 = vpack.c.b16 %v3800, %v3799
  %v3854 = vpack.c.b16 %v3802, %v3801
  %v3855 = vpack.c.b16 %v3804, %v3803
  %v3856 = vpack.c.b16 %v3806, %v3805
  %v3857 = vpack.c.b16 %v3808, %v3807
  %v3858 = vpack.c.b16 %v3810, %v3809
  %v3859 = vpack.c.b16 %v3812, %v3811
  %v3860 = vpack.c.b16 %v3814, %v3813
  %v3861 = vpack.c.b16 %v3816, %v3815
  %v3862 = vpack.c.b16 %v3818, %v3817
  %v3863 = vpack.c.b16 %v3820, %v3819
  %v3864 = vpack.c.b16 %v3822, %v3821
  %v3865 = vpack.c.b16 %v3824, %v3823
  %v3866 = vpack.c.b16 %v3826, %v3825
  %v3867 = vpack.c.b16 %v3828, %v3827
  %v3868 = vpack.c.b16 %v3830, %v3829
  %v3869 = vpack.c.b16 %v3832, %v3831
  %v3870 = vpack.c.b16 %v3834, %v3833
  %v3871 = vpack.c.b16 %v3836, %v3835
  %v3872 = vpack.c.b16 %v3838, %v3837
  %v3873 = vpack.c.b16 %v3840, %v3839
  %v3874 = vpack.c.b16 %v3842, %v3841
  %3907 = vmatprep.subr.bf16.mxu0 0
  %3908 = vmatpush1.bf16.msra.mxu0 %v3843
  %3909 = vmatprep.subr.bf16.mxu0 0
  %3910 = vmatpush1.bf16.msra.mxu0 %v3844
  %3911 = vmatprep.subr.bf16.mxu0 0
  %3912 = vmatpush1.bf16.msra.mxu0 %v3845
  %3913 = vmatprep.subr.bf16.mxu0 0
  %3914 = vmatpush1.bf16.msra.mxu0 %v3846
  %3915 = vmatprep.subr.bf16.mxu0 0
  %3916 = vmatpush1.bf16.msra.mxu0 %v3847
  %3917 = vmatprep.subr.bf16.mxu0 0
  %3918 = vmatpush1.bf16.msra.mxu0 %v3848
  %3919 = vmatprep.subr.bf16.mxu0 0
  %3920 = vmatpush1.bf16.msra.mxu0 %v3849
  %3921 = vmatprep.subr.bf16.mxu0 0
  %3922 = vmatpush1.bf16.msra.mxu0 %v3850
  %3923 = vmatprep.subr.bf16.mxu0 0
  %3924 = vmatpush1.bf16.msra.mxu0 %v3851
  %3925 = vmatprep.subr.bf16.mxu0 0
  %3926 = vmatpush1.bf16.msra.mxu0 %v3852
  %3927 = vmatprep.subr.bf16.mxu0 0
  %3928 = vmatpush1.bf16.msra.mxu0 %v3853
  %3929 = vmatprep.subr.bf16.mxu0 0
  %3930 = vmatpush1.bf16.msra.mxu0 %v3854
  %3931 = vmatprep.subr.bf16.mxu0 0
  %3932 = vmatpush1.bf16.msra.mxu0 %v3855
  %3933 = vmatprep.subr.bf16.mxu0 0
  %3934 = vmatpush1.bf16.msra.mxu0 %v3856
  %3935 = vmatprep.subr.bf16.mxu0 0
  %3936 = vmatpush1.bf16.msra.mxu0 %v3857
  %3937 = vmatprep.subr.bf16.mxu0 0
  %3938 = vmatpush1.bf16.msra.mxu0 %v3858
  %3939 = vmatprep.mubr.bf16.mxu0 %v3647
  %3940 = vmatmul.mubr.bf16.gmra.mrb[0].mxu0 %v3646
  %v3941 = vpop.f32.mrb[0].mxu0
  %v3942 = vadd.f32 0.0, %v3941
  %v3943 = vpop.f32.mrb[0].mxu0
  %v3944 = vpop.f32.mrb[0].mxu0
  %v3945 = vadd.f32 0.0, %v3944
  %v3946 = vpop.f32.mrb[0].mxu0
  %3947 = vdwg.mxu0
  %3948 = vmatprep.subr.bf16.mxu0 0
  %3949 = vmatpush1.bf16.msra.mxu0 %v3859
  %3950 = vmatprep.subr.bf16.mxu0 0
  %3951 = vmatpush1.bf16.msra.mxu0 %v3860
  %3952 = vmatprep.subr.bf16.mxu0 0
  %3953 = vmatpush1.bf16.msra.mxu0 %v3861
  %3954 = vmatprep.subr.bf16.mxu0 0
  %3955 = vmatpush1.bf16.msra.mxu0 %v3862
  %3956 = vmatprep.subr.bf16.mxu0 0
  %3957 = vmatpush1.bf16.msra.mxu0 %v3863
  %3958 = vmatprep.subr.bf16.mxu0 0
  %3959 = vmatpush1.bf16.msra.mxu0 %v3864
  %3960 = vmatprep.subr.bf16.mxu0 0
  %3961 = vmatpush1.bf16.msra.mxu0 %v3865
  %3962 = vmatprep.subr.bf16.mxu0 0
  %3963 = vmatpush1.bf16.msra.mxu0 %v3866
  %3964 = vmatprep.subr.bf16.mxu0 0
  %3965 = vmatpush1.bf16.msra.mxu0 %v3867
  %3966 = vmatprep.subr.bf16.mxu0 0
  %3967 = vmatpush1.bf16.msra.mxu0 %v3868
  %3968 = vmatprep.subr.bf16.mxu0 0
  %3969 = vmatpush1.bf16.msra.mxu0 %v3869
  %3970 = vmatprep.subr.bf16.mxu0 0
  %3971 = vmatpush1.bf16.msra.mxu0 %v3870
  %3972 = vmatprep.subr.bf16.mxu0 0
  %3973 = vmatpush1.bf16.msra.mxu0 %v3871
  %3974 = vmatprep.subr.bf16.mxu0 0
  %3975 = vmatpush1.bf16.msra.mxu0 %v3872
  %3976 = vmatprep.subr.bf16.mxu0 0
  %3977 = vmatpush1.bf16.msra.mxu0 %v3873
  %3978 = vmatprep.subr.bf16.mxu0 0
  %3979 = vmatpush1.bf16.msra.mxu0 %v3874
  %3980 = vmatprep.mubr.bf16.mxu0 %v3649
  %3981 = vmatmul.mubr.bf16.gmra.mrb[0].mxu0 %v3648
  %v3982 = vpop.f32.mrb[0].mxu0
  %v3983 = vadd.f32 %v3942, %v3982
  %v3984 = vpop.f32.mrb[0].mxu0
  %v3985 = vpop.f32.mrb[0].mxu0
  %v3986 = vadd.f32 %v3945, %v3985
  %v3987 = vpop.f32.mrb[0].mxu0
  %3988 = vdwg.mxu0
  %v3989 = vadd.f32 %v3474, %v3983
  %v3990 = vadd.f32 %v3477, %v3986
  %s3991 = scalar_lea.vmem %s21, 192
  %v3992 = vld [vmem:[%s3991] sm:$0xff]
  %v3993 = vld [vmem:[%s3991 + $0x8] sm:$0xff]
  %v3994 = vld [vmem:[%s3991 + $0x10] sm:$0xff]
  %v3995 = vld [vmem:[%s3991 + $0x18] sm:$0xff]
  %v3996 = vld [vmem:[%s3991 + $0x20] sm:$0xff]
  %v3997 = vld [vmem:[%s3991 + $0x28] sm:$0xff]
  %v3998 = vld [vmem:[%s3991 + $0x30] sm:$0xff]
  %v3999 = vld [vmem:[%s3991 + $0x38] sm:$0xff]
  %s4000 = scalar_lea.vmem %s22, 12
  %v4001 = vld [vmem:[%s4000] sm:$0xf]
  %v4003 = vlaneseq
  %v4004 = vshrl.u32 %v4003, 7
  %v4005 = vsub.s32 0, %v4004
  %v4006 = vrot.slane %v4001, %v4005
  %v4007 = vlaneseq
  %v4008 = vshrl.u32 %v4007, 7
  %v4009 = vsub.s32 1, %v4008
  %v4010 = vrot.slane %v4001, %v4009
  %v4011 = vlaneseq
  %v4012 = vshrl.u32 %v4011, 7
  %v4013 = vsub.s32 2, %v4012
  %v4014 = vrot.slane %v4001, %v4013
  %v4015 = vlaneseq
  %v4016 = vshrl.u32 %v4015, 7
  %v4017 = vsub.s32 3, %v4016
  %v4018 = vrot.slane %v4001, %v4017
  %v4031 = vunpack.c.l.b16 %v3992
  %v4032 = vunpack.c.h.b16 %v3992
  %v4033 = vunpack.c.l.b16 %v3993
  %v4034 = vunpack.c.h.b16 %v3993
  %v4035 = vunpack.c.l.b16 %v3994
  %v4036 = vunpack.c.h.b16 %v3994
  %v4037 = vunpack.c.l.b16 %v3995
  %v4038 = vunpack.c.h.b16 %v3995
  %v4039 = vunpack.c.l.b16 %v3996
  %v4040 = vunpack.c.h.b16 %v3996
  %v4041 = vunpack.c.l.b16 %v3997
  %v4042 = vunpack.c.h.b16 %v3997
  %v4043 = vunpack.c.l.b16 %v3998
  %v4044 = vunpack.c.h.b16 %v3998
  %v4045 = vunpack.c.l.b16 %v3999
  %v4046 = vunpack.c.h.b16 %v3999
  %v4047 = vpack.c.b16 %v4035, %v4031
  %v4048 = vpack.c.b16 %v4036, %v4032
  %v4049 = vpack.c.b16 %v4037, %v4033
  %v4050 = vpack.c.b16 %v4038, %v4034
  %v4051 = vpack.c.b16 %v4043, %v4039
  %v4052 = vpack.c.b16 %v4044, %v4040
  %v4053 = vpack.c.b16 %v4045, %v4041
  %v4054 = vpack.c.b16 %v4046, %v4042
  %4063 = vmatprep.subr.bf16.mxu0 %v4048
  %4064 = vmatpush1.bf16.msra.mxu0 %v4047
  %4065 = vmatprep.subr.bf16.mxu0 %v4052
  %4066 = vmatpush1.bf16.msra.mxu0 %v4051
  %4067 = vmatprep.subr.bf16.mxu0 0
  %4068 = vmatpush1.bf16.msra.mxu0 0
  %4069 = vmatprep.subr.bf16.mxu0 0
  %4070 = vmatpush1.bf16.msra.mxu0 0
  %4071 = vmatprep.subr.bf16.mxu0 0
  %4072 = vmatpush1.bf16.msra.mxu0 0
  %4073 = vmatprep.subr.bf16.mxu0 0
  %4074 = vmatpush1.bf16.msra.mxu0 0
  %4075 = vmatprep.subr.bf16.mxu0 0
  %4076 = vmatpush1.bf16.msra.mxu0 0
  %4077 = vmatprep.subr.bf16.mxu0 0
  %4078 = vmatpush1.bf16.msra.mxu0 0
  %4079 = vmatprep.subr.bf16.mxu0 0
  %4080 = vmatpush1.bf16.msra.mxu0 0
  %4081 = vmatprep.subr.bf16.mxu0 0
  %4082 = vmatpush1.bf16.msra.mxu0 0
  %4083 = vmatprep.subr.bf16.mxu0 0
  %4084 = vmatpush1.bf16.msra.mxu0 0
  %4085 = vmatprep.subr.bf16.mxu0 0
  %4086 = vmatpush1.bf16.msra.mxu0 0
  %4087 = vmatprep.subr.bf16.mxu0 0
  %4088 = vmatpush1.bf16.msra.mxu0 0
  %4089 = vmatprep.subr.bf16.mxu0 0
  %4090 = vmatpush1.bf16.msra.mxu0 0
  %4091 = vmatprep.subr.bf16.mxu0 0
  %4092 = vmatpush1.bf16.msra.mxu0 0
  %4093 = vmatprep.subr.bf16.mxu0 0
  %4094 = vmatpush1.bf16.msra.mxu0 0
  %4095 = vmatprep.mubr.bf16.mxu0 0
  %4096 = vmatmul.mubr.bf16.gmra.mrb[0].mxu0 %v2533
  %v4097 = vpop.f32.mrb[0].mxu0
  %v4098 = vadd.f32 %v4006, %v4097
  %v4099 = vpop.f32.mrb[0].mxu0
  %v4100 = vadd.f32 %v4010, %v4099
  %v4101 = vpop.f32.mrb[0].mxu0
  %v4102 = vadd.f32 %v4006, %v4101
  %v4103 = vpop.f32.mrb[0].mxu0
  %v4104 = vadd.f32 %v4010, %v4103
  %4105 = vdwg.mxu0
  %4106 = vmatprep.subr.bf16.mxu0 %v4050
  %4107 = vmatpush1.bf16.msra.mxu0 %v4049
  %4108 = vmatprep.subr.bf16.mxu0 %v4054
  %4109 = vmatpush1.bf16.msra.mxu0 %v4053
  %4110 = vmatprep.subr.bf16.mxu0 0
  %4111 = vmatpush1.bf16.msra.mxu0 0
  %4112 = vmatprep.subr.bf16.mxu0 0
  %4113 = vmatpush1.bf16.msra.mxu0 0
  %4114 = vmatprep.subr.bf16.mxu0 0
  %4115 = vmatpush1.bf16.msra.mxu0 0
  %4116 = vmatprep.subr.bf16.mxu0 0
  %4117 = vmatpush1.bf16.msra.mxu0 0
  %4118 = vmatprep.subr.bf16.mxu0 0
  %4119 = vmatpush1.bf16.msra.mxu0 0
  %4120 = vmatprep.subr.bf16.mxu0 0
  %4121 = vmatpush1.bf16.msra.mxu0 0
  %4122 = vmatprep.subr.bf16.mxu0 0
  %4123 = vmatpush1.bf16.msra.mxu0 0
  %4124 = vmatprep.subr.bf16.mxu0 0
  %4125 = vmatpush1.bf16.msra.mxu0 0
  %4126 = vmatprep.subr.bf16.mxu0 0
  %4127 = vmatpush1.bf16.msra.mxu0 0
  %4128 = vmatprep.subr.bf16.mxu0 0
  %4129 = vmatpush1.bf16.msra.mxu0 0
  %4130 = vmatprep.subr.bf16.mxu0 0
  %4131 = vmatpush1.bf16.msra.mxu0 0
  %4132 = vmatprep.subr.bf16.mxu0 0
  %4133 = vmatpush1.bf16.msra.mxu0 0
  %4134 = vmatprep.subr.bf16.mxu0 0
  %4135 = vmatpush1.bf16.msra.mxu0 0
  %4136 = vmatprep.subr.bf16.mxu0 0
  %4137 = vmatpush1.bf16.msra.mxu0 0
  %4138 = vmatprep.mubr.bf16.mxu0 0
  %4139 = vmatmul.mubr.bf16.gmra.mrb[0].mxu0 %v2533
  %v4140 = vpop.f32.mrb[0].mxu0
  %v4141 = vadd.f32 %v4014, %v4140
  %v4142 = vpop.f32.mrb[0].mxu0
  %v4143 = vadd.f32 %v4018, %v4142
  %v4144 = vpop.f32.mrb[0].mxu0
  %v4145 = vadd.f32 %v4014, %v4144
  %v4146 = vpop.f32.mrb[0].mxu0
  %v4147 = vadd.f32 %v4018, %v4146
  %4148 = vdwg.mxu0
  %v4149 = vmax.f32 %v4098, 0.0
  %v4150 = vmax.f32 %v4100, 0.0
  %v4151 = vmax.f32 %v4141, 0.0
  %v4152 = vmax.f32 %v4143, 0.0
  %v4153 = vmax.f32 %v4102, 0.0
  %v4154 = vmax.f32 %v4104, 0.0
  %v4155 = vmax.f32 %v4145, 0.0
  %v4156 = vmax.f32 %v4147, 0.0
  %v4157 = vpack.c.bf16 %v4153, %v4149
  %v4158 = vpack.c.bf16 %v4154, %v4150
  %v4159 = vpack.c.bf16 %v4155, %v4151
  %v4160 = vpack.c.bf16 %v4156, %v4152
  %s4161 = scalar_lea.vmem %s23, 768
  %v4162 = vld [vmem:[%s4161] sm:$0xf]
  %v4163 = vld [vmem:[%s4161 + $0x4] sm:$0xf]
  %v4164 = vld [vmem:[%s4161 + $0x8] sm:$0xf]
  %v4165 = vld [vmem:[%s4161 + $0xc] sm:$0xf]
  %v4166 = vld [vmem:[%s4161 + $0x10] sm:$0xf]
  %v4167 = vld [vmem:[%s4161 + $0x14] sm:$0xf]
  %v4168 = vld [vmem:[%s4161 + $0x18] sm:$0xf]
  %v4169 = vld [vmem:[%s4161 + $0x1c] sm:$0xf]
  %v4170 = vld [vmem:[%s4161 + $0x20] sm:$0xf]
  %v4171 = vld [vmem:[%s4161 + $0x24] sm:$0xf]
  %v4172 = vld [vmem:[%s4161 + $0x28] sm:$0xf]
  %v4173 = vld [vmem:[%s4161 + $0x2c] sm:$0xf]
  %v4174 = vld [vmem:[%s4161 + $0x30] sm:$0xf]
  %v4175 = vld [vmem:[%s4161 + $0x34] sm:$0xf]
  %v4176 = vld [vmem:[%s4161 + $0x38] sm:$0xf]
  %v4177 = vld [vmem:[%s4161 + $0x3c] sm:$0xf]
  %v4178 = vld [vmem:[%s4161 + $0x40] sm:$0xf]
  %v4179 = vld [vmem:[%s4161 + $0x44] sm:$0xf]
  %v4180 = vld [vmem:[%s4161 + $0x48] sm:$0xf]
  %v4181 = vld [vmem:[%s4161 + $0x4c] sm:$0xf]
  %v4182 = vld [vmem:[%s4161 + $0x50] sm:$0xf]
  %v4183 = vld [vmem:[%s4161 + $0x54] sm:$0xf]
  %v4184 = vld [vmem:[%s4161 + $0x58] sm:$0xf]
  %v4185 = vld [vmem:[%s4161 + $0x5c] sm:$0xf]
  %v4186 = vld [vmem:[%s4161 + $0x60] sm:$0xf]
  %v4187 = vld [vmem:[%s4161 + $0x64] sm:$0xf]
  %v4188 = vld [vmem:[%s4161 + $0x68] sm:$0xf]
  %v4189 = vld [vmem:[%s4161 + $0x6c] sm:$0xf]
  %v4190 = vld [vmem:[%s4161 + $0x70] sm:$0xf]
  %v4191 = vld [vmem:[%s4161 + $0x74] sm:$0xf]
  %v4192 = vld [vmem:[%s4161 + $0x78] sm:$0xf]
  %v4193 = vld [vmem:[%s4161 + $0x7c] sm:$0xf]
  %v4194 = vld [vmem:[%s4161 + $0x80] sm:$0xf]
  %v4195 = vld [vmem:[%s4161 + $0x84] sm:$0xf]
  %v4196 = vld [vmem:[%s4161 + $0x88] sm:$0xf]
  %v4197 = vld [vmem:[%s4161 + $0x8c] sm:$0xf]
  %v4198 = vld [vmem:[%s4161 + $0x90] sm:$0xf]
  %v4199 = vld [vmem:[%s4161 + $0x94] sm:$0xf]
  %v4200 = vld [vmem:[%s4161 + $0x98] sm:$0xf]
  %v4201 = vld [vmem:[%s4161 + $0x9c] sm:$0xf]
  %v4202 = vld [vmem:[%s4161 + $0xa0] sm:$0xf]
  %v4203 = vld [vmem:[%s4161 + $0xa4] sm:$0xf]
  %v4204 = vld [vmem:[%s4161 + $0xa8] sm:$0xf]
  %v4205 = vld [vmem:[%s4161 + $0xac] sm:$0xf]
  %v4206 = vld [vmem:[%s4161 + $0xb0] sm:$0xf]
  %v4207 = vld [vmem:[%s4161 + $0xb4] sm:$0xf]
  %v4208 = vld [vmem:[%s4161 + $0xb8] sm:$0xf]
  %v4209 = vld [vmem:[%s4161 + $0xbc] sm:$0xf]
  %v4210 = vld [vmem:[%s4161 + $0xc0] sm:$0xf]
  %v4211 = vld [vmem:[%s4161 + $0xc4] sm:$0xf]
  %v4212 = vld [vmem:[%s4161 + $0xc8] sm:$0xf]
  %v4213 = vld [vmem:[%s4161 + $0xcc] sm:$0xf]
  %v4214 = vld [vmem:[%s4161 + $0xd0] sm:$0xf]
  %v4215 = vld [vmem:[%s4161 + $0xd4] sm:$0xf]
  %v4216 = vld [vmem:[%s4161 + $0xd8] sm:$0xf]
  %v4217 = vld [vmem:[%s4161 + $0xdc] sm:$0xf]
  %v4218 = vld [vmem:[%s4161 + $0xe0] sm:$0xf]
  %v4219 = vld [vmem:[%s4161 + $0xe4] sm:$0xf]
  %v4220 = vld [vmem:[%s4161 + $0xe8] sm:$0xf]
  %v4221 = vld [vmem:[%s4161 + $0xec] sm:$0xf]
  %v4222 = vld [vmem:[%s4161 + $0xf0] sm:$0xf]
  %v4223 = vld [vmem:[%s4161 + $0xf4] sm:$0xf]
  %v4224 = vld [vmem:[%s4161 + $0xf8] sm:$0xf]
  %v4225 = vld [vmem:[%s4161 + $0xfc] sm:$0xf]
  %v4290 = vunpack.c.l.b16 %v4162
  %v4291 = vunpack.c.l.b16 %v4163
  %v4292 = vunpack.c.l.b16 %v4164
  %v4293 = vunpack.c.l.b16 %v4165
  %v4294 = vunpack.c.l.b16 %v4166
  %v4295 = vunpack.c.l.b16 %v4167
  %v4296 = vunpack.c.l.b16 %v4168
  %v4297 = vunpack.c.l.b16 %v4169
  %v4298 = vunpack.c.l.b16 %v4170
  %v4299 = vunpack.c.l.b16 %v4171
  %v4300 = vunpack.c.l.b16 %v4172
  %v4301 = vunpack.c.l.b16 %v4173
  %v4302 = vunpack.c.l.b16 %v4174
  %v4303 = vunpack.c.l.b16 %v4175
  %v4304 = vunpack.c.l.b16 %v4176
  %v4305 = vunpack.c.l.b16 %v4177
  %v4306 = vunpack.c.l.b16 %v4178
  %v4307 = vunpack.c.l.b16 %v4179
  %v4308 = vunpack.c.l.b16 %v4180
  %v4309 = vunpack.c.l.b16 %v4181
  %v4310 = vunpack.c.l.b16 %v4182
  %v4311 = vunpack.c.l.b16 %v4183
  %v4312 = vunpack.c.l.b16 %v4184
  %v4313 = vunpack.c.l.b16 %v4185
  %v4314 = vunpack.c.l.b16 %v4186
  %v4315 = vunpack.c.l.b16 %v4187
  %v4316 = vunpack.c.l.b16 %v4188
  %v4317 = vunpack.c.l.b16 %v4189
  %v4318 = vunpack.c.l.b16 %v4190
  %v4319 = vunpack.c.l.b16 %v4191
  %v4320 = vunpack.c.l.b16 %v4192
  %v4321 = vunpack.c.l.b16 %v4193
  %v4322 = vunpack.c.l.b16 %v4194
  %v4323 = vunpack.c.l.b16 %v4195
  %v4324 = vunpack.c.l.b16 %v4196
  %v4325 = vunpack.c.l.b16 %v4197
  %v4326 = vunpack.c.l.b16 %v4198
  %v4327 = vunpack.c.l.b16 %v4199
  %v4328 = vunpack.c.l.b16 %v4200
  %v4329 = vunpack.c.l.b16 %v4201
  %v4330 = vunpack.c.l.b16 %v4202
  %v4331 = vunpack.c.l.b16 %v4203
  %v4332 = vunpack.c.l.b16 %v4204
  %v4333 = vunpack.c.l.b16 %v4205
  %v4334 = vunpack.c.l.b16 %v4206
  %v4335 = vunpack.c.l.b16 %v4207
  %v4336 = vunpack.c.l.b16 %v4208
  %v4337 = vunpack.c.l.b16 %v4209
  %v4338 = vunpack.c.l.b16 %v4210
  %v4339 = vunpack.c.l.b16 %v4211
  %v4340 = vunpack.c.l.b16 %v4212
  %v4341 = vunpack.c.l.b16 %v4213
  %v4342 = vunpack.c.l.b16 %v4214
  %v4343 = vunpack.c.l.b16 %v4215
  %v4344 = vunpack.c.l.b16 %v4216
  %v4345 = vunpack.c.l.b16 %v4217
  %v4346 = vunpack.c.l.b16 %v4218
  %v4347 = vunpack.c.l.b16 %v4219
  %v4348 = vunpack.c.l.b16 %v4220
  %v4349 = vunpack.c.l.b16 %v4221
  %v4350 = vunpack.c.l.b16 %v4222
  %v4351 = vunpack.c.l.b16 %v4223
  %v4352 = vunpack.c.l.b16 %v4224
  %v4353 = vunpack.c.l.b16 %v4225
  %v4354 = vpack.c.b16 %v4291, %v4290
  %v4355 = vpack.c.b16 %v4293, %v4292
  %v4356 = vpack.c.b16 %v4295, %v4294
  %v4357 = vpack.c.b16 %v4297, %v4296
  %v4358 = vpack.c.b16 %v4299, %v4298
  %v4359 = vpack.c.b16 %v4301, %v4300
  %v4360 = vpack.c.b16 %v4303, %v4302
  %v4361 = vpack.c.b16 %v4305, %v4304
  %v4362 = vpack.c.b16 %v4307, %v4306
  %v4363 = vpack.c.b16 %v4309, %v4308
  %v4364 = vpack.c.b16 %v4311, %v4310
  %v4365 = vpack.c.b16 %v4313, %v4312
  %v4366 = vpack.c.b16 %v4315, %v4314
  %v4367 = vpack.c.b16 %v4317, %v4316
  %v4368 = vpack.c.b16 %v4319, %v4318
  %v4369 = vpack.c.b16 %v4321, %v4320
  %v4370 = vpack.c.b16 %v4323, %v4322
  %v4371 = vpack.c.b16 %v4325, %v4324
  %v4372 = vpack.c.b16 %v4327, %v4326
  %v4373 = vpack.c.b16 %v4329, %v4328
  %v4374 = vpack.c.b16 %v4331, %v4330
  %v4375 = vpack.c.b16 %v4333, %v4332
  %v4376 = vpack.c.b16 %v4335, %v4334
  %v4377 = vpack.c.b16 %v4337, %v4336
  %v4378 = vpack.c.b16 %v4339, %v4338
  %v4379 = vpack.c.b16 %v4341, %v4340
  %v4380 = vpack.c.b16 %v4343, %v4342
  %v4381 = vpack.c.b16 %v4345, %v4344
  %v4382 = vpack.c.b16 %v4347, %v4346
  %v4383 = vpack.c.b16 %v4349, %v4348
  %v4384 = vpack.c.b16 %v4351, %v4350
  %v4385 = vpack.c.b16 %v4353, %v4352
  %4418 = vmatprep.subr.bf16.mxu0 0
  %4419 = vmatpush1.bf16.msra.mxu0 %v4354
  %4420 = vmatprep.subr.bf16.mxu0 0
  %4421 = vmatpush1.bf16.msra.mxu0 %v4355
  %4422 = vmatprep.subr.bf16.mxu0 0
  %4423 = vmatpush1.bf16.msra.mxu0 %v4356
  %4424 = vmatprep.subr.bf16.mxu0 0
  %4425 = vmatpush1.bf16.msra.mxu0 %v4357
  %4426 = vmatprep.subr.bf16.mxu0 0
  %4427 = vmatpush1.bf16.msra.mxu0 %v4358
  %4428 = vmatprep.subr.bf16.mxu0 0
  %4429 = vmatpush1.bf16.msra.mxu0 %v4359
  %4430 = vmatprep.subr.bf16.mxu0 0
  %4431 = vmatpush1.bf16.msra.mxu0 %v4360
  %4432 = vmatprep.subr.bf16.mxu0 0
  %4433 = vmatpush1.bf16.msra.mxu0 %v4361
  %4434 = vmatprep.subr.bf16.mxu0 0
  %4435 = vmatpush1.bf16.msra.mxu0 %v4362
  %4436 = vmatprep.subr.bf16.mxu0 0
  %4437 = vmatpush1.bf16.msra.mxu0 %v4363
  %4438 = vmatprep.subr.bf16.mxu0 0
  %4439 = vmatpush1.bf16.msra.mxu0 %v4364
  %4440 = vmatprep.subr.bf16.mxu0 0
  %4441 = vmatpush1.bf16.msra.mxu0 %v4365
  %4442 = vmatprep.subr.bf16.mxu0 0
  %4443 = vmatpush1.bf16.msra.mxu0 %v4366
  %4444 = vmatprep.subr.bf16.mxu0 0
  %4445 = vmatpush1.bf16.msra.mxu0 %v4367
  %4446 = vmatprep.subr.bf16.mxu0 0
  %4447 = vmatpush1.bf16.msra.mxu0 %v4368
  %4448 = vmatprep.subr.bf16.mxu0 0
  %4449 = vmatpush1.bf16.msra.mxu0 %v4369
  %4450 = vmatprep.mubr.bf16.mxu0 %v4158
  %4451 = vmatmul.mubr.bf16.gmra.mrb[0].mxu0 %v4157
  %v4452 = vpop.f32.mrb[0].mxu0
  %v4453 = vadd.f32 0.0, %v4452
  %v4454 = vpop.f32.mrb[0].mxu0
  %v4455 = vpop.f32.mrb[0].mxu0
  %v4456 = vadd.f32 0.0, %v4455
  %v4457 = vpop.f32.mrb[0].mxu0
  %4458 = vdwg.mxu0
  %4459 = vmatprep.subr.bf16.mxu0 0
  %4460 = vmatpush1.bf16.msra.mxu0 %v4370
  %4461 = vmatprep.subr.bf16.mxu0 0
  %4462 = vmatpush1.bf16.msra.mxu0 %v4371
  %4463 = vmatprep.subr.bf16.mxu0 0
  %4464 = vmatpush1.bf16.msra.mxu0 %v4372
  %4465 = vmatprep.subr.bf16.mxu0 0
  %4466 = vmatpush1.bf16.msra.mxu0 %v4373
  %4467 = vmatprep.subr.bf16.mxu0 0
  %4468 = vmatpush1.bf16.msra.mxu0 %v4374
  %4469 = vmatprep.subr.bf16.mxu0 0
  %4470 = vmatpush1.bf16.msra.mxu0 %v4375
  %4471 = vmatprep.subr.bf16.mxu0 0
  %4472 = vmatpush1.bf16.msra.mxu0 %v4376
  %4473 = vmatprep.subr.bf16.mxu0 0
  %4474 = vmatpush1.bf16.msra.mxu0 %v4377
  %4475 = vmatprep.subr.bf16.mxu0 0
  %4476 = vmatpush1.bf16.msra.mxu0 %v4378
  %4477 = vmatprep.subr.bf16.mxu0 0
  %4478 = vmatpush1.bf16.msra.mxu0 %v4379
  %4479 = vmatprep.subr.bf16.mxu0 0
  %4480 = vmatpush1.bf16.msra.mxu0 %v4380
  %4481 = vmatprep.subr.bf16.mxu0 0
  %4482 = vmatpush1.bf16.msra.mxu0 %v4381
  %4483 = vmatprep.subr.bf16.mxu0 0
  %4484 = vmatpush1.bf16.msra.mxu0 %v4382
  %4485 = vmatprep.subr.bf16.mxu0 0
  %4486 = vmatpush1.bf16.msra.mxu0 %v4383
  %4487 = vmatprep.subr.bf16.mxu0 0
  %4488 = vmatpush1.bf16.msra.mxu0 %v4384
  %4489 = vmatprep.subr.bf16.mxu0 0
  %4490 = vmatpush1.bf16.msra.mxu0 %v4385
  %4491 = vmatprep.mubr.bf16.mxu0 %v4160
  %4492 = vmatmul.mubr.bf16.gmra.mrb[0].mxu0 %v4159
  %v4493 = vpop.f32.mrb[0].mxu0
  %v4494 = vadd.f32 %v4453, %v4493
  %v4495 = vpop.f32.mrb[0].mxu0
  %v4496 = vpop.f32.mrb[0].mxu0
  %v4497 = vadd.f32 %v4456, %v4496
  %v4498 = vpop.f32.mrb[0].mxu0
  %4499 = vdwg.mxu0
  %v4500 = vadd.f32 %v3989, %v4494
  %v4501 = vadd.f32 %v3990, %v4497
  %v4502 = vadd.f32 %v2459, %v4500
  %v4503 = vadd.f32 %v2460, %v4501
  %v4504 = vld [vmem:[%s24] sm:$0x1]
  %v4506 = vlaneseq
  %v4507 = vshrl.u32 %v4506, 7
  %v4508 = vsub.s32 0, %v4507
  %v4509 = vrot.slane %v4504, %v4508
  %v4511 = vadd.f32 %v4502, %v4509
  %v4512 = vadd.f32 %v4503, %v4509
  %v4513 = vld [vmem:[%s19] sm:$0x1]
  %v4514 = vld [vmem:[%s20] sm:$0x1]
  %v4515 = vsel %vm230, %v4511, 0.0
  %4516 = vadd.xlane.f32.xlu0 %v4515
  %v4517 = vpop.xlane.xlu0 %4516
  %v4518 = vsel %vm230, %v4512, 0.0
  %4519 = vadd.xlane.f32.xlu0 %v4518
  %v4520 = vpop.xlane.xlu0 %4519
  %v4521 = vmul.f32 %v4517, %v1352
  %v4522 = vmul.f32 %v4520, %v1352
  %v4523 = vsub.f32 %v4511, %v4521
  %v4524 = vsub.f32 %v4512, %v4522
  %v4525 = vmul.f32 %v4523, %v4523
  %v4526 = vmul.f32 %v4524, %v4524
  %v4527 = vsel %vm230, %v4525, 0.0
  %4528 = vadd.xlane.f32.xlu0 %v4527
  %v4529 = vpop.xlane.xlu0 %4528
  %v4530 = vsel %vm230, %v4526, 0.0
  %4531 = vadd.xlane.f32.xlu0 %v4530
  %v4532 = vpop.xlane.xlu0 %4531
  %v4533 = vmul.f32 %v4529, %v1352
  %v4534 = vmul.f32 %v4532, %v1352
  %v4535 = vadd.f32 %v4533, 1e-05
  %v4536 = vadd.f32 %v4534, 1e-05
  %v4537 = vrsqrt.pop %v4535
  %v4538 = vrsqrt.pop %v4536
  %v4539 = vmul.f32 %v4523, %v4537
  %v4540 = vmul.f32 %v4524, %v4538
  %v4542 = vlaneseq
  %v4543 = vshrl.u32 %v4542, 7
  %v4544 = vsub.s32 0, %v4543
  %v4545 = vrot.slane %v4513, %v4544
  %v4547 = vmul.f32 %v4539, %v4545
  %v4548 = vmul.f32 %v4540, %v4545
  %v4550 = vlaneseq
  %v4551 = vshrl.u32 %v4550, 7
  %v4552 = vsub.s32 0, %v4551
  %v4553 = vrot.slane %v4514, %v4552
  %v4555 = vadd.f32 %v4547, %v4553
  %v4556 = vadd.f32 %v4548, %v4553
  %s4557 = scalar_lea.vmem %s5, 32
  %v4558 = vld [vmem:[%s4557] sm:$0xff]
  %v4559 = vld [vmem:[%s4557 + $0x8] sm:$0xff]
  %v4560 = vld [vmem:[%s4557 + $0x10] sm:$0xff]
  %v4561 = vld [vmem:[%s4557 + $0x18] sm:$0xff]
  %s4562 = scalar_lea.vmem %s6, 1
  %v4563 = vld [vmem:[%s4562] sm:$0x1]
  %v4565 = vlaneseq
  %v4566 = vshrl.u32 %v4565, 7
  %v4567 = vsub.s32 0, %v4566
  %v4568 = vrot.slane %v4563, %v4567
  %v4571 = vsel %vm230, %v4555, 0
  %v4574 = vsel %vm230, %v4556, 0
  %4576 = vmatprep.subr.mxu0 0.0
  %4577 = vmatpush1.msra.mxu0 %v4558
  %4578 = vmatprep.subr.mxu0 0.0
  %4579 = vmatpush1.msra.mxu0 %v4559
  %4580 = vmatprep.subr.mxu0 0.0
  %4581 = vmatpush1.msra.mxu0 %v4560
  %4582 = vmatprep.subr.mxu0 0.0
  %4583 = vmatpush1.msra.mxu0 %v4561
  %4584 = vmatprep.subr.mxu0 0.0
  %4585 = vmatpush1.msra.mxu0 0.0
  %4586 = vmatprep.subr.mxu0 0.0
  %4587 = vmatpush1.msra.mxu0 0.0
  %4588 = vmatprep.subr.mxu0 0.0
  %4589 = vmatpush1.msra.mxu0 0.0
  %4590 = vmatprep.subr.mxu0 0.0
  %4591 = vmatpush1.msra.mxu0 0.0
  %4592 = vmatprep.subr.mxu0 0.0
  %4593 = vmatpush1.msra.mxu0 0.0
  %4594 = vmatprep.subr.mxu0 0.0
  %4595 = vmatpush1.msra.mxu0 0.0
  %4596 = vmatprep.subr.mxu0 0.0
  %4597 = vmatpush1.msra.mxu0 0.0
  %4598 = vmatprep.subr.mxu0 0.0
  %4599 = vmatpush1.msra.mxu0 0.0
  %4600 = vmatprep.subr.mxu0 0.0
  %4601 = vmatpush1.msra.mxu0 0.0
  %4602 = vmatprep.subr.mxu0 0.0
  %4603 = vmatpush1.msra.mxu0 0.0
  %4604 = vmatprep.subr.mxu0 0.0
  %4605 = vmatpush1.msra.mxu0 0.0
  %4606 = vmatprep.subr.mxu0 0.0
  %4607 = vmatpush1.msra.mxu0 0.0
  %4608 = vmatprep.subr.mxu0 0.0
  %4609 = vmatpush1.msra.mxu0 0.0
  %4610 = vmatprep.subr.mxu0 0.0
  %4611 = vmatpush1.msra.mxu0 0.0
  %4612 = vmatprep.subr.mxu0 0.0
  %4613 = vmatpush1.msra.mxu0 0.0
  %4614 = vmatprep.subr.mxu0 0.0
  %4615 = vmatpush1.msra.mxu0 0.0
  %4616 = vmatprep.subr.mxu0 0.0
  %4617 = vmatpush1.msra.mxu0 0.0
  %4618 = vmatprep.subr.mxu0 0.0
  %4619 = vmatpush1.msra.mxu0 0.0
  %4620 = vmatprep.subr.mxu0 0.0
  %4621 = vmatpush1.msra.mxu0 0.0
  %4622 = vmatprep.subr.mxu0 0.0
  %4623 = vmatpush1.msra.mxu0 0.0
  %4624 = vmatprep.subr.mxu0 0.0
  %4625 = vmatpush1.msra.mxu0 0.0
  %4626 = vmatprep.subr.mxu0 0.0
  %4627 = vmatpush1.msra.mxu0 0.0
  %4628 = vmatprep.subr.mxu0 0.0
  %4629 = vmatpush1.msra.mxu0 0.0
  %4630 = vmatprep.subr.mxu0 0.0
  %4631 = vmatpush1.msra.mxu0 0.0
  %4632 = vmatprep.subr.mxu0 0.0
  %4633 = vmatpush1.msra.mxu0 0.0
  %4634 = vmatprep.subr.mxu0 0.0
  %4635 = vmatpush1.msra.mxu0 0.0
  %4636 = vmatprep.subr.mxu0 0.0
  %4637 = vmatpush1.msra.mxu0 0.0
  %4638 = vmatprep.subr.mxu0 0.0
  %4639 = vmatpush1.msra.mxu0 0.0
  %4640 = vmatprep.mubr.f32.mxu0 0.0
  %4641 = vmatmul.mubr.f32.gmra.mrb[0].mxu0 %v4571
  %v4642 = vpop.f32.mrb[0].mxu0
  %v4643 = vadd.f32 %v4568, %v4642
  %v4644 = vpop.f32.mrb[0].mxu0
  %4645 = vmatprep.mubr.f32.mxu0 0.0
  %4646 = vmatmul.mubr.f32.gmra.mrb[0].mxu0 %v4574
  %v4647 = vpop.f32.mrb[0].mxu0
  %v4648 = vadd.f32 %v4568, %v4647
  %v4649 = vpop.f32.mrb[0].mxu0
  %4650 = vdwg.mxu0
  %s4651 = scalar_lea.vmem %s7, 32
  %v4652 = vld [vmem:[%s4651] sm:$0xff]
  %v4653 = vld [vmem:[%s4651 + $0x8] sm:$0xff]
  %v4654 = vld [vmem:[%s4651 + $0x10] sm:$0xff]
  %v4655 = vld [vmem:[%s4651 + $0x18] sm:$0xff]
  %s4656 = scalar_lea.vmem %s8, 1
  %v4657 = vld [vmem:[%s4656] sm:$0x1]
  %4660 = vrot.lane.b32.xlu0 %v4643, 96
  %v4661 = vpop.permute.xlu0 %4660
  %4662 = vrot.lane.b32.xlu0 %v4648, 96
  %v4663 = vpop.permute.xlu0 %4662
  %v4664 = vsel %vm415, %v4643, 0
  %v4666 = vsel %vm415, %v4648, 0
  %v4668 = vsel %vm415, %v4661, 0
  %v4670 = vsel %vm415, %v4663, 0
  %4672 = vmatprep.subr.mxu0 0.0
  %4673 = vmatpush1.xpose.msra.mxu0 %v4668
  %4674 = vmatprep.subr.mxu0 0.0
  %4675 = vmatpush1.xpose.msra.mxu0 %v4670
  %4676 = vmatprep.subr.mxu0 0.0
  %4677 = vmatpush1.xpose.msra.mxu0 0.0
  %4678 = vmatprep.subr.mxu0 0.0
  %4679 = vmatpush1.xpose.msra.mxu0 0.0
  %4680 = vmatprep.subr.mxu0 0.0
  %4681 = vmatpush1.xpose.msra.mxu0 0.0
  %4682 = vmatprep.subr.mxu0 0.0
  %4683 = vmatpush1.xpose.msra.mxu0 0.0
  %4684 = vmatprep.subr.mxu0 0.0
  %4685 = vmatpush1.xpose.msra.mxu0 0.0
  %4686 = vmatprep.subr.mxu0 0.0
  %4687 = vmatpush1.xpose.msra.mxu0 0.0
  %4688 = vmatprep.subr.mxu0 0.0
  %4689 = vmatpush1.xpose.msra.mxu0 0.0
  %4690 = vmatprep.subr.mxu0 0.0
  %4691 = vmatpush1.xpose.msra.mxu0 0.0
  %4692 = vmatprep.subr.mxu0 0.0
  %4693 = vmatpush1.xpose.msra.mxu0 0.0
  %4694 = vmatprep.subr.mxu0 0.0
  %4695 = vmatpush1.xpose.msra.mxu0 0.0
  %4696 = vmatprep.subr.mxu0 0.0
  %4697 = vmatpush1.xpose.msra.mxu0 0.0
  %4698 = vmatprep.subr.mxu0 0.0
  %4699 = vmatpush1.xpose.msra.mxu0 0.0
  %4700 = vmatprep.subr.mxu0 0.0
  %4701 = vmatpush1.xpose.msra.mxu0 0.0
  %4702 = vmatprep.subr.mxu0 0.0
  %4703 = vmatpush1.xpose.msra.mxu0 0.0
  %4704 = vmatprep.subr.mxu0 0.0
  %4705 = vmatpush1.xpose.msra.mxu0 0.0
  %4706 = vmatprep.subr.mxu0 0.0
  %4707 = vmatpush1.xpose.msra.mxu0 0.0
  %4708 = vmatprep.subr.mxu0 0.0
  %4709 = vmatpush1.xpose.msra.mxu0 0.0
  %4710 = vmatprep.subr.mxu0 0.0
  %4711 = vmatpush1.xpose.msra.mxu0 0.0
  %4712 = vmatprep.subr.mxu0 0.0
  %4713 = vmatpush1.xpose.msra.mxu0 0.0
  %4714 = vmatprep.subr.mxu0 0.0
  %4715 = vmatpush1.xpose.msra.mxu0 0.0
  %4716 = vmatprep.subr.mxu0 0.0
  %4717 = vmatpush1.xpose.msra.mxu0 0.0
  %4718 = vmatprep.subr.mxu0 0.0
  %4719 = vmatpush1.xpose.msra.mxu0 0.0
  %4720 = vmatprep.subr.mxu0 0.0
  %4721 = vmatpush1.xpose.msra.mxu0 0.0
  %4722 = vmatprep.subr.mxu0 0.0
  %4723 = vmatpush1.xpose.msra.mxu0 0.0
  %4724 = vmatprep.subr.mxu0 0.0
  %4725 = vmatpush1.xpose.msra.mxu0 0.0
  %4726 = vmatprep.subr.mxu0 0.0
  %4727 = vmatpush1.xpose.msra.mxu0 0.0
  %4728 = vmatprep.subr.mxu0 0.0
  %4729 = vmatpush1.xpose.msra.mxu0 0.0
  %4730 = vmatprep.subr.mxu0 0.0
  %4731 = vmatpush1.xpose.msra.mxu0 0.0
  %4732 = vmatprep.subr.mxu0 0.0
  %4733 = vmatpush1.xpose.msra.mxu0 0.0
  %4734 = vmatprep.subr.mxu0 0.0
  %4735 = vmatpush1.xpose.msra.mxu0 0.0
  %4736 = vmatprep.mubr.f32.mxu0 0.0
  %4737 = vmatmul.mubr.f32.gmra.mrb[0].mxu0 %v4664
  %v4738 = vpop.f32.mrb[0].mxu0
  %v4739 = vadd.f32 0.0, %v4738
  %v4740 = vpop.f32.mrb[0].mxu0
  %4741 = vmatprep.mubr.f32.mxu0 0.0
  %4742 = vmatmul.mubr.f32.gmra.mrb[0].mxu0 %v4666
  %v4743 = vpop.f32.mrb[0].mxu0
  %v4744 = vadd.f32 0.0, %v4743
  %v4745 = vpop.f32.mrb[0].mxu0
  %4746 = vdwg.mxu0
  %v4747 = vmul.f32 %v4739, 0.35355338
  %v4748 = vmul.f32 %v4744, 0.35355338
  %v4749 = vadd.f32 %v4747, %v213
  %v4750 = vadd.f32 %v4748, %v214
  %v4751 = vsel %vm106, %v4749, -inf
  %4752 = vmax.xlane.f32.xlu0 %v4751
  %v4753 = vpop.xlane.xlu0 %4752
  %v4754 = vsel %vm106, %v4750, -inf
  %4755 = vmax.xlane.f32.xlu0 %v4754
  %v4756 = vpop.xlane.xlu0 %4755
  %v4757 = vsub.f32 %v4749, %v4753
  %v4758 = vsub.f32 %v4750, %v4756
  %v4759 = vmul.f32 %v4757, 1.442695
  %v4760 = vpow.pop %v4759
  %v4761 = vmul.f32 %v4758, 1.442695
  %v4762 = vpow.pop %v4761
  %v4763 = vsel %vm106, %v4760, 0.0
  %4764 = vadd.xlane.f32.xlu0 %v4763
  %v4765 = vpop.xlane.xlu0 %4764
  %v4766 = vsel %vm106, %v4762, 0.0
  %4767 = vadd.xlane.f32.xlu0 %v4766
  %v4768 = vpop.xlane.xlu0 %4767
  %v4769 = vrcp.pop %v4765
  %v4770 = vmul.f32 %v4760, %v4769
  %v4771 = vrcp.pop %v4768
  %v4772 = vmul.f32 %v4762, %v4771
  %4773 = vrot.lane.b32.xlu0 %v4643, 64
  %v4774 = vpop.permute.xlu0 %4773
  %4775 = vrot.lane.b32.xlu0 %v4648, 64
  %v4776 = vpop.permute.xlu0 %4775
  %v4780 = vsel %vm106, %v4770, 0
  %v4783 = vsel %vm106, %v4772, 0
  %4785 = vmatprep.subr.mxu0 0.0
  %4786 = vmatpush1.msra.mxu0 %v4774
  %4787 = vmatprep.subr.mxu0 0.0
  %4788 = vmatpush1.msra.mxu0 %v4776
  %4789 = vmatprep.subr.mxu0 0.0
  %4790 = vmatpush1.msra.mxu0 0.0
  %4791 = vmatprep.subr.mxu0 0.0
  %4792 = vmatpush1.msra.mxu0 0.0
  %4793 = vmatprep.subr.mxu0 0.0
  %4794 = vmatpush1.msra.mxu0 0.0
  %4795 = vmatprep.subr.mxu0 0.0
  %4796 = vmatpush1.msra.mxu0 0.0
  %4797 = vmatprep.subr.mxu0 0.0
  %4798 = vmatpush1.msra.mxu0 0.0
  %4799 = vmatprep.subr.mxu0 0.0
  %4800 = vmatpush1.msra.mxu0 0.0
  %4801 = vmatprep.subr.mxu0 0.0
  %4802 = vmatpush1.msra.mxu0 0.0
  %4803 = vmatprep.subr.mxu0 0.0
  %4804 = vmatpush1.msra.mxu0 0.0
  %4805 = vmatprep.subr.mxu0 0.0
  %4806 = vmatpush1.msra.mxu0 0.0
  %4807 = vmatprep.subr.mxu0 0.0
  %4808 = vmatpush1.msra.mxu0 0.0
  %4809 = vmatprep.subr.mxu0 0.0
  %4810 = vmatpush1.msra.mxu0 0.0
  %4811 = vmatprep.subr.mxu0 0.0
  %4812 = vmatpush1.msra.mxu0 0.0
  %4813 = vmatprep.subr.mxu0 0.0
  %4814 = vmatpush1.msra.mxu0 0.0
  %4815 = vmatprep.subr.mxu0 0.0
  %4816 = vmatpush1.msra.mxu0 0.0
  %4817 = vmatprep.subr.mxu0 0.0
  %4818 = vmatpush1.msra.mxu0 0.0
  %4819 = vmatprep.subr.mxu0 0.0
  %4820 = vmatpush1.msra.mxu0 0.0
  %4821 = vmatprep.subr.mxu0 0.0
  %4822 = vmatpush1.msra.mxu0 0.0
  %4823 = vmatprep.subr.mxu0 0.0
  %4824 = vmatpush1.msra.mxu0 0.0
  %4825 = vmatprep.subr.mxu0 0.0
  %4826 = vmatpush1.msra.mxu0 0.0
  %4827 = vmatprep.subr.mxu0 0.0
  %4828 = vmatpush1.msra.mxu0 0.0
  %4829 = vmatprep.subr.mxu0 0.0
  %4830 = vmatpush1.msra.mxu0 0.0
  %4831 = vmatprep.subr.mxu0 0.0
  %4832 = vmatpush1.msra.mxu0 0.0
  %4833 = vmatprep.subr.mxu0 0.0
  %4834 = vmatpush1.msra.mxu0 0.0
  %4835 = vmatprep.subr.mxu0 0.0
  %4836 = vmatpush1.msra.mxu0 0.0
  %4837 = vmatprep.subr.mxu0 0.0
  %4838 = vmatpush1.msra.mxu0 0.0
  %4839 = vmatprep.subr.mxu0 0.0
  %4840 = vmatpush1.msra.mxu0 0.0
  %4841 = vmatprep.subr.mxu0 0.0
  %4842 = vmatpush1.msra.mxu0 0.0
  %4843 = vmatprep.subr.mxu0 0.0
  %4844 = vmatpush1.msra.mxu0 0.0
  %4845 = vmatprep.subr.mxu0 0.0
  %4846 = vmatpush1.msra.mxu0 0.0
  %4847 = vmatprep.subr.mxu0 0.0
  %4848 = vmatpush1.msra.mxu0 0.0
  %4849 = vmatprep.mubr.f32.mxu0 0.0
  %4850 = vmatmul.mubr.f32.gmra.mrb[0].mxu0 %v4780
  %v4851 = vpop.f32.mrb[0].mxu0
  %v4852 = vadd.f32 0.0, %v4851
  %v4853 = vpop.f32.mrb[0].mxu0
  %4854 = vmatprep.mubr.f32.mxu0 0.0
  %4855 = vmatmul.mubr.f32.gmra.mrb[0].mxu0 %v4783
  %v4856 = vpop.f32.mrb[0].mxu0
  %v4857 = vadd.f32 0.0, %v4856
  %v4858 = vpop.f32.mrb[0].mxu0
  %4859 = vdwg.mxu0
  %4860 = vrot.lane.b32.xlu0 %v4643, 120
  %v4861 = vpop.permute.xlu0 %4860
  %4862 = vrot.lane.b32.xlu0 %v4648, 120
  %v4863 = vpop.permute.xlu0 %4862
  %4864 = vrot.lane.b32.xlu0 %v4643, 88
  %v4865 = vpop.permute.xlu0 %4864
  %4866 = vrot.lane.b32.xlu0 %v4648, 88
  %v4867 = vpop.permute.xlu0 %4866
  %v4868 = vsel %vm415, %v4861, 0
  %v4870 = vsel %vm415, %v4863, 0
  %v4872 = vsel %vm415, %v4865, 0
  %v4874 = vsel %vm415, %v4867, 0
  %4876 = vmatprep.subr.mxu0 0.0
  %4877 = vmatpush1.xpose.msra.mxu0 %v4872
  %4878 = vmatprep.subr.mxu0 0.0
  %4879 = vmatpush1.xpose.msra.mxu0 %v4874
  %4880 = vmatprep.subr.mxu0 0.0
  %4881 = vmatpush1.xpose.msra.mxu0 0.0
  %4882 = vmatprep.subr.mxu0 0.0
  %4883 = vmatpush1.xpose.msra.mxu0 0.0
  %4884 = vmatprep.subr.mxu0 0.0
  %4885 = vmatpush1.xpose.msra.mxu0 0.0
  %4886 = vmatprep.subr.mxu0 0.0
  %4887 = vmatpush1.xpose.msra.mxu0 0.0
  %4888 = vmatprep.subr.mxu0 0.0
  %4889 = vmatpush1.xpose.msra.mxu0 0.0
  %4890 = vmatprep.subr.mxu0 0.0
  %4891 = vmatpush1.xpose.msra.mxu0 0.0
  %4892 = vmatprep.subr.mxu0 0.0
  %4893 = vmatpush1.xpose.msra.mxu0 0.0
  %4894 = vmatprep.subr.mxu0 0.0
  %4895 = vmatpush1.xpose.msra.mxu0 0.0
  %4896 = vmatprep.subr.mxu0 0.0
  %4897 = vmatpush1.xpose.msra.mxu0 0.0
  %4898 = vmatprep.subr.mxu0 0.0
  %4899 = vmatpush1.xpose.msra.mxu0 0.0
  %4900 = vmatprep.subr.mxu0 0.0
  %4901 = vmatpush1.xpose.msra.mxu0 0.0
  %4902 = vmatprep.subr.mxu0 0.0
  %4903 = vmatpush1.xpose.msra.mxu0 0.0
  %4904 = vmatprep.subr.mxu0 0.0
  %4905 = vmatpush1.xpose.msra.mxu0 0.0
  %4906 = vmatprep.subr.mxu0 0.0
  %4907 = vmatpush1.xpose.msra.mxu0 0.0
  %4908 = vmatprep.subr.mxu0 0.0
  %4909 = vmatpush1.xpose.msra.mxu0 0.0
  %4910 = vmatprep.subr.mxu0 0.0
  %4911 = vmatpush1.xpose.msra.mxu0 0.0
  %4912 = vmatprep.subr.mxu0 0.0
  %4913 = vmatpush1.xpose.msra.mxu0 0.0
  %4914 = vmatprep.subr.mxu0 0.0
  %4915 = vmatpush1.xpose.msra.mxu0 0.0
  %4916 = vmatprep.subr.mxu0 0.0
  %4917 = vmatpush1.xpose.msra.mxu0 0.0
  %4918 = vmatprep.subr.mxu0 0.0
  %4919 = vmatpush1.xpose.msra.mxu0 0.0
  %4920 = vmatprep.subr.mxu0 0.0
  %4921 = vmatpush1.xpose.msra.mxu0 0.0
  %4922 = vmatprep.subr.mxu0 0.0
  %4923 = vmatpush1.xpose.msra.mxu0 0.0
  %4924 = vmatprep.subr.mxu0 0.0
  %4925 = vmatpush1.xpose.msra.mxu0 0.0
  %4926 = vmatprep.subr.mxu0 0.0
  %4927 = vmatpush1.xpose.msra.mxu0 0.0
  %4928 = vmatprep.subr.mxu0 0.0
  %4929 = vmatpush1.xpose.msra.mxu0 0.0
  %4930 = vmatprep.subr.mxu0 0.0
  %4931 = vmatpush1.xpose.msra.mxu0 0.0
  %4932 = vmatprep.subr.mxu0 0.0
  %4933 = vmatpush1.xpose.msra.mxu0 0.0
  %4934 = vmatprep.subr.mxu0 0.0
  %4935 = vmatpush1.xpose.msra.mxu0 0.0
  %4936 = vmatprep.subr.mxu0 0.0
  %4937 = vmatpush1.xpose.msra.mxu0 0.0
  %4938 = vmatprep.subr.mxu0 0.0
  %4939 = vmatpush1.xpose.msra.mxu0 0.0
  %4940 = vmatprep.mubr.f32.mxu0 0.0
  %4941 = vmatmul.mubr.f32.gmra.mrb[0].mxu0 %v4868
  %v4942 = vpop.f32.mrb[0].mxu0
  %v4943 = vadd.f32 0.0, %v4942
  %v4944 = vpop.f32.mrb[0].mxu0
  %4945 = vmatprep.mubr.f32.mxu0 0.0
  %4946 = vmatmul.mubr.f32.gmra.mrb[0].mxu0 %v4870
  %v4947 = vpop.f32.mrb[0].mxu0
  %v4948 = vadd.f32 0.0, %v4947
  %v4949 = vpop.f32.mrb[0].mxu0
  %4950 = vdwg.mxu0
  %v4951 = vmul.f32 %v4943, 0.35355338
  %v4952 = vmul.f32 %v4948, 0.35355338
  %v4953 = vadd.f32 %v4951, %v213
  %v4954 = vadd.f32 %v4952, %v214
  %v4955 = vsel %vm106, %v4953, -inf
  %4956 = vmax.xlane.f32.xlu0 %v4955
  %v4957 = vpop.xlane.xlu0 %4956
  %v4958 = vsel %vm106, %v4954, -inf
  %4959 = vmax.xlane.f32.xlu0 %v4958
  %v4960 = vpop.xlane.xlu0 %4959
  %v4961 = vsub.f32 %v4953, %v4957
  %v4962 = vsub.f32 %v4954, %v4960
  %v4963 = vmul.f32 %v4961, 1.442695
  %v4964 = vpow.pop %v4963
  %v4965 = vmul.f32 %v4962, 1.442695
  %v4966 = vpow.pop %v4965
  %v4967 = vsel %vm106, %v4964, 0.0
  %4968 = vadd.xlane.f32.xlu0 %v4967
  %v4969 = vpop.xlane.xlu0 %4968
  %v4970 = vsel %vm106, %v4966, 0.0
  %4971 = vadd.xlane.f32.xlu0 %v4970
  %v4972 = vpop.xlane.xlu0 %4971
  %v4973 = vrcp.pop %v4969
  %v4974 = vmul.f32 %v4964, %v4973
  %v4975 = vrcp.pop %v4972
  %v4976 = vmul.f32 %v4966, %v4975
  %4977 = vrot.lane.b32.xlu0 %v4643, 56
  %v4978 = vpop.permute.xlu0 %4977
  %4979 = vrot.lane.b32.xlu0 %v4648, 56
  %v4980 = vpop.permute.xlu0 %4979
  %v4984 = vsel %vm106, %v4974, 0
  %v4987 = vsel %vm106, %v4976, 0
  %4989 = vmatprep.subr.mxu0 0.0
  %4990 = vmatpush1.msra.mxu0 %v4978
  %4991 = vmatprep.subr.mxu0 0.0
  %4992 = vmatpush1.msra.mxu0 %v4980
  %4993 = vmatprep.subr.mxu0 0.0
  %4994 = vmatpush1.msra.mxu0 0.0
  %4995 = vmatprep.subr.mxu0 0.0
  %4996 = vmatpush1.msra.mxu0 0.0
  %4997 = vmatprep.subr.mxu0 0.0
  %4998 = vmatpush1.msra.mxu0 0.0
  %4999 = vmatprep.subr.mxu0 0.0
  %5000 = vmatpush1.msra.mxu0 0.0
  %5001 = vmatprep.subr.mxu0 0.0
  %5002 = vmatpush1.msra.mxu0 0.0
  %5003 = vmatprep.subr.mxu0 0.0
  %5004 = vmatpush1.msra.mxu0 0.0
  %5005 = vmatprep.subr.mxu0 0.0
  %5006 = vmatpush1.msra.mxu0 0.0
  %5007 = vmatprep.subr.mxu0 0.0
  %5008 = vmatpush1.msra.mxu0 0.0
  %5009 = vmatprep.subr.mxu0 0.0
  %5010 = vmatpush1.msra.mxu0 0.0
  %5011 = vmatprep.subr.mxu0 0.0
  %5012 = vmatpush1.msra.mxu0 0.0
  %5013 = vmatprep.subr.mxu0 0.0
  %5014 = vmatpush1.msra.mxu0 0.0
  %5015 = vmatprep.subr.mxu0 0.0
  %5016 = vmatpush1.msra.mxu0 0.0
  %5017 = vmatprep.subr.mxu0 0.0
  %5018 = vmatpush1.msra.mxu0 0.0
  %5019 = vmatprep.subr.mxu0 0.0
  %5020 = vmatpush1.msra.mxu0 0.0
  %5021 = vmatprep.subr.mxu0 0.0
  %5022 = vmatpush1.msra.mxu0 0.0
  %5023 = vmatprep.subr.mxu0 0.0
  %5024 = vmatpush1.msra.mxu0 0.0
  %5025 = vmatprep.subr.mxu0 0.0
  %5026 = vmatpush1.msra.mxu0 0.0
  %5027 = vmatprep.subr.mxu0 0.0
  %5028 = vmatpush1.msra.mxu0 0.0
  %5029 = vmatprep.subr.mxu0 0.0
  %5030 = vmatpush1.msra.mxu0 0.0
  %5031 = vmatprep.subr.mxu0 0.0
  %5032 = vmatpush1.msra.mxu0 0.0
  %5033 = vmatprep.subr.mxu0 0.0
  %5034 = vmatpush1.msra.mxu0 0.0
  %5035 = vmatprep.subr.mxu0 0.0
  %5036 = vmatpush1.msra.mxu0 0.0
  %5037 = vmatprep.subr.mxu0 0.0
  %5038 = vmatpush1.msra.mxu0 0.0
  %5039 = vmatprep.subr.mxu0 0.0
  %5040 = vmatpush1.msra.mxu0 0.0
  %5041 = vmatprep.subr.mxu0 0.0
  %5042 = vmatpush1.msra.mxu0 0.0
  %5043 = vmatprep.subr.mxu0 0.0
  %5044 = vmatpush1.msra.mxu0 0.0
  %5045 = vmatprep.subr.mxu0 0.0
  %5046 = vmatpush1.msra.mxu0 0.0
  %5047 = vmatprep.subr.mxu0 0.0
  %5048 = vmatpush1.msra.mxu0 0.0
  %5049 = vmatprep.subr.mxu0 0.0
  %5050 = vmatpush1.msra.mxu0 0.0
  %5051 = vmatprep.subr.mxu0 0.0
  %5052 = vmatpush1.msra.mxu0 0.0
  %5053 = vmatprep.mubr.f32.mxu0 0.0
  %5054 = vmatmul.mubr.f32.gmra.mrb[0].mxu0 %v4984
  %v5055 = vpop.f32.mrb[0].mxu0
  %v5056 = vadd.f32 0.0, %v5055
  %v5057 = vpop.f32.mrb[0].mxu0
  %5058 = vmatprep.mubr.f32.mxu0 0.0
  %5059 = vmatmul.mubr.f32.gmra.mrb[0].mxu0 %v4987
  %v5060 = vpop.f32.mrb[0].mxu0
  %v5061 = vadd.f32 0.0, %v5060
  %v5062 = vpop.f32.mrb[0].mxu0
  %5063 = vdwg.mxu0
  %5064 = vrot.lane.b32.xlu0 %v4643, 112
  %v5065 = vpop.permute.xlu0 %5064
  %5066 = vrot.lane.b32.xlu0 %v4648, 112
  %v5067 = vpop.permute.xlu0 %5066
  %5068 = vrot.lane.b32.xlu0 %v4643, 80
  %v5069 = vpop.permute.xlu0 %5068
  %5070 = vrot.lane.b32.xlu0 %v4648, 80
  %v5071 = vpop.permute.xlu0 %5070
  %v5072 = vsel %vm415, %v5065, 0
  %v5074 = vsel %vm415, %v5067, 0
  %v5076 = vsel %vm415, %v5069, 0
  %v5078 = vsel %vm415, %v5071, 0
  %5080 = vmatprep.subr.mxu0 0.0
  %5081 = vmatpush1.xpose.msra.mxu0 %v5076
  %5082 = vmatprep.subr.mxu0 0.0
  %5083 = vmatpush1.xpose.msra.mxu0 %v5078
  %5084 = vmatprep.subr.mxu0 0.0
  %5085 = vmatpush1.xpose.msra.mxu0 0.0
  %5086 = vmatprep.subr.mxu0 0.0
  %5087 = vmatpush1.xpose.msra.mxu0 0.0
  %5088 = vmatprep.subr.mxu0 0.0
  %5089 = vmatpush1.xpose.msra.mxu0 0.0
  %5090 = vmatprep.subr.mxu0 0.0
  %5091 = vmatpush1.xpose.msra.mxu0 0.0
  %5092 = vmatprep.subr.mxu0 0.0
  %5093 = vmatpush1.xpose.msra.mxu0 0.0
  %5094 = vmatprep.subr.mxu0 0.0
  %5095 = vmatpush1.xpose.msra.mxu0 0.0
  %5096 = vmatprep.subr.mxu0 0.0
  %5097 = vmatpush1.xpose.msra.mxu0 0.0
  %5098 = vmatprep.subr.mxu0 0.0
  %5099 = vmatpush1.xpose.msra.mxu0 0.0
  %5100 = vmatprep.subr.mxu0 0.0
  %5101 = vmatpush1.xpose.msra.mxu0 0.0
  %5102 = vmatprep.subr.mxu0 0.0
  %5103 = vmatpush1.xpose.msra.mxu0 0.0
  %5104 = vmatprep.subr.mxu0 0.0
  %5105 = vmatpush1.xpose.msra.mxu0 0.0
  %5106 = vmatprep.subr.mxu0 0.0
  %5107 = vmatpush1.xpose.msra.mxu0 0.0
  %5108 = vmatprep.subr.mxu0 0.0
  %5109 = vmatpush1.xpose.msra.mxu0 0.0
  %5110 = vmatprep.subr.mxu0 0.0
  %5111 = vmatpush1.xpose.msra.mxu0 0.0
  %5112 = vmatprep.subr.mxu0 0.0
  %5113 = vmatpush1.xpose.msra.mxu0 0.0
  %5114 = vmatprep.subr.mxu0 0.0
  %5115 = vmatpush1.xpose.msra.mxu0 0.0
  %5116 = vmatprep.subr.mxu0 0.0
  %5117 = vmatpush1.xpose.msra.mxu0 0.0
  %5118 = vmatprep.subr.mxu0 0.0
  %5119 = vmatpush1.xpose.msra.mxu0 0.0
  %5120 = vmatprep.subr.mxu0 0.0
  %5121 = vmatpush1.xpose.msra.mxu0 0.0
  %5122 = vmatprep.subr.mxu0 0.0
  %5123 = vmatpush1.xpose.msra.mxu0 0.0
  %5124 = vmatprep.subr.mxu0 0.0
  %5125 = vmatpush1.xpose.msra.mxu0 0.0
  %5126 = vmatprep.subr.mxu0 0.0
  %5127 = vmatpush1.xpose.msra.mxu0 0.0
  %5128 = vmatprep.subr.mxu0 0.0
  %5129 = vmatpush1.xpose.msra.mxu0 0.0
  %5130 = vmatprep.subr.mxu0 0.0
  %5131 = vmatpush1.xpose.msra.mxu0 0.0
  %5132 = vmatprep.subr.mxu0 0.0
  %5133 = vmatpush1.xpose.msra.mxu0 0.0
  %5134 = vmatprep.subr.mxu0 0.0
  %5135 = vmatpush1.xpose.msra.mxu0 0.0
  %5136 = vmatprep.subr.mxu0 0.0
  %5137 = vmatpush1.xpose.msra.mxu0 0.0
  %5138 = vmatprep.subr.mxu0 0.0
  %5139 = vmatpush1.xpose.msra.mxu0 0.0
  %5140 = vmatprep.subr.mxu0 0.0
  %5141 = vmatpush1.xpose.msra.mxu0 0.0
  %5142 = vmatprep.subr.mxu0 0.0
  %5143 = vmatpush1.xpose.msra.mxu0 0.0
  %5144 = vmatprep.mubr.f32.mxu0 0.0
  %5145 = vmatmul.mubr.f32.gmra.mrb[0].mxu0 %v5072
  %v5146 = vpop.f32.mrb[0].mxu0
  %v5147 = vadd.f32 0.0, %v5146
  %v5148 = vpop.f32.mrb[0].mxu0
  %5149 = vmatprep.mubr.f32.mxu0 0.0
  %5150 = vmatmul.mubr.f32.gmra.mrb[0].mxu0 %v5074
  %v5151 = vpop.f32.mrb[0].mxu0
  %v5152 = vadd.f32 0.0, %v5151
  %v5153 = vpop.f32.mrb[0].mxu0
  %5154 = vdwg.mxu0
  %v5155 = vmul.f32 %v5147, 0.35355338
  %v5156 = vmul.f32 %v5152, 0.35355338
  %v5157 = vadd.f32 %v5155, %v213
  %v5158 = vadd.f32 %v5156, %v214
  %v5159 = vsel %vm106, %v5157, -inf
  %5160 = vmax.xlane.f32.xlu0 %v5159
  %v5161 = vpop.xlane.xlu0 %5160
  %v5162 = vsel %vm106, %v5158, -inf
  %5163 = vmax.xlane.f32.xlu0 %v5162
  %v5164 = vpop.xlane.xlu0 %5163
  %v5165 = vsub.f32 %v5157, %v5161
  %v5166 = vsub.f32 %v5158, %v5164
  %v5167 = vmul.f32 %v5165, 1.442695
  %v5168 = vpow.pop %v5167
  %v5169 = vmul.f32 %v5166, 1.442695
  %v5170 = vpow.pop %v5169
  %v5171 = vsel %vm106, %v5168, 0.0
  %5172 = vadd.xlane.f32.xlu0 %v5171
  %v5173 = vpop.xlane.xlu0 %5172
  %v5174 = vsel %vm106, %v5170, 0.0
  %5175 = vadd.xlane.f32.xlu0 %v5174
  %v5176 = vpop.xlane.xlu0 %5175
  %v5177 = vrcp.pop %v5173
  %v5178 = vmul.f32 %v5168, %v5177
  %v5179 = vrcp.pop %v5176
  %v5180 = vmul.f32 %v5170, %v5179
  %5181 = vrot.lane.b32.xlu0 %v4643, 48
  %v5182 = vpop.permute.xlu0 %5181
  %5183 = vrot.lane.b32.xlu0 %v4648, 48
  %v5184 = vpop.permute.xlu0 %5183
  %v5188 = vsel %vm106, %v5178, 0
  %v5191 = vsel %vm106, %v5180, 0
  %5193 = vmatprep.subr.mxu0 0.0
  %5194 = vmatpush1.msra.mxu0 %v5182
  %5195 = vmatprep.subr.mxu0 0.0
  %5196 = vmatpush1.msra.mxu0 %v5184
  %5197 = vmatprep.subr.mxu0 0.0
  %5198 = vmatpush1.msra.mxu0 0.0
  %5199 = vmatprep.subr.mxu0 0.0
  %5200 = vmatpush1.msra.mxu0 0.0
  %5201 = vmatprep.subr.mxu0 0.0
  %5202 = vmatpush1.msra.mxu0 0.0
  %5203 = vmatprep.subr.mxu0 0.0
  %5204 = vmatpush1.msra.mxu0 0.0
  %5205 = vmatprep.subr.mxu0 0.0
  %5206 = vmatpush1.msra.mxu0 0.0
  %5207 = vmatprep.subr.mxu0 0.0
  %5208 = vmatpush1.msra.mxu0 0.0
  %5209 = vmatprep.subr.mxu0 0.0
  %5210 = vmatpush1.msra.mxu0 0.0
  %5211 = vmatprep.subr.mxu0 0.0
  %5212 = vmatpush1.msra.mxu0 0.0
  %5213 = vmatprep.subr.mxu0 0.0
  %5214 = vmatpush1.msra.mxu0 0.0
  %5215 = vmatprep.subr.mxu0 0.0
  %5216 = vmatpush1.msra.mxu0 0.0
  %5217 = vmatprep.subr.mxu0 0.0
  %5218 = vmatpush1.msra.mxu0 0.0
  %5219 = vmatprep.subr.mxu0 0.0
  %5220 = vmatpush1.msra.mxu0 0.0
  %5221 = vmatprep.subr.mxu0 0.0
  %5222 = vmatpush1.msra.mxu0 0.0
  %5223 = vmatprep.subr.mxu0 0.0
  %5224 = vmatpush1.msra.mxu0 0.0
  %5225 = vmatprep.subr.mxu0 0.0
  %5226 = vmatpush1.msra.mxu0 0.0
  %5227 = vmatprep.subr.mxu0 0.0
  %5228 = vmatpush1.msra.mxu0 0.0
  %5229 = vmatprep.subr.mxu0 0.0
  %5230 = vmatpush1.msra.mxu0 0.0
  %5231 = vmatprep.subr.mxu0 0.0
  %5232 = vmatpush1.msra.mxu0 0.0
  %5233 = vmatprep.subr.mxu0 0.0
  %5234 = vmatpush1.msra.mxu0 0.0
  %5235 = vmatprep.subr.mxu0 0.0
  %5236 = vmatpush1.msra.mxu0 0.0
  %5237 = vmatprep.subr.mxu0 0.0
  %5238 = vmatpush1.msra.mxu0 0.0
  %5239 = vmatprep.subr.mxu0 0.0
  %5240 = vmatpush1.msra.mxu0 0.0
  %5241 = vmatprep.subr.mxu0 0.0
  %5242 = vmatpush1.msra.mxu0 0.0
  %5243 = vmatprep.subr.mxu0 0.0
  %5244 = vmatpush1.msra.mxu0 0.0
  %5245 = vmatprep.subr.mxu0 0.0
  %5246 = vmatpush1.msra.mxu0 0.0
  %5247 = vmatprep.subr.mxu0 0.0
  %5248 = vmatpush1.msra.mxu0 0.0
  %5249 = vmatprep.subr.mxu0 0.0
  %5250 = vmatpush1.msra.mxu0 0.0
  %5251 = vmatprep.subr.mxu0 0.0
  %5252 = vmatpush1.msra.mxu0 0.0
  %5253 = vmatprep.subr.mxu0 0.0
  %5254 = vmatpush1.msra.mxu0 0.0
  %5255 = vmatprep.subr.mxu0 0.0
  %5256 = vmatpush1.msra.mxu0 0.0
  %5257 = vmatprep.mubr.f32.mxu0 0.0
  %5258 = vmatmul.mubr.f32.gmra.mrb[0].mxu0 %v5188
  %v5259 = vpop.f32.mrb[0].mxu0
  %v5260 = vadd.f32 0.0, %v5259
  %v5261 = vpop.f32.mrb[0].mxu0
  %5262 = vmatprep.mubr.f32.mxu0 0.0
  %5263 = vmatmul.mubr.f32.gmra.mrb[0].mxu0 %v5191
  %v5264 = vpop.f32.mrb[0].mxu0
  %v5265 = vadd.f32 0.0, %v5264
  %v5266 = vpop.f32.mrb[0].mxu0
  %5267 = vdwg.mxu0
  %5268 = vrot.lane.b32.xlu0 %v4643, 104
  %v5269 = vpop.permute.xlu0 %5268
  %5270 = vrot.lane.b32.xlu0 %v4648, 104
  %v5271 = vpop.permute.xlu0 %5270
  %5272 = vrot.lane.b32.xlu0 %v4643, 72
  %v5273 = vpop.permute.xlu0 %5272
  %5274 = vrot.lane.b32.xlu0 %v4648, 72
  %v5275 = vpop.permute.xlu0 %5274
  %v5276 = vsel %vm415, %v5269, 0
  %v5278 = vsel %vm415, %v5271, 0
  %v5280 = vsel %vm415, %v5273, 0
  %v5282 = vsel %vm415, %v5275, 0
  %5284 = vmatprep.subr.mxu0 0.0
  %5285 = vmatpush1.xpose.msra.mxu0 %v5280
  %5286 = vmatprep.subr.mxu0 0.0
  %5287 = vmatpush1.xpose.msra.mxu0 %v5282
  %5288 = vmatprep.subr.mxu0 0.0
  %5289 = vmatpush1.xpose.msra.mxu0 0.0
  %5290 = vmatprep.subr.mxu0 0.0
  %5291 = vmatpush1.xpose.msra.mxu0 0.0
  %5292 = vmatprep.subr.mxu0 0.0
  %5293 = vmatpush1.xpose.msra.mxu0 0.0
  %5294 = vmatprep.subr.mxu0 0.0
  %5295 = vmatpush1.xpose.msra.mxu0 0.0
  %5296 = vmatprep.subr.mxu0 0.0
  %5297 = vmatpush1.xpose.msra.mxu0 0.0
  %5298 = vmatprep.subr.mxu0 0.0
  %5299 = vmatpush1.xpose.msra.mxu0 0.0
  %5300 = vmatprep.subr.mxu0 0.0
  %5301 = vmatpush1.xpose.msra.mxu0 0.0
  %5302 = vmatprep.subr.mxu0 0.0
  %5303 = vmatpush1.xpose.msra.mxu0 0.0
  %5304 = vmatprep.subr.mxu0 0.0
  %5305 = vmatpush1.xpose.msra.mxu0 0.0
  %5306 = vmatprep.subr.mxu0 0.0
  %5307 = vmatpush1.xpose.msra.mxu0 0.0
  %5308 = vmatprep.subr.mxu0 0.0
  %5309 = vmatpush1.xpose.msra.mxu0 0.0
  %5310 = vmatprep.subr.mxu0 0.0
  %5311 = vmatpush1.xpose.msra.mxu0 0.0
  %5312 = vmatprep.subr.mxu0 0.0
  %5313 = vmatpush1.xpose.msra.mxu0 0.0
  %5314 = vmatprep.subr.mxu0 0.0
  %5315 = vmatpush1.xpose.msra.mxu0 0.0
  %5316 = vmatprep.subr.mxu0 0.0
  %5317 = vmatpush1.xpose.msra.mxu0 0.0
  %5318 = vmatprep.subr.mxu0 0.0
  %5319 = vmatpush1.xpose.msra.mxu0 0.0
  %5320 = vmatprep.subr.mxu0 0.0
  %5321 = vmatpush1.xpose.msra.mxu0 0.0
  %5322 = vmatprep.subr.mxu0 0.0
  %5323 = vmatpush1.xpose.msra.mxu0 0.0
  %5324 = vmatprep.subr.mxu0 0.0
  %5325 = vmatpush1.xpose.msra.mxu0 0.0
  %5326 = vmatprep.subr.mxu0 0.0
  %5327 = vmatpush1.xpose.msra.mxu0 0.0
  %5328 = vmatprep.subr.mxu0 0.0
  %5329 = vmatpush1.xpose.msra.mxu0 0.0
  %5330 = vmatprep.subr.mxu0 0.0
  %5331 = vmatpush1.xpose.msra.mxu0 0.0
  %5332 = vmatprep.subr.mxu0 0.0
  %5333 = vmatpush1.xpose.msra.mxu0 0.0
  %5334 = vmatprep.subr.mxu0 0.0
  %5335 = vmatpush1.xpose.msra.mxu0 0.0
  %5336 = vmatprep.subr.mxu0 0.0
  %5337 = vmatpush1.xpose.msra.mxu0 0.0
  %5338 = vmatprep.subr.mxu0 0.0
  %5339 = vmatpush1.xpose.msra.mxu0 0.0
  %5340 = vmatprep.subr.mxu0 0.0
  %5341 = vmatpush1.xpose.msra.mxu0 0.0
  %5342 = vmatprep.subr.mxu0 0.0
  %5343 = vmatpush1.xpose.msra.mxu0 0.0
  %5344 = vmatprep.subr.mxu0 0.0
  %5345 = vmatpush1.xpose.msra.mxu0 0.0
  %5346 = vmatprep.subr.mxu0 0.0
  %5347 = vmatpush1.xpose.msra.mxu0 0.0
  %5348 = vmatprep.mubr.f32.mxu0 0.0
  %5349 = vmatmul.mubr.f32.gmra.mrb[0].mxu0 %v5276
  %v5350 = vpop.f32.mrb[0].mxu0
  %v5351 = vadd.f32 0.0, %v5350
  %v5352 = vpop.f32.mrb[0].mxu0
  %5353 = vmatprep.mubr.f32.mxu0 0.0
  %5354 = vmatmul.mubr.f32.gmra.mrb[0].mxu0 %v5278
  %v5355 = vpop.f32.mrb[0].mxu0
  %v5356 = vadd.f32 0.0, %v5355
  %v5357 = vpop.f32.mrb[0].mxu0
  %5358 = vdwg.mxu0
  %v5359 = vmul.f32 %v5351, 0.35355338
  %v5360 = vmul.f32 %v5356, 0.35355338
  %v5361 = vadd.f32 %v5359, %v213
  %v5362 = vadd.f32 %v5360, %v214
  %v5363 = vsel %vm106, %v5361, -inf
  %5364 = vmax.xlane.f32.xlu0 %v5363
  %v5365 = vpop.xlane.xlu0 %5364
  %v5366 = vsel %vm106, %v5362, -inf
  %5367 = vmax.xlane.f32.xlu0 %v5366
  %v5368 = vpop.xlane.xlu0 %5367
  %v5369 = vsub.f32 %v5361, %v5365
  %v5370 = vsub.f32 %v5362, %v5368
  %v5371 = vmul.f32 %v5369, 1.442695
  %v5372 = vpow.pop %v5371
  %v5373 = vmul.f32 %v5370, 1.442695
  %v5374 = vpow.pop %v5373
  %v5375 = vsel %vm106, %v5372, 0.0
  %5376 = vadd.xlane.f32.xlu0 %v5375
  %v5377 = vpop.xlane.xlu0 %5376
  %v5378 = vsel %vm106, %v5374, 0.0
  %5379 = vadd.xlane.f32.xlu0 %v5378
  %v5380 = vpop.xlane.xlu0 %5379
  %v5381 = vrcp.pop %v5377
  %v5382 = vmul.f32 %v5372, %v5381
  %v5383 = vrcp.pop %v5380
  %v5384 = vmul.f32 %v5374, %v5383
  %5385 = vrot.lane.b32.xlu0 %v4643, 40
  %v5386 = vpop.permute.xlu0 %5385
  %5387 = vrot.lane.b32.xlu0 %v4648, 40
  %v5388 = vpop.permute.xlu0 %5387
  %v5392 = vsel %vm106, %v5382, 0
  %v5395 = vsel %vm106, %v5384, 0
  %5397 = vmatprep.subr.mxu0 0.0
  %5398 = vmatpush1.msra.mxu0 %v5386
  %5399 = vmatprep.subr.mxu0 0.0
  %5400 = vmatpush1.msra.mxu0 %v5388
  %5401 = vmatprep.subr.mxu0 0.0
  %5402 = vmatpush1.msra.mxu0 0.0
  %5403 = vmatprep.subr.mxu0 0.0
  %5404 = vmatpush1.msra.mxu0 0.0
  %5405 = vmatprep.subr.mxu0 0.0
  %5406 = vmatpush1.msra.mxu0 0.0
  %5407 = vmatprep.subr.mxu0 0.0
  %5408 = vmatpush1.msra.mxu0 0.0
  %5409 = vmatprep.subr.mxu0 0.0
  %5410 = vmatpush1.msra.mxu0 0.0
  %5411 = vmatprep.subr.mxu0 0.0
  %5412 = vmatpush1.msra.mxu0 0.0
  %5413 = vmatprep.subr.mxu0 0.0
  %5414 = vmatpush1.msra.mxu0 0.0
  %5415 = vmatprep.subr.mxu0 0.0
  %5416 = vmatpush1.msra.mxu0 0.0
  %5417 = vmatprep.subr.mxu0 0.0
  %5418 = vmatpush1.msra.mxu0 0.0
  %5419 = vmatprep.subr.mxu0 0.0
  %5420 = vmatpush1.msra.mxu0 0.0
  %5421 = vmatprep.subr.mxu0 0.0
  %5422 = vmatpush1.msra.mxu0 0.0
  %5423 = vmatprep.subr.mxu0 0.0
  %5424 = vmatpush1.msra.mxu0 0.0
  %5425 = vmatprep.subr.mxu0 0.0
  %5426 = vmatpush1.msra.mxu0 0.0
  %5427 = vmatprep.subr.mxu0 0.0
  %5428 = vmatpush1.msra.mxu0 0.0
  %5429 = vmatprep.subr.mxu0 0.0
  %5430 = vmatpush1.msra.mxu0 0.0
  %5431 = vmatprep.subr.mxu0 0.0
  %5432 = vmatpush1.msra.mxu0 0.0
  %5433 = vmatprep.subr.mxu0 0.0
  %5434 = vmatpush1.msra.mxu0 0.0
  %5435 = vmatprep.subr.mxu0 0.0
  %5436 = vmatpush1.msra.mxu0 0.0
  %5437 = vmatprep.subr.mxu0 0.0
  %5438 = vmatpush1.msra.mxu0 0.0
  %5439 = vmatprep.subr.mxu0 0.0
  %5440 = vmatpush1.msra.mxu0 0.0
  %5441 = vmatprep.subr.mxu0 0.0
  %5442 = vmatpush1.msra.mxu0 0.0
  %5443 = vmatprep.subr.mxu0 0.0
  %5444 = vmatpush1.msra.mxu0 0.0
  %5445 = vmatprep.subr.mxu0 0.0
  %5446 = vmatpush1.msra.mxu0 0.0
  %5447 = vmatprep.subr.mxu0 0.0
  %5448 = vmatpush1.msra.mxu0 0.0
  %5449 = vmatprep.subr.mxu0 0.0
  %5450 = vmatpush1.msra.mxu0 0.0
  %5451 = vmatprep.subr.mxu0 0.0
  %5452 = vmatpush1.msra.mxu0 0.0
  %5453 = vmatprep.subr.mxu0 0.0
  %5454 = vmatpush1.msra.mxu0 0.0
  %5455 = vmatprep.subr.mxu0 0.0
  %5456 = vmatpush1.msra.mxu0 0.0
  %5457 = vmatprep.subr.mxu0 0.0
  %5458 = vmatpush1.msra.mxu0 0.0
  %5459 = vmatprep.subr.mxu0 0.0
  %5460 = vmatpush1.msra.mxu0 0.0
  %5461 = vmatprep.mubr.f32.mxu0 0.0
  %5462 = vmatmul.mubr.f32.gmra.mrb[0].mxu0 %v5392
  %v5463 = vpop.f32.mrb[0].mxu0
  %v5464 = vadd.f32 0.0, %v5463
  %v5465 = vpop.f32.mrb[0].mxu0
  %5466 = vmatprep.mubr.f32.mxu0 0.0
  %5467 = vmatmul.mubr.f32.gmra.mrb[0].mxu0 %v5395
  %v5468 = vpop.f32.mrb[0].mxu0
  %v5469 = vadd.f32 0.0, %v5468
  %v5470 = vpop.f32.mrb[0].mxu0
  %5471 = vdwg.mxu0
  %5474 = vrot.lane.b32.xlu0 %v5056, 8
  %v5475 = vpop.permute.xlu0 %5474
  %5476 = vrot.lane.b32.xlu0 %v5061, 8
  %v5477 = vpop.permute.xlu0 %5476
  %5482 = vrot.lane.b32.xlu0 %v5260, 16
  %v5483 = vpop.permute.xlu0 %5482
  %5484 = vrot.lane.b32.xlu0 %v5265, 16
  %v5485 = vpop.permute.xlu0 %5484
  %5490 = vrot.lane.b32.xlu0 %v5464, 24
  %v5491 = vpop.permute.xlu0 %5490
  %5492 = vrot.lane.b32.xlu0 %v5469, 24
  %v5493 = vpop.permute.xlu0 %5492
  %v5496 = vsel %vm415, %v4852, %v5475
  %v5497 = vsel %vm415, %v4857, %v5477
  %v5498 = vsel %vm106, %v5496, %v5483
  %v5499 = vsel %vm106, %v5497, %v5485
  %v5500 = vsel %vm1252, %v5498, %v5491
  %v5501 = vsel %vm1252, %v5499, %v5493
  %v5503 = vlaneseq
  %v5504 = vshrl.u32 %v5503, 7
  %v5505 = vsub.s32 0, %v5504
  %v5506 = vrot.slane %v4657, %v5505
  %v5509 = vsel %vm230, %v5500, 0
  %v5512 = vsel %vm230, %v5501, 0
  %5514 = vmatprep.subr.mxu0 0.0
  %5515 = vmatpush1.msra.mxu0 %v4652
  %5516 = vmatprep.subr.mxu0 0.0
  %5517 = vmatpush1.msra.mxu0 %v4653
  %5518 = vmatprep.subr.mxu0 0.0
  %5519 = vmatpush1.msra.mxu0 %v4654
  %5520 = vmatprep.subr.mxu0 0.0
  %5521 = vmatpush1.msra.mxu0 %v4655
  %5522 = vmatprep.subr.mxu0 0.0
  %5523 = vmatpush1.msra.mxu0 0.0
  %5524 = vmatprep.subr.mxu0 0.0
  %5525 = vmatpush1.msra.mxu0 0.0
  %5526 = vmatprep.subr.mxu0 0.0
  %5527 = vmatpush1.msra.mxu0 0.0
  %5528 = vmatprep.subr.mxu0 0.0
  %5529 = vmatpush1.msra.mxu0 0.0
  %5530 = vmatprep.subr.mxu0 0.0
  %5531 = vmatpush1.msra.mxu0 0.0
  %5532 = vmatprep.subr.mxu0 0.0
  %5533 = vmatpush1.msra.mxu0 0.0
  %5534 = vmatprep.subr.mxu0 0.0
  %5535 = vmatpush1.msra.mxu0 0.0
  %5536 = vmatprep.subr.mxu0 0.0
  %5537 = vmatpush1.msra.mxu0 0.0
  %5538 = vmatprep.subr.mxu0 0.0
  %5539 = vmatpush1.msra.mxu0 0.0
  %5540 = vmatprep.subr.mxu0 0.0
  %5541 = vmatpush1.msra.mxu0 0.0
  %5542 = vmatprep.subr.mxu0 0.0
  %5543 = vmatpush1.msra.mxu0 0.0
  %5544 = vmatprep.subr.mxu0 0.0
  %5545 = vmatpush1.msra.mxu0 0.0
  %5546 = vmatprep.subr.mxu0 0.0
  %5547 = vmatpush1.msra.mxu0 0.0
  %5548 = vmatprep.subr.mxu0 0.0
  %5549 = vmatpush1.msra.mxu0 0.0
  %5550 = vmatprep.subr.mxu0 0.0
  %5551 = vmatpush1.msra.mxu0 0.0
  %5552 = vmatprep.subr.mxu0 0.0
  %5553 = vmatpush1.msra.mxu0 0.0
  %5554 = vmatprep.subr.mxu0 0.0
  %5555 = vmatpush1.msra.mxu0 0.0
  %5556 = vmatprep.subr.mxu0 0.0
  %5557 = vmatpush1.msra.mxu0 0.0
  %5558 = vmatprep.subr.mxu0 0.0
  %5559 = vmatpush1.msra.mxu0 0.0
  %5560 = vmatprep.subr.mxu0 0.0
  %5561 = vmatpush1.msra.mxu0 0.0
  %5562 = vmatprep.subr.mxu0 0.0
  %5563 = vmatpush1.msra.mxu0 0.0
  %5564 = vmatprep.subr.mxu0 0.0
  %5565 = vmatpush1.msra.mxu0 0.0
  %5566 = vmatprep.subr.mxu0 0.0
  %5567 = vmatpush1.msra.mxu0 0.0
  %5568 = vmatprep.subr.mxu0 0.0
  %5569 = vmatpush1.msra.mxu0 0.0
  %5570 = vmatprep.subr.mxu0 0.0
  %5571 = vmatpush1.msra.mxu0 0.0
  %5572 = vmatprep.subr.mxu0 0.0
  %5573 = vmatpush1.msra.mxu0 0.0
  %5574 = vmatprep.subr.mxu0 0.0
  %5575 = vmatpush1.msra.mxu0 0.0
  %5576 = vmatprep.subr.mxu0 0.0
  %5577 = vmatpush1.msra.mxu0 0.0
  %5578 = vmatprep.mubr.f32.mxu0 0.0
  %5579 = vmatmul.mubr.f32.gmra.mrb[0].mxu0 %v5509
  %v5580 = vpop.f32.mrb[0].mxu0
  %v5581 = vadd.f32 %v5506, %v5580
  %v5582 = vpop.f32.mrb[0].mxu0
  %5583 = vmatprep.mubr.f32.mxu0 0.0
  %5584 = vmatmul.mubr.f32.gmra.mrb[0].mxu0 %v5512
  %v5585 = vpop.f32.mrb[0].mxu0
  %v5586 = vadd.f32 %v5506, %v5585
  %v5587 = vpop.f32.mrb[0].mxu0
  %5588 = vdwg.mxu0
  %v5589 = vadd.f32 %v4555, %v5581
  %v5590 = vadd.f32 %v4556, %v5586
  %s5591 = scalar_lea.vmem %s15, 1
  %v5592 = vld [vmem:[%s5591] sm:$0x1]
  %s5593 = scalar_lea.vmem %s16, 1
  %v5594 = vld [vmem:[%s5593] sm:$0x1]
  %v5595 = vsel %vm230, %v5589, 0.0
  %5596 = vadd.xlane.f32.xlu0 %v5595
  %v5597 = vpop.xlane.xlu0 %5596
  %v5598 = vsel %vm230, %v5590, 0.0
  %5599 = vadd.xlane.f32.xlu0 %v5598
  %v5600 = vpop.xlane.xlu0 %5599
  %v5601 = vmul.f32 %v5597, %v1352
  %v5602 = vmul.f32 %v5600, %v1352
  %v5603 = vsub.f32 %v5589, %v5601
  %v5604 = vsub.f32 %v5590, %v5602
  %v5605 = vmul.f32 %v5603, %v5603
  %v5606 = vmul.f32 %v5604, %v5604
  %v5607 = vsel %vm230, %v5605, 0.0
  %5608 = vadd.xlane.f32.xlu0 %v5607
  %v5609 = vpop.xlane.xlu0 %5608
  %v5610 = vsel %vm230, %v5606, 0.0
  %5611 = vadd.xlane.f32.xlu0 %v5610
  %v5612 = vpop.xlane.xlu0 %5611
  %v5613 = vmul.f32 %v5609, %v1352
  %v5614 = vmul.f32 %v5612, %v1352
  %v5615 = vadd.f32 %v5613, 1e-05
  %v5616 = vadd.f32 %v5614, 1e-05
  %v5617 = vrsqrt.pop %v5615
  %v5618 = vrsqrt.pop %v5616
  %v5619 = vmul.f32 %v5603, %v5617
  %v5620 = vmul.f32 %v5604, %v5618
  %v5622 = vlaneseq
  %v5623 = vshrl.u32 %v5622, 7
  %v5624 = vsub.s32 0, %v5623
  %v5625 = vrot.slane %v5592, %v5624
  %v5627 = vmul.f32 %v5619, %v5625
  %v5628 = vmul.f32 %v5620, %v5625
  %v5630 = vlaneseq
  %v5631 = vshrl.u32 %v5630, 7
  %v5632 = vsub.s32 0, %v5631
  %v5633 = vrot.slane %v5594, %v5632
  %v5635 = vadd.f32 %v5627, %v5633
  %v5636 = vadd.f32 %v5628, %v5633
  %s5637 = scalar_lea.vmem %s9, 32
  %v5638 = vld [vmem:[%s5637] sm:$0xff]
  %v5639 = vld [vmem:[%s5637 + $0x8] sm:$0xff]
  %v5640 = vld [vmem:[%s5637 + $0x10] sm:$0xff]
  %v5641 = vld [vmem:[%s5637 + $0x18] sm:$0xff]
  %s5642 = scalar_lea.vmem %s10, 1
  %v5643 = vld [vmem:[%s5642] sm:$0x1]
  %v5645 = vlaneseq
  %v5646 = vshrl.u32 %v5645, 7
  %v5647 = vsub.s32 0, %v5646
  %v5648 = vrot.slane %v5643, %v5647
  %v5651 = vsel %vm230, %v5635, 0
  %v5654 = vsel %vm230, %v5636, 0
  %5656 = vmatprep.subr.mxu0 0.0
  %5657 = vmatpush1.msra.mxu0 %v5638
  %5658 = vmatprep.subr.mxu0 0.0
  %5659 = vmatpush1.msra.mxu0 %v5639
  %5660 = vmatprep.subr.mxu0 0.0
  %5661 = vmatpush1.msra.mxu0 %v5640
  %5662 = vmatprep.subr.mxu0 0.0
  %5663 = vmatpush1.msra.mxu0 %v5641
  %5664 = vmatprep.subr.mxu0 0.0
  %5665 = vmatpush1.msra.mxu0 0.0
  %5666 = vmatprep.subr.mxu0 0.0
  %5667 = vmatpush1.msra.mxu0 0.0
  %5668 = vmatprep.subr.mxu0 0.0
  %5669 = vmatpush1.msra.mxu0 0.0
  %5670 = vmatprep.subr.mxu0 0.0
  %5671 = vmatpush1.msra.mxu0 0.0
  %5672 = vmatprep.subr.mxu0 0.0
  %5673 = vmatpush1.msra.mxu0 0.0
  %5674 = vmatprep.subr.mxu0 0.0
  %5675 = vmatpush1.msra.mxu0 0.0
  %5676 = vmatprep.subr.mxu0 0.0
  %5677 = vmatpush1.msra.mxu0 0.0
  %5678 = vmatprep.subr.mxu0 0.0
  %5679 = vmatpush1.msra.mxu0 0.0
  %5680 = vmatprep.subr.mxu0 0.0
  %5681 = vmatpush1.msra.mxu0 0.0
  %5682 = vmatprep.subr.mxu0 0.0
  %5683 = vmatpush1.msra.mxu0 0.0
  %5684 = vmatprep.subr.mxu0 0.0
  %5685 = vmatpush1.msra.mxu0 0.0
  %5686 = vmatprep.subr.mxu0 0.0
  %5687 = vmatpush1.msra.mxu0 0.0
  %5688 = vmatprep.subr.mxu0 0.0
  %5689 = vmatpush1.msra.mxu0 0.0
  %5690 = vmatprep.subr.mxu0 0.0
  %5691 = vmatpush1.msra.mxu0 0.0
  %5692 = vmatprep.subr.mxu0 0.0
  %5693 = vmatpush1.msra.mxu0 0.0
  %5694 = vmatprep.subr.mxu0 0.0
  %5695 = vmatpush1.msra.mxu0 0.0
  %5696 = vmatprep.subr.mxu0 0.0
  %5697 = vmatpush1.msra.mxu0 0.0
  %5698 = vmatprep.subr.mxu0 0.0
  %5699 = vmatpush1.msra.mxu0 0.0
  %5700 = vmatprep.subr.mxu0 0.0
  %5701 = vmatpush1.msra.mxu0 0.0
  %5702 = vmatprep.subr.mxu0 0.0
  %5703 = vmatpush1.msra.mxu0 0.0
  %5704 = vmatprep.subr.mxu0 0.0
  %5705 = vmatpush1.msra.mxu0 0.0
  %5706 = vmatprep.subr.mxu0 0.0
  %5707 = vmatpush1.msra.mxu0 0.0
  %5708 = vmatprep.subr.mxu0 0.0
  %5709 = vmatpush1.msra.mxu0 0.0
  %5710 = vmatprep.subr.mxu0 0.0
  %5711 = vmatpush1.msra.mxu0 0.0
  %5712 = vmatprep.subr.mxu0 0.0
  %5713 = vmatpush1.msra.mxu0 0.0
  %5714 = vmatprep.subr.mxu0 0.0
  %5715 = vmatpush1.msra.mxu0 0.0
  %5716 = vmatprep.subr.mxu0 0.0
  %5717 = vmatpush1.msra.mxu0 0.0
  %5718 = vmatprep.subr.mxu0 0.0
  %5719 = vmatpush1.msra.mxu0 0.0
  %5720 = vmatprep.mubr.f32.mxu0 0.0
  %5721 = vmatmul.mubr.f32.gmra.mrb[0].mxu0 %v5651
  %v5722 = vpop.f32.mrb[0].mxu0
  %v5723 = vadd.f32 %v5648, %v5722
  %v5724 = vpop.f32.mrb[0].mxu0
  %5725 = vmatprep.mubr.f32.mxu0 0.0
  %5726 = vmatmul.mubr.f32.gmra.mrb[0].mxu0 %v5654
  %v5727 = vpop.f32.mrb[0].mxu0
  %v5728 = vadd.f32 %v5648, %v5727
  %v5729 = vpop.f32.mrb[0].mxu0
  %5730 = vdwg.mxu0
  %s5731 = scalar_lea.vmem %s13, 32
  %v5732 = vld [vmem:[%s5731] sm:$0xff]
  %v5733 = vld [vmem:[%s5731 + $0x8] sm:$0xff]
  %v5734 = vld [vmem:[%s5731 + $0x10] sm:$0xff]
  %v5735 = vld [vmem:[%s5731 + $0x18] sm:$0xff]
  %s5736 = scalar_lea.vmem %s14, 1
  %v5737 = vld [vmem:[%s5736] sm:$0x1]
  %5738 = vrot.lane.b32.xlu0 %v304, 64
  %v5739 = vpop.permute.xlu0 %5738
  %5740 = vrot.lane.b32.xlu0 %v309, 64
  %v5741 = vpop.permute.xlu0 %5740
  %v5743 = vsel %vm415, %v5723, 0
  %v5746 = vsel %vm415, %v5728, 0
  %v5748 = vsel %vm415, %v5739, 0
  %v5750 = vsel %vm415, %v5741, 0
  %5752 = vmatprep.subr.mxu0 0.0
  %5753 = vmatpush1.xpose.msra.mxu0 %v5748
  %5754 = vmatprep.subr.mxu0 0.0
  %5755 = vmatpush1.xpose.msra.mxu0 %v5750
  %5756 = vmatprep.subr.mxu0 0.0
  %5757 = vmatpush1.xpose.msra.mxu0 0.0
  %5758 = vmatprep.subr.mxu0 0.0
  %5759 = vmatpush1.xpose.msra.mxu0 0.0
  %5760 = vmatprep.subr.mxu0 0.0
  %5761 = vmatpush1.xpose.msra.mxu0 0.0
  %5762 = vmatprep.subr.mxu0 0.0
  %5763 = vmatpush1.xpose.msra.mxu0 0.0
  %5764 = vmatprep.subr.mxu0 0.0
  %5765 = vmatpush1.xpose.msra.mxu0 0.0
  %5766 = vmatprep.subr.mxu0 0.0
  %5767 = vmatpush1.xpose.msra.mxu0 0.0
  %5768 = vmatprep.subr.mxu0 0.0
  %5769 = vmatpush1.xpose.msra.mxu0 0.0
  %5770 = vmatprep.subr.mxu0 0.0
  %5771 = vmatpush1.xpose.msra.mxu0 0.0
  %5772 = vmatprep.subr.mxu0 0.0
  %5773 = vmatpush1.xpose.msra.mxu0 0.0
  %5774 = vmatprep.subr.mxu0 0.0
  %5775 = vmatpush1.xpose.msra.mxu0 0.0
  %5776 = vmatprep.subr.mxu0 0.0
  %5777 = vmatpush1.xpose.msra.mxu0 0.0
  %5778 = vmatprep.subr.mxu0 0.0
  %5779 = vmatpush1.xpose.msra.mxu0 0.0
  %5780 = vmatprep.subr.mxu0 0.0
  %5781 = vmatpush1.xpose.msra.mxu0 0.0
  %5782 = vmatprep.subr.mxu0 0.0
  %5783 = vmatpush1.xpose.msra.mxu0 0.0
  %5784 = vmatprep.subr.mxu0 0.0
  %5785 = vmatpush1.xpose.msra.mxu0 0.0
  %5786 = vmatprep.subr.mxu0 0.0
  %5787 = vmatpush1.xpose.msra.mxu0 0.0
  %5788 = vmatprep.subr.mxu0 0.0
  %5789 = vmatpush1.xpose.msra.mxu0 0.0
  %5790 = vmatprep.subr.mxu0 0.0
  %5791 = vmatpush1.xpose.msra.mxu0 0.0
  %5792 = vmatprep.subr.mxu0 0.0
  %5793 = vmatpush1.xpose.msra.mxu0 0.0
  %5794 = vmatprep.subr.mxu0 0.0
  %5795 = vmatpush1.xpose.msra.mxu0 0.0
  %5796 = vmatprep.subr.mxu0 0.0
  %5797 = vmatpush1.xpose.msra.mxu0 0.0
  %5798 = vmatprep.subr.mxu0 0.0
  %5799 = vmatpush1.xpose.msra.mxu0 0.0
  %5800 = vmatprep.subr.mxu0 0.0
  %5801 = vmatpush1.xpose.msra.mxu0 0.0
  %5802 = vmatprep.subr.mxu0 0.0
  %5803 = vmatpush1.xpose.msra.mxu0 0.0
  %5804 = vmatprep.subr.mxu0 0.0
  %5805 = vmatpush1.xpose.msra.mxu0 0.0
  %5806 = vmatprep.subr.mxu0 0.0
  %5807 = vmatpush1.xpose.msra.mxu0 0.0
  %5808 = vmatprep.subr.mxu0 0.0
  %5809 = vmatpush1.xpose.msra.mxu0 0.0
  %5810 = vmatprep.subr.mxu0 0.0
  %5811 = vmatpush1.xpose.msra.mxu0 0.0
  %5812 = vmatprep.subr.mxu0 0.0
  %5813 = vmatpush1.xpose.msra.mxu0 0.0
  %5814 = vmatprep.subr.mxu0 0.0
  %5815 = vmatpush1.xpose.msra.mxu0 0.0
  %5816 = vmatprep.mubr.f32.mxu0 0.0
  %5817 = vmatmul.mubr.f32.gmra.mrb[0].mxu0 %v5743
  %v5818 = vpop.f32.mrb[0].mxu0
  %v5819 = vadd.f32 0.0, %v5818
  %v5820 = vpop.f32.mrb[0].mxu0
  %5821 = vmatprep.mubr.f32.mxu0 0.0
  %5822 = vmatmul.mubr.f32.gmra.mrb[0].mxu0 %v5746
  %v5823 = vpop.f32.mrb[0].mxu0
  %v5824 = vadd.f32 0.0, %v5823
  %v5825 = vpop.f32.mrb[0].mxu0
  %5826 = vdwg.mxu0
  %v5827 = vmul.f32 %v5819, 0.35355338
  %v5828 = vmul.f32 %v5824, 0.35355338
  %v5829 = vadd.f32 %v5827, %v215
  %v5830 = vadd.f32 %v5828, %v216
  %v5831 = vsel %vm106, %v5829, -inf
  %5832 = vmax.xlane.f32.xlu0 %v5831
  %v5833 = vpop.xlane.xlu0 %5832
  %v5834 = vsel %vm106, %v5830, -inf
  %5835 = vmax.xlane.f32.xlu0 %v5834
  %v5836 = vpop.xlane.xlu0 %5835
  %v5837 = vsub.f32 %v5829, %v5833
  %v5838 = vsub.f32 %v5830, %v5836
  %v5839 = vmul.f32 %v5837, 1.442695
  %v5840 = vpow.pop %v5839
  %v5841 = vmul.f32 %v5838, 1.442695
  %v5842 = vpow.pop %v5841
  %v5843 = vsel %vm106, %v5840, 0.0
  %5844 = vadd.xlane.f32.xlu0 %v5843
  %v5845 = vpop.xlane.xlu0 %5844
  %v5846 = vsel %vm106, %v5842, 0.0
  %5847 = vadd.xlane.f32.xlu0 %v5846
  %v5848 = vpop.xlane.xlu0 %5847
  %v5849 = vrcp.pop %v5845
  %v5850 = vmul.f32 %v5840, %v5849
  %v5851 = vrcp.pop %v5848
  %v5852 = vmul.f32 %v5842, %v5851
  %5853 = vrot.lane.b32.xlu0 %v304, 32
  %v5854 = vpop.permute.xlu0 %5853
  %5855 = vrot.lane.b32.xlu0 %v309, 32
  %v5856 = vpop.permute.xlu0 %5855
  %v5860 = vsel %vm106, %v5850, 0
  %v5863 = vsel %vm106, %v5852, 0
  %5865 = vmatprep.subr.mxu0 0.0
  %5866 = vmatpush1.msra.mxu0 %v5854
  %5867 = vmatprep.subr.mxu0 0.0
  %5868 = vmatpush1.msra.mxu0 %v5856
  %5869 = vmatprep.subr.mxu0 0.0
  %5870 = vmatpush1.msra.mxu0 0.0
  %5871 = vmatprep.subr.mxu0 0.0
  %5872 = vmatpush1.msra.mxu0 0.0
  %5873 = vmatprep.subr.mxu0 0.0
  %5874 = vmatpush1.msra.mxu0 0.0
  %5875 = vmatprep.subr.mxu0 0.0
  %5876 = vmatpush1.msra.mxu0 0.0
  %5877 = vmatprep.subr.mxu0 0.0
  %5878 = vmatpush1.msra.mxu0 0.0
  %5879 = vmatprep.subr.mxu0 0.0
  %5880 = vmatpush1.msra.mxu0 0.0
  %5881 = vmatprep.subr.mxu0 0.0
  %5882 = vmatpush1.msra.mxu0 0.0
  %5883 = vmatprep.subr.mxu0 0.0
  %5884 = vmatpush1.msra.mxu0 0.0
  %5885 = vmatprep.subr.mxu0 0.0
  %5886 = vmatpush1.msra.mxu0 0.0
  %5887 = vmatprep.subr.mxu0 0.0
  %5888 = vmatpush1.msra.mxu0 0.0
  %5889 = vmatprep.subr.mxu0 0.0
  %5890 = vmatpush1.msra.mxu0 0.0
  %5891 = vmatprep.subr.mxu0 0.0
  %5892 = vmatpush1.msra.mxu0 0.0
  %5893 = vmatprep.subr.mxu0 0.0
  %5894 = vmatpush1.msra.mxu0 0.0
  %5895 = vmatprep.subr.mxu0 0.0
  %5896 = vmatpush1.msra.mxu0 0.0
  %5897 = vmatprep.subr.mxu0 0.0
  %5898 = vmatpush1.msra.mxu0 0.0
  %5899 = vmatprep.subr.mxu0 0.0
  %5900 = vmatpush1.msra.mxu0 0.0
  %5901 = vmatprep.subr.mxu0 0.0
  %5902 = vmatpush1.msra.mxu0 0.0
  %5903 = vmatprep.subr.mxu0 0.0
  %5904 = vmatpush1.msra.mxu0 0.0
  %5905 = vmatprep.subr.mxu0 0.0
  %5906 = vmatpush1.msra.mxu0 0.0
  %5907 = vmatprep.subr.mxu0 0.0
  %5908 = vmatpush1.msra.mxu0 0.0
  %5909 = vmatprep.subr.mxu0 0.0
  %5910 = vmatpush1.msra.mxu0 0.0
  %5911 = vmatprep.subr.mxu0 0.0
  %5912 = vmatpush1.msra.mxu0 0.0
  %5913 = vmatprep.subr.mxu0 0.0
  %5914 = vmatpush1.msra.mxu0 0.0
  %5915 = vmatprep.subr.mxu0 0.0
  %5916 = vmatpush1.msra.mxu0 0.0
  %5917 = vmatprep.subr.mxu0 0.0
  %5918 = vmatpush1.msra.mxu0 0.0
  %5919 = vmatprep.subr.mxu0 0.0
  %5920 = vmatpush1.msra.mxu0 0.0
  %5921 = vmatprep.subr.mxu0 0.0
  %5922 = vmatpush1.msra.mxu0 0.0
  %5923 = vmatprep.subr.mxu0 0.0
  %5924 = vmatpush1.msra.mxu0 0.0
  %5925 = vmatprep.subr.mxu0 0.0
  %5926 = vmatpush1.msra.mxu0 0.0
  %5927 = vmatprep.subr.mxu0 0.0
  %5928 = vmatpush1.msra.mxu0 0.0
  %5929 = vmatprep.mubr.f32.mxu0 0.0
  %5930 = vmatmul.mubr.f32.gmra.mrb[0].mxu0 %v5860
  %v5931 = vpop.f32.mrb[0].mxu0
  %v5932 = vadd.f32 0.0, %v5931
  %v5933 = vpop.f32.mrb[0].mxu0
  %5934 = vmatprep.mubr.f32.mxu0 0.0
  %5935 = vmatmul.mubr.f32.gmra.mrb[0].mxu0 %v5863
  %v5936 = vpop.f32.mrb[0].mxu0
  %v5937 = vadd.f32 0.0, %v5936
  %v5938 = vpop.f32.mrb[0].mxu0
  %5939 = vdwg.mxu0
  %5940 = vrot.lane.b32.xlu0 %v5723, 120
  %v5941 = vpop.permute.xlu0 %5940
  %5942 = vrot.lane.b32.xlu0 %v5728, 120
  %v5943 = vpop.permute.xlu0 %5942
  %5944 = vrot.lane.b32.xlu0 %v304, 56
  %v5945 = vpop.permute.xlu0 %5944
  %5946 = vrot.lane.b32.xlu0 %v309, 56
  %v5947 = vpop.permute.xlu0 %5946
  %v5948 = vsel %vm415, %v5941, 0
  %v5950 = vsel %vm415, %v5943, 0
  %v5952 = vsel %vm415, %v5945, 0
  %v5954 = vsel %vm415, %v5947, 0
  %5956 = vmatprep.subr.mxu0 0.0
  %5957 = vmatpush1.xpose.msra.mxu0 %v5952
  %5958 = vmatprep.subr.mxu0 0.0
  %5959 = vmatpush1.xpose.msra.mxu0 %v5954
  %5960 = vmatprep.subr.mxu0 0.0
  %5961 = vmatpush1.xpose.msra.mxu0 0.0
  %5962 = vmatprep.subr.mxu0 0.0
  %5963 = vmatpush1.xpose.msra.mxu0 0.0
  %5964 = vmatprep.subr.mxu0 0.0
  %5965 = vmatpush1.xpose.msra.mxu0 0.0
  %5966 = vmatprep.subr.mxu0 0.0
  %5967 = vmatpush1.xpose.msra.mxu0 0.0
  %5968 = vmatprep.subr.mxu0 0.0
  %5969 = vmatpush1.xpose.msra.mxu0 0.0
  %5970 = vmatprep.subr.mxu0 0.0
  %5971 = vmatpush1.xpose.msra.mxu0 0.0
  %5972 = vmatprep.subr.mxu0 0.0
  %5973 = vmatpush1.xpose.msra.mxu0 0.0
  %5974 = vmatprep.subr.mxu0 0.0
  %5975 = vmatpush1.xpose.msra.mxu0 0.0
  %5976 = vmatprep.subr.mxu0 0.0
  %5977 = vmatpush1.xpose.msra.mxu0 0.0
  %5978 = vmatprep.subr.mxu0 0.0
  %5979 = vmatpush1.xpose.msra.mxu0 0.0
  %5980 = vmatprep.subr.mxu0 0.0
  %5981 = vmatpush1.xpose.msra.mxu0 0.0
  %5982 = vmatprep.subr.mxu0 0.0
  %5983 = vmatpush1.xpose.msra.mxu0 0.0
  %5984 = vmatprep.subr.mxu0 0.0
  %5985 = vmatpush1.xpose.msra.mxu0 0.0
  %5986 = vmatprep.subr.mxu0 0.0
  %5987 = vmatpush1.xpose.msra.mxu0 0.0
  %5988 = vmatprep.subr.mxu0 0.0
  %5989 = vmatpush1.xpose.msra.mxu0 0.0
  %5990 = vmatprep.subr.mxu0 0.0
  %5991 = vmatpush1.xpose.msra.mxu0 0.0
  %5992 = vmatprep.subr.mxu0 0.0
  %5993 = vmatpush1.xpose.msra.mxu0 0.0
  %5994 = vmatprep.subr.mxu0 0.0
  %5995 = vmatpush1.xpose.msra.mxu0 0.0
  %5996 = vmatprep.subr.mxu0 0.0
  %5997 = vmatpush1.xpose.msra.mxu0 0.0
  %5998 = vmatprep.subr.mxu0 0.0
  %5999 = vmatpush1.xpose.msra.mxu0 0.0
  %6000 = vmatprep.subr.mxu0 0.0
  %6001 = vmatpush1.xpose.msra.mxu0 0.0
  %6002 = vmatprep.subr.mxu0 0.0
  %6003 = vmatpush1.xpose.msra.mxu0 0.0
  %6004 = vmatprep.subr.mxu0 0.0
  %6005 = vmatpush1.xpose.msra.mxu0 0.0
  %6006 = vmatprep.subr.mxu0 0.0
  %6007 = vmatpush1.xpose.msra.mxu0 0.0
  %6008 = vmatprep.subr.mxu0 0.0
  %6009 = vmatpush1.xpose.msra.mxu0 0.0
  %6010 = vmatprep.subr.mxu0 0.0
  %6011 = vmatpush1.xpose.msra.mxu0 0.0
  %6012 = vmatprep.subr.mxu0 0.0
  %6013 = vmatpush1.xpose.msra.mxu0 0.0
  %6014 = vmatprep.subr.mxu0 0.0
  %6015 = vmatpush1.xpose.msra.mxu0 0.0
  %6016 = vmatprep.subr.mxu0 0.0
  %6017 = vmatpush1.xpose.msra.mxu0 0.0
  %6018 = vmatprep.subr.mxu0 0.0
  %6019 = vmatpush1.xpose.msra.mxu0 0.0
  %6020 = vmatprep.mubr.f32.mxu0 0.0
  %6021 = vmatmul.mubr.f32.gmra.mrb[0].mxu0 %v5948
  %v6022 = vpop.f32.mrb[0].mxu0
  %v6023 = vadd.f32 0.0, %v6022
  %v6024 = vpop.f32.mrb[0].mxu0
  %6025 = vmatprep.mubr.f32.mxu0 0.0
  %6026 = vmatmul.mubr.f32.gmra.mrb[0].mxu0 %v5950
  %v6027 = vpop.f32.mrb[0].mxu0
  %v6028 = vadd.f32 0.0, %v6027
  %v6029 = vpop.f32.mrb[0].mxu0
  %6030 = vdwg.mxu0
  %v6031 = vmul.f32 %v6023, 0.35355338
  %v6032 = vmul.f32 %v6028, 0.35355338
  %v6033 = vadd.f32 %v6031, %v215
  %v6034 = vadd.f32 %v6032, %v216
  %v6035 = vsel %vm106, %v6033, -inf
  %6036 = vmax.xlane.f32.xlu0 %v6035
  %v6037 = vpop.xlane.xlu0 %6036
  %v6038 = vsel %vm106, %v6034, -inf
  %6039 = vmax.xlane.f32.xlu0 %v6038
  %v6040 = vpop.xlane.xlu0 %6039
  %v6041 = vsub.f32 %v6033, %v6037
  %v6042 = vsub.f32 %v6034, %v6040
  %v6043 = vmul.f32 %v6041, 1.442695
  %v6044 = vpow.pop %v6043
  %v6045 = vmul.f32 %v6042, 1.442695
  %v6046 = vpow.pop %v6045
  %v6047 = vsel %vm106, %v6044, 0.0
  %6048 = vadd.xlane.f32.xlu0 %v6047
  %v6049 = vpop.xlane.xlu0 %6048
  %v6050 = vsel %vm106, %v6046, 0.0
  %6051 = vadd.xlane.f32.xlu0 %v6050
  %v6052 = vpop.xlane.xlu0 %6051
  %v6053 = vrcp.pop %v6049
  %v6054 = vmul.f32 %v6044, %v6053
  %v6055 = vrcp.pop %v6052
  %v6056 = vmul.f32 %v6046, %v6055
  %6057 = vrot.lane.b32.xlu0 %v304, 24
  %v6058 = vpop.permute.xlu0 %6057
  %6059 = vrot.lane.b32.xlu0 %v309, 24
  %v6060 = vpop.permute.xlu0 %6059
  %v6064 = vsel %vm106, %v6054, 0
  %v6067 = vsel %vm106, %v6056, 0
  %6069 = vmatprep.subr.mxu0 0.0
  %6070 = vmatpush1.msra.mxu0 %v6058
  %6071 = vmatprep.subr.mxu0 0.0
  %6072 = vmatpush1.msra.mxu0 %v6060
  %6073 = vmatprep.subr.mxu0 0.0
  %6074 = vmatpush1.msra.mxu0 0.0
  %6075 = vmatprep.subr.mxu0 0.0
  %6076 = vmatpush1.msra.mxu0 0.0
  %6077 = vmatprep.subr.mxu0 0.0
  %6078 = vmatpush1.msra.mxu0 0.0
  %6079 = vmatprep.subr.mxu0 0.0
  %6080 = vmatpush1.msra.mxu0 0.0
  %6081 = vmatprep.subr.mxu0 0.0
  %6082 = vmatpush1.msra.mxu0 0.0
  %6083 = vmatprep.subr.mxu0 0.0
  %6084 = vmatpush1.msra.mxu0 0.0
  %6085 = vmatprep.subr.mxu0 0.0
  %6086 = vmatpush1.msra.mxu0 0.0
  %6087 = vmatprep.subr.mxu0 0.0
  %6088 = vmatpush1.msra.mxu0 0.0
  %6089 = vmatprep.subr.mxu0 0.0
  %6090 = vmatpush1.msra.mxu0 0.0
  %6091 = vmatprep.subr.mxu0 0.0
  %6092 = vmatpush1.msra.mxu0 0.0
  %6093 = vmatprep.subr.mxu0 0.0
  %6094 = vmatpush1.msra.mxu0 0.0
  %6095 = vmatprep.subr.mxu0 0.0
  %6096 = vmatpush1.msra.mxu0 0.0
  %6097 = vmatprep.subr.mxu0 0.0
  %6098 = vmatpush1.msra.mxu0 0.0
  %6099 = vmatprep.subr.mxu0 0.0
  %6100 = vmatpush1.msra.mxu0 0.0
  %6101 = vmatprep.subr.mxu0 0.0
  %6102 = vmatpush1.msra.mxu0 0.0
  %6103 = vmatprep.subr.mxu0 0.0
  %6104 = vmatpush1.msra.mxu0 0.0
  %6105 = vmatprep.subr.mxu0 0.0
  %6106 = vmatpush1.msra.mxu0 0.0
  %6107 = vmatprep.subr.mxu0 0.0
  %6108 = vmatpush1.msra.mxu0 0.0
  %6109 = vmatprep.subr.mxu0 0.0
  %6110 = vmatpush1.msra.mxu0 0.0
  %6111 = vmatprep.subr.mxu0 0.0
  %6112 = vmatpush1.msra.mxu0 0.0
  %6113 = vmatprep.subr.mxu0 0.0
  %6114 = vmatpush1.msra.mxu0 0.0
  %6115 = vmatprep.subr.mxu0 0.0
  %6116 = vmatpush1.msra.mxu0 0.0
  %6117 = vmatprep.subr.mxu0 0.0
  %6118 = vmatpush1.msra.mxu0 0.0
  %6119 = vmatprep.subr.mxu0 0.0
  %6120 = vmatpush1.msra.mxu0 0.0
  %6121 = vmatprep.subr.mxu0 0.0
  %6122 = vmatpush1.msra.mxu0 0.0
  %6123 = vmatprep.subr.mxu0 0.0
  %6124 = vmatpush1.msra.mxu0 0.0
  %6125 = vmatprep.subr.mxu0 0.0
  %6126 = vmatpush1.msra.mxu0 0.0
  %6127 = vmatprep.subr.mxu0 0.0
  %6128 = vmatpush1.msra.mxu0 0.0
  %6129 = vmatprep.subr.mxu0 0.0
  %6130 = vmatpush1.msra.mxu0 0.0
  %6131 = vmatprep.subr.mxu0 0.0
  %6132 = vmatpush1.msra.mxu0 0.0
  %6133 = vmatprep.mubr.f32.mxu0 0.0
  %6134 = vmatmul.mubr.f32.gmra.mrb[0].mxu0 %v6064
  %v6135 = vpop.f32.mrb[0].mxu0
  %v6136 = vadd.f32 0.0, %v6135
  %v6137 = vpop.f32.mrb[0].mxu0
  %6138 = vmatprep.mubr.f32.mxu0 0.0
  %6139 = vmatmul.mubr.f32.gmra.mrb[0].mxu0 %v6067
  %v6140 = vpop.f32.mrb[0].mxu0
  %v6141 = vadd.f32 0.0, %v6140
  %v6142 = vpop.f32.mrb[0].mxu0
  %6143 = vdwg.mxu0
  %6144 = vrot.lane.b32.xlu0 %v5723, 112
  %v6145 = vpop.permute.xlu0 %6144
  %6146 = vrot.lane.b32.xlu0 %v5728, 112
  %v6147 = vpop.permute.xlu0 %6146
  %6148 = vrot.lane.b32.xlu0 %v304, 48
  %v6149 = vpop.permute.xlu0 %6148
  %6150 = vrot.lane.b32.xlu0 %v309, 48
  %v6151 = vpop.permute.xlu0 %6150
  %v6152 = vsel %vm415, %v6145, 0
  %v6154 = vsel %vm415, %v6147, 0
  %v6156 = vsel %vm415, %v6149, 0
  %v6158 = vsel %vm415, %v6151, 0
  %6160 = vmatprep.subr.mxu0 0.0
  %6161 = vmatpush1.xpose.msra.mxu0 %v6156
  %6162 = vmatprep.subr.mxu0 0.0
  %6163 = vmatpush1.xpose.msra.mxu0 %v6158
  %6164 = vmatprep.subr.mxu0 0.0
  %6165 = vmatpush1.xpose.msra.mxu0 0.0
  %6166 = vmatprep.subr.mxu0 0.0
  %6167 = vmatpush1.xpose.msra.mxu0 0.0
  %6168 = vmatprep.subr.mxu0 0.0
  %6169 = vmatpush1.xpose.msra.mxu0 0.0
  %6170 = vmatprep.subr.mxu0 0.0
  %6171 = vmatpush1.xpose.msra.mxu0 0.0
  %6172 = vmatprep.subr.mxu0 0.0
  %6173 = vmatpush1.xpose.msra.mxu0 0.0
  %6174 = vmatprep.subr.mxu0 0.0
  %6175 = vmatpush1.xpose.msra.mxu0 0.0
  %6176 = vmatprep.subr.mxu0 0.0
  %6177 = vmatpush1.xpose.msra.mxu0 0.0
  %6178 = vmatprep.subr.mxu0 0.0
  %6179 = vmatpush1.xpose.msra.mxu0 0.0
  %6180 = vmatprep.subr.mxu0 0.0
  %6181 = vmatpush1.xpose.msra.mxu0 0.0
  %6182 = vmatprep.subr.mxu0 0.0
  %6183 = vmatpush1.xpose.msra.mxu0 0.0
  %6184 = vmatprep.subr.mxu0 0.0
  %6185 = vmatpush1.xpose.msra.mxu0 0.0
  %6186 = vmatprep.subr.mxu0 0.0
  %6187 = vmatpush1.xpose.msra.mxu0 0.0
  %6188 = vmatprep.subr.mxu0 0.0
  %6189 = vmatpush1.xpose.msra.mxu0 0.0
  %6190 = vmatprep.subr.mxu0 0.0
  %6191 = vmatpush1.xpose.msra.mxu0 0.0
  %6192 = vmatprep.subr.mxu0 0.0
  %6193 = vmatpush1.xpose.msra.mxu0 0.0
  %6194 = vmatprep.subr.mxu0 0.0
  %6195 = vmatpush1.xpose.msra.mxu0 0.0
  %6196 = vmatprep.subr.mxu0 0.0
  %6197 = vmatpush1.xpose.msra.mxu0 0.0
  %6198 = vmatprep.subr.mxu0 0.0
  %6199 = vmatpush1.xpose.msra.mxu0 0.0
  %6200 = vmatprep.subr.mxu0 0.0
  %6201 = vmatpush1.xpose.msra.mxu0 0.0
  %6202 = vmatprep.subr.mxu0 0.0
  %6203 = vmatpush1.xpose.msra.mxu0 0.0
  %6204 = vmatprep.subr.mxu0 0.0
  %6205 = vmatpush1.xpose.msra.mxu0 0.0
  %6206 = vmatprep.subr.mxu0 0.0
  %6207 = vmatpush1.xpose.msra.mxu0 0.0
  %6208 = vmatprep.subr.mxu0 0.0
  %6209 = vmatpush1.xpose.msra.mxu0 0.0
  %6210 = vmatprep.subr.mxu0 0.0
  %6211 = vmatpush1.xpose.msra.mxu0 0.0
  %6212 = vmatprep.subr.mxu0 0.0
  %6213 = vmatpush1.xpose.msra.mxu0 0.0
  %6214 = vmatprep.subr.mxu0 0.0
  %6215 = vmatpush1.xpose.msra.mxu0 0.0
  %6216 = vmatprep.subr.mxu0 0.0
  %6217 = vmatpush1.xpose.msra.mxu0 0.0
  %6218 = vmatprep.subr.mxu0 0.0
  %6219 = vmatpush1.xpose.msra.mxu0 0.0
  %6220 = vmatprep.subr.mxu0 0.0
  %6221 = vmatpush1.xpose.msra.mxu0 0.0
  %6222 = vmatprep.subr.mxu0 0.0
  %6223 = vmatpush1.xpose.msra.mxu0 0.0
  %6224 = vmatprep.mubr.f32.mxu0 0.0
  %6225 = vmatmul.mubr.f32.gmra.mrb[0].mxu0 %v6152
  %v6226 = vpop.f32.mrb[0].mxu0
  %v6227 = vadd.f32 0.0, %v6226
  %v6228 = vpop.f32.mrb[0].mxu0
  %6229 = vmatprep.mubr.f32.mxu0 0.0
  %6230 = vmatmul.mubr.f32.gmra.mrb[0].mxu0 %v6154
  %v6231 = vpop.f32.mrb[0].mxu0
  %v6232 = vadd.f32 0.0, %v6231
  %v6233 = vpop.f32.mrb[0].mxu0
  %6234 = vdwg.mxu0
  %v6235 = vmul.f32 %v6227, 0.35355338
  %v6236 = vmul.f32 %v6232, 0.35355338
  %v6237 = vadd.f32 %v6235, %v215
  %v6238 = vadd.f32 %v6236, %v216
  %v6239 = vsel %vm106, %v6237, -inf
  %6240 = vmax.xlane.f32.xlu0 %v6239
  %v6241 = vpop.xlane.xlu0 %6240
  %v6242 = vsel %vm106, %v6238, -inf
  %6243 = vmax.xlane.f32.xlu0 %v6242
  %v6244 = vpop.xlane.xlu0 %6243
  %v6245 = vsub.f32 %v6237, %v6241
  %v6246 = vsub.f32 %v6238, %v6244
  %v6247 = vmul.f32 %v6245, 1.442695
  %v6248 = vpow.pop %v6247
  %v6249 = vmul.f32 %v6246, 1.442695
  %v6250 = vpow.pop %v6249
  %v6251 = vsel %vm106, %v6248, 0.0
  %6252 = vadd.xlane.f32.xlu0 %v6251
  %v6253 = vpop.xlane.xlu0 %6252
  %v6254 = vsel %vm106, %v6250, 0.0
  %6255 = vadd.xlane.f32.xlu0 %v6254
  %v6256 = vpop.xlane.xlu0 %6255
  %v6257 = vrcp.pop %v6253
  %v6258 = vmul.f32 %v6248, %v6257
  %v6259 = vrcp.pop %v6256
  %v6260 = vmul.f32 %v6250, %v6259
  %6261 = vrot.lane.b32.xlu0 %v304, 16
  %v6262 = vpop.permute.xlu0 %6261
  %6263 = vrot.lane.b32.xlu0 %v309, 16
  %v6264 = vpop.permute.xlu0 %6263
  %v6268 = vsel %vm106, %v6258, 0
  %v6271 = vsel %vm106, %v6260, 0
  %6273 = vmatprep.subr.mxu0 0.0
  %6274 = vmatpush1.msra.mxu0 %v6262
  %6275 = vmatprep.subr.mxu0 0.0
  %6276 = vmatpush1.msra.mxu0 %v6264
  %6277 = vmatprep.subr.mxu0 0.0
  %6278 = vmatpush1.msra.mxu0 0.0
  %6279 = vmatprep.subr.mxu0 0.0
  %6280 = vmatpush1.msra.mxu0 0.0
  %6281 = vmatprep.subr.mxu0 0.0
  %6282 = vmatpush1.msra.mxu0 0.0
  %6283 = vmatprep.subr.mxu0 0.0
  %6284 = vmatpush1.msra.mxu0 0.0
  %6285 = vmatprep.subr.mxu0 0.0
  %6286 = vmatpush1.msra.mxu0 0.0
  %6287 = vmatprep.subr.mxu0 0.0
  %6288 = vmatpush1.msra.mxu0 0.0
  %6289 = vmatprep.subr.mxu0 0.0
  %6290 = vmatpush1.msra.mxu0 0.0
  %6291 = vmatprep.subr.mxu0 0.0
  %6292 = vmatpush1.msra.mxu0 0.0
  %6293 = vmatprep.subr.mxu0 0.0
  %6294 = vmatpush1.msra.mxu0 0.0
  %6295 = vmatprep.subr.mxu0 0.0
  %6296 = vmatpush1.msra.mxu0 0.0
  %6297 = vmatprep.subr.mxu0 0.0
  %6298 = vmatpush1.msra.mxu0 0.0
  %6299 = vmatprep.subr.mxu0 0.0
  %6300 = vmatpush1.msra.mxu0 0.0
  %6301 = vmatprep.subr.mxu0 0.0
  %6302 = vmatpush1.msra.mxu0 0.0
  %6303 = vmatprep.subr.mxu0 0.0
  %6304 = vmatpush1.msra.mxu0 0.0
  %6305 = vmatprep.subr.mxu0 0.0
  %6306 = vmatpush1.msra.mxu0 0.0
  %6307 = vmatprep.subr.mxu0 0.0
  %6308 = vmatpush1.msra.mxu0 0.0
  %6309 = vmatprep.subr.mxu0 0.0
  %6310 = vmatpush1.msra.mxu0 0.0
  %6311 = vmatprep.subr.mxu0 0.0
  %6312 = vmatpush1.msra.mxu0 0.0
  %6313 = vmatprep.subr.mxu0 0.0
  %6314 = vmatpush1.msra.mxu0 0.0
  %6315 = vmatprep.subr.mxu0 0.0
  %6316 = vmatpush1.msra.mxu0 0.0
  %6317 = vmatprep.subr.mxu0 0.0
  %6318 = vmatpush1.msra.mxu0 0.0
  %6319 = vmatprep.subr.mxu0 0.0
  %6320 = vmatpush1.msra.mxu0 0.0
  %6321 = vmatprep.subr.mxu0 0.0
  %6322 = vmatpush1.msra.mxu0 0.0
  %6323 = vmatprep.subr.mxu0 0.0
  %6324 = vmatpush1.msra.mxu0 0.0
  %6325 = vmatprep.subr.mxu0 0.0
  %6326 = vmatpush1.msra.mxu0 0.0
  %6327 = vmatprep.subr.mxu0 0.0
  %6328 = vmatpush1.msra.mxu0 0.0
  %6329 = vmatprep.subr.mxu0 0.0
  %6330 = vmatpush1.msra.mxu0 0.0
  %6331 = vmatprep.subr.mxu0 0.0
  %6332 = vmatpush1.msra.mxu0 0.0
  %6333 = vmatprep.subr.mxu0 0.0
  %6334 = vmatpush1.msra.mxu0 0.0
  %6335 = vmatprep.subr.mxu0 0.0
  %6336 = vmatpush1.msra.mxu0 0.0
  %6337 = vmatprep.mubr.f32.mxu0 0.0
  %6338 = vmatmul.mubr.f32.gmra.mrb[0].mxu0 %v6268
  %v6339 = vpop.f32.mrb[0].mxu0
  %v6340 = vadd.f32 0.0, %v6339
  %v6341 = vpop.f32.mrb[0].mxu0
  %6342 = vmatprep.mubr.f32.mxu0 0.0
  %6343 = vmatmul.mubr.f32.gmra.mrb[0].mxu0 %v6271
  %v6344 = vpop.f32.mrb[0].mxu0
  %v6345 = vadd.f32 0.0, %v6344
  %v6346 = vpop.f32.mrb[0].mxu0
  %6347 = vdwg.mxu0
  %6348 = vrot.lane.b32.xlu0 %v5723, 104
  %v6349 = vpop.permute.xlu0 %6348
  %6350 = vrot.lane.b32.xlu0 %v5728, 104
  %v6351 = vpop.permute.xlu0 %6350
  %6352 = vrot.lane.b32.xlu0 %v304, 40
  %v6353 = vpop.permute.xlu0 %6352
  %6354 = vrot.lane.b32.xlu0 %v309, 40
  %v6355 = vpop.permute.xlu0 %6354
  %v6356 = vsel %vm415, %v6349, 0
  %v6358 = vsel %vm415, %v6351, 0
  %v6360 = vsel %vm415, %v6353, 0
  %v6362 = vsel %vm415, %v6355, 0
  %6364 = vmatprep.subr.mxu0 0.0
  %6365 = vmatpush1.xpose.msra.mxu0 %v6360
  %6366 = vmatprep.subr.mxu0 0.0
  %6367 = vmatpush1.xpose.msra.mxu0 %v6362
  %6368 = vmatprep.subr.mxu0 0.0
  %6369 = vmatpush1.xpose.msra.mxu0 0.0
  %6370 = vmatprep.subr.mxu0 0.0
  %6371 = vmatpush1.xpose.msra.mxu0 0.0
  %6372 = vmatprep.subr.mxu0 0.0
  %6373 = vmatpush1.xpose.msra.mxu0 0.0
  %6374 = vmatprep.subr.mxu0 0.0
  %6375 = vmatpush1.xpose.msra.mxu0 0.0
  %6376 = vmatprep.subr.mxu0 0.0
  %6377 = vmatpush1.xpose.msra.mxu0 0.0
  %6378 = vmatprep.subr.mxu0 0.0
  %6379 = vmatpush1.xpose.msra.mxu0 0.0
  %6380 = vmatprep.subr.mxu0 0.0
  %6381 = vmatpush1.xpose.msra.mxu0 0.0
  %6382 = vmatprep.subr.mxu0 0.0
  %6383 = vmatpush1.xpose.msra.mxu0 0.0
  %6384 = vmatprep.subr.mxu0 0.0
  %6385 = vmatpush1.xpose.msra.mxu0 0.0
  %6386 = vmatprep.subr.mxu0 0.0
  %6387 = vmatpush1.xpose.msra.mxu0 0.0
  %6388 = vmatprep.subr.mxu0 0.0
  %6389 = vmatpush1.xpose.msra.mxu0 0.0
  %6390 = vmatprep.subr.mxu0 0.0
  %6391 = vmatpush1.xpose.msra.mxu0 0.0
  %6392 = vmatprep.subr.mxu0 0.0
  %6393 = vmatpush1.xpose.msra.mxu0 0.0
  %6394 = vmatprep.subr.mxu0 0.0
  %6395 = vmatpush1.xpose.msra.mxu0 0.0
  %6396 = vmatprep.subr.mxu0 0.0
  %6397 = vmatpush1.xpose.msra.mxu0 0.0
  %6398 = vmatprep.subr.mxu0 0.0
  %6399 = vmatpush1.xpose.msra.mxu0 0.0
  %6400 = vmatprep.subr.mxu0 0.0
  %6401 = vmatpush1.xpose.msra.mxu0 0.0
  %6402 = vmatprep.subr.mxu0 0.0
  %6403 = vmatpush1.xpose.msra.mxu0 0.0
  %6404 = vmatprep.subr.mxu0 0.0
  %6405 = vmatpush1.xpose.msra.mxu0 0.0
  %6406 = vmatprep.subr.mxu0 0.0
  %6407 = vmatpush1.xpose.msra.mxu0 0.0
  %6408 = vmatprep.subr.mxu0 0.0
  %6409 = vmatpush1.xpose.msra.mxu0 0.0
  %6410 = vmatprep.subr.mxu0 0.0
  %6411 = vmatpush1.xpose.msra.mxu0 0.0
  %6412 = vmatprep.subr.mxu0 0.0
  %6413 = vmatpush1.xpose.msra.mxu0 0.0
  %6414 = vmatprep.subr.mxu0 0.0
  %6415 = vmatpush1.xpose.msra.mxu0 0.0
  %6416 = vmatprep.subr.mxu0 0.0
  %6417 = vmatpush1.xpose.msra.mxu0 0.0
  %6418 = vmatprep.subr.mxu0 0.0
  %6419 = vmatpush1.xpose.msra.mxu0 0.0
  %6420 = vmatprep.subr.mxu0 0.0
  %6421 = vmatpush1.xpose.msra.mxu0 0.0
  %6422 = vmatprep.subr.mxu0 0.0
  %6423 = vmatpush1.xpose.msra.mxu0 0.0
  %6424 = vmatprep.subr.mxu0 0.0
  %6425 = vmatpush1.xpose.msra.mxu0 0.0
  %6426 = vmatprep.subr.mxu0 0.0
  %6427 = vmatpush1.xpose.msra.mxu0 0.0
  %6428 = vmatprep.mubr.f32.mxu0 0.0
  %6429 = vmatmul.mubr.f32.gmra.mrb[0].mxu0 %v6356
  %v6430 = vpop.f32.mrb[0].mxu0
  %v6431 = vadd.f32 0.0, %v6430
  %v6432 = vpop.f32.mrb[0].mxu0
  %6433 = vmatprep.mubr.f32.mxu0 0.0
  %6434 = vmatmul.mubr.f32.gmra.mrb[0].mxu0 %v6358
  %v6435 = vpop.f32.mrb[0].mxu0
  %v6436 = vadd.f32 0.0, %v6435
  %v6437 = vpop.f32.mrb[0].mxu0
  %6438 = vdwg.mxu0
  %v6439 = vmul.f32 %v6431, 0.35355338
  %v6440 = vmul.f32 %v6436, 0.35355338
  %v6441 = vadd.f32 %v6439, %v215
  %v6442 = vadd.f32 %v6440, %v216
  %v6443 = vsel %vm106, %v6441, -inf
  %6444 = vmax.xlane.f32.xlu0 %v6443
  %v6445 = vpop.xlane.xlu0 %6444
  %v6446 = vsel %vm106, %v6442, -inf
  %6447 = vmax.xlane.f32.xlu0 %v6446
  %v6448 = vpop.xlane.xlu0 %6447
  %v6449 = vsub.f32 %v6441, %v6445
  %v6450 = vsub.f32 %v6442, %v6448
  %v6451 = vmul.f32 %v6449, 1.442695
  %v6452 = vpow.pop %v6451
  %v6453 = vmul.f32 %v6450, 1.442695
  %v6454 = vpow.pop %v6453
  %v6455 = vsel %vm106, %v6452, 0.0
  %6456 = vadd.xlane.f32.xlu0 %v6455
  %v6457 = vpop.xlane.xlu0 %6456
  %v6458 = vsel %vm106, %v6454, 0.0
  %6459 = vadd.xlane.f32.xlu0 %v6458
  %v6460 = vpop.xlane.xlu0 %6459
  %v6461 = vrcp.pop %v6457
  %v6462 = vmul.f32 %v6452, %v6461
  %v6463 = vrcp.pop %v6460
  %v6464 = vmul.f32 %v6454, %v6463
  %6465 = vrot.lane.b32.xlu0 %v304, 8
  %v6466 = vpop.permute.xlu0 %6465
  %6467 = vrot.lane.b32.xlu0 %v309, 8
  %v6468 = vpop.permute.xlu0 %6467
  %v6472 = vsel %vm106, %v6462, 0
  %v6475 = vsel %vm106, %v6464, 0
  %6477 = vmatprep.subr.mxu0 0.0
  %6478 = vmatpush1.msra.mxu0 %v6466
  %6479 = vmatprep.subr.mxu0 0.0
  %6480 = vmatpush1.msra.mxu0 %v6468
  %6481 = vmatprep.subr.mxu0 0.0
  %6482 = vmatpush1.msra.mxu0 0.0
  %6483 = vmatprep.subr.mxu0 0.0
  %6484 = vmatpush1.msra.mxu0 0.0
  %6485 = vmatprep.subr.mxu0 0.0
  %6486 = vmatpush1.msra.mxu0 0.0
  %6487 = vmatprep.subr.mxu0 0.0
  %6488 = vmatpush1.msra.mxu0 0.0
  %6489 = vmatprep.subr.mxu0 0.0
  %6490 = vmatpush1.msra.mxu0 0.0
  %6491 = vmatprep.subr.mxu0 0.0
  %6492 = vmatpush1.msra.mxu0 0.0
  %6493 = vmatprep.subr.mxu0 0.0
  %6494 = vmatpush1.msra.mxu0 0.0
  %6495 = vmatprep.subr.mxu0 0.0
  %6496 = vmatpush1.msra.mxu0 0.0
  %6497 = vmatprep.subr.mxu0 0.0
  %6498 = vmatpush1.msra.mxu0 0.0
  %6499 = vmatprep.subr.mxu0 0.0
  %6500 = vmatpush1.msra.mxu0 0.0
  %6501 = vmatprep.subr.mxu0 0.0
  %6502 = vmatpush1.msra.mxu0 0.0
  %6503 = vmatprep.subr.mxu0 0.0
  %6504 = vmatpush1.msra.mxu0 0.0
  %6505 = vmatprep.subr.mxu0 0.0
  %6506 = vmatpush1.msra.mxu0 0.0
  %6507 = vmatprep.subr.mxu0 0.0
  %6508 = vmatpush1.msra.mxu0 0.0
  %6509 = vmatprep.subr.mxu0 0.0
  %6510 = vmatpush1.msra.mxu0 0.0
  %6511 = vmatprep.subr.mxu0 0.0
  %6512 = vmatpush1.msra.mxu0 0.0
  %6513 = vmatprep.subr.mxu0 0.0
  %6514 = vmatpush1.msra.mxu0 0.0
  %6515 = vmatprep.subr.mxu0 0.0
  %6516 = vmatpush1.msra.mxu0 0.0
  %6517 = vmatprep.subr.mxu0 0.0
  %6518 = vmatpush1.msra.mxu0 0.0
  %6519 = vmatprep.subr.mxu0 0.0
  %6520 = vmatpush1.msra.mxu0 0.0
  %6521 = vmatprep.subr.mxu0 0.0
  %6522 = vmatpush1.msra.mxu0 0.0
  %6523 = vmatprep.subr.mxu0 0.0
  %6524 = vmatpush1.msra.mxu0 0.0
  %6525 = vmatprep.subr.mxu0 0.0
  %6526 = vmatpush1.msra.mxu0 0.0
  %6527 = vmatprep.subr.mxu0 0.0
  %6528 = vmatpush1.msra.mxu0 0.0
  %6529 = vmatprep.subr.mxu0 0.0
  %6530 = vmatpush1.msra.mxu0 0.0
  %6531 = vmatprep.subr.mxu0 0.0
  %6532 = vmatpush1.msra.mxu0 0.0
  %6533 = vmatprep.subr.mxu0 0.0
  %6534 = vmatpush1.msra.mxu0 0.0
  %6535 = vmatprep.subr.mxu0 0.0
  %6536 = vmatpush1.msra.mxu0 0.0
  %6537 = vmatprep.subr.mxu0 0.0
  %6538 = vmatpush1.msra.mxu0 0.0
  %6539 = vmatprep.subr.mxu0 0.0
  %6540 = vmatpush1.msra.mxu0 0.0
  %6541 = vmatprep.mubr.f32.mxu0 0.0
  %6542 = vmatmul.mubr.f32.gmra.mrb[0].mxu0 %v6472
  %v6543 = vpop.f32.mrb[0].mxu0
  %v6544 = vadd.f32 0.0, %v6543
  %v6545 = vpop.f32.mrb[0].mxu0
  %6546 = vmatprep.mubr.f32.mxu0 0.0
  %6547 = vmatmul.mubr.f32.gmra.mrb[0].mxu0 %v6475
  %v6548 = vpop.f32.mrb[0].mxu0
  %v6549 = vadd.f32 0.0, %v6548
  %v6550 = vpop.f32.mrb[0].mxu0
  %6551 = vdwg.mxu0
  %6554 = vrot.lane.b32.xlu0 %v6136, 8
  %v6555 = vpop.permute.xlu0 %6554
  %6556 = vrot.lane.b32.xlu0 %v6141, 8
  %v6557 = vpop.permute.xlu0 %6556
  %6562 = vrot.lane.b32.xlu0 %v6340, 16
  %v6563 = vpop.permute.xlu0 %6562
  %6564 = vrot.lane.b32.xlu0 %v6345, 16
  %v6565 = vpop.permute.xlu0 %6564
  %6570 = vrot.lane.b32.xlu0 %v6544, 24
  %v6571 = vpop.permute.xlu0 %6570
  %6572 = vrot.lane.b32.xlu0 %v6549, 24
  %v6573 = vpop.permute.xlu0 %6572
  %v6576 = vsel %vm415, %v5932, %v6555
  %v6577 = vsel %vm415, %v5937, %v6557
  %v6578 = vsel %vm106, %v6576, %v6563
  %v6579 = vsel %vm106, %v6577, %v6565
  %v6580 = vsel %vm1252, %v6578, %v6571
  %v6581 = vsel %vm1252, %v6579, %v6573
  %v6583 = vlaneseq
  %v6584 = vshrl.u32 %v6583, 7
  %v6585 = vsub.s32 0, %v6584
  %v6586 = vrot.slane %v5737, %v6585
  %v6589 = vsel %vm230, %v6580, 0
  %v6592 = vsel %vm230, %v6581, 0
  %6594 = vmatprep.subr.mxu0 0.0
  %6595 = vmatpush1.msra.mxu0 %v5732
  %6596 = vmatprep.subr.mxu0 0.0
  %6597 = vmatpush1.msra.mxu0 %v5733
  %6598 = vmatprep.subr.mxu0 0.0
  %6599 = vmatpush1.msra.mxu0 %v5734
  %6600 = vmatprep.subr.mxu0 0.0
  %6601 = vmatpush1.msra.mxu0 %v5735
  %6602 = vmatprep.subr.mxu0 0.0
  %6603 = vmatpush1.msra.mxu0 0.0
  %6604 = vmatprep.subr.mxu0 0.0
  %6605 = vmatpush1.msra.mxu0 0.0
  %6606 = vmatprep.subr.mxu0 0.0
  %6607 = vmatpush1.msra.mxu0 0.0
  %6608 = vmatprep.subr.mxu0 0.0
  %6609 = vmatpush1.msra.mxu0 0.0
  %6610 = vmatprep.subr.mxu0 0.0
  %6611 = vmatpush1.msra.mxu0 0.0
  %6612 = vmatprep.subr.mxu0 0.0
  %6613 = vmatpush1.msra.mxu0 0.0
  %6614 = vmatprep.subr.mxu0 0.0
  %6615 = vmatpush1.msra.mxu0 0.0
  %6616 = vmatprep.subr.mxu0 0.0
  %6617 = vmatpush1.msra.mxu0 0.0
  %6618 = vmatprep.subr.mxu0 0.0
  %6619 = vmatpush1.msra.mxu0 0.0
  %6620 = vmatprep.subr.mxu0 0.0
  %6621 = vmatpush1.msra.mxu0 0.0
  %6622 = vmatprep.subr.mxu0 0.0
  %6623 = vmatpush1.msra.mxu0 0.0
  %6624 = vmatprep.subr.mxu0 0.0
  %6625 = vmatpush1.msra.mxu0 0.0
  %6626 = vmatprep.subr.mxu0 0.0
  %6627 = vmatpush1.msra.mxu0 0.0
  %6628 = vmatprep.subr.mxu0 0.0
  %6629 = vmatpush1.msra.mxu0 0.0
  %6630 = vmatprep.subr.mxu0 0.0
  %6631 = vmatpush1.msra.mxu0 0.0
  %6632 = vmatprep.subr.mxu0 0.0
  %6633 = vmatpush1.msra.mxu0 0.0
  %6634 = vmatprep.subr.mxu0 0.0
  %6635 = vmatpush1.msra.mxu0 0.0
  %6636 = vmatprep.subr.mxu0 0.0
  %6637 = vmatpush1.msra.mxu0 0.0
  %6638 = vmatprep.subr.mxu0 0.0
  %6639 = vmatpush1.msra.mxu0 0.0
  %6640 = vmatprep.subr.mxu0 0.0
  %6641 = vmatpush1.msra.mxu0 0.0
  %6642 = vmatprep.subr.mxu0 0.0
  %6643 = vmatpush1.msra.mxu0 0.0
  %6644 = vmatprep.subr.mxu0 0.0
  %6645 = vmatpush1.msra.mxu0 0.0
  %6646 = vmatprep.subr.mxu0 0.0
  %6647 = vmatpush1.msra.mxu0 0.0
  %6648 = vmatprep.subr.mxu0 0.0
  %6649 = vmatpush1.msra.mxu0 0.0
  %6650 = vmatprep.subr.mxu0 0.0
  %6651 = vmatpush1.msra.mxu0 0.0
  %6652 = vmatprep.subr.mxu0 0.0
  %6653 = vmatpush1.msra.mxu0 0.0
  %6654 = vmatprep.subr.mxu0 0.0
  %6655 = vmatpush1.msra.mxu0 0.0
  %6656 = vmatprep.subr.mxu0 0.0
  %6657 = vmatpush1.msra.mxu0 0.0
  %6658 = vmatprep.mubr.f32.mxu0 0.0
  %6659 = vmatmul.mubr.f32.gmra.mrb[0].mxu0 %v6589
  %v6660 = vpop.f32.mrb[0].mxu0
  %v6661 = vadd.f32 %v6586, %v6660
  %v6662 = vpop.f32.mrb[0].mxu0
  %6663 = vmatprep.mubr.f32.mxu0 0.0
  %6664 = vmatmul.mubr.f32.gmra.mrb[0].mxu0 %v6592
  %v6665 = vpop.f32.mrb[0].mxu0
  %v6666 = vadd.f32 %v6586, %v6665
  %v6667 = vpop.f32.mrb[0].mxu0
  %6668 = vdwg.mxu0
  %v6669 = vadd.f32 %v5635, %v6661
  %v6670 = vadd.f32 %v5636, %v6666
  %s6671 = scalar_lea.vmem %s17, 1
  %v6672 = vld [vmem:[%s6671] sm:$0x1]
  %s6673 = scalar_lea.vmem %s18, 1
  %v6674 = vld [vmem:[%s6673] sm:$0x1]
  %v6675 = vsel %vm230, %v6669, 0.0
  %6676 = vadd.xlane.f32.xlu0 %v6675
  %v6677 = vpop.xlane.xlu0 %6676
  %v6678 = vsel %vm230, %v6670, 0.0
  %6679 = vadd.xlane.f32.xlu0 %v6678
  %v6680 = vpop.xlane.xlu0 %6679
  %v6681 = vmul.f32 %v6677, %v1352
  %v6682 = vmul.f32 %v6680, %v1352
  %v6683 = vsub.f32 %v6669, %v6681
  %v6684 = vsub.f32 %v6670, %v6682
  %v6685 = vmul.f32 %v6683, %v6683
  %v6686 = vmul.f32 %v6684, %v6684
  %v6687 = vsel %vm230, %v6685, 0.0
  %6688 = vadd.xlane.f32.xlu0 %v6687
  %v6689 = vpop.xlane.xlu0 %6688
  %v6690 = vsel %vm230, %v6686, 0.0
  %6691 = vadd.xlane.f32.xlu0 %v6690
  %v6692 = vpop.xlane.xlu0 %6691
  %v6693 = vmul.f32 %v6689, %v1352
  %v6694 = vmul.f32 %v6692, %v1352
  %v6695 = vadd.f32 %v6693, 1e-05
  %v6696 = vadd.f32 %v6694, 1e-05
  %v6697 = vrsqrt.pop %v6695
  %v6698 = vrsqrt.pop %v6696
  %v6699 = vmul.f32 %v6683, %v6697
  %v6700 = vmul.f32 %v6684, %v6698
  %v6702 = vlaneseq
  %v6703 = vshrl.u32 %v6702, 7
  %v6704 = vsub.s32 0, %v6703
  %v6705 = vrot.slane %v6672, %v6704
  %v6707 = vmul.f32 %v6699, %v6705
  %v6708 = vmul.f32 %v6700, %v6705
  %v6710 = vlaneseq
  %v6711 = vshrl.u32 %v6710, 7
  %v6712 = vsub.s32 0, %v6711
  %v6713 = vrot.slane %v6674, %v6712
  %v6715 = vadd.f32 %v6707, %v6713
  %v6716 = vadd.f32 %v6708, %v6713
  %v6717 = vpack.c.bf16 %v6716, %v6715
  %s6718 = scalar_lea.vmem %s21, 256
  %v6719 = vld [vmem:[%s6718] sm:$0xff]
  %v6720 = vld [vmem:[%s6718 + $0x8] sm:$0xff]
  %v6721 = vld [vmem:[%s6718 + $0x10] sm:$0xff]
  %v6722 = vld [vmem:[%s6718 + $0x18] sm:$0xff]
  %v6723 = vld [vmem:[%s6718 + $0x20] sm:$0xff]
  %v6724 = vld [vmem:[%s6718 + $0x28] sm:$0xff]
  %v6725 = vld [vmem:[%s6718 + $0x30] sm:$0xff]
  %v6726 = vld [vmem:[%s6718 + $0x38] sm:$0xff]
  %s6727 = scalar_lea.vmem %s22, 16
  %v6728 = vld [vmem:[%s6727] sm:$0xf]
  %v6730 = vlaneseq
  %v6731 = vshrl.u32 %v6730, 7
  %v6732 = vsub.s32 0, %v6731
  %v6733 = vrot.slane %v6728, %v6732
  %v6734 = vlaneseq
  %v6735 = vshrl.u32 %v6734, 7
  %v6736 = vsub.s32 1, %v6735
  %v6737 = vrot.slane %v6728, %v6736
  %v6738 = vlaneseq
  %v6739 = vshrl.u32 %v6738, 7
  %v6740 = vsub.s32 2, %v6739
  %v6741 = vrot.slane %v6728, %v6740
  %v6742 = vlaneseq
  %v6743 = vshrl.u32 %v6742, 7
  %v6744 = vsub.s32 3, %v6743
  %v6745 = vrot.slane %v6728, %v6744
  %v6758 = vunpack.c.l.b16 %v6719
  %v6759 = vunpack.c.h.b16 %v6719
  %v6760 = vunpack.c.l.b16 %v6720
  %v6761 = vunpack.c.h.b16 %v6720
  %v6762 = vunpack.c.l.b16 %v6721
  %v6763 = vunpack.c.h.b16 %v6721
  %v6764 = vunpack.c.l.b16 %v6722
  %v6765 = vunpack.c.h.b16 %v6722
  %v6766 = vunpack.c.l.b16 %v6723
  %v6767 = vunpack.c.h.b16 %v6723
  %v6768 = vunpack.c.l.b16 %v6724
  %v6769 = vunpack.c.h.b16 %v6724
  %v6770 = vunpack.c.l.b16 %v6725
  %v6771 = vunpack.c.h.b16 %v6725
  %v6772 = vunpack.c.l.b16 %v6726
  %v6773 = vunpack.c.h.b16 %v6726
  %v6774 = vpack.c.b16 %v6762, %v6758
  %v6775 = vpack.c.b16 %v6763, %v6759
  %v6776 = vpack.c.b16 %v6764, %v6760
  %v6777 = vpack.c.b16 %v6765, %v6761
  %v6778 = vpack.c.b16 %v6770, %v6766
  %v6779 = vpack.c.b16 %v6771, %v6767
  %v6780 = vpack.c.b16 %v6772, %v6768
  %v6781 = vpack.c.b16 %v6773, %v6769
  %v6791 = vsel %vm230, %v6717, 0
  %6793 = vmatprep.subr.bf16.mxu0 %v6775
  %6794 = vmatpush1.bf16.msra.mxu0 %v6774
  %6795 = vmatprep.subr.bf16.mxu0 %v6779
  %6796 = vmatpush1.bf16.msra.mxu0 %v6778
  %6797 = vmatprep.subr.bf16.mxu0 0
  %6798 = vmatpush1.bf16.msra.mxu0 0
  %6799 = vmatprep.subr.bf16.mxu0 0
  %6800 = vmatpush1.bf16.msra.mxu0 0
  %6801 = vmatprep.subr.bf16.mxu0 0
  %6802 = vmatpush1.bf16.msra.mxu0 0
  %6803 = vmatprep.subr.bf16.mxu0 0
  %6804 = vmatpush1.bf16.msra.mxu0 0
  %6805 = vmatprep.subr.bf16.mxu0 0
  %6806 = vmatpush1.bf16.msra.mxu0 0
  %6807 = vmatprep.subr.bf16.mxu0 0
  %6808 = vmatpush1.bf16.msra.mxu0 0
  %6809 = vmatprep.subr.bf16.mxu0 0
  %6810 = vmatpush1.bf16.msra.mxu0 0
  %6811 = vmatprep.subr.bf16.mxu0 0
  %6812 = vmatpush1.bf16.msra.mxu0 0
  %6813 = vmatprep.subr.bf16.mxu0 0
  %6814 = vmatpush1.bf16.msra.mxu0 0
  %6815 = vmatprep.subr.bf16.mxu0 0
  %6816 = vmatpush1.bf16.msra.mxu0 0
  %6817 = vmatprep.subr.bf16.mxu0 0
  %6818 = vmatpush1.bf16.msra.mxu0 0
  %6819 = vmatprep.subr.bf16.mxu0 0
  %6820 = vmatpush1.bf16.msra.mxu0 0
  %6821 = vmatprep.subr.bf16.mxu0 0
  %6822 = vmatpush1.bf16.msra.mxu0 0
  %6823 = vmatprep.subr.bf16.mxu0 0
  %6824 = vmatpush1.bf16.msra.mxu0 0
  %6825 = vmatprep.mubr.bf16.mxu0 0
  %6826 = vmatmul.mubr.bf16.gmra.mrb[0].mxu0 %v6791
  %v6827 = vpop.f32.mrb[0].mxu0
  %v6828 = vadd.f32 %v6733, %v6827
  %v6829 = vpop.f32.mrb[0].mxu0
  %v6830 = vadd.f32 %v6737, %v6829
  %v6831 = vpop.f32.mrb[0].mxu0
  %v6832 = vadd.f32 %v6733, %v6831
  %v6833 = vpop.f32.mrb[0].mxu0
  %v6834 = vadd.f32 %v6737, %v6833
  %6835 = vdwg.mxu0
  %6836 = vmatprep.subr.bf16.mxu0 %v6777
  %6837 = vmatpush1.bf16.msra.mxu0 %v6776
  %6838 = vmatprep.subr.bf16.mxu0 %v6781
  %6839 = vmatpush1.bf16.msra.mxu0 %v6780
  %6840 = vmatprep.subr.bf16.mxu0 0
  %6841 = vmatpush1.bf16.msra.mxu0 0
  %6842 = vmatprep.subr.bf16.mxu0 0
  %6843 = vmatpush1.bf16.msra.mxu0 0
  %6844 = vmatprep.subr.bf16.mxu0 0
  %6845 = vmatpush1.bf16.msra.mxu0 0
  %6846 = vmatprep.subr.bf16.mxu0 0
  %6847 = vmatpush1.bf16.msra.mxu0 0
  %6848 = vmatprep.subr.bf16.mxu0 0
  %6849 = vmatpush1.bf16.msra.mxu0 0
  %6850 = vmatprep.subr.bf16.mxu0 0
  %6851 = vmatpush1.bf16.msra.mxu0 0
  %6852 = vmatprep.subr.bf16.mxu0 0
  %6853 = vmatpush1.bf16.msra.mxu0 0
  %6854 = vmatprep.subr.bf16.mxu0 0
  %6855 = vmatpush1.bf16.msra.mxu0 0
  %6856 = vmatprep.subr.bf16.mxu0 0
  %6857 = vmatpush1.bf16.msra.mxu0 0
  %6858 = vmatprep.subr.bf16.mxu0 0
  %6859 = vmatpush1.bf16.msra.mxu0 0
  %6860 = vmatprep.subr.bf16.mxu0 0
  %6861 = vmatpush1.bf16.msra.mxu0 0
  %6862 = vmatprep.subr.bf16.mxu0 0
  %6863 = vmatpush1.bf16.msra.mxu0 0
  %6864 = vmatprep.subr.bf16.mxu0 0
  %6865 = vmatpush1.bf16.msra.mxu0 0
  %6866 = vmatprep.subr.bf16.mxu0 0
  %6867 = vmatpush1.bf16.msra.mxu0 0
  %6868 = vmatprep.mubr.bf16.mxu0 0
  %6869 = vmatmul.mubr.bf16.gmra.mrb[0].mxu0 %v6791
  %v6870 = vpop.f32.mrb[0].mxu0
  %v6871 = vadd.f32 %v6741, %v6870
  %v6872 = vpop.f32.mrb[0].mxu0
  %v6873 = vadd.f32 %v6745, %v6872
  %v6874 = vpop.f32.mrb[0].mxu0
  %v6875 = vadd.f32 %v6741, %v6874
  %v6876 = vpop.f32.mrb[0].mxu0
  %v6877 = vadd.f32 %v6745, %v6876
  %6878 = vdwg.mxu0
  %v6879 = vmax.f32 %v6828, 0.0
  %v6880 = vmax.f32 %v6830, 0.0
  %v6881 = vmax.f32 %v6871, 0.0
  %v6882 = vmax.f32 %v6873, 0.0
  %v6883 = vmax.f32 %v6832, 0.0
  %v6884 = vmax.f32 %v6834, 0.0
  %v6885 = vmax.f32 %v6875, 0.0
  %v6886 = vmax.f32 %v6877, 0.0
  %v6887 = vpack.c.bf16 %v6883, %v6879
  %v6888 = vpack.c.bf16 %v6884, %v6880
  %v6889 = vpack.c.bf16 %v6885, %v6881
  %v6890 = vpack.c.bf16 %v6886, %v6882
  %s6891 = scalar_lea.vmem %s23, 1024
  %v6892 = vld [vmem:[%s6891] sm:$0xf]
  %v6893 = vld [vmem:[%s6891 + $0x4] sm:$0xf]
  %v6894 = vld [vmem:[%s6891 + $0x8] sm:$0xf]
  %v6895 = vld [vmem:[%s6891 + $0xc] sm:$0xf]
  %v6896 = vld [vmem:[%s6891 + $0x10] sm:$0xf]
  %v6897 = vld [vmem:[%s6891 + $0x14] sm:$0xf]
  %v6898 = vld [vmem:[%s6891 + $0x18] sm:$0xf]
  %v6899 = vld [vmem:[%s6891 + $0x1c] sm:$0xf]
  %v6900 = vld [vmem:[%s6891 + $0x20] sm:$0xf]
  %v6901 = vld [vmem:[%s6891 + $0x24] sm:$0xf]
  %v6902 = vld [vmem:[%s6891 + $0x28] sm:$0xf]
  %v6903 = vld [vmem:[%s6891 + $0x2c] sm:$0xf]
  %v6904 = vld [vmem:[%s6891 + $0x30] sm:$0xf]
  %v6905 = vld [vmem:[%s6891 + $0x34] sm:$0xf]
  %v6906 = vld [vmem:[%s6891 + $0x38] sm:$0xf]
  %v6907 = vld [vmem:[%s6891 + $0x3c] sm:$0xf]
  %v6908 = vld [vmem:[%s6891 + $0x40] sm:$0xf]
  %v6909 = vld [vmem:[%s6891 + $0x44] sm:$0xf]
  %v6910 = vld [vmem:[%s6891 + $0x48] sm:$0xf]
  %v6911 = vld [vmem:[%s6891 + $0x4c] sm:$0xf]
  %v6912 = vld [vmem:[%s6891 + $0x50] sm:$0xf]
  %v6913 = vld [vmem:[%s6891 + $0x54] sm:$0xf]
  %v6914 = vld [vmem:[%s6891 + $0x58] sm:$0xf]
  %v6915 = vld [vmem:[%s6891 + $0x5c] sm:$0xf]
  %v6916 = vld [vmem:[%s6891 + $0x60] sm:$0xf]
  %v6917 = vld [vmem:[%s6891 + $0x64] sm:$0xf]
  %v6918 = vld [vmem:[%s6891 + $0x68] sm:$0xf]
  %v6919 = vld [vmem:[%s6891 + $0x6c] sm:$0xf]
  %v6920 = vld [vmem:[%s6891 + $0x70] sm:$0xf]
  %v6921 = vld [vmem:[%s6891 + $0x74] sm:$0xf]
  %v6922 = vld [vmem:[%s6891 + $0x78] sm:$0xf]
  %v6923 = vld [vmem:[%s6891 + $0x7c] sm:$0xf]
  %v6924 = vld [vmem:[%s6891 + $0x80] sm:$0xf]
  %v6925 = vld [vmem:[%s6891 + $0x84] sm:$0xf]
  %v6926 = vld [vmem:[%s6891 + $0x88] sm:$0xf]
  %v6927 = vld [vmem:[%s6891 + $0x8c] sm:$0xf]
  %v6928 = vld [vmem:[%s6891 + $0x90] sm:$0xf]
  %v6929 = vld [vmem:[%s6891 + $0x94] sm:$0xf]
  %v6930 = vld [vmem:[%s6891 + $0x98] sm:$0xf]
  %v6931 = vld [vmem:[%s6891 + $0x9c] sm:$0xf]
  %v6932 = vld [vmem:[%s6891 + $0xa0] sm:$0xf]
  %v6933 = vld [vmem:[%s6891 + $0xa4] sm:$0xf]
  %v6934 = vld [vmem:[%s6891 + $0xa8] sm:$0xf]
  %v6935 = vld [vmem:[%s6891 + $0xac] sm:$0xf]
  %v6936 = vld [vmem:[%s6891 + $0xb0] sm:$0xf]
  %v6937 = vld [vmem:[%s6891 + $0xb4] sm:$0xf]
  %v6938 = vld [vmem:[%s6891 + $0xb8] sm:$0xf]
  %v6939 = vld [vmem:[%s6891 + $0xbc] sm:$0xf]
  %v6940 = vld [vmem:[%s6891 + $0xc0] sm:$0xf]
  %v6941 = vld [vmem:[%s6891 + $0xc4] sm:$0xf]
  %v6942 = vld [vmem:[%s6891 + $0xc8] sm:$0xf]
  %v6943 = vld [vmem:[%s6891 + $0xcc] sm:$0xf]
  %v6944 = vld [vmem:[%s6891 + $0xd0] sm:$0xf]
  %v6945 = vld [vmem:[%s6891 + $0xd4] sm:$0xf]
  %v6946 = vld [vmem:[%s6891 + $0xd8] sm:$0xf]
  %v6947 = vld [vmem:[%s6891 + $0xdc] sm:$0xf]
  %v6948 = vld [vmem:[%s6891 + $0xe0] sm:$0xf]
  %v6949 = vld [vmem:[%s6891 + $0xe4] sm:$0xf]
  %v6950 = vld [vmem:[%s6891 + $0xe8] sm:$0xf]
  %v6951 = vld [vmem:[%s6891 + $0xec] sm:$0xf]
  %v6952 = vld [vmem:[%s6891 + $0xf0] sm:$0xf]
  %v6953 = vld [vmem:[%s6891 + $0xf4] sm:$0xf]
  %v6954 = vld [vmem:[%s6891 + $0xf8] sm:$0xf]
  %v6955 = vld [vmem:[%s6891 + $0xfc] sm:$0xf]
  %s6956 = scalar_lea.vmem %s21, 320
  %v6957 = vld [vmem:[%s6956] sm:$0xff]
  %v6958 = vld [vmem:[%s6956 + $0x8] sm:$0xff]
  %v6959 = vld [vmem:[%s6956 + $0x10] sm:$0xff]
  %v6960 = vld [vmem:[%s6956 + $0x18] sm:$0xff]
  %v6961 = vld [vmem:[%s6956 + $0x20] sm:$0xff]
  %v6962 = vld [vmem:[%s6956 + $0x28] sm:$0xff]
  %v6963 = vld [vmem:[%s6956 + $0x30] sm:$0xff]
  %v6964 = vld [vmem:[%s6956 + $0x38] sm:$0xff]
  %s6965 = scalar_lea.vmem %s22, 20
  %v6966 = vld [vmem:[%s6965] sm:$0xf]
  %v6968 = vlaneseq
  %v6969 = vshrl.u32 %v6968, 7
  %v6970 = vsub.s32 0, %v6969
  %v6971 = vrot.slane %v6966, %v6970
  %v6972 = vlaneseq
  %v6973 = vshrl.u32 %v6972, 7
  %v6974 = vsub.s32 1, %v6973
  %v6975 = vrot.slane %v6966, %v6974
  %v6976 = vlaneseq
  %v6977 = vshrl.u32 %v6976, 7
  %v6978 = vsub.s32 2, %v6977
  %v6979 = vrot.slane %v6966, %v6978
  %v6980 = vlaneseq
  %v6981 = vshrl.u32 %v6980, 7
  %v6982 = vsub.s32 3, %v6981
  %v6983 = vrot.slane %v6966, %v6982
  %v6996 = vunpack.c.l.b16 %v6957
  %v6997 = vunpack.c.h.b16 %v6957
  %v6998 = vunpack.c.l.b16 %v6958
  %v6999 = vunpack.c.h.b16 %v6958
  %v7000 = vunpack.c.l.b16 %v6959
  %v7001 = vunpack.c.h.b16 %v6959
  %v7002 = vunpack.c.l.b16 %v6960
  %v7003 = vunpack.c.h.b16 %v6960
  %v7004 = vunpack.c.l.b16 %v6961
  %v7005 = vunpack.c.h.b16 %v6961
  %v7006 = vunpack.c.l.b16 %v6962
  %v7007 = vunpack.c.h.b16 %v6962
  %v7008 = vunpack.c.l.b16 %v6963
  %v7009 = vunpack.c.h.b16 %v6963
  %v7010 = vunpack.c.l.b16 %v6964
  %v7011 = vunpack.c.h.b16 %v6964
  %v7012 = vpack.c.b16 %v7000, %v6996
  %v7013 = vpack.c.b16 %v7001, %v6997
  %v7014 = vpack.c.b16 %v7002, %v6998
  %v7015 = vpack.c.b16 %v7003, %v6999
  %v7016 = vpack.c.b16 %v7008, %v7004
  %v7017 = vpack.c.b16 %v7009, %v7005
  %v7018 = vpack.c.b16 %v7010, %v7006
  %v7019 = vpack.c.b16 %v7011, %v7007
  %7028 = vmatprep.subr.bf16.mxu0 %v7013
  %7029 = vmatpush1.bf16.msra.mxu0 %v7012
  %7030 = vmatprep.subr.bf16.mxu0 %v7017
  %7031 = vmatpush1.bf16.msra.mxu0 %v7016
  %7032 = vmatprep.subr.bf16.mxu0 0
  %7033 = vmatpush1.bf16.msra.mxu0 0
  %7034 = vmatprep.subr.bf16.mxu0 0
  %7035 = vmatpush1.bf16.msra.mxu0 0
  %7036 = vmatprep.subr.bf16.mxu0 0
  %7037 = vmatpush1.bf16.msra.mxu0 0
  %7038 = vmatprep.subr.bf16.mxu0 0
  %7039 = vmatpush1.bf16.msra.mxu0 0
  %7040 = vmatprep.subr.bf16.mxu0 0
  %7041 = vmatpush1.bf16.msra.mxu0 0
  %7042 = vmatprep.subr.bf16.mxu0 0
  %7043 = vmatpush1.bf16.msra.mxu0 0
  %7044 = vmatprep.subr.bf16.mxu0 0
  %7045 = vmatpush1.bf16.msra.mxu0 0
  %7046 = vmatprep.subr.bf16.mxu0 0
  %7047 = vmatpush1.bf16.msra.mxu0 0
  %7048 = vmatprep.subr.bf16.mxu0 0
  %7049 = vmatpush1.bf16.msra.mxu0 0
  %7050 = vmatprep.subr.bf16.mxu0 0
  %7051 = vmatpush1.bf16.msra.mxu0 0
  %7052 = vmatprep.subr.bf16.mxu0 0
  %7053 = vmatpush1.bf16.msra.mxu0 0
  %7054 = vmatprep.subr.bf16.mxu0 0
  %7055 = vmatpush1.bf16.msra.mxu0 0
  %7056 = vmatprep.subr.bf16.mxu0 0
  %7057 = vmatpush1.bf16.msra.mxu0 0
  %7058 = vmatprep.subr.bf16.mxu0 0
  %7059 = vmatpush1.bf16.msra.mxu0 0
  %7060 = vmatprep.mubr.bf16.mxu0 0
  %7061 = vmatmul.mubr.bf16.gmra.mrb[0].mxu0 %v6791
  %v7062 = vpop.f32.mrb[0].mxu0
  %v7063 = vadd.f32 %v6971, %v7062
  %v7064 = vpop.f32.mrb[0].mxu0
  %v7065 = vadd.f32 %v6975, %v7064
  %v7066 = vpop.f32.mrb[0].mxu0
  %v7067 = vadd.f32 %v6971, %v7066
  %v7068 = vpop.f32.mrb[0].mxu0
  %v7069 = vadd.f32 %v6975, %v7068
  %7070 = vdwg.mxu0
  %7071 = vmatprep.subr.bf16.mxu0 %v7015
  %7072 = vmatpush1.bf16.msra.mxu0 %v7014
  %7073 = vmatprep.subr.bf16.mxu0 %v7019
  %7074 = vmatpush1.bf16.msra.mxu0 %v7018
  %7075 = vmatprep.subr.bf16.mxu0 0
  %7076 = vmatpush1.bf16.msra.mxu0 0
  %7077 = vmatprep.subr.bf16.mxu0 0
  %7078 = vmatpush1.bf16.msra.mxu0 0
  %7079 = vmatprep.subr.bf16.mxu0 0
  %7080 = vmatpush1.bf16.msra.mxu0 0
  %7081 = vmatprep.subr.bf16.mxu0 0
  %7082 = vmatpush1.bf16.msra.mxu0 0
  %7083 = vmatprep.subr.bf16.mxu0 0
  %7084 = vmatpush1.bf16.msra.mxu0 0
  %7085 = vmatprep.subr.bf16.mxu0 0
  %7086 = vmatpush1.bf16.msra.mxu0 0
  %7087 = vmatprep.subr.bf16.mxu0 0
  %7088 = vmatpush1.bf16.msra.mxu0 0
  %7089 = vmatprep.subr.bf16.mxu0 0
  %7090 = vmatpush1.bf16.msra.mxu0 0
  %7091 = vmatprep.subr.bf16.mxu0 0
  %7092 = vmatpush1.bf16.msra.mxu0 0
  %7093 = vmatprep.subr.bf16.mxu0 0
  %7094 = vmatpush1.bf16.msra.mxu0 0
  %7095 = vmatprep.subr.bf16.mxu0 0
  %7096 = vmatpush1.bf16.msra.mxu0 0
  %7097 = vmatprep.subr.bf16.mxu0 0
  %7098 = vmatpush1.bf16.msra.mxu0 0
  %7099 = vmatprep.subr.bf16.mxu0 0
  %7100 = vmatpush1.bf16.msra.mxu0 0
  %7101 = vmatprep.subr.bf16.mxu0 0
  %7102 = vmatpush1.bf16.msra.mxu0 0
  %7103 = vmatprep.mubr.bf16.mxu0 0
  %7104 = vmatmul.mubr.bf16.gmra.mrb[0].mxu0 %v6791
  %v7105 = vpop.f32.mrb[0].mxu0
  %v7106 = vadd.f32 %v6979, %v7105
  %v7107 = vpop.f32.mrb[0].mxu0
  %v7108 = vadd.f32 %v6983, %v7107
  %v7109 = vpop.f32.mrb[0].mxu0
  %v7110 = vadd.f32 %v6979, %v7109
  %v7111 = vpop.f32.mrb[0].mxu0
  %v7112 = vadd.f32 %v6983, %v7111
  %7113 = vdwg.mxu0
  %v7114 = vmax.f32 %v7063, 0.0
  %v7115 = vmax.f32 %v7065, 0.0
  %v7116 = vmax.f32 %v7106, 0.0
  %v7117 = vmax.f32 %v7108, 0.0
  %v7118 = vmax.f32 %v7067, 0.0
  %v7119 = vmax.f32 %v7069, 0.0
  %v7120 = vmax.f32 %v7110, 0.0
  %v7121 = vmax.f32 %v7112, 0.0
  %v7122 = vpack.c.bf16 %v7118, %v7114
  %v7123 = vpack.c.bf16 %v7119, %v7115
  %v7124 = vpack.c.bf16 %v7120, %v7116
  %v7125 = vpack.c.bf16 %v7121, %v7117
  %s7126 = scalar_lea.vmem %s23, 1280
  %v7127 = vld [vmem:[%s7126] sm:$0xf]
  %v7128 = vld [vmem:[%s7126 + $0x4] sm:$0xf]
  %v7129 = vld [vmem:[%s7126 + $0x8] sm:$0xf]
  %v7130 = vld [vmem:[%s7126 + $0xc] sm:$0xf]
  %v7131 = vld [vmem:[%s7126 + $0x10] sm:$0xf]
  %v7132 = vld [vmem:[%s7126 + $0x14] sm:$0xf]
  %v7133 = vld [vmem:[%s7126 + $0x18] sm:$0xf]
  %v7134 = vld [vmem:[%s7126 + $0x1c] sm:$0xf]
  %v7135 = vld [vmem:[%s7126 + $0x20] sm:$0xf]
  %v7136 = vld [vmem:[%s7126 + $0x24] sm:$0xf]
  %v7137 = vld [vmem:[%s7126 + $0x28] sm:$0xf]
  %v7138 = vld [vmem:[%s7126 + $0x2c] sm:$0xf]
  %v7139 = vld [vmem:[%s7126 + $0x30] sm:$0xf]
  %v7140 = vld [vmem:[%s7126 + $0x34] sm:$0xf]
  %v7141 = vld [vmem:[%s7126 + $0x38] sm:$0xf]
  %v7142 = vld [vmem:[%s7126 + $0x3c] sm:$0xf]
  %v7143 = vld [vmem:[%s7126 + $0x40] sm:$0xf]
  %v7144 = vld [vmem:[%s7126 + $0x44] sm:$0xf]
  %v7145 = vld [vmem:[%s7126 + $0x48] sm:$0xf]
  %v7146 = vld [vmem:[%s7126 + $0x4c] sm:$0xf]
  %v7147 = vld [vmem:[%s7126 + $0x50] sm:$0xf]
  %v7148 = vld [vmem:[%s7126 + $0x54] sm:$0xf]
  %v7149 = vld [vmem:[%s7126 + $0x58] sm:$0xf]
  %v7150 = vld [vmem:[%s7126 + $0x5c] sm:$0xf]
  %v7151 = vld [vmem:[%s7126 + $0x60] sm:$0xf]
  %v7152 = vld [vmem:[%s7126 + $0x64] sm:$0xf]
  %v7153 = vld [vmem:[%s7126 + $0x68] sm:$0xf]
  %v7154 = vld [vmem:[%s7126 + $0x6c] sm:$0xf]
  %v7155 = vld [vmem:[%s7126 + $0x70] sm:$0xf]
  %v7156 = vld [vmem:[%s7126 + $0x74] sm:$0xf]
  %v7157 = vld [vmem:[%s7126 + $0x78] sm:$0xf]
  %v7158 = vld [vmem:[%s7126 + $0x7c] sm:$0xf]
  %v7159 = vld [vmem:[%s7126 + $0x80] sm:$0xf]
  %v7160 = vld [vmem:[%s7126 + $0x84] sm:$0xf]
  %v7161 = vld [vmem:[%s7126 + $0x88] sm:$0xf]
  %v7162 = vld [vmem:[%s7126 + $0x8c] sm:$0xf]
  %v7163 = vld [vmem:[%s7126 + $0x90] sm:$0xf]
  %v7164 = vld [vmem:[%s7126 + $0x94] sm:$0xf]
  %v7165 = vld [vmem:[%s7126 + $0x98] sm:$0xf]
  %v7166 = vld [vmem:[%s7126 + $0x9c] sm:$0xf]
  %v7167 = vld [vmem:[%s7126 + $0xa0] sm:$0xf]
  %v7168 = vld [vmem:[%s7126 + $0xa4] sm:$0xf]
  %v7169 = vld [vmem:[%s7126 + $0xa8] sm:$0xf]
  %v7170 = vld [vmem:[%s7126 + $0xac] sm:$0xf]
  %v7171 = vld [vmem:[%s7126 + $0xb0] sm:$0xf]
  %v7172 = vld [vmem:[%s7126 + $0xb4] sm:$0xf]
  %v7173 = vld [vmem:[%s7126 + $0xb8] sm:$0xf]
  %v7174 = vld [vmem:[%s7126 + $0xbc] sm:$0xf]
  %v7175 = vld [vmem:[%s7126 + $0xc0] sm:$0xf]
  %v7176 = vld [vmem:[%s7126 + $0xc4] sm:$0xf]
  %v7177 = vld [vmem:[%s7126 + $0xc8] sm:$0xf]
  %v7178 = vld [vmem:[%s7126 + $0xcc] sm:$0xf]
  %v7179 = vld [vmem:[%s7126 + $0xd0] sm:$0xf]
  %v7180 = vld [vmem:[%s7126 + $0xd4] sm:$0xf]
  %v7181 = vld [vmem:[%s7126 + $0xd8] sm:$0xf]
  %v7182 = vld [vmem:[%s7126 + $0xdc] sm:$0xf]
  %v7183 = vld [vmem:[%s7126 + $0xe0] sm:$0xf]
  %v7184 = vld [vmem:[%s7126 + $0xe4] sm:$0xf]
  %v7185 = vld [vmem:[%s7126 + $0xe8] sm:$0xf]
  %v7186 = vld [vmem:[%s7126 + $0xec] sm:$0xf]
  %v7187 = vld [vmem:[%s7126 + $0xf0] sm:$0xf]
  %v7188 = vld [vmem:[%s7126 + $0xf4] sm:$0xf]
  %v7189 = vld [vmem:[%s7126 + $0xf8] sm:$0xf]
  %v7190 = vld [vmem:[%s7126 + $0xfc] sm:$0xf]
  %v7255 = vunpack.c.l.b16 %v7127
  %v7256 = vunpack.c.l.b16 %v7128
  %v7257 = vunpack.c.l.b16 %v7129
  %v7258 = vunpack.c.l.b16 %v7130
  %v7259 = vunpack.c.l.b16 %v7131
  %v7260 = vunpack.c.l.b16 %v7132
  %v7261 = vunpack.c.l.b16 %v7133
  %v7262 = vunpack.c.l.b16 %v7134
  %v7263 = vunpack.c.l.b16 %v7135
  %v7264 = vunpack.c.l.b16 %v7136
  %v7265 = vunpack.c.l.b16 %v7137
  %v7266 = vunpack.c.l.b16 %v7138
  %v7267 = vunpack.c.l.b16 %v7139
  %v7268 = vunpack.c.l.b16 %v7140
  %v7269 = vunpack.c.l.b16 %v7141
  %v7270 = vunpack.c.l.b16 %v7142
  %v7271 = vunpack.c.l.b16 %v7143
  %v7272 = vunpack.c.l.b16 %v7144
  %v7273 = vunpack.c.l.b16 %v7145
  %v7274 = vunpack.c.l.b16 %v7146
  %v7275 = vunpack.c.l.b16 %v7147
  %v7276 = vunpack.c.l.b16 %v7148
  %v7277 = vunpack.c.l.b16 %v7149
  %v7278 = vunpack.c.l.b16 %v7150
  %v7279 = vunpack.c.l.b16 %v7151
  %v7280 = vunpack.c.l.b16 %v7152
  %v7281 = vunpack.c.l.b16 %v7153
  %v7282 = vunpack.c.l.b16 %v7154
  %v7283 = vunpack.c.l.b16 %v7155
  %v7284 = vunpack.c.l.b16 %v7156
  %v7285 = vunpack.c.l.b16 %v7157
  %v7286 = vunpack.c.l.b16 %v7158
  %v7287 = vunpack.c.l.b16 %v7159
  %v7288 = vunpack.c.l.b16 %v7160
  %v7289 = vunpack.c.l.b16 %v7161
  %v7290 = vunpack.c.l.b16 %v7162
  %v7291 = vunpack.c.l.b16 %v7163
  %v7292 = vunpack.c.l.b16 %v7164
  %v7293 = vunpack.c.l.b16 %v7165
  %v7294 = vunpack.c.l.b16 %v7166
  %v7295 = vunpack.c.l.b16 %v7167
  %v7296 = vunpack.c.l.b16 %v7168
  %v7297 = vunpack.c.l.b16 %v7169
  %v7298 = vunpack.c.l.b16 %v7170
  %v7299 = vunpack.c.l.b16 %v7171
  %v7300 = vunpack.c.l.b16 %v7172
  %v7301 = vunpack.c.l.b16 %v7173
  %v7302 = vunpack.c.l.b16 %v7174
  %v7303 = vunpack.c.l.b16 %v7175
  %v7304 = vunpack.c.l.b16 %v7176
  %v7305 = vunpack.c.l.b16 %v7177
  %v7306 = vunpack.c.l.b16 %v7178
  %v7307 = vunpack.c.l.b16 %v7179
  %v7308 = vunpack.c.l.b16 %v7180
  %v7309 = vunpack.c.l.b16 %v7181
  %v7310 = vunpack.c.l.b16 %v7182
  %v7311 = vunpack.c.l.b16 %v7183
  %v7312 = vunpack.c.l.b16 %v7184
  %v7313 = vunpack.c.l.b16 %v7185
  %v7314 = vunpack.c.l.b16 %v7186
  %v7315 = vunpack.c.l.b16 %v7187
  %v7316 = vunpack.c.l.b16 %v7188
  %v7317 = vunpack.c.l.b16 %v7189
  %v7318 = vunpack.c.l.b16 %v7190
  %v7319 = vpack.c.b16 %v7256, %v7255
  %v7320 = vpack.c.b16 %v7258, %v7257
  %v7321 = vpack.c.b16 %v7260, %v7259
  %v7322 = vpack.c.b16 %v7262, %v7261
  %v7323 = vpack.c.b16 %v7264, %v7263
  %v7324 = vpack.c.b16 %v7266, %v7265
  %v7325 = vpack.c.b16 %v7268, %v7267
  %v7326 = vpack.c.b16 %v7270, %v7269
  %v7327 = vpack.c.b16 %v7272, %v7271
  %v7328 = vpack.c.b16 %v7274, %v7273
  %v7329 = vpack.c.b16 %v7276, %v7275
  %v7330 = vpack.c.b16 %v7278, %v7277
  %v7331 = vpack.c.b16 %v7280, %v7279
  %v7332 = vpack.c.b16 %v7282, %v7281
  %v7333 = vpack.c.b16 %v7284, %v7283
  %v7334 = vpack.c.b16 %v7286, %v7285
  %v7335 = vpack.c.b16 %v7288, %v7287
  %v7336 = vpack.c.b16 %v7290, %v7289
  %v7337 = vpack.c.b16 %v7292, %v7291
  %v7338 = vpack.c.b16 %v7294, %v7293
  %v7339 = vpack.c.b16 %v7296, %v7295
  %v7340 = vpack.c.b16 %v7298, %v7297
  %v7341 = vpack.c.b16 %v7300, %v7299
  %v7342 = vpack.c.b16 %v7302, %v7301
  %v7343 = vpack.c.b16 %v7304, %v7303
  %v7344 = vpack.c.b16 %v7306, %v7305
  %v7345 = vpack.c.b16 %v7308, %v7307
  %v7346 = vpack.c.b16 %v7310, %v7309
  %v7347 = vpack.c.b16 %v7312, %v7311
  %v7348 = vpack.c.b16 %v7314, %v7313
  %v7349 = vpack.c.b16 %v7316, %v7315
  %v7350 = vpack.c.b16 %v7318, %v7317
  %7383 = vmatprep.subr.bf16.mxu0 0
  %7384 = vmatpush1.bf16.msra.mxu0 %v7319
  %7385 = vmatprep.subr.bf16.mxu0 0
  %7386 = vmatpush1.bf16.msra.mxu0 %v7320
  %7387 = vmatprep.subr.bf16.mxu0 0
  %7388 = vmatpush1.bf16.msra.mxu0 %v7321
  %7389 = vmatprep.subr.bf16.mxu0 0
  %7390 = vmatpush1.bf16.msra.mxu0 %v7322
  %7391 = vmatprep.subr.bf16.mxu0 0
  %7392 = vmatpush1.bf16.msra.mxu0 %v7323
  %7393 = vmatprep.subr.bf16.mxu0 0
  %7394 = vmatpush1.bf16.msra.mxu0 %v7324
  %7395 = vmatprep.subr.bf16.mxu0 0
  %7396 = vmatpush1.bf16.msra.mxu0 %v7325
  %7397 = vmatprep.subr.bf16.mxu0 0
  %7398 = vmatpush1.bf16.msra.mxu0 %v7326
  %7399 = vmatprep.subr.bf16.mxu0 0
  %7400 = vmatpush1.bf16.msra.mxu0 %v7327
  %7401 = vmatprep.subr.bf16.mxu0 0
  %7402 = vmatpush1.bf16.msra.mxu0 %v7328
  %7403 = vmatprep.subr.bf16.mxu0 0
  %7404 = vmatpush1.bf16.msra.mxu0 %v7329
  %7405 = vmatprep.subr.bf16.mxu0 0
  %7406 = vmatpush1.bf16.msra.mxu0 %v7330
  %7407 = vmatprep.subr.bf16.mxu0 0
  %7408 = vmatpush1.bf16.msra.mxu0 %v7331
  %7409 = vmatprep.subr.bf16.mxu0 0
  %7410 = vmatpush1.bf16.msra.mxu0 %v7332
  %7411 = vmatprep.subr.bf16.mxu0 0
  %7412 = vmatpush1.bf16.msra.mxu0 %v7333
  %7413 = vmatprep.subr.bf16.mxu0 0
  %7414 = vmatpush1.bf16.msra.mxu0 %v7334
  %7415 = vmatprep.mubr.bf16.mxu0 %v7123
  %7416 = vmatmul.mubr.bf16.gmra.mrb[0].mxu0 %v7122
  %v7417 = vpop.f32.mrb[0].mxu0
  %v7418 = vadd.f32 0.0, %v7417
  %v7419 = vpop.f32.mrb[0].mxu0
  %v7420 = vpop.f32.mrb[0].mxu0
  %v7421 = vadd.f32 0.0, %v7420
  %v7422 = vpop.f32.mrb[0].mxu0
  %7423 = vdwg.mxu0
  %7424 = vmatprep.subr.bf16.mxu0 0
  %7425 = vmatpush1.bf16.msra.mxu0 %v7335
  %7426 = vmatprep.subr.bf16.mxu0 0
  %7427 = vmatpush1.bf16.msra.mxu0 %v7336
  %7428 = vmatprep.subr.bf16.mxu0 0
  %7429 = vmatpush1.bf16.msra.mxu0 %v7337
  %7430 = vmatprep.subr.bf16.mxu0 0
  %7431 = vmatpush1.bf16.msra.mxu0 %v7338
  %7432 = vmatprep.subr.bf16.mxu0 0
  %7433 = vmatpush1.bf16.msra.mxu0 %v7339
  %7434 = vmatprep.subr.bf16.mxu0 0
  %7435 = vmatpush1.bf16.msra.mxu0 %v7340
  %7436 = vmatprep.subr.bf16.mxu0 0
  %7437 = vmatpush1.bf16.msra.mxu0 %v7341
  %7438 = vmatprep.subr.bf16.mxu0 0
  %7439 = vmatpush1.bf16.msra.mxu0 %v7342
  %7440 = vmatprep.subr.bf16.mxu0 0
  %7441 = vmatpush1.bf16.msra.mxu0 %v7343
  %7442 = vmatprep.subr.bf16.mxu0 0
  %7443 = vmatpush1.bf16.msra.mxu0 %v7344
  %7444 = vmatprep.subr.bf16.mxu0 0
  %7445 = vmatpush1.bf16.msra.mxu0 %v7345
  %7446 = vmatprep.subr.bf16.mxu0 0
  %7447 = vmatpush1.bf16.msra.mxu0 %v7346
  %7448 = vmatprep.subr.bf16.mxu0 0
  %7449 = vmatpush1.bf16.msra.mxu0 %v7347
  %7450 = vmatprep.subr.bf16.mxu0 0
  %7451 = vmatpush1.bf16.msra.mxu0 %v7348
  %7452 = vmatprep.subr.bf16.mxu0 0
  %7453 = vmatpush1.bf16.msra.mxu0 %v7349
  %7454 = vmatprep.subr.bf16.mxu0 0
  %7455 = vmatpush1.bf16.msra.mxu0 %v7350
  %7456 = vmatprep.mubr.bf16.mxu0 %v7125
  %7457 = vmatmul.mubr.bf16.gmra.mrb[0].mxu0 %v7124
  %v7458 = vpop.f32.mrb[0].mxu0
  %v7459 = vadd.f32 %v7418, %v7458
  %v7460 = vpop.f32.mrb[0].mxu0
  %v7461 = vpop.f32.mrb[0].mxu0
  %v7462 = vadd.f32 %v7421, %v7461
  %v7463 = vpop.f32.mrb[0].mxu0
  %7464 = vdwg.mxu0
  %v7529 = vunpack.c.l.b16 %v6892
  %v7530 = vunpack.c.l.b16 %v6893
  %v7531 = vunpack.c.l.b16 %v6894
  %v7532 = vunpack.c.l.b16 %v6895
  %v7533 = vunpack.c.l.b16 %v6896
  %v7534 = vunpack.c.l.b16 %v6897
  %v7535 = vunpack.c.l.b16 %v6898
  %v7536 = vunpack.c.l.b16 %v6899
  %v7537 = vunpack.c.l.b16 %v6900
  %v7538 = vunpack.c.l.b16 %v6901
  %v7539 = vunpack.c.l.b16 %v6902
  %v7540 = vunpack.c.l.b16 %v6903
  %v7541 = vunpack.c.l.b16 %v6904
  %v7542 = vunpack.c.l.b16 %v6905
  %v7543 = vunpack.c.l.b16 %v6906
  %v7544 = vunpack.c.l.b16 %v6907
  %v7545 = vunpack.c.l.b16 %v6908
  %v7546 = vunpack.c.l.b16 %v6909
  %v7547 = vunpack.c.l.b16 %v6910
  %v7548 = vunpack.c.l.b16 %v6911
  %v7549 = vunpack.c.l.b16 %v6912
  %v7550 = vunpack.c.l.b16 %v6913
  %v7551 = vunpack.c.l.b16 %v6914
  %v7552 = vunpack.c.l.b16 %v6915
  %v7553 = vunpack.c.l.b16 %v6916
  %v7554 = vunpack.c.l.b16 %v6917
  %v7555 = vunpack.c.l.b16 %v6918
  %v7556 = vunpack.c.l.b16 %v6919
  %v7557 = vunpack.c.l.b16 %v6920
  %v7558 = vunpack.c.l.b16 %v6921
  %v7559 = vunpack.c.l.b16 %v6922
  %v7560 = vunpack.c.l.b16 %v6923
  %v7561 = vunpack.c.l.b16 %v6924
  %v7562 = vunpack.c.l.b16 %v6925
  %v7563 = vunpack.c.l.b16 %v6926
  %v7564 = vunpack.c.l.b16 %v6927
  %v7565 = vunpack.c.l.b16 %v6928
  %v7566 = vunpack.c.l.b16 %v6929
  %v7567 = vunpack.c.l.b16 %v6930
  %v7568 = vunpack.c.l.b16 %v6931
  %v7569 = vunpack.c.l.b16 %v6932
  %v7570 = vunpack.c.l.b16 %v6933
  %v7571 = vunpack.c.l.b16 %v6934
  %v7572 = vunpack.c.l.b16 %v6935
  %v7573 = vunpack.c.l.b16 %v6936
  %v7574 = vunpack.c.l.b16 %v6937
  %v7575 = vunpack.c.l.b16 %v6938
  %v7576 = vunpack.c.l.b16 %v6939
  %v7577 = vunpack.c.l.b16 %v6940
  %v7578 = vunpack.c.l.b16 %v6941
  %v7579 = vunpack.c.l.b16 %v6942
  %v7580 = vunpack.c.l.b16 %v6943
  %v7581 = vunpack.c.l.b16 %v6944
  %v7582 = vunpack.c.l.b16 %v6945
  %v7583 = vunpack.c.l.b16 %v6946
  %v7584 = vunpack.c.l.b16 %v6947
  %v7585 = vunpack.c.l.b16 %v6948
  %v7586 = vunpack.c.l.b16 %v6949
  %v7587 = vunpack.c.l.b16 %v6950
  %v7588 = vunpack.c.l.b16 %v6951
  %v7589 = vunpack.c.l.b16 %v6952
  %v7590 = vunpack.c.l.b16 %v6953
  %v7591 = vunpack.c.l.b16 %v6954
  %v7592 = vunpack.c.l.b16 %v6955
  %v7593 = vpack.c.b16 %v7530, %v7529
  %v7594 = vpack.c.b16 %v7532, %v7531
  %v7595 = vpack.c.b16 %v7534, %v7533
  %v7596 = vpack.c.b16 %v7536, %v7535
  %v7597 = vpack.c.b16 %v7538, %v7537
  %v7598 = vpack.c.b16 %v7540, %v7539
  %v7599 = vpack.c.b16 %v7542, %v7541
  %v7600 = vpack.c.b16 %v7544, %v7543
  %v7601 = vpack.c.b16 %v7546, %v7545
  %v7602 = vpack.c.b16 %v7548, %v7547
  %v7603 = vpack.c.b16 %v7550, %v7549
  %v7604 = vpack.c.b16 %v7552, %v7551
  %v7605 = vpack.c.b16 %v7554, %v7553
  %v7606 = vpack.c.b16 %v7556, %v7555
  %v7607 = vpack.c.b16 %v7558, %v7557
  %v7608 = vpack.c.b16 %v7560, %v7559
  %v7609 = vpack.c.b16 %v7562, %v7561
  %v7610 = vpack.c.b16 %v7564, %v7563
  %v7611 = vpack.c.b16 %v7566, %v7565
  %v7612 = vpack.c.b16 %v7568, %v7567
  %v7613 = vpack.c.b16 %v7570, %v7569
  %v7614 = vpack.c.b16 %v7572, %v7571
  %v7615 = vpack.c.b16 %v7574, %v7573
  %v7616 = vpack.c.b16 %v7576, %v7575
  %v7617 = vpack.c.b16 %v7578, %v7577
  %v7618 = vpack.c.b16 %v7580, %v7579
  %v7619 = vpack.c.b16 %v7582, %v7581
  %v7620 = vpack.c.b16 %v7584, %v7583
  %v7621 = vpack.c.b16 %v7586, %v7585
  %v7622 = vpack.c.b16 %v7588, %v7587
  %v7623 = vpack.c.b16 %v7590, %v7589
  %v7624 = vpack.c.b16 %v7592, %v7591
  %7657 = vmatprep.subr.bf16.mxu0 0
  %7658 = vmatpush1.bf16.msra.mxu0 %v7593
  %7659 = vmatprep.subr.bf16.mxu0 0
  %7660 = vmatpush1.bf16.msra.mxu0 %v7594
  %7661 = vmatprep.subr.bf16.mxu0 0
  %7662 = vmatpush1.bf16.msra.mxu0 %v7595
  %7663 = vmatprep.subr.bf16.mxu0 0
  %7664 = vmatpush1.bf16.msra.mxu0 %v7596
  %7665 = vmatprep.subr.bf16.mxu0 0
  %7666 = vmatpush1.bf16.msra.mxu0 %v7597
  %7667 = vmatprep.subr.bf16.mxu0 0
  %7668 = vmatpush1.bf16.msra.mxu0 %v7598
  %7669 = vmatprep.subr.bf16.mxu0 0
  %7670 = vmatpush1.bf16.msra.mxu0 %v7599
  %7671 = vmatprep.subr.bf16.mxu0 0
  %7672 = vmatpush1.bf16.msra.mxu0 %v7600
  %7673 = vmatprep.subr.bf16.mxu0 0
  %7674 = vmatpush1.bf16.msra.mxu0 %v7601
  %7675 = vmatprep.subr.bf16.mxu0 0
  %7676 = vmatpush1.bf16.msra.mxu0 %v7602
  %7677 = vmatprep.subr.bf16.mxu0 0
  %7678 = vmatpush1.bf16.msra.mxu0 %v7603
  %7679 = vmatprep.subr.bf16.mxu0 0
  %7680 = vmatpush1.bf16.msra.mxu0 %v7604
  %7681 = vmatprep.subr.bf16.mxu0 0
  %7682 = vmatpush1.bf16.msra.mxu0 %v7605
  %7683 = vmatprep.subr.bf16.mxu0 0
  %7684 = vmatpush1.bf16.msra.mxu0 %v7606
  %7685 = vmatprep.subr.bf16.mxu0 0
  %7686 = vmatpush1.bf16.msra.mxu0 %v7607
  %7687 = vmatprep.subr.bf16.mxu0 0
  %7688 = vmatpush1.bf16.msra.mxu0 %v7608
  %7689 = vmatprep.mubr.bf16.mxu0 %v6888
  %7690 = vmatmul.mubr.bf16.gmra.mrb[0].mxu0 %v6887
  %v7691 = vpop.f32.mrb[0].mxu0
  %v7692 = vadd.f32 %v7459, %v7691
  %v7693 = vpop.f32.mrb[0].mxu0
  %v7694 = vpop.f32.mrb[0].mxu0
  %v7695 = vadd.f32 %v7462, %v7694
  %v7696 = vpop.f32.mrb[0].mxu0
  %7697 = vdwg.mxu0
  %7698 = vmatprep.subr.bf16.mxu0 0
  %7699 = vmatpush1.bf16.msra.mxu0 %v7609
  %7700 = vmatprep.subr.bf16.mxu0 0
  %7701 = vmatpush1.bf16.msra.mxu0 %v7610
  %7702 = vmatprep.subr.bf16.mxu0 0
  %7703 = vmatpush1.bf16.msra.mxu0 %v7611
  %7704 = vmatprep.subr.bf16.mxu0 0
  %7705 = vmatpush1.bf16.msra.mxu0 %v7612
  %7706 = vmatprep.subr.bf16.mxu0 0
  %7707 = vmatpush1.bf16.msra.mxu0 %v7613
  %7708 = vmatprep.subr.bf16.mxu0 0
  %7709 = vmatpush1.bf16.msra.mxu0 %v7614
  %7710 = vmatprep.subr.bf16.mxu0 0
  %7711 = vmatpush1.bf16.msra.mxu0 %v7615
  %7712 = vmatprep.subr.bf16.mxu0 0
  %7713 = vmatpush1.bf16.msra.mxu0 %v7616
  %7714 = vmatprep.subr.bf16.mxu0 0
  %7715 = vmatpush1.bf16.msra.mxu0 %v7617
  %7716 = vmatprep.subr.bf16.mxu0 0
  %7717 = vmatpush1.bf16.msra.mxu0 %v7618
  %7718 = vmatprep.subr.bf16.mxu0 0
  %7719 = vmatpush1.bf16.msra.mxu0 %v7619
  %7720 = vmatprep.subr.bf16.mxu0 0
  %7721 = vmatpush1.bf16.msra.mxu0 %v7620
  %7722 = vmatprep.subr.bf16.mxu0 0
  %7723 = vmatpush1.bf16.msra.mxu0 %v7621
  %7724 = vmatprep.subr.bf16.mxu0 0
  %7725 = vmatpush1.bf16.msra.mxu0 %v7622
  %7726 = vmatprep.subr.bf16.mxu0 0
  %7727 = vmatpush1.bf16.msra.mxu0 %v7623
  %7728 = vmatprep.subr.bf16.mxu0 0
  %7729 = vmatpush1.bf16.msra.mxu0 %v7624
  %7730 = vmatprep.mubr.bf16.mxu0 %v6890
  %7731 = vmatmul.mubr.bf16.gmra.mrb[0].mxu0 %v6889
  %v7732 = vpop.f32.mrb[0].mxu0
  %v7733 = vadd.f32 %v7692, %v7732
  %v7734 = vpop.f32.mrb[0].mxu0
  %v7735 = vpop.f32.mrb[0].mxu0
  %v7736 = vadd.f32 %v7695, %v7735
  %v7737 = vpop.f32.mrb[0].mxu0
  %7738 = vdwg.mxu0
  %s7739 = scalar_lea.vmem %s21, 384
  %v7740 = vld [vmem:[%s7739] sm:$0xff]
  %v7741 = vld [vmem:[%s7739 + $0x8] sm:$0xff]
  %v7742 = vld [vmem:[%s7739 + $0x10] sm:$0xff]
  %v7743 = vld [vmem:[%s7739 + $0x18] sm:$0xff]
  %v7744 = vld [vmem:[%s7739 + $0x20] sm:$0xff]
  %v7745 = vld [vmem:[%s7739 + $0x28] sm:$0xff]
  %v7746 = vld [vmem:[%s7739 + $0x30] sm:$0xff]
  %v7747 = vld [vmem:[%s7739 + $0x38] sm:$0xff]
  %s7748 = scalar_lea.vmem %s22, 24
  %v7749 = vld [vmem:[%s7748] sm:$0xf]
  %v7751 = vlaneseq
  %v7752 = vshrl.u32 %v7751, 7
  %v7753 = vsub.s32 0, %v7752
  %v7754 = vrot.slane %v7749, %v7753
  %v7755 = vlaneseq
  %v7756 = vshrl.u32 %v7755, 7
  %v7757 = vsub.s32 1, %v7756
  %v7758 = vrot.slane %v7749, %v7757
  %v7759 = vlaneseq
  %v7760 = vshrl.u32 %v7759, 7
  %v7761 = vsub.s32 2, %v7760
  %v7762 = vrot.slane %v7749, %v7761
  %v7763 = vlaneseq
  %v7764 = vshrl.u32 %v7763, 7
  %v7765 = vsub.s32 3, %v7764
  %v7766 = vrot.slane %v7749, %v7765
  %v7779 = vunpack.c.l.b16 %v7740
  %v7780 = vunpack.c.h.b16 %v7740
  %v7781 = vunpack.c.l.b16 %v7741
  %v7782 = vunpack.c.h.b16 %v7741
  %v7783 = vunpack.c.l.b16 %v7742
  %v7784 = vunpack.c.h.b16 %v7742
  %v7785 = vunpack.c.l.b16 %v7743
  %v7786 = vunpack.c.h.b16 %v7743
  %v7787 = vunpack.c.l.b16 %v7744
  %v7788 = vunpack.c.h.b16 %v7744
  %v7789 = vunpack.c.l.b16 %v7745
  %v7790 = vunpack.c.h.b16 %v7745
  %v7791 = vunpack.c.l.b16 %v7746
  %v7792 = vunpack.c.h.b16 %v7746
  %v7793 = vunpack.c.l.b16 %v7747
  %v7794 = vunpack.c.h.b16 %v7747
  %v7795 = vpack.c.b16 %v7783, %v7779
  %v7796 = vpack.c.b16 %v7784, %v7780
  %v7797 = vpack.c.b16 %v7785, %v7781
  %v7798 = vpack.c.b16 %v7786, %v7782
  %v7799 = vpack.c.b16 %v7791, %v7787
  %v7800 = vpack.c.b16 %v7792, %v7788
  %v7801 = vpack.c.b16 %v7793, %v7789
  %v7802 = vpack.c.b16 %v7794, %v7790
  %7811 = vmatprep.subr.bf16.mxu0 %v7796
  %7812 = vmatpush1.bf16.msra.mxu0 %v7795
  %7813 = vmatprep.subr.bf16.mxu0 %v7800
  %7814 = vmatpush1.bf16.msra.mxu0 %v7799
  %7815 = vmatprep.subr.bf16.mxu0 0
  %7816 = vmatpush1.bf16.msra.mxu0 0
  %7817 = vmatprep.subr.bf16.mxu0 0
  %7818 = vmatpush1.bf16.msra.mxu0 0
  %7819 = vmatprep.subr.bf16.mxu0 0
  %7820 = vmatpush1.bf16.msra.mxu0 0
  %7821 = vmatprep.subr.bf16.mxu0 0
  %7822 = vmatpush1.bf16.msra.mxu0 0
  %7823 = vmatprep.subr.bf16.mxu0 0
  %7824 = vmatpush1.bf16.msra.mxu0 0
  %7825 = vmatprep.subr.bf16.mxu0 0
  %7826 = vmatpush1.bf16.msra.mxu0 0
  %7827 = vmatprep.subr.bf16.mxu0 0
  %7828 = vmatpush1.bf16.msra.mxu0 0
  %7829 = vmatprep.subr.bf16.mxu0 0
  %7830 = vmatpush1.bf16.msra.mxu0 0
  %7831 = vmatprep.subr.bf16.mxu0 0
  %7832 = vmatpush1.bf16.msra.mxu0 0
  %7833 = vmatprep.subr.bf16.mxu0 0
  %7834 = vmatpush1.bf16.msra.mxu0 0
  %7835 = vmatprep.subr.bf16.mxu0 0
  %7836 = vmatpush1.bf16.msra.mxu0 0
  %7837 = vmatprep.subr.bf16.mxu0 0
  %7838 = vmatpush1.bf16.msra.mxu0 0
  %7839 = vmatprep.subr.bf16.mxu0 0
  %7840 = vmatpush1.bf16.msra.mxu0 0
  %7841 = vmatprep.subr.bf16.mxu0 0
  %7842 = vmatpush1.bf16.msra.mxu0 0
  %7843 = vmatprep.mubr.bf16.mxu0 0
  %7844 = vmatmul.mubr.bf16.gmra.mrb[0].mxu0 %v6791
  %v7845 = vpop.f32.mrb[0].mxu0
  %v7846 = vadd.f32 %v7754, %v7845
  %v7847 = vpop.f32.mrb[0].mxu0
  %v7848 = vadd.f32 %v7758, %v7847
  %v7849 = vpop.f32.mrb[0].mxu0
  %v7850 = vadd.f32 %v7754, %v7849
  %v7851 = vpop.f32.mrb[0].mxu0
  %v7852 = vadd.f32 %v7758, %v7851
  %7853 = vdwg.mxu0
  %7854 = vmatprep.subr.bf16.mxu0 %v7798
  %7855 = vmatpush1.bf16.msra.mxu0 %v7797
  %7856 = vmatprep.subr.bf16.mxu0 %v7802
  %7857 = vmatpush1.bf16.msra.mxu0 %v7801
  %7858 = vmatprep.subr.bf16.mxu0 0
  %7859 = vmatpush1.bf16.msra.mxu0 0
  %7860 = vmatprep.subr.bf16.mxu0 0
  %7861 = vmatpush1.bf16.msra.mxu0 0
  %7862 = vmatprep.subr.bf16.mxu0 0
  %7863 = vmatpush1.bf16.msra.mxu0 0
  %7864 = vmatprep.subr.bf16.mxu0 0
  %7865 = vmatpush1.bf16.msra.mxu0 0
  %7866 = vmatprep.subr.bf16.mxu0 0
  %7867 = vmatpush1.bf16.msra.mxu0 0
  %7868 = vmatprep.subr.bf16.mxu0 0
  %7869 = vmatpush1.bf16.msra.mxu0 0
  %7870 = vmatprep.subr.bf16.mxu0 0
  %7871 = vmatpush1.bf16.msra.mxu0 0
  %7872 = vmatprep.subr.bf16.mxu0 0
  %7873 = vmatpush1.bf16.msra.mxu0 0
  %7874 = vmatprep.subr.bf16.mxu0 0
  %7875 = vmatpush1.bf16.msra.mxu0 0
  %7876 = vmatprep.subr.bf16.mxu0 0
  %7877 = vmatpush1.bf16.msra.mxu0 0
  %7878 = vmatprep.subr.bf16.mxu0 0
  %7879 = vmatpush1.bf16.msra.mxu0 0
  %7880 = vmatprep.subr.bf16.mxu0 0
  %7881 = vmatpush1.bf16.msra.mxu0 0
  %7882 = vmatprep.subr.bf16.mxu0 0
  %7883 = vmatpush1.bf16.msra.mxu0 0
  %7884 = vmatprep.subr.bf16.mxu0 0
  %7885 = vmatpush1.bf16.msra.mxu0 0
  %7886 = vmatprep.mubr.bf16.mxu0 0
  %7887 = vmatmul.mubr.bf16.gmra.mrb[0].mxu0 %v6791
  %v7888 = vpop.f32.mrb[0].mxu0
  %v7889 = vadd.f32 %v7762, %v7888
  %v7890 = vpop.f32.mrb[0].mxu0
  %v7891 = vadd.f32 %v7766, %v7890
  %v7892 = vpop.f32.mrb[0].mxu0
  %v7893 = vadd.f32 %v7762, %v7892
  %v7894 = vpop.f32.mrb[0].mxu0
  %v7895 = vadd.f32 %v7766, %v7894
  %7896 = vdwg.mxu0
  %v7897 = vmax.f32 %v7846, 0.0
  %v7898 = vmax.f32 %v7848, 0.0
  %v7899 = vmax.f32 %v7889, 0.0
  %v7900 = vmax.f32 %v7891, 0.0
  %v7901 = vmax.f32 %v7850, 0.0
  %v7902 = vmax.f32 %v7852, 0.0
  %v7903 = vmax.f32 %v7893, 0.0
  %v7904 = vmax.f32 %v7895, 0.0
  %v7905 = vpack.c.bf16 %v7901, %v7897
  %v7906 = vpack.c.bf16 %v7902, %v7898
  %v7907 = vpack.c.bf16 %v7903, %v7899
  %v7908 = vpack.c.bf16 %v7904, %v7900
  %s7909 = scalar_lea.vmem %s23, 1536
  %v7910 = vld [vmem:[%s7909] sm:$0xf]
  %v7911 = vld [vmem:[%s7909 + $0x4] sm:$0xf]
  %v7912 = vld [vmem:[%s7909 + $0x8] sm:$0xf]
  %v7913 = vld [vmem:[%s7909 + $0xc] sm:$0xf]
  %v7914 = vld [vmem:[%s7909 + $0x10] sm:$0xf]
  %v7915 = vld [vmem:[%s7909 + $0x14] sm:$0xf]
  %v7916 = vld [vmem:[%s7909 + $0x18] sm:$0xf]
  %v7917 = vld [vmem:[%s7909 + $0x1c] sm:$0xf]
  %v7918 = vld [vmem:[%s7909 + $0x20] sm:$0xf]
  %v7919 = vld [vmem:[%s7909 + $0x24] sm:$0xf]
  %v7920 = vld [vmem:[%s7909 + $0x28] sm:$0xf]
  %v7921 = vld [vmem:[%s7909 + $0x2c] sm:$0xf]
  %v7922 = vld [vmem:[%s7909 + $0x30] sm:$0xf]
  %v7923 = vld [vmem:[%s7909 + $0x34] sm:$0xf]
  %v7924 = vld [vmem:[%s7909 + $0x38] sm:$0xf]
  %v7925 = vld [vmem:[%s7909 + $0x3c] sm:$0xf]
  %v7926 = vld [vmem:[%s7909 + $0x40] sm:$0xf]
  %v7927 = vld [vmem:[%s7909 + $0x44] sm:$0xf]
  %v7928 = vld [vmem:[%s7909 + $0x48] sm:$0xf]
  %v7929 = vld [vmem:[%s7909 + $0x4c] sm:$0xf]
  %v7930 = vld [vmem:[%s7909 + $0x50] sm:$0xf]
  %v7931 = vld [vmem:[%s7909 + $0x54] sm:$0xf]
  %v7932 = vld [vmem:[%s7909 + $0x58] sm:$0xf]
  %v7933 = vld [vmem:[%s7909 + $0x5c] sm:$0xf]
  %v7934 = vld [vmem:[%s7909 + $0x60] sm:$0xf]
  %v7935 = vld [vmem:[%s7909 + $0x64] sm:$0xf]
  %v7936 = vld [vmem:[%s7909 + $0x68] sm:$0xf]
  %v7937 = vld [vmem:[%s7909 + $0x6c] sm:$0xf]
  %v7938 = vld [vmem:[%s7909 + $0x70] sm:$0xf]
  %v7939 = vld [vmem:[%s7909 + $0x74] sm:$0xf]
  %v7940 = vld [vmem:[%s7909 + $0x78] sm:$0xf]
  %v7941 = vld [vmem:[%s7909 + $0x7c] sm:$0xf]
  %v7942 = vld [vmem:[%s7909 + $0x80] sm:$0xf]
  %v7943 = vld [vmem:[%s7909 + $0x84] sm:$0xf]
  %v7944 = vld [vmem:[%s7909 + $0x88] sm:$0xf]
  %v7945 = vld [vmem:[%s7909 + $0x8c] sm:$0xf]
  %v7946 = vld [vmem:[%s7909 + $0x90] sm:$0xf]
  %v7947 = vld [vmem:[%s7909 + $0x94] sm:$0xf]
  %v7948 = vld [vmem:[%s7909 + $0x98] sm:$0xf]
  %v7949 = vld [vmem:[%s7909 + $0x9c] sm:$0xf]
  %v7950 = vld [vmem:[%s7909 + $0xa0] sm:$0xf]
  %v7951 = vld [vmem:[%s7909 + $0xa4] sm:$0xf]
  %v7952 = vld [vmem:[%s7909 + $0xa8] sm:$0xf]
  %v7953 = vld [vmem:[%s7909 + $0xac] sm:$0xf]
  %v7954 = vld [vmem:[%s7909 + $0xb0] sm:$0xf]
  %v7955 = vld [vmem:[%s7909 + $0xb4] sm:$0xf]
  %v7956 = vld [vmem:[%s7909 + $0xb8] sm:$0xf]
  %v7957 = vld [vmem:[%s7909 + $0xbc] sm:$0xf]
  %v7958 = vld [vmem:[%s7909 + $0xc0] sm:$0xf]
  %v7959 = vld [vmem:[%s7909 + $0xc4] sm:$0xf]
  %v7960 = vld [vmem:[%s7909 + $0xc8] sm:$0xf]
  %v7961 = vld [vmem:[%s7909 + $0xcc] sm:$0xf]
  %v7962 = vld [vmem:[%s7909 + $0xd0] sm:$0xf]
  %v7963 = vld [vmem:[%s7909 + $0xd4] sm:$0xf]
  %v7964 = vld [vmem:[%s7909 + $0xd8] sm:$0xf]
  %v7965 = vld [vmem:[%s7909 + $0xdc] sm:$0xf]
  %v7966 = vld [vmem:[%s7909 + $0xe0] sm:$0xf]
  %v7967 = vld [vmem:[%s7909 + $0xe4] sm:$0xf]
  %v7968 = vld [vmem:[%s7909 + $0xe8] sm:$0xf]
  %v7969 = vld [vmem:[%s7909 + $0xec] sm:$0xf]
  %v7970 = vld [vmem:[%s7909 + $0xf0] sm:$0xf]
  %v7971 = vld [vmem:[%s7909 + $0xf4] sm:$0xf]
  %v7972 = vld [vmem:[%s7909 + $0xf8] sm:$0xf]
  %v7973 = vld [vmem:[%s7909 + $0xfc] sm:$0xf]
  %v8038 = vunpack.c.l.b16 %v7910
  %v8039 = vunpack.c.l.b16 %v7911
  %v8040 = vunpack.c.l.b16 %v7912
  %v8041 = vunpack.c.l.b16 %v7913
  %v8042 = vunpack.c.l.b16 %v7914
  %v8043 = vunpack.c.l.b16 %v7915
  %v8044 = vunpack.c.l.b16 %v7916
  %v8045 = vunpack.c.l.b16 %v7917
  %v8046 = vunpack.c.l.b16 %v7918
  %v8047 = vunpack.c.l.b16 %v7919
  %v8048 = vunpack.c.l.b16 %v7920
  %v8049 = vunpack.c.l.b16 %v7921
  %v8050 = vunpack.c.l.b16 %v7922
  %v8051 = vunpack.c.l.b16 %v7923
  %v8052 = vunpack.c.l.b16 %v7924
  %v8053 = vunpack.c.l.b16 %v7925
  %v8054 = vunpack.c.l.b16 %v7926
  %v8055 = vunpack.c.l.b16 %v7927
  %v8056 = vunpack.c.l.b16 %v7928
  %v8057 = vunpack.c.l.b16 %v7929
  %v8058 = vunpack.c.l.b16 %v7930
  %v8059 = vunpack.c.l.b16 %v7931
  %v8060 = vunpack.c.l.b16 %v7932
  %v8061 = vunpack.c.l.b16 %v7933
  %v8062 = vunpack.c.l.b16 %v7934
  %v8063 = vunpack.c.l.b16 %v7935
  %v8064 = vunpack.c.l.b16 %v7936
  %v8065 = vunpack.c.l.b16 %v7937
  %v8066 = vunpack.c.l.b16 %v7938
  %v8067 = vunpack.c.l.b16 %v7939
  %v8068 = vunpack.c.l.b16 %v7940
  %v8069 = vunpack.c.l.b16 %v7941
  %v8070 = vunpack.c.l.b16 %v7942
  %v8071 = vunpack.c.l.b16 %v7943
  %v8072 = vunpack.c.l.b16 %v7944
  %v8073 = vunpack.c.l.b16 %v7945
  %v8074 = vunpack.c.l.b16 %v7946
  %v8075 = vunpack.c.l.b16 %v7947
  %v8076 = vunpack.c.l.b16 %v7948
  %v8077 = vunpack.c.l.b16 %v7949
  %v8078 = vunpack.c.l.b16 %v7950
  %v8079 = vunpack.c.l.b16 %v7951
  %v8080 = vunpack.c.l.b16 %v7952
  %v8081 = vunpack.c.l.b16 %v7953
  %v8082 = vunpack.c.l.b16 %v7954
  %v8083 = vunpack.c.l.b16 %v7955
  %v8084 = vunpack.c.l.b16 %v7956
  %v8085 = vunpack.c.l.b16 %v7957
  %v8086 = vunpack.c.l.b16 %v7958
  %v8087 = vunpack.c.l.b16 %v7959
  %v8088 = vunpack.c.l.b16 %v7960
  %v8089 = vunpack.c.l.b16 %v7961
  %v8090 = vunpack.c.l.b16 %v7962
  %v8091 = vunpack.c.l.b16 %v7963
  %v8092 = vunpack.c.l.b16 %v7964
  %v8093 = vunpack.c.l.b16 %v7965
  %v8094 = vunpack.c.l.b16 %v7966
  %v8095 = vunpack.c.l.b16 %v7967
  %v8096 = vunpack.c.l.b16 %v7968
  %v8097 = vunpack.c.l.b16 %v7969
  %v8098 = vunpack.c.l.b16 %v7970
  %v8099 = vunpack.c.l.b16 %v7971
  %v8100 = vunpack.c.l.b16 %v7972
  %v8101 = vunpack.c.l.b16 %v7973
  %v8102 = vpack.c.b16 %v8039, %v8038
  %v8103 = vpack.c.b16 %v8041, %v8040
  %v8104 = vpack.c.b16 %v8043, %v8042
  %v8105 = vpack.c.b16 %v8045, %v8044
  %v8106 = vpack.c.b16 %v8047, %v8046
  %v8107 = vpack.c.b16 %v8049, %v8048
  %v8108 = vpack.c.b16 %v8051, %v8050
  %v8109 = vpack.c.b16 %v8053, %v8052
  %v8110 = vpack.c.b16 %v8055, %v8054
  %v8111 = vpack.c.b16 %v8057, %v8056
  %v8112 = vpack.c.b16 %v8059, %v8058
  %v8113 = vpack.c.b16 %v8061, %v8060
  %v8114 = vpack.c.b16 %v8063, %v8062
  %v8115 = vpack.c.b16 %v8065, %v8064
  %v8116 = vpack.c.b16 %v8067, %v8066
  %v8117 = vpack.c.b16 %v8069, %v8068
  %v8118 = vpack.c.b16 %v8071, %v8070
  %v8119 = vpack.c.b16 %v8073, %v8072
  %v8120 = vpack.c.b16 %v8075, %v8074
  %v8121 = vpack.c.b16 %v8077, %v8076
  %v8122 = vpack.c.b16 %v8079, %v8078
  %v8123 = vpack.c.b16 %v8081, %v8080
  %v8124 = vpack.c.b16 %v8083, %v8082
  %v8125 = vpack.c.b16 %v8085, %v8084
  %v8126 = vpack.c.b16 %v8087, %v8086
  %v8127 = vpack.c.b16 %v8089, %v8088
  %v8128 = vpack.c.b16 %v8091, %v8090
  %v8129 = vpack.c.b16 %v8093, %v8092
  %v8130 = vpack.c.b16 %v8095, %v8094
  %v8131 = vpack.c.b16 %v8097, %v8096
  %v8132 = vpack.c.b16 %v8099, %v8098
  %v8133 = vpack.c.b16 %v8101, %v8100
  %8166 = vmatprep.subr.bf16.mxu0 0
  %8167 = vmatpush1.bf16.msra.mxu0 %v8102
  %8168 = vmatprep.subr.bf16.mxu0 0
  %8169 = vmatpush1.bf16.msra.mxu0 %v8103
  %8170 = vmatprep.subr.bf16.mxu0 0
  %8171 = vmatpush1.bf16.msra.mxu0 %v8104
  %8172 = vmatprep.subr.bf16.mxu0 0
  %8173 = vmatpush1.bf16.msra.mxu0 %v8105
  %8174 = vmatprep.subr.bf16.mxu0 0
  %8175 = vmatpush1.bf16.msra.mxu0 %v8106
  %8176 = vmatprep.subr.bf16.mxu0 0
  %8177 = vmatpush1.bf16.msra.mxu0 %v8107
  %8178 = vmatprep.subr.bf16.mxu0 0
  %8179 = vmatpush1.bf16.msra.mxu0 %v8108
  %8180 = vmatprep.subr.bf16.mxu0 0
  %8181 = vmatpush1.bf16.msra.mxu0 %v8109
  %8182 = vmatprep.subr.bf16.mxu0 0
  %8183 = vmatpush1.bf16.msra.mxu0 %v8110
  %8184 = vmatprep.subr.bf16.mxu0 0
  %8185 = vmatpush1.bf16.msra.mxu0 %v8111
  %8186 = vmatprep.subr.bf16.mxu0 0
  %8187 = vmatpush1.bf16.msra.mxu0 %v8112
  %8188 = vmatprep.subr.bf16.mxu0 0
  %8189 = vmatpush1.bf16.msra.mxu0 %v8113
  %8190 = vmatprep.subr.bf16.mxu0 0
  %8191 = vmatpush1.bf16.msra.mxu0 %v8114
  %8192 = vmatprep.subr.bf16.mxu0 0
  %8193 = vmatpush1.bf16.msra.mxu0 %v8115
  %8194 = vmatprep.subr.bf16.mxu0 0
  %8195 = vmatpush1.bf16.msra.mxu0 %v8116
  %8196 = vmatprep.subr.bf16.mxu0 0
  %8197 = vmatpush1.bf16.msra.mxu0 %v8117
  %8198 = vmatprep.mubr.bf16.mxu0 %v7906
  %8199 = vmatmul.mubr.bf16.gmra.mrb[0].mxu0 %v7905
  %v8200 = vpop.f32.mrb[0].mxu0
  %v8201 = vadd.f32 0.0, %v8200
  %v8202 = vpop.f32.mrb[0].mxu0
  %v8203 = vpop.f32.mrb[0].mxu0
  %v8204 = vadd.f32 0.0, %v8203
  %v8205 = vpop.f32.mrb[0].mxu0
  %8206 = vdwg.mxu0
  %8207 = vmatprep.subr.bf16.mxu0 0
  %8208 = vmatpush1.bf16.msra.mxu0 %v8118
  %8209 = vmatprep.subr.bf16.mxu0 0
  %8210 = vmatpush1.bf16.msra.mxu0 %v8119
  %8211 = vmatprep.subr.bf16.mxu0 0
  %8212 = vmatpush1.bf16.msra.mxu0 %v8120
  %8213 = vmatprep.subr.bf16.mxu0 0
  %8214 = vmatpush1.bf16.msra.mxu0 %v8121
  %8215 = vmatprep.subr.bf16.mxu0 0
  %8216 = vmatpush1.bf16.msra.mxu0 %v8122
  %8217 = vmatprep.subr.bf16.mxu0 0
  %8218 = vmatpush1.bf16.msra.mxu0 %v8123
  %8219 = vmatprep.subr.bf16.mxu0 0
  %8220 = vmatpush1.bf16.msra.mxu0 %v8124
  %8221 = vmatprep.subr.bf16.mxu0 0
  %8222 = vmatpush1.bf16.msra.mxu0 %v8125
  %8223 = vmatprep.subr.bf16.mxu0 0
  %8224 = vmatpush1.bf16.msra.mxu0 %v8126
  %8225 = vmatprep.subr.bf16.mxu0 0
  %8226 = vmatpush1.bf16.msra.mxu0 %v8127
  %8227 = vmatprep.subr.bf16.mxu0 0
  %8228 = vmatpush1.bf16.msra.mxu0 %v8128
  %8229 = vmatprep.subr.bf16.mxu0 0
  %8230 = vmatpush1.bf16.msra.mxu0 %v8129
  %8231 = vmatprep.subr.bf16.mxu0 0
  %8232 = vmatpush1.bf16.msra.mxu0 %v8130
  %8233 = vmatprep.subr.bf16.mxu0 0
  %8234 = vmatpush1.bf16.msra.mxu0 %v8131
  %8235 = vmatprep.subr.bf16.mxu0 0
  %8236 = vmatpush1.bf16.msra.mxu0 %v8132
  %8237 = vmatprep.subr.bf16.mxu0 0
  %8238 = vmatpush1.bf16.msra.mxu0 %v8133
  %8239 = vmatprep.mubr.bf16.mxu0 %v7908
  %8240 = vmatmul.mubr.bf16.gmra.mrb[0].mxu0 %v7907
  %v8241 = vpop.f32.mrb[0].mxu0
  %v8242 = vadd.f32 %v8201, %v8241
  %v8243 = vpop.f32.mrb[0].mxu0
  %v8244 = vpop.f32.mrb[0].mxu0
  %v8245 = vadd.f32 %v8204, %v8244
  %v8246 = vpop.f32.mrb[0].mxu0
  %8247 = vdwg.mxu0
  %v8248 = vadd.f32 %v7733, %v8242
  %v8249 = vadd.f32 %v7736, %v8245
  %s8250 = scalar_lea.vmem %s21, 448
  %v8251 = vld [vmem:[%s8250] sm:$0xff]
  %v8252 = vld [vmem:[%s8250 + $0x8] sm:$0xff]
  %v8253 = vld [vmem:[%s8250 + $0x10] sm:$0xff]
  %v8254 = vld [vmem:[%s8250 + $0x18] sm:$0xff]
  %v8255 = vld [vmem:[%s8250 + $0x20] sm:$0xff]
  %v8256 = vld [vmem:[%s8250 + $0x28] sm:$0xff]
  %v8257 = vld [vmem:[%s8250 + $0x30] sm:$0xff]
  %v8258 = vld [vmem:[%s8250 + $0x38] sm:$0xff]
  %s8259 = scalar_lea.vmem %s22, 28
  %v8260 = vld [vmem:[%s8259] sm:$0xf]
  %v8262 = vlaneseq
  %v8263 = vshrl.u32 %v8262, 7
  %v8264 = vsub.s32 0, %v8263
  %v8265 = vrot.slane %v8260, %v8264
  %v8266 = vlaneseq
  %v8267 = vshrl.u32 %v8266, 7
  %v8268 = vsub.s32 1, %v8267
  %v8269 = vrot.slane %v8260, %v8268
  %v8270 = vlaneseq
  %v8271 = vshrl.u32 %v8270, 7
  %v8272 = vsub.s32 2, %v8271
  %v8273 = vrot.slane %v8260, %v8272
  %v8274 = vlaneseq
  %v8275 = vshrl.u32 %v8274, 7
  %v8276 = vsub.s32 3, %v8275
  %v8277 = vrot.slane %v8260, %v8276
  %v8290 = vunpack.c.l.b16 %v8251
  %v8291 = vunpack.c.h.b16 %v8251
  %v8292 = vunpack.c.l.b16 %v8252
  %v8293 = vunpack.c.h.b16 %v8252
  %v8294 = vunpack.c.l.b16 %v8253
  %v8295 = vunpack.c.h.b16 %v8253
  %v8296 = vunpack.c.l.b16 %v8254
  %v8297 = vunpack.c.h.b16 %v8254
  %v8298 = vunpack.c.l.b16 %v8255
  %v8299 = vunpack.c.h.b16 %v8255
  %v8300 = vunpack.c.l.b16 %v8256
  %v8301 = vunpack.c.h.b16 %v8256
  %v8302 = vunpack.c.l.b16 %v8257
  %v8303 = vunpack.c.h.b16 %v8257
  %v8304 = vunpack.c.l.b16 %v8258
  %v8305 = vunpack.c.h.b16 %v8258
  %v8306 = vpack.c.b16 %v8294, %v8290
  %v8307 = vpack.c.b16 %v8295, %v8291
  %v8308 = vpack.c.b16 %v8296, %v8292
  %v8309 = vpack.c.b16 %v8297, %v8293
  %v8310 = vpack.c.b16 %v8302, %v8298
  %v8311 = vpack.c.b16 %v8303, %v8299
  %v8312 = vpack.c.b16 %v8304, %v8300
  %v8313 = vpack.c.b16 %v8305, %v8301
  %8322 = vmatprep.subr.bf16.mxu0 %v8307
  %8323 = vmatpush1.bf16.msra.mxu0 %v8306
  %8324 = vmatprep.subr.bf16.mxu0 %v8311
  %8325 = vmatpush1.bf16.msra.mxu0 %v8310
  %8326 = vmatprep.subr.bf16.mxu0 0
  %8327 = vmatpush1.bf16.msra.mxu0 0
  %8328 = vmatprep.subr.bf16.mxu0 0
  %8329 = vmatpush1.bf16.msra.mxu0 0
  %8330 = vmatprep.subr.bf16.mxu0 0
  %8331 = vmatpush1.bf16.msra.mxu0 0
  %8332 = vmatprep.subr.bf16.mxu0 0
  %8333 = vmatpush1.bf16.msra.mxu0 0
  %8334 = vmatprep.subr.bf16.mxu0 0
  %8335 = vmatpush1.bf16.msra.mxu0 0
  %8336 = vmatprep.subr.bf16.mxu0 0
  %8337 = vmatpush1.bf16.msra.mxu0 0
  %8338 = vmatprep.subr.bf16.mxu0 0
  %8339 = vmatpush1.bf16.msra.mxu0 0
  %8340 = vmatprep.subr.bf16.mxu0 0
  %8341 = vmatpush1.bf16.msra.mxu0 0
  %8342 = vmatprep.subr.bf16.mxu0 0
  %8343 = vmatpush1.bf16.msra.mxu0 0
  %8344 = vmatprep.subr.bf16.mxu0 0
  %8345 = vmatpush1.bf16.msra.mxu0 0
  %8346 = vmatprep.subr.bf16.mxu0 0
  %8347 = vmatpush1.bf16.msra.mxu0 0
  %8348 = vmatprep.subr.bf16.mxu0 0
  %8349 = vmatpush1.bf16.msra.mxu0 0
  %8350 = vmatprep.subr.bf16.mxu0 0
  %8351 = vmatpush1.bf16.msra.mxu0 0
  %8352 = vmatprep.subr.bf16.mxu0 0
  %8353 = vmatpush1.bf16.msra.mxu0 0
  %8354 = vmatprep.mubr.bf16.mxu0 0
  %8355 = vmatmul.mubr.bf16.gmra.mrb[0].mxu0 %v6791
  %v8356 = vpop.f32.mrb[0].mxu0
  %v8357 = vadd.f32 %v8265, %v8356
  %v8358 = vpop.f32.mrb[0].mxu0
  %v8359 = vadd.f32 %v8269, %v8358
  %v8360 = vpop.f32.mrb[0].mxu0
  %v8361 = vadd.f32 %v8265, %v8360
  %v8362 = vpop.f32.mrb[0].mxu0
  %v8363 = vadd.f32 %v8269, %v8362
  %8364 = vdwg.mxu0
  %8365 = vmatprep.subr.bf16.mxu0 %v8309
  %8366 = vmatpush1.bf16.msra.mxu0 %v8308
  %8367 = vmatprep.subr.bf16.mxu0 %v8313
  %8368 = vmatpush1.bf16.msra.mxu0 %v8312
  %8369 = vmatprep.subr.bf16.mxu0 0
  %8370 = vmatpush1.bf16.msra.mxu0 0
  %8371 = vmatprep.subr.bf16.mxu0 0
  %8372 = vmatpush1.bf16.msra.mxu0 0
  %8373 = vmatprep.subr.bf16.mxu0 0
  %8374 = vmatpush1.bf16.msra.mxu0 0
  %8375 = vmatprep.subr.bf16.mxu0 0
  %8376 = vmatpush1.bf16.msra.mxu0 0
  %8377 = vmatprep.subr.bf16.mxu0 0
  %8378 = vmatpush1.bf16.msra.mxu0 0
  %8379 = vmatprep.subr.bf16.mxu0 0
  %8380 = vmatpush1.bf16.msra.mxu0 0
  %8381 = vmatprep.subr.bf16.mxu0 0
  %8382 = vmatpush1.bf16.msra.mxu0 0
  %8383 = vmatprep.subr.bf16.mxu0 0
  %8384 = vmatpush1.bf16.msra.mxu0 0
  %8385 = vmatprep.subr.bf16.mxu0 0
  %8386 = vmatpush1.bf16.msra.mxu0 0
  %8387 = vmatprep.subr.bf16.mxu0 0
  %8388 = vmatpush1.bf16.msra.mxu0 0
  %8389 = vmatprep.subr.bf16.mxu0 0
  %8390 = vmatpush1.bf16.msra.mxu0 0
  %8391 = vmatprep.subr.bf16.mxu0 0
  %8392 = vmatpush1.bf16.msra.mxu0 0
  %8393 = vmatprep.subr.bf16.mxu0 0
  %8394 = vmatpush1.bf16.msra.mxu0 0
  %8395 = vmatprep.subr.bf16.mxu0 0
  %8396 = vmatpush1.bf16.msra.mxu0 0
  %8397 = vmatprep.mubr.bf16.mxu0 0
  %8398 = vmatmul.mubr.bf16.gmra.mrb[0].mxu0 %v6791
  %v8399 = vpop.f32.mrb[0].mxu0
  %v8400 = vadd.f32 %v8273, %v8399
  %v8401 = vpop.f32.mrb[0].mxu0
  %v8402 = vadd.f32 %v8277, %v8401
  %v8403 = vpop.f32.mrb[0].mxu0
  %v8404 = vadd.f32 %v8273, %v8403
  %v8405 = vpop.f32.mrb[0].mxu0
  %v8406 = vadd.f32 %v8277, %v8405
  %8407 = vdwg.mxu0
  %v8408 = vmax.f32 %v8357, 0.0
  %v8409 = vmax.f32 %v8359, 0.0
  %v8410 = vmax.f32 %v8400, 0.0
  %v8411 = vmax.f32 %v8402, 0.0
  %v8412 = vmax.f32 %v8361, 0.0
  %v8413 = vmax.f32 %v8363, 0.0
  %v8414 = vmax.f32 %v8404, 0.0
  %v8415 = vmax.f32 %v8406, 0.0
  %v8416 = vpack.c.bf16 %v8412, %v8408
  %v8417 = vpack.c.bf16 %v8413, %v8409
  %v8418 = vpack.c.bf16 %v8414, %v8410
  %v8419 = vpack.c.bf16 %v8415, %v8411
  %s8420 = scalar_lea.vmem %s23, 1792
  %v8421 = vld [vmem:[%s8420] sm:$0xf]
  %v8422 = vld [vmem:[%s8420 + $0x4] sm:$0xf]
  %v8423 = vld [vmem:[%s8420 + $0x8] sm:$0xf]
  %v8424 = vld [vmem:[%s8420 + $0xc] sm:$0xf]
  %v8425 = vld [vmem:[%s8420 + $0x10] sm:$0xf]
  %v8426 = vld [vmem:[%s8420 + $0x14] sm:$0xf]
  %v8427 = vld [vmem:[%s8420 + $0x18] sm:$0xf]
  %v8428 = vld [vmem:[%s8420 + $0x1c] sm:$0xf]
  %v8429 = vld [vmem:[%s8420 + $0x20] sm:$0xf]
  %v8430 = vld [vmem:[%s8420 + $0x24] sm:$0xf]
  %v8431 = vld [vmem:[%s8420 + $0x28] sm:$0xf]
  %v8432 = vld [vmem:[%s8420 + $0x2c] sm:$0xf]
  %v8433 = vld [vmem:[%s8420 + $0x30] sm:$0xf]
  %v8434 = vld [vmem:[%s8420 + $0x34] sm:$0xf]
  %v8435 = vld [vmem:[%s8420 + $0x38] sm:$0xf]
  %v8436 = vld [vmem:[%s8420 + $0x3c] sm:$0xf]
  %v8437 = vld [vmem:[%s8420 + $0x40] sm:$0xf]
  %v8438 = vld [vmem:[%s8420 + $0x44] sm:$0xf]
  %v8439 = vld [vmem:[%s8420 + $0x48] sm:$0xf]
  %v8440 = vld [vmem:[%s8420 + $0x4c] sm:$0xf]
  %v8441 = vld [vmem:[%s8420 + $0x50] sm:$0xf]
  %v8442 = vld [vmem:[%s8420 + $0x54] sm:$0xf]
  %v8443 = vld [vmem:[%s8420 + $0x58] sm:$0xf]
  %v8444 = vld [vmem:[%s8420 + $0x5c] sm:$0xf]
  %v8445 = vld [vmem:[%s8420 + $0x60] sm:$0xf]
  %v8446 = vld [vmem:[%s8420 + $0x64] sm:$0xf]
  %v8447 = vld [vmem:[%s8420 + $0x68] sm:$0xf]
  %v8448 = vld [vmem:[%s8420 + $0x6c] sm:$0xf]
  %v8449 = vld [vmem:[%s8420 + $0x70] sm:$0xf]
  %v8450 = vld [vmem:[%s8420 + $0x74] sm:$0xf]
  %v8451 = vld [vmem:[%s8420 + $0x78] sm:$0xf]
  %v8452 = vld [vmem:[%s8420 + $0x7c] sm:$0xf]
  %v8453 = vld [vmem:[%s8420 + $0x80] sm:$0xf]
  %v8454 = vld [vmem:[%s8420 + $0x84] sm:$0xf]
  %v8455 = vld [vmem:[%s8420 + $0x88] sm:$0xf]
  %v8456 = vld [vmem:[%s8420 + $0x8c] sm:$0xf]
  %v8457 = vld [vmem:[%s8420 + $0x90] sm:$0xf]
  %v8458 = vld [vmem:[%s8420 + $0x94] sm:$0xf]
  %v8459 = vld [vmem:[%s8420 + $0x98] sm:$0xf]
  %v8460 = vld [vmem:[%s8420 + $0x9c] sm:$0xf]
  %v8461 = vld [vmem:[%s8420 + $0xa0] sm:$0xf]
  %v8462 = vld [vmem:[%s8420 + $0xa4] sm:$0xf]
  %v8463 = vld [vmem:[%s8420 + $0xa8] sm:$0xf]
  %v8464 = vld [vmem:[%s8420 + $0xac] sm:$0xf]
  %v8465 = vld [vmem:[%s8420 + $0xb0] sm:$0xf]
  %v8466 = vld [vmem:[%s8420 + $0xb4] sm:$0xf]
  %v8467 = vld [vmem:[%s8420 + $0xb8] sm:$0xf]
  %v8468 = vld [vmem:[%s8420 + $0xbc] sm:$0xf]
  %v8469 = vld [vmem:[%s8420 + $0xc0] sm:$0xf]
  %v8470 = vld [vmem:[%s8420 + $0xc4] sm:$0xf]
  %v8471 = vld [vmem:[%s8420 + $0xc8] sm:$0xf]
  %v8472 = vld [vmem:[%s8420 + $0xcc] sm:$0xf]
  %v8473 = vld [vmem:[%s8420 + $0xd0] sm:$0xf]
  %v8474 = vld [vmem:[%s8420 + $0xd4] sm:$0xf]
  %v8475 = vld [vmem:[%s8420 + $0xd8] sm:$0xf]
  %v8476 = vld [vmem:[%s8420 + $0xdc] sm:$0xf]
  %v8477 = vld [vmem:[%s8420 + $0xe0] sm:$0xf]
  %v8478 = vld [vmem:[%s8420 + $0xe4] sm:$0xf]
  %v8479 = vld [vmem:[%s8420 + $0xe8] sm:$0xf]
  %v8480 = vld [vmem:[%s8420 + $0xec] sm:$0xf]
  %v8481 = vld [vmem:[%s8420 + $0xf0] sm:$0xf]
  %v8482 = vld [vmem:[%s8420 + $0xf4] sm:$0xf]
  %v8483 = vld [vmem:[%s8420 + $0xf8] sm:$0xf]
  %v8484 = vld [vmem:[%s8420 + $0xfc] sm:$0xf]
  %v8549 = vunpack.c.l.b16 %v8421
  %v8550 = vunpack.c.l.b16 %v8422
  %v8551 = vunpack.c.l.b16 %v8423
  %v8552 = vunpack.c.l.b16 %v8424
  %v8553 = vunpack.c.l.b16 %v8425
  %v8554 = vunpack.c.l.b16 %v8426
  %v8555 = vunpack.c.l.b16 %v8427
  %v8556 = vunpack.c.l.b16 %v8428
  %v8557 = vunpack.c.l.b16 %v8429
  %v8558 = vunpack.c.l.b16 %v8430
  %v8559 = vunpack.c.l.b16 %v8431
  %v8560 = vunpack.c.l.b16 %v8432
  %v8561 = vunpack.c.l.b16 %v8433
  %v8562 = vunpack.c.l.b16 %v8434
  %v8563 = vunpack.c.l.b16 %v8435
  %v8564 = vunpack.c.l.b16 %v8436
  %v8565 = vunpack.c.l.b16 %v8437
  %v8566 = vunpack.c.l.b16 %v8438
  %v8567 = vunpack.c.l.b16 %v8439
  %v8568 = vunpack.c.l.b16 %v8440
  %v8569 = vunpack.c.l.b16 %v8441
  %v8570 = vunpack.c.l.b16 %v8442
  %v8571 = vunpack.c.l.b16 %v8443
  %v8572 = vunpack.c.l.b16 %v8444
  %v8573 = vunpack.c.l.b16 %v8445
  %v8574 = vunpack.c.l.b16 %v8446
  %v8575 = vunpack.c.l.b16 %v8447
  %v8576 = vunpack.c.l.b16 %v8448
  %v8577 = vunpack.c.l.b16 %v8449
  %v8578 = vunpack.c.l.b16 %v8450
  %v8579 = vunpack.c.l.b16 %v8451
  %v8580 = vunpack.c.l.b16 %v8452
  %v8581 = vunpack.c.l.b16 %v8453
  %v8582 = vunpack.c.l.b16 %v8454
  %v8583 = vunpack.c.l.b16 %v8455
  %v8584 = vunpack.c.l.b16 %v8456
  %v8585 = vunpack.c.l.b16 %v8457
  %v8586 = vunpack.c.l.b16 %v8458
  %v8587 = vunpack.c.l.b16 %v8459
  %v8588 = vunpack.c.l.b16 %v8460
  %v8589 = vunpack.c.l.b16 %v8461
  %v8590 = vunpack.c.l.b16 %v8462
  %v8591 = vunpack.c.l.b16 %v8463
  %v8592 = vunpack.c.l.b16 %v8464
  %v8593 = vunpack.c.l.b16 %v8465
  %v8594 = vunpack.c.l.b16 %v8466
  %v8595 = vunpack.c.l.b16 %v8467
  %v8596 = vunpack.c.l.b16 %v8468
  %v8597 = vunpack.c.l.b16 %v8469
  %v8598 = vunpack.c.l.b16 %v8470
  %v8599 = vunpack.c.l.b16 %v8471
  %v8600 = vunpack.c.l.b16 %v8472
  %v8601 = vunpack.c.l.b16 %v8473
  %v8602 = vunpack.c.l.b16 %v8474
  %v8603 = vunpack.c.l.b16 %v8475
  %v8604 = vunpack.c.l.b16 %v8476
  %v8605 = vunpack.c.l.b16 %v8477
  %v8606 = vunpack.c.l.b16 %v8478
  %v8607 = vunpack.c.l.b16 %v8479
  %v8608 = vunpack.c.l.b16 %v8480
  %v8609 = vunpack.c.l.b16 %v8481
  %v8610 = vunpack.c.l.b16 %v8482
  %v8611 = vunpack.c.l.b16 %v8483
  %v8612 = vunpack.c.l.b16 %v8484
  %v8613 = vpack.c.b16 %v8550, %v8549
  %v8614 = vpack.c.b16 %v8552, %v8551
  %v8615 = vpack.c.b16 %v8554, %v8553
  %v8616 = vpack.c.b16 %v8556, %v8555
  %v8617 = vpack.c.b16 %v8558, %v8557
  %v8618 = vpack.c.b16 %v8560, %v8559
  %v8619 = vpack.c.b16 %v8562, %v8561
  %v8620 = vpack.c.b16 %v8564, %v8563
  %v8621 = vpack.c.b16 %v8566, %v8565
  %v8622 = vpack.c.b16 %v8568, %v8567
  %v8623 = vpack.c.b16 %v8570, %v8569
  %v8624 = vpack.c.b16 %v8572, %v8571
  %v8625 = vpack.c.b16 %v8574, %v8573
  %v8626 = vpack.c.b16 %v8576, %v8575
  %v8627 = vpack.c.b16 %v8578, %v8577
  %v8628 = vpack.c.b16 %v8580, %v8579
  %v8629 = vpack.c.b16 %v8582, %v8581
  %v8630 = vpack.c.b16 %v8584, %v8583
  %v8631 = vpack.c.b16 %v8586, %v8585
  %v8632 = vpack.c.b16 %v8588, %v8587
  %v8633 = vpack.c.b16 %v8590, %v8589
  %v8634 = vpack.c.b16 %v8592, %v8591
  %v8635 = vpack.c.b16 %v8594, %v8593
  %v8636 = vpack.c.b16 %v8596, %v8595
  %v8637 = vpack.c.b16 %v8598, %v8597
  %v8638 = vpack.c.b16 %v8600, %v8599
  %v8639 = vpack.c.b16 %v8602, %v8601
  %v8640 = vpack.c.b16 %v8604, %v8603
  %v8641 = vpack.c.b16 %v8606, %v8605
  %v8642 = vpack.c.b16 %v8608, %v8607
  %v8643 = vpack.c.b16 %v8610, %v8609
  %v8644 = vpack.c.b16 %v8612, %v8611
  %8677 = vmatprep.subr.bf16.mxu0 0
  %8678 = vmatpush1.bf16.msra.mxu0 %v8613
  %8679 = vmatprep.subr.bf16.mxu0 0
  %8680 = vmatpush1.bf16.msra.mxu0 %v8614
  %8681 = vmatprep.subr.bf16.mxu0 0
  %8682 = vmatpush1.bf16.msra.mxu0 %v8615
  %8683 = vmatprep.subr.bf16.mxu0 0
  %8684 = vmatpush1.bf16.msra.mxu0 %v8616
  %8685 = vmatprep.subr.bf16.mxu0 0
  %8686 = vmatpush1.bf16.msra.mxu0 %v8617
  %8687 = vmatprep.subr.bf16.mxu0 0
  %8688 = vmatpush1.bf16.msra.mxu0 %v8618
  %8689 = vmatprep.subr.bf16.mxu0 0
  %8690 = vmatpush1.bf16.msra.mxu0 %v8619
  %8691 = vmatprep.subr.bf16.mxu0 0
  %8692 = vmatpush1.bf16.msra.mxu0 %v8620
  %8693 = vmatprep.subr.bf16.mxu0 0
  %8694 = vmatpush1.bf16.msra.mxu0 %v8621
  %8695 = vmatprep.subr.bf16.mxu0 0
  %8696 = vmatpush1.bf16.msra.mxu0 %v8622
  %8697 = vmatprep.subr.bf16.mxu0 0
  %8698 = vmatpush1.bf16.msra.mxu0 %v8623
  %8699 = vmatprep.subr.bf16.mxu0 0
  %8700 = vmatpush1.bf16.msra.mxu0 %v8624
  %8701 = vmatprep.subr.bf16.mxu0 0
  %8702 = vmatpush1.bf16.msra.mxu0 %v8625
  %8703 = vmatprep.subr.bf16.mxu0 0
  %8704 = vmatpush1.bf16.msra.mxu0 %v8626
  %8705 = vmatprep.subr.bf16.mxu0 0
  %8706 = vmatpush1.bf16.msra.mxu0 %v8627
  %8707 = vmatprep.subr.bf16.mxu0 0
  %8708 = vmatpush1.bf16.msra.mxu0 %v8628
  %8709 = vmatprep.mubr.bf16.mxu0 %v8417
  %8710 = vmatmul.mubr.bf16.gmra.mrb[0].mxu0 %v8416
  %v8711 = vpop.f32.mrb[0].mxu0
  %v8712 = vadd.f32 0.0, %v8711
  %v8713 = vpop.f32.mrb[0].mxu0
  %v8714 = vpop.f32.mrb[0].mxu0
  %v8715 = vadd.f32 0.0, %v8714
  %v8716 = vpop.f32.mrb[0].mxu0
  %8717 = vdwg.mxu0
  %8718 = vmatprep.subr.bf16.mxu0 0
  %8719 = vmatpush1.bf16.msra.mxu0 %v8629
  %8720 = vmatprep.subr.bf16.mxu0 0
  %8721 = vmatpush1.bf16.msra.mxu0 %v8630
  %8722 = vmatprep.subr.bf16.mxu0 0
  %8723 = vmatpush1.bf16.msra.mxu0 %v8631
  %8724 = vmatprep.subr.bf16.mxu0 0
  %8725 = vmatpush1.bf16.msra.mxu0 %v8632
  %8726 = vmatprep.subr.bf16.mxu0 0
  %8727 = vmatpush1.bf16.msra.mxu0 %v8633
  %8728 = vmatprep.subr.bf16.mxu0 0
  %8729 = vmatpush1.bf16.msra.mxu0 %v8634
  %8730 = vmatprep.subr.bf16.mxu0 0
  %8731 = vmatpush1.bf16.msra.mxu0 %v8635
  %8732 = vmatprep.subr.bf16.mxu0 0
  %8733 = vmatpush1.bf16.msra.mxu0 %v8636
  %8734 = vmatprep.subr.bf16.mxu0 0
  %8735 = vmatpush1.bf16.msra.mxu0 %v8637
  %8736 = vmatprep.subr.bf16.mxu0 0
  %8737 = vmatpush1.bf16.msra.mxu0 %v8638
  %8738 = vmatprep.subr.bf16.mxu0 0
  %8739 = vmatpush1.bf16.msra.mxu0 %v8639
  %8740 = vmatprep.subr.bf16.mxu0 0
  %8741 = vmatpush1.bf16.msra.mxu0 %v8640
  %8742 = vmatprep.subr.bf16.mxu0 0
  %8743 = vmatpush1.bf16.msra.mxu0 %v8641
  %8744 = vmatprep.subr.bf16.mxu0 0
  %8745 = vmatpush1.bf16.msra.mxu0 %v8642
  %8746 = vmatprep.subr.bf16.mxu0 0
  %8747 = vmatpush1.bf16.msra.mxu0 %v8643
  %8748 = vmatprep.subr.bf16.mxu0 0
  %8749 = vmatpush1.bf16.msra.mxu0 %v8644
  %8750 = vmatprep.mubr.bf16.mxu0 %v8419
  %8751 = vmatmul.mubr.bf16.gmra.mrb[0].mxu0 %v8418
  %v8752 = vpop.f32.mrb[0].mxu0
  %v8753 = vadd.f32 %v8712, %v8752
  %v8754 = vpop.f32.mrb[0].mxu0
  %v8755 = vpop.f32.mrb[0].mxu0
  %v8756 = vadd.f32 %v8715, %v8755
  %v8757 = vpop.f32.mrb[0].mxu0
  %8758 = vdwg.mxu0
  %v8759 = vadd.f32 %v8248, %v8753
  %v8760 = vadd.f32 %v8249, %v8756
  %v8761 = vadd.f32 %v6715, %v8759
  %v8762 = vadd.f32 %v6716, %v8760
  %s8763 = scalar_lea.vmem %s24, 1
  %v8764 = vld [vmem:[%s8763] sm:$0x1]
  %v8766 = vlaneseq
  %v8767 = vshrl.u32 %v8766, 7
  %v8768 = vsub.s32 0, %v8767
  %v8769 = vrot.slane %v8764, %v8768
  %v8771 = vadd.f32 %v8761, %v8769
  %v8772 = vadd.f32 %v8762, %v8769
  %s8773 = scalar_lea.vmem %s19, 1
  %v8774 = vld [vmem:[%s8773] sm:$0x1]
  %s8775 = scalar_lea.vmem %s20, 1
  %v8776 = vld [vmem:[%s8775] sm:$0x1]
  %v8777 = vsel %vm230, %v8771, 0.0
  %8778 = vadd.xlane.f32.xlu0 %v8777
  %v8779 = vpop.xlane.xlu0 %8778
  %v8780 = vsel %vm230, %v8772, 0.0
  %8781 = vadd.xlane.f32.xlu0 %v8780
  %v8782 = vpop.xlane.xlu0 %8781
  %v8783 = vmul.f32 %v8779, %v1352
  %v8784 = vmul.f32 %v8782, %v1352
  %v8785 = vsub.f32 %v8771, %v8783
  %v8786 = vsub.f32 %v8772, %v8784
  %v8787 = vmul.f32 %v8785, %v8785
  %v8788 = vmul.f32 %v8786, %v8786
  %v8789 = vsel %vm230, %v8787, 0.0
  %8790 = vadd.xlane.f32.xlu0 %v8789
  %v8791 = vpop.xlane.xlu0 %8790
  %v8792 = vsel %vm230, %v8788, 0.0
  %8793 = vadd.xlane.f32.xlu0 %v8792
  %v8794 = vpop.xlane.xlu0 %8793
  %v8795 = vmul.f32 %v8791, %v1352
  %v8796 = vmul.f32 %v8794, %v1352
  %v8797 = vadd.f32 %v8795, 1e-05
  %v8798 = vadd.f32 %v8796, 1e-05
  %v8799 = vrsqrt.pop %v8797
  %v8800 = vrsqrt.pop %v8798
  %v8801 = vmul.f32 %v8785, %v8799
  %v8802 = vmul.f32 %v8786, %v8800
  %v8804 = vlaneseq
  %v8805 = vshrl.u32 %v8804, 7
  %v8806 = vsub.s32 0, %v8805
  %v8807 = vrot.slane %v8774, %v8806
  %v8809 = vmul.f32 %v8801, %v8807
  %v8810 = vmul.f32 %v8802, %v8807
  %v8812 = vlaneseq
  %v8813 = vshrl.u32 %v8812, 7
  %v8814 = vsub.s32 0, %v8813
  %v8815 = vrot.slane %v8776, %v8814
  %v8817 = vadd.f32 %v8809, %v8815
  %v8818 = vadd.f32 %v8810, %v8815
  %v8819 = vld [vmem:[%s25] sm:$0xff]
  %v8820 = vld [vmem:[%s25 + $0x8] sm:$0xff]
  %v8821 = vld [vmem:[%s25 + $0x10] sm:$0xff]
  %v8822 = vld [vmem:[%s25 + $0x18] sm:$0xff]
  %v8823 = vld [vmem:[%s26] sm:$0x1]
  %v8825 = vlaneseq
  %v8826 = vshrl.u32 %v8825, 7
  %v8827 = vsub.s32 0, %v8826
  %v8828 = vrot.slane %v8823, %v8827
  %v8831 = vsel %vm230, %v8817, 0
  %v8834 = vsel %vm230, %v8818, 0
  %8836 = vmatprep.subr.mxu0 0.0
  %8837 = vmatpush1.msra.mxu0 %v8819
  %8838 = vmatprep.subr.mxu0 0.0
  %8839 = vmatpush1.msra.mxu0 %v8820
  %8840 = vmatprep.subr.mxu0 0.0
  %8841 = vmatpush1.msra.mxu0 %v8821
  %8842 = vmatprep.subr.mxu0 0.0
  %8843 = vmatpush1.msra.mxu0 %v8822
  %8844 = vmatprep.subr.mxu0 0.0
  %8845 = vmatpush1.msra.mxu0 0.0
  %8846 = vmatprep.subr.mxu0 0.0
  %8847 = vmatpush1.msra.mxu0 0.0
  %8848 = vmatprep.subr.mxu0 0.0
  %8849 = vmatpush1.msra.mxu0 0.0
  %8850 = vmatprep.subr.mxu0 0.0
  %8851 = vmatpush1.msra.mxu0 0.0
  %8852 = vmatprep.subr.mxu0 0.0
  %8853 = vmatpush1.msra.mxu0 0.0
  %8854 = vmatprep.subr.mxu0 0.0
  %8855 = vmatpush1.msra.mxu0 0.0
  %8856 = vmatprep.subr.mxu0 0.0
  %8857 = vmatpush1.msra.mxu0 0.0
  %8858 = vmatprep.subr.mxu0 0.0
  %8859 = vmatpush1.msra.mxu0 0.0
  %8860 = vmatprep.subr.mxu0 0.0
  %8861 = vmatpush1.msra.mxu0 0.0
  %8862 = vmatprep.subr.mxu0 0.0
  %8863 = vmatpush1.msra.mxu0 0.0
  %8864 = vmatprep.subr.mxu0 0.0
  %8865 = vmatpush1.msra.mxu0 0.0
  %8866 = vmatprep.subr.mxu0 0.0
  %8867 = vmatpush1.msra.mxu0 0.0
  %8868 = vmatprep.subr.mxu0 0.0
  %8869 = vmatpush1.msra.mxu0 0.0
  %8870 = vmatprep.subr.mxu0 0.0
  %8871 = vmatpush1.msra.mxu0 0.0
  %8872 = vmatprep.subr.mxu0 0.0
  %8873 = vmatpush1.msra.mxu0 0.0
  %8874 = vmatprep.subr.mxu0 0.0
  %8875 = vmatpush1.msra.mxu0 0.0
  %8876 = vmatprep.subr.mxu0 0.0
  %8877 = vmatpush1.msra.mxu0 0.0
  %8878 = vmatprep.subr.mxu0 0.0
  %8879 = vmatpush1.msra.mxu0 0.0
  %8880 = vmatprep.subr.mxu0 0.0
  %8881 = vmatpush1.msra.mxu0 0.0
  %8882 = vmatprep.subr.mxu0 0.0
  %8883 = vmatpush1.msra.mxu0 0.0
  %8884 = vmatprep.subr.mxu0 0.0
  %8885 = vmatpush1.msra.mxu0 0.0
  %8886 = vmatprep.subr.mxu0 0.0
  %8887 = vmatpush1.msra.mxu0 0.0
  %8888 = vmatprep.subr.mxu0 0.0
  %8889 = vmatpush1.msra.mxu0 0.0
  %8890 = vmatprep.subr.mxu0 0.0
  %8891 = vmatpush1.msra.mxu0 0.0
  %8892 = vmatprep.subr.mxu0 0.0
  %8893 = vmatpush1.msra.mxu0 0.0
  %8894 = vmatprep.subr.mxu0 0.0
  %8895 = vmatpush1.msra.mxu0 0.0
  %8896 = vmatprep.subr.mxu0 0.0
  %8897 = vmatpush1.msra.mxu0 0.0
  %8898 = vmatprep.subr.mxu0 0.0
  %8899 = vmatpush1.msra.mxu0 0.0
  %8900 = vmatprep.mubr.f32.mxu0 0.0
  %8901 = vmatmul.mubr.f32.gmra.mrb[0].mxu0 %v8831
  %v8902 = vpop.f32.mrb[0].mxu0
  %v8903 = vadd.f32 %v8828, %v8902
  %v8904 = vpop.f32.mrb[0].mxu0
  %8905 = vmatprep.mubr.f32.mxu0 0.0
  %8906 = vmatmul.mubr.f32.gmra.mrb[0].mxu0 %v8834
  %v8907 = vpop.f32.mrb[0].mxu0
  %v8908 = vadd.f32 %v8828, %v8907
  %v8909 = vpop.f32.mrb[0].mxu0
  %8910 = vdwg.mxu0
  %8911 = vst [vmem:[%s27] sm:$0xff] %v8903
  %8912 = vst [vmem:[%s27 + $0x8] sm:$0xff] %v8908
  // Predicated region
  $region110: #{control_predict_forward_pallas.1} parent=0 // pred_check
    _
  $region111: #{control_predict_forward_pallas.1} parent=0 // pred_check_branch
    %8914 = sbr.rel (0) target = $region113
  $region112: #{control_predict_forward_pallas.1} parent=0 // pred_region
    _
  $region113: #{control_predict_forward_pallas.1} parent=0 // pred_fallthru
    _
  // Predicated region
  $region114: #{control_predict_forward_pallas.1} parent=0 // pred_check
    _
  $region115: #{control_predict_forward_pallas.1} parent=0 // pred_check_branch
    %8916 = sbr.rel (0) target = $region117
  $region116: #{control_predict_forward_pallas.1} parent=0 // pred_region
    _
  $region117: #{control_predict_forward_pallas.1} parent=0 // pred_fallthru
    _

</llo_original>
